<compile_context>
chip_gen: v7x
topology: tpu7x:2x2x1
jax: 0.10.0
libtpu: 0.0.40
codegen_flags: <defaults>
</compile_context>

<pallas_src>
import functools

import jax
import jax.numpy as jnp
from jax import lax
from jax.experimental import pallas as pl
from jax.experimental.pallas import tpu as pltpu


def _resblock_kernel(x_ref, w1_ref, b1_ref, w2_ref, b2_ref,
                     w3x_ref, w3r_ref, b3_ref, o_ref,
                     xpad_ref, rpad_ref, *, H, W):
    """Fused ResBlock on one image (channels-last tile resident in VMEM).

    x_ref   : (1, H, W, Cin)   input image
    w1_ref  : (9, Cin, F)      conv1 weights, one (Cin, F) slab per 3x3 tap
    b1_ref  : (1, F)
    w2_ref  : (9*F, F)         conv2 weights, im2col-flattened
    b2_ref  : (1, F)
    w3x_ref : (9, Cin, Cout)   conv3 weights acting on x (first Cin channels)
    w3r_ref : (9*F, Cout)      conv3 weights acting on the residual
    b3_ref  : (1, Cout)
    o_ref   : (1, H*W, Cout)   output
    xpad_ref: (H+2, W+2, Cin)  VMEM scratch (zero-padded x)
    rpad_ref: (H+2, W+2, F)    VMEM scratch (zero-padded residual)
    """
    Cin = x_ref.shape[-1]
    F = b1_ref.shape[-1]
    Cout = b3_ref.shape[-1]
    cdt = xpad_ref.dtype

    def leaky(v):                       # LeakyReLU(0.2); epilogue kept in f32
        return jnp.where(v >= 0, v, 0.2 * v)

    def im2col(pad_ref, C):             # (H*W, 9*C) slab from a padded ref
        taps = []
        for ky in range(3):
            for kx in range(3):
                taps.append(pad_ref[ky:ky + H, kx:kx + W, :].reshape(H * W, C))
        return jnp.concatenate(taps, axis=-1)

    # Stage x zero-padded in VMEM; the borders of both pads stay zero.
    xpad_ref[...] = jnp.zeros_like(xpad_ref)
    rpad_ref[...] = jnp.zeros_like(rpad_ref)
    xpad_ref[1:H + 1, 1:W + 1, :] = x_ref[0].astype(cdt)

    # conv1 and the x-branch of conv3 share the 9 x-taps (loaded once);
    # accumulators are initialized with the broadcast bias (hoisted).
    acc1 = jnp.broadcast_to(b1_ref[...], (H * W, F)).astype(jnp.float32)
    acc3 = jnp.broadcast_to(b3_ref[...], (H * W, Cout)).astype(jnp.float32)
    t = 0
    for ky in range(3):
        for kx in range(3):
            patch = xpad_ref[ky:ky + H, kx:kx + W, :].reshape(H * W, Cin)
            acc1 = acc1 + jnp.dot(patch, w1_ref[t],
                                  preferred_element_type=jnp.float32)
            acc3 = acc3 + jnp.dot(patch, w3x_ref[t],
                                  preferred_element_type=jnp.float32)
            t += 1
    r = leaky(acc1)                                        # (H*W, F) f32

    # conv2: single K = 9*F matmul on the im2col slab of the padded residual.
    rpad_ref[1:H + 1, 1:W + 1, :] = r.reshape(H, W, F).astype(cdt)
    slab = im2col(rpad_ref, F)                             # (H*W, 9*F)
    r = leaky(jnp.dot(slab, w2_ref[...],
                      preferred_element_type=jnp.float32) + b2_ref[...])

    # conv3: residual branch as one K = 9*F matmul; x branch already in acc3.
    rpad_ref[1:H + 1, 1:W + 1, :] = r.reshape(H, W, F).astype(cdt)
    slab = im2col(rpad_ref, F)
    out = acc3 + jnp.dot(slab, w3r_ref[...],
                         preferred_element_type=jnp.float32)

    o_ref[...] = out.reshape(1, H * W, Cout).astype(o_ref.dtype)


def resblock_forward(x_nchw, params, *, compute_dtype=jnp.float32):
    """Matches ResBlock.forward; x_nchw is (N, Cin, H, W) like PyTorch."""
    N, Cin, H, W = x_nchw.shape
    F = params["w1"].shape[-1]
    Cout = params["w3"].shape[-1]
    cdt = compute_dtype

    # Kernel works channels-last so channels map to the 128-wide lane axis.
    x_nhwc = jnp.transpose(x_nchw, (0, 2, 3, 1))

    # Flatten / split weights for the fused kernel (params are HWIO).
    # NOTE: real PyTorch conv weights are OIHW and must be transposed to HWIO.
    w1_t = params["w1"].reshape(9, Cin, F).astype(cdt)
    w2_f = params["w2"].reshape(9 * F, F).astype(cdt)
    w3x_t = params["w3"][:, :, :Cin, :].reshape(9, Cin, Cout).astype(cdt)
    w3r_f = params["w3"][:, :, Cin:, :].reshape(9 * F, Cout).astype(cdt)
    b1 = params["b1"].reshape(1, F).astype(jnp.float32)
    b2 = params["b2"].reshape(1, F).astype(jnp.float32)
    b3 = params["b3"].reshape(1, Cout).astype(jnp.float32)

    kernel = functools.partial(_resblock_kernel, H=H, W=W)

    flops = 2 * N * H * W * 9 * (Cin * F + F * F + (Cin + F) * Cout)
    bytes_accessed = int(
        x_nhwc.size * x_nhwc.dtype.itemsize
        + sum(a.size * a.dtype.itemsize
              for a in (w1_t, w2_f, w3x_t, w3r_f, b1, b2, b3))
        + N * H * W * Cout * 4)

    out_flat = pl.pallas_call(
        kernel,
        out_shape=jax.ShapeDtypeStruct((N, H * W, Cout), jnp.float32),
        grid_spec=pltpu.PrefetchScalarGridSpec(
            num_scalar_prefetch=0,
            grid=(N,),
            in_specs=[
                pl.BlockSpec((1, H, W, Cin), lambda n: (n, 0, 0, 0)),
                pl.BlockSpec((9, Cin, F), lambda n: (0, 0, 0)),
                pl.BlockSpec((1, F), lambda n: (0, 0)),
                pl.BlockSpec((9 * F, F), lambda n: (0, 0)),
                pl.BlockSpec((1, F), lambda n: (0, 0)),
                pl.BlockSpec((9, Cin, Cout), lambda n: (0, 0, 0)),
                pl.BlockSpec((9 * F, Cout), lambda n: (0, 0)),
                pl.BlockSpec((1, Cout), lambda n: (0, 0)),
            ],
            out_specs=pl.BlockSpec((1, H * W, Cout), lambda n: (n, 0, 0)),
            scratch_shapes=[
                pltpu.VMEM((H + 2, W + 2, Cin), cdt),
                pltpu.VMEM((H + 2, W + 2, F), cdt),
            ],
        ),
        compiler_params=pltpu.CompilerParams(
            dimension_semantics=("parallel",)),
        cost_estimate=pl.CostEstimate(
            flops=flops, transcendentals=0, bytes_accessed=bytes_accessed),
    )(x_nhwc, w1_t, b1, w2_f, b2, w3x_t, w3r_f, b3)

    return jnp.transpose(out_flat.reshape(N, H, W, Cout), (0, 3, 1, 2))


def init_resblock_params(key, channel_in, channel_out, feature=64):
    """Deterministic synthetic parameters (shapes match the PyTorch module)."""
    k1, k2, k3, k4, k5, k6 = jax.random.split(key, 6)
    scale = 0.05
    w1 = scale * jax.random.normal(k1, (3, 3, channel_in, feature), jnp.float32)
    b1 = scale * jax.random.normal(k2, (feature,), jnp.float32)
    w2 = scale * jax.random.normal(k3, (3, 3, feature, feature), jnp.float32)
    b2 = scale * jax.random.normal(k4, (feature,), jnp.float32)
    w3 = scale * jax.random.normal(
        k5, (3, 3, feature + channel_in, channel_out), jnp.float32)
    b3 = scale * jax.random.normal(k6, (channel_out,), jnp.float32)
    return dict(w1=w1, b1=b1, w2=w2, b2=b2, w3=w3, b3=b3)


def _reference_forward(x_nchw, params):
    """Pure-JAX reference (lax.conv, unsplit w3 + explicit concat)."""
    def conv(x, w, b):
        y = lax.conv_general_dilated(
            x, w, window_strides=(1, 1), padding="SAME",
            dimension_numbers=("NHWC", "HWIO", "NHWC"))
        return y + b
    lrelu = lambda v: jnp.where(v >= 0, v, 0.2 * v)
    x = jnp.transpose(x_nchw, (0, 2, 3, 1))
    r = lrelu(conv(x, params["w1"], params["b1"]))
    r = lrelu(conv(r, params["w2"], params["b2"]))
    cat = jnp.concatenate([x, r], axis=-1)
    out = conv(cat, params["w3"], params["b3"])
    return jnp.transpose(out, (0, 3, 1, 2))


if __name__ == "__main__":
    key = jax.random.PRNGKey(0)
    k_x, k_p = jax.random.split(key)

    N, C_in, H, W = 2, 4, 16, 16
    C_out = 4
    x = jax.random.normal(k_x, (N, C_in, H, W), jnp.float32)  # NCHW like PyTorch
    params = init_resblock_params(k_p, C_in, C_out)

    # compute_dtype default is f32; pass jnp.bfloat16 on v6e/v7x for 2x MXU
    # throughput / halved weight+activation DMA (accumulation stays f32).
    fwd = jax.jit(resblock_forward)
    out = jax.block_until_ready(fwd(x, params))

    ref = jax.block_until_ready(_reference_forward(x, params))
    assert out.shape == (N, C_out, H, W)
    assert jnp.allclose(out, ref, atol=1e-4, rtol=1e-4), "mismatch vs reference"

    print("KERNEL_OK")
</pallas_src>

<mosaic_0001>
module attributes {stable_mosaic.version = 11 : i64} {
  func.func @_resblock_kernel(%arg0: i32, %arg1: memref<1x16x16x4xf32, #tpu.memory_space<vmem>>, %arg2: memref<9x4x64xf32, #tpu.memory_space<vmem>>, %arg3: memref<1x64xf32, #tpu.memory_space<vmem>>, %arg4: memref<576x64xf32, #tpu.memory_space<vmem>>, %arg5: memref<1x64xf32, #tpu.memory_space<vmem>>, %arg6: memref<9x4x4xf32, #tpu.memory_space<vmem>>, %arg7: memref<576x4xf32, #tpu.memory_space<vmem>>, %arg8: memref<1x4xf32, #tpu.memory_space<vmem>>, %arg9: memref<1x256x4xf32, #tpu.memory_space<vmem>>, %arg10: memref<18x18x4xf32, #tpu.memory_space<vmem>>, %arg11: memref<18x18x64xf32, #tpu.memory_space<vmem>>) attributes {dimension_semantics = [#tpu.dimension_semantics<parallel>], iteration_bounds = array<i64: 2>, scalar_prefetch = 0 : i64, scratch_operands = 2 : i64, tpu.core_type = #tpu.core_type<tc>, window_params = [{transform_indices = @transform_0, window_bounds = array<i64: 1, 16, 16, 4>}, {pipeline_mode = #tpu.pipeline_mode<synchronous>, transform_indices = @transform_1, window_bounds = array<i64: 9, 4, 64>}, {pipeline_mode = #tpu.pipeline_mode<synchronous>, transform_indices = @transform_2, window_bounds = array<i64: 1, 64>}, {pipeline_mode = #tpu.pipeline_mode<synchronous>, transform_indices = @transform_3, window_bounds = array<i64: 576, 64>}, {pipeline_mode = #tpu.pipeline_mode<synchronous>, transform_indices = @transform_4, window_bounds = array<i64: 1, 64>}, {pipeline_mode = #tpu.pipeline_mode<synchronous>, transform_indices = @transform_5, window_bounds = array<i64: 9, 4, 4>}, {pipeline_mode = #tpu.pipeline_mode<synchronous>, transform_indices = @transform_6, window_bounds = array<i64: 576, 4>}, {pipeline_mode = #tpu.pipeline_mode<synchronous>, transform_indices = @transform_7, window_bounds = array<i64: 1, 4>}, {transform_indices = @transform_8, window_bounds = array<i64: 1, 256, 4>}]} {
    %cst = arith.constant 0.000000e+00 : f32
    %0 = vector.broadcast %cst : f32 to vector<18x18x4xf32>
    %c0 = arith.constant 0 : index
    %c0_0 = arith.constant 0 : index
    %c0_1 = arith.constant 0 : index
    %1 = vector.load %arg10[%c0, %c0_0, %c0_1] : memref<18x18x4xf32, #tpu.memory_space<vmem>>, vector<18x18x4xf32>
    tpu.vector_store %arg10[%c0, %c0_0, %c0_1], %0 {strides = array<i32>} : memref<18x18x4xf32, #tpu.memory_space<vmem>>, vector<18x18x4xf32>,
    %cst_2 = arith.constant 0.000000e+00 : f32
    %2 = vector.broadcast %cst_2 : f32 to vector<18x18x64xf32>
    %c0_3 = arith.constant 0 : index
    %c0_4 = arith.constant 0 : index
    %c0_5 = arith.constant 0 : index
    %3 = vector.load %arg11[%c0_3, %c0_4, %c0_5] : memref<18x18x64xf32, #tpu.memory_space<vmem>>, vector<18x18x64xf32>
    tpu.vector_store %arg11[%c0_3, %c0_4, %c0_5], %2 {strides = array<i32>} : memref<18x18x64xf32, #tpu.memory_space<vmem>>, vector<18x18x64xf32>,
    %c0_6 = arith.constant 0 : index
    %c0_7 = arith.constant 0 : index
    %c0_8 = arith.constant 0 : index
    %c0_9 = arith.constant 0 : index
    %4 = vector.load %arg1[%c0_6, %c0_7, %c0_8, %c0_9] : memref<1x16x16x4xf32, #tpu.memory_space<vmem>>, vector<1x16x16x4xf32>
    %5 = vector.shape_cast %4 : vector<1x16x16x4xf32> to vector<16x16x4xf32>
    %c1 = arith.constant 1 : index
    %c1_10 = arith.constant 1 : index
    %c0_11 = arith.constant 0 : index
    %6 = vector.load %arg10[%c1, %c1_10, %c0_11] : memref<18x18x4xf32, #tpu.memory_space<vmem>>, vector<16x16x4xf32>
    tpu.vector_store %arg10[%c1, %c1_10, %c0_11], %5 {strides = array<i32>} : memref<18x18x4xf32, #tpu.memory_space<vmem>>, vector<16x16x4xf32>,
    %c0_12 = arith.constant 0 : index
    %c0_13 = arith.constant 0 : index
    %7 = vector.load %arg3[%c0_12, %c0_13] : memref<1x64xf32, #tpu.memory_space<vmem>>, vector<1x64xf32>
    %8 = vector.shape_cast %7 : vector<1x64xf32> to vector<1x64xf32>
    %9 = vector.broadcast %8 : vector<1x64xf32> to vector<256x64xf32>
    %c0_14 = arith.constant 0 : index
    %c0_15 = arith.constant 0 : index
    %10 = vector.load %arg8[%c0_14, %c0_15] : memref<1x4xf32, #tpu.memory_space<vmem>>, vector<1x4xf32>
    %11 = vector.shape_cast %10 : vector<1x4xf32> to vector<1x4xf32>
    %12 = vector.broadcast %11 : vector<1x4xf32> to vector<256x4xf32>
    %c0_16 = arith.constant 0 : index
    %c0_17 = arith.constant 0 : index
    %c0_18 = arith.constant 0 : index
    %13 = vector.load %arg10[%c0_16, %c0_17, %c0_18] : memref<18x18x4xf32, #tpu.memory_space<vmem>>, vector<16x16x4xf32>
    %14 = vector.shape_cast %13 : vector<16x16x4xf32> to vector<256x4xf32>
    %c0_19 = arith.constant 0 : index
    %c0_20 = arith.constant 0 : index
    %c0_21 = arith.constant 0 : index
    %15 = vector.load %arg2[%c0_19, %c0_20, %c0_21] : memref<9x4x64xf32, #tpu.memory_space<vmem>>, vector<1x4x64xf32>
    %16 = vector.shape_cast %15 : vector<1x4x64xf32> to vector<4x64xf32>
    %cst_22 = arith.constant dense<0.000000e+00> : vector<256x64xf32>
    %17 = tpu.matmul %14, %16, %cst_22 {dimension_numbers = #tpu.dot_dimension_numbers<[1], [0], [0], [1], [0, 0, 1, 1], [], []>} : vector<256x4xf32>, vector<4x64xf32>, vector<256x64xf32> -> vector<256x64xf32>
    %18 = arith.addf %9, %17 : vector<256x64xf32>
    %c0_23 = arith.constant 0 : index
    %c0_24 = arith.constant 0 : index
    %c0_25 = arith.constant 0 : index
    %19 = vector.load %arg6[%c0_23, %c0_24, %c0_25] : memref<9x4x4xf32, #tpu.memory_space<vmem>>, vector<1x4x4xf32>
    %20 = vector.shape_cast %19 : vector<1x4x4xf32> to vector<4x4xf32>
    %cst_26 = arith.constant dense<0.000000e+00> : vector<256x4xf32>
    %21 = tpu.matmul %14, %20, %cst_26 {dimension_numbers = #tpu.dot_dimension_numbers<[1], [0], [0], [1], [0, 0, 1, 1], [], []>} : vector<256x4xf32>, vector<4x4xf32>, vector<256x4xf32> -> vector<256x4xf32>
    %22 = arith.addf %12, %21 : vector<256x4xf32>
    %c0_27 = arith.constant 0 : index
    %c1_28 = arith.constant 1 : index
    %c0_29 = arith.constant 0 : index
    %23 = vector.load %arg10[%c0_27, %c1_28, %c0_29] : memref<18x18x4xf32, #tpu.memory_space<vmem>>, vector<16x16x4xf32>
    %24 = vector.shape_cast %23 : vector<16x16x4xf32> to vector<256x4xf32>
    %c1_30 = arith.constant 1 : index
    %c0_31 = arith.constant 0 : index
    %c0_32 = arith.constant 0 : index
    %25 = vector.load %arg2[%c1_30, %c0_31, %c0_32] : memref<9x4x64xf32, #tpu.memory_space<vmem>>, vector<1x4x64xf32>
    %26 = vector.shape_cast %25 : vector<1x4x64xf32> to vector<4x64xf32>
    %cst_33 = arith.constant dense<0.000000e+00> : vector<256x64xf32>
    %27 = tpu.matmul %24, %26, %cst_33 {dimension_numbers = #tpu.dot_dimension_numbers<[1], [0], [0], [1], [0, 0, 1, 1], [], []>} : vector<256x4xf32>, vector<4x64xf32>, vector<256x64xf32> -> vector<256x64xf32>
    %28 = arith.addf %18, %27 : vector<256x64xf32>
    %c1_34 = arith.constant 1 : index
    %c0_35 = arith.constant 0 : index
    %c0_36 = arith.constant 0 : index
    %29 = vector.load %arg6[%c1_34, %c0_35, %c0_36] : memref<9x4x4xf32, #tpu.memory_space<vmem>>, vector<1x4x4xf32>
    %30 = vector.shape_cast %29 : vector<1x4x4xf32> to vector<4x4xf32>
    %cst_37 = arith.constant dense<0.000000e+00> : vector<256x4xf32>
    %31 = tpu.matmul %24, %30, %cst_37 {dimension_numbers = #tpu.dot_dimension_numbers<[1], [0], [0], [1], [0, 0, 1, 1], [], []>} : vector<256x4xf32>, vector<4x4xf32>, vector<256x4xf32> -> vector<256x4xf32>
    %32 = arith.addf %22, %31 : vector<256x4xf32>
    %c0_38 = arith.constant 0 : index
    %c2 = arith.constant 2 : index
    %c0_39 = arith.constant 0 : index
    %33 = vector.load %arg10[%c0_38, %c2, %c0_39] : memref<18x18x4xf32, #tpu.memory_space<vmem>>, vector<16x16x4xf32>
    %34 = vector.shape_cast %33 : vector<16x16x4xf32> to vector<256x4xf32>
    %c2_40 = arith.constant 2 : index
    %c0_41 = arith.constant 0 : index
    %c0_42 = arith.constant 0 : index
    %35 = vector.load %arg2[%c2_40, %c0_41, %c0_42] : memref<9x4x64xf32, #tpu.memory_space<vmem>>, vector<1x4x64xf32>
    %36 = vector.shape_cast %35 : vector<1x4x64xf32> to vector<4x64xf32>
    %cst_43 = arith.constant dense<0.000000e+00> : vector<256x64xf32>
    %37 = tpu.matmul %34, %36, %cst_43 {dimension_numbers = #tpu.dot_dimension_numbers<[1], [0], [0], [1], [0, 0, 1, 1], [], []>} : vector<256x4xf32>, vector<4x64xf32>, vector<256x64xf32> -> vector<256x64xf32>
    %38 = arith.addf %28, %37 : vector<256x64xf32>
    %c2_44 = arith.constant 2 : index
    %c0_45 = arith.constant 0 : index
    %c0_46 = arith.constant 0 : index
    %39 = vector.load %arg6[%c2_44, %c0_45, %c0_46] : memref<9x4x4xf32, #tpu.memory_space<vmem>>, vector<1x4x4xf32>
    %40 = vector.shape_cast %39 : vector<1x4x4xf32> to vector<4x4xf32>
    %cst_47 = arith.constant dense<0.000000e+00> : vector<256x4xf32>
    %41 = tpu.matmul %34, %40, %cst_47 {dimension_numbers = #tpu.dot_dimension_numbers<[1], [0], [0], [1], [0, 0, 1, 1], [], []>} : vector<256x4xf32>, vector<4x4xf32>, vector<256x4xf32> -> vector<256x4xf32>
    %42 = arith.addf %32, %41 : vector<256x4xf32>
    %c1_48 = arith.constant 1 : index
    %c0_49 = arith.constant 0 : index
    %c0_50 = arith.constant 0 : index
    %43 = vector.load %arg10[%c1_48, %c0_49, %c0_50] : memref<18x18x4xf32, #tpu.memory_space<vmem>>, vector<16x16x4xf32>
    %44 = vector.shape_cast %43 : vector<16x16x4xf32> to vector<256x4xf32>
    %c3 = arith.constant 3 : index
    %c0_51 = arith.constant 0 : index
    %c0_52 = arith.constant 0 : index
    %45 = vector.load %arg2[%c3, %c0_51, %c0_52] : memref<9x4x64xf32, #tpu.memory_space<vmem>>, vector<1x4x64xf32>
    %46 = vector.shape_cast %45 : vector<1x4x64xf32> to vector<4x64xf32>
    %cst_53 = arith.constant dense<0.000000e+00> : vector<256x64xf32>
    %47 = tpu.matmul %44, %46, %cst_53 {dimension_numbers = #tpu.dot_dimension_numbers<[1], [0], [0], [1], [0, 0, 1, 1], [], []>} : vector<256x4xf32>, vector<4x64xf32>, vector<256x64xf32> -> vector<256x64xf32>
    %48 = arith.addf %38, %47 : vector<256x64xf32>
    %c3_54 = arith.constant 3 : index
    %c0_55 = arith.constant 0 : index
    %c0_56 = arith.constant 0 : index
    %49 = vector.load %arg6[%c3_54, %c0_55, %c0_56] : memref<9x4x4xf32, #tpu.memory_space<vmem>>, vector<1x4x4xf32>
    %50 = vector.shape_cast %49 : vector<1x4x4xf32> to vector<4x4xf32>
    %cst_57 = arith.constant dense<0.000000e+00> : vector<256x4xf32>
    %51 = tpu.matmul %44, %50, %cst_57 {dimension_numbers = #tpu.dot_dimension_numbers<[1], [0], [0], [1], [0, 0, 1, 1], [], []>} : vector<256x4xf32>, vector<4x4xf32>, vector<256x4xf32> -> vector<256x4xf32>
    %52 = arith.addf %42, %51 : vector<256x4xf32>
    %c1_58 = arith.constant 1 : index
    %c1_59 = arith.constant 1 : index
    %c0_60 = arith.constant 0 : index
    %53 = vector.load %arg10[%c1_58, %c1_59, %c0_60] : memref<18x18x4xf32, #tpu.memory_space<vmem>>, vector<16x16x4xf32>
    %54 = vector.shape_cast %53 : vector<16x16x4xf32> to vector<256x4xf32>
    %c4 = arith.constant 4 : index
    %c0_61 = arith.constant 0 : index
    %c0_62 = arith.constant 0 : index
    %55 = vector.load %arg2[%c4, %c0_61, %c0_62] : memref<9x4x64xf32, #tpu.memory_space<vmem>>, vector<1x4x64xf32>
    %56 = vector.shape_cast %55 : vector<1x4x64xf32> to vector<4x64xf32>
    %cst_63 = arith.constant dense<0.000000e+00> : vector<256x64xf32>
    %57 = tpu.matmul %54, %56, %cst_63 {dimension_numbers = #tpu.dot_dimension_numbers<[1], [0], [0], [1], [0, 0, 1, 1], [], []>} : vector<256x4xf32>, vector<4x64xf32>, vector<256x64xf32> -> vector<256x64xf32>
    %58 = arith.addf %48, %57 : vector<256x64xf32>
    %c4_64 = arith.constant 4 : index
    %c0_65 = arith.constant 0 : index
    %c0_66 = arith.constant 0 : index
    %59 = vector.load %arg6[%c4_64, %c0_65, %c0_66] : memref<9x4x4xf32, #tpu.memory_space<vmem>>, vector<1x4x4xf32>
    %60 = vector.shape_cast %59 : vector<1x4x4xf32> to vector<4x4xf32>
    %cst_67 = arith.constant dense<0.000000e+00> : vector<256x4xf32>
    %61 = tpu.matmul %54, %60, %cst_67 {dimension_numbers = #tpu.dot_dimension_numbers<[1], [0], [0], [1], [0, 0, 1, 1], [], []>} : vector<256x4xf32>, vector<4x4xf32>, vector<256x4xf32> -> vector<256x4xf32>
    %62 = arith.addf %52, %61 : vector<256x4xf32>
    %c1_68 = arith.constant 1 : index
    %c2_69 = arith.constant 2 : index
    %c0_70 = arith.constant 0 : index
    %63 = vector.load %arg10[%c1_68, %c2_69, %c0_70] : memref<18x18x4xf32, #tpu.memory_space<vmem>>, vector<16x16x4xf32>
    %64 = vector.shape_cast %63 : vector<16x16x4xf32> to vector<256x4xf32>
    %c5 = arith.constant 5 : index
    %c0_71 = arith.constant 0 : index
    %c0_72 = arith.constant 0 : index
    %65 = vector.load %arg2[%c5, %c0_71, %c0_72] : memref<9x4x64xf32, #tpu.memory_space<vmem>>, vector<1x4x64xf32>
    %66 = vector.shape_cast %65 : vector<1x4x64xf32> to vector<4x64xf32>
    %cst_73 = arith.constant dense<0.000000e+00> : vector<256x64xf32>
    %67 = tpu.matmul %64, %66, %cst_73 {dimension_numbers = #tpu.dot_dimension_numbers<[1], [0], [0], [1], [0, 0, 1, 1], [], []>} : vector<256x4xf32>, vector<4x64xf32>, vector<256x64xf32> -> vector<256x64xf32>
    %68 = arith.addf %58, %67 : vector<256x64xf32>
    %c5_74 = arith.constant 5 : index
    %c0_75 = arith.constant 0 : index
    %c0_76 = arith.constant 0 : index
    %69 = vector.load %arg6[%c5_74, %c0_75, %c0_76] : memref<9x4x4xf32, #tpu.memory_space<vmem>>, vector<1x4x4xf32>
    %70 = vector.shape_cast %69 : vector<1x4x4xf32> to vector<4x4xf32>
    %cst_77 = arith.constant dense<0.000000e+00> : vector<256x4xf32>
    %71 = tpu.matmul %64, %70, %cst_77 {dimension_numbers = #tpu.dot_dimension_numbers<[1], [0], [0], [1], [0, 0, 1, 1], [], []>} : vector<256x4xf32>, vector<4x4xf32>, vector<256x4xf32> -> vector<256x4xf32>
    %72 = arith.addf %62, %71 : vector<256x4xf32>
    %c2_78 = arith.constant 2 : index
    %c0_79 = arith.constant 0 : index
    %c0_80 = arith.constant 0 : index
    %73 = vector.load %arg10[%c2_78, %c0_79, %c0_80] : memref<18x18x4xf32, #tpu.memory_space<vmem>>, vector<16x16x4xf32>
    %74 = vector.shape_cast %73 : vector<16x16x4xf32> to vector<256x4xf32>
    %c6 = arith.constant 6 : index
    %c0_81 = arith.constant 0 : index
    %c0_82 = arith.constant 0 : index
    %75 = vector.load %arg2[%c6, %c0_81, %c0_82] : memref<9x4x64xf32, #tpu.memory_space<vmem>>, vector<1x4x64xf32>
    %76 = vector.shape_cast %75 : vector<1x4x64xf32> to vector<4x64xf32>
    %cst_83 = arith.constant dense<0.000000e+00> : vector<256x64xf32>
    %77 = tpu.matmul %74, %76, %cst_83 {dimension_numbers = #tpu.dot_dimension_numbers<[1], [0], [0], [1], [0, 0, 1, 1], [], []>} : vector<256x4xf32>, vector<4x64xf32>, vector<256x64xf32> -> vector<256x64xf32>
    %78 = arith.addf %68, %77 : vector<256x64xf32>
    %c6_84 = arith.constant 6 : index
    %c0_85 = arith.constant 0 : index
    %c0_86 = arith.constant 0 : index
    %79 = vector.load %arg6[%c6_84, %c0_85, %c0_86] : memref<9x4x4xf32, #tpu.memory_space<vmem>>, vector<1x4x4xf32>
    %80 = vector.shape_cast %79 : vector<1x4x4xf32> to vector<4x4xf32>
    %cst_87 = arith.constant dense<0.000000e+00> : vector<256x4xf32>
    %81 = tpu.matmul %74, %80, %cst_87 {dimension_numbers = #tpu.dot_dimension_numbers<[1], [0], [0], [1], [0, 0, 1, 1], [], []>} : vector<256x4xf32>, vector<4x4xf32>, vector<256x4xf32> -> vector<256x4xf32>
    %82 = arith.addf %72, %81 : vector<256x4xf32>
    %c2_88 = arith.constant 2 : index
    %c1_89 = arith.constant 1 : index
    %c0_90 = arith.constant 0 : index
    %83 = vector.load %arg10[%c2_88, %c1_89, %c0_90] : memref<18x18x4xf32, #tpu.memory_space<vmem>>, vector<16x16x4xf32>
    %84 = vector.shape_cast %83 : vector<16x16x4xf32> to vector<256x4xf32>
    %c7 = arith.constant 7 : index
    %c0_91 = arith.constant 0 : index
    %c0_92 = arith.constant 0 : index
    %85 = vector.load %arg2[%c7, %c0_91, %c0_92] : memref<9x4x64xf32, #tpu.memory_space<vmem>>, vector<1x4x64xf32>
    %86 = vector.shape_cast %85 : vector<1x4x64xf32> to vector<4x64xf32>
    %cst_93 = arith.constant dense<0.000000e+00> : vector<256x64xf32>
    %87 = tpu.matmul %84, %86, %cst_93 {dimension_numbers = #tpu.dot_dimension_numbers<[1], [0], [0], [1], [0, 0, 1, 1], [], []>} : vector<256x4xf32>, vector<4x64xf32>, vector<256x64xf32> -> vector<256x64xf32>
    %88 = arith.addf %78, %87 : vector<256x64xf32>
    %c7_94 = arith.constant 7 : index
    %c0_95 = arith.constant 0 : index
    %c0_96 = arith.constant 0 : index
    %89 = vector.load %arg6[%c7_94, %c0_95, %c0_96] : memref<9x4x4xf32, #tpu.memory_space<vmem>>, vector<1x4x4xf32>
    %90 = vector.shape_cast %89 : vector<1x4x4xf32> to vector<4x4xf32>
    %cst_97 = arith.constant dense<0.000000e+00> : vector<256x4xf32>
    %91 = tpu.matmul %84, %90, %cst_97 {dimension_numbers = #tpu.dot_dimension_numbers<[1], [0], [0], [1], [0, 0, 1, 1], [], []>} : vector<256x4xf32>, vector<4x4xf32>, vector<256x4xf32> -> vector<256x4xf32>
    %92 = arith.addf %82, %91 : vector<256x4xf32>
    %c2_98 = arith.constant 2 : index
    %c2_99 = arith.constant 2 : index
    %c0_100 = arith.constant 0 : index
    %93 = vector.load %arg10[%c2_98, %c2_99, %c0_100] : memref<18x18x4xf32, #tpu.memory_space<vmem>>, vector<16x16x4xf32>
    %94 = vector.shape_cast %93 : vector<16x16x4xf32> to vector<256x4xf32>
    %c8 = arith.constant 8 : index
    %c0_101 = arith.constant 0 : index
    %c0_102 = arith.constant 0 : index
    %95 = vector.load %arg2[%c8, %c0_101, %c0_102] : memref<9x4x64xf32, #tpu.memory_space<vmem>>, vector<1x4x64xf32>
    %96 = vector.shape_cast %95 : vector<1x4x64xf32> to vector<4x64xf32>
    %cst_103 = arith.constant dense<0.000000e+00> : vector<256x64xf32>
    %97 = tpu.matmul %94, %96, %cst_103 {dimension_numbers = #tpu.dot_dimension_numbers<[1], [0], [0], [1], [0, 0, 1, 1], [], []>} : vector<256x4xf32>, vector<4x64xf32>, vector<256x64xf32> -> vector<256x64xf32>
    %98 = arith.addf %88, %97 : vector<256x64xf32>
    %c8_104 = arith.constant 8 : index
    %c0_105 = arith.constant 0 : index
    %c0_106 = arith.constant 0 : index
    %99 = vector.load %arg6[%c8_104, %c0_105, %c0_106] : memref<9x4x4xf32, #tpu.memory_space<vmem>>, vector<1x4x4xf32>
    %100 = vector.shape_cast %99 : vector<1x4x4xf32> to vector<4x4xf32>
    %cst_107 = arith.constant dense<0.000000e+00> : vector<256x4xf32>
    %101 = tpu.matmul %94, %100, %cst_107 {dimension_numbers = #tpu.dot_dimension_numbers<[1], [0], [0], [1], [0, 0, 1, 1], [], []>} : vector<256x4xf32>, vector<4x4xf32>, vector<256x4xf32> -> vector<256x4xf32>
    %102 = arith.addf %92, %101 : vector<256x4xf32>
    %cst_108 = arith.constant 0.000000e+00 : f32
    %103 = vector.broadcast %cst_108 : f32 to vector<256x64xf32>
    %104 = arith.cmpf oge, %98, %103 : vector<256x64xf32>
    %cst_109 = arith.constant 2.000000e-01 : f32
    %105 = vector.broadcast %cst_109 : f32 to vector<256x64xf32>
    %106 = arith.mulf %105, %98 : vector<256x64xf32>
    %107 = arith.select %104, %98, %106 : vector<256x64xi1>, vector<256x64xf32>
    %108 = vector.shape_cast %107 : vector<256x64xf32> to vector<16x16x64xf32>
    %c1_110 = arith.constant 1 : index
    %c1_111 = arith.constant 1 : index
    %c0_112 = arith.constant 0 : index
    %109 = vector.load %arg11[%c1_110, %c1_111, %c0_112] : memref<18x18x64xf32, #tpu.memory_space<vmem>>, vector<16x16x64xf32>
    tpu.vector_store %arg11[%c1_110, %c1_111, %c0_112], %108 {strides = array<i32>} : memref<18x18x64xf32, #tpu.memory_space<vmem>>, vector<16x16x64xf32>,
    %c0_113 = arith.constant 0 : index
    %c0_114 = arith.constant 0 : index
    %c0_115 = arith.constant 0 : index
    %110 = vector.load %arg11[%c0_113, %c0_114, %c0_115] : memref<18x18x64xf32, #tpu.memory_space<vmem>>, vector<16x16x64xf32>
    %111 = vector.shape_cast %110 : vector<16x16x64xf32> to vector<256x64xf32>
    %c0_116 = arith.constant 0 : index
    %c1_117 = arith.constant 1 : index
    %c0_118 = arith.constant 0 : index
    %112 = vector.load %arg11[%c0_116, %c1_117, %c0_118] : memref<18x18x64xf32, #tpu.memory_space<vmem>>, vector<16x16x64xf32>
    %113 = vector.shape_cast %112 : vector<16x16x64xf32> to vector<256x64xf32>
    %c0_119 = arith.constant 0 : index
    %c2_120 = arith.constant 2 : index
    %c0_121 = arith.constant 0 : index
    %114 = vector.load %arg11[%c0_119, %c2_120, %c0_121] : memref<18x18x64xf32, #tpu.memory_space<vmem>>, vector<16x16x64xf32>
    %115 = vector.shape_cast %114 : vector<16x16x64xf32> to vector<256x64xf32>
    %c1_122 = arith.constant 1 : index
    %c0_123 = arith.constant 0 : index
    %c0_124 = arith.constant 0 : index
    %116 = vector.load %arg11[%c1_122, %c0_123, %c0_124] : memref<18x18x64xf32, #tpu.memory_space<vmem>>, vector<16x16x64xf32>
    %117 = vector.shape_cast %116 : vector<16x16x64xf32> to vector<256x64xf32>
    %c1_125 = arith.constant 1 : index
    %c1_126 = arith.constant 1 : index
    %c0_127 = arith.constant 0 : index
    %118 = vector.load %arg11[%c1_125, %c1_126, %c0_127] : memref<18x18x64xf32, #tpu.memory_space<vmem>>, vector<16x16x64xf32>
    %119 = vector.shape_cast %118 : vector<16x16x64xf32> to vector<256x64xf32>
    %c1_128 = arith.constant 1 : index
    %c2_129 = arith.constant 2 : index
    %c0_130 = arith.constant 0 : index
    %120 = vector.load %arg11[%c1_128, %c2_129, %c0_130] : memref<18x18x64xf32, #tpu.memory_space<vmem>>, vector<16x16x64xf32>
    %121 = vector.shape_cast %120 : vector<16x16x64xf32> to vector<256x64xf32>
    %c2_131 = arith.constant 2 : index
    %c0_132 = arith.constant 0 : index
    %c0_133 = arith.constant 0 : index
    %122 = vector.load %arg11[%c2_131, %c0_132, %c0_133] : memref<18x18x64xf32, #tpu.memory_space<vmem>>, vector<16x16x64xf32>
    %123 = vector.shape_cast %122 : vector<16x16x64xf32> to vector<256x64xf32>
    %c2_134 = arith.constant 2 : index
    %c1_135 = arith.constant 1 : index
    %c0_136 = arith.constant 0 : index
    %124 = vector.load %arg11[%c2_134, %c1_135, %c0_136] : memref<18x18x64xf32, #tpu.memory_space<vmem>>, vector<16x16x64xf32>
    %125 = vector.shape_cast %124 : vector<16x16x64xf32> to vector<256x64xf32>
    %c2_137 = arith.constant 2 : index
    %c2_138 = arith.constant 2 : index
    %c0_139 = arith.constant 0 : index
    %126 = vector.load %arg11[%c2_137, %c2_138, %c0_139] : memref<18x18x64xf32, #tpu.memory_space<vmem>>, vector<16x16x64xf32>
    %127 = vector.shape_cast %126 : vector<16x16x64xf32> to vector<256x64xf32>
    %128 = tpu.concatenate %111, %113, %115, %117, %119, %121, %123, %125, %127 in 1 : vector<256x64xf32>, vector<256x64xf32>, vector<256x64xf32>, vector<256x64xf32>, vector<256x64xf32>, vector<256x64xf32>, vector<256x64xf32>, vector<256x64xf32>, vector<256x64xf32> -> vector<256x576xf32>
    %c0_140 = arith.constant 0 : index
    %c0_141 = arith.constant 0 : index
    %129 = vector.load %arg4[%c0_140, %c0_141] : memref<576x64xf32, #tpu.memory_space<vmem>>, vector<576x64xf32>
    %cst_142 = arith.constant dense<0.000000e+00> : vector<256x64xf32>
    %130 = tpu.matmul %128, %129, %cst_142 {dimension_numbers = #tpu.dot_dimension_numbers<[1], [0], [0], [1], [0, 0, 1, 1], [], []>} : vector<256x576xf32>, vector<576x64xf32>, vector<256x64xf32> -> vector<256x64xf32>
    %c0_143 = arith.constant 0 : index
    %c0_144 = arith.constant 0 : index
    %131 = vector.load %arg5[%c0_143, %c0_144] : memref<1x64xf32, #tpu.memory_space<vmem>>, vector<1x64xf32>
    %132 = vector.broadcast %131 : vector<1x64xf32> to vector<256x64xf32>
    %133 = arith.addf %130, %132 : vector<256x64xf32>
    %cst_145 = arith.constant 0.000000e+00 : f32
    %134 = vector.broadcast %cst_145 : f32 to vector<256x64xf32>
    %135 = arith.cmpf oge, %133, %134 : vector<256x64xf32>
    %cst_146 = arith.constant 2.000000e-01 : f32
    %136 = vector.broadcast %cst_146 : f32 to vector<256x64xf32>
    %137 = arith.mulf %136, %133 : vector<256x64xf32>
    %138 = arith.select %135, %133, %137 : vector<256x64xi1>, vector<256x64xf32>
    %139 = vector.shape_cast %138 : vector<256x64xf32> to vector<16x16x64xf32>
    %c1_147 = arith.constant 1 : index
    %c1_148 = arith.constant 1 : index
    %c0_149 = arith.constant 0 : index
    %140 = vector.load %arg11[%c1_147, %c1_148, %c0_149] : memref<18x18x64xf32, #tpu.memory_space<vmem>>, vector<16x16x64xf32>
    tpu.vector_store %arg11[%c1_147, %c1_148, %c0_149], %139 {strides = array<i32>} : memref<18x18x64xf32, #tpu.memory_space<vmem>>, vector<16x16x64xf32>,
    %c0_150 = arith.constant 0 : index
    %c0_151 = arith.constant 0 : index
    %c0_152 = arith.constant 0 : index
    %141 = vector.load %arg11[%c0_150, %c0_151, %c0_152] : memref<18x18x64xf32, #tpu.memory_space<vmem>>, vector<16x16x64xf32>
    %142 = vector.shape_cast %141 : vector<16x16x64xf32> to vector<256x64xf32>
    %c0_153 = arith.constant 0 : index
    %c1_154 = arith.constant 1 : index
    %c0_155 = arith.constant 0 : index
    %143 = vector.load %arg11[%c0_153, %c1_154, %c0_155] : memref<18x18x64xf32, #tpu.memory_space<vmem>>, vector<16x16x64xf32>
    %144 = vector.shape_cast %143 : vector<16x16x64xf32> to vector<256x64xf32>
    %c0_156 = arith.constant 0 : index
    %c2_157 = arith.constant 2 : index
    %c0_158 = arith.constant 0 : index
    %145 = vector.load %arg11[%c0_156, %c2_157, %c0_158] : memref<18x18x64xf32, #tpu.memory_space<vmem>>, vector<16x16x64xf32>
    %146 = vector.shape_cast %145 : vector<16x16x64xf32> to vector<256x64xf32>
    %c1_159 = arith.constant 1 : index
    %c0_160 = arith.constant 0 : index
    %c0_161 = arith.constant 0 : index
    %147 = vector.load %arg11[%c1_159, %c0_160, %c0_161] : memref<18x18x64xf32, #tpu.memory_space<vmem>>, vector<16x16x64xf32>
    %148 = vector.shape_cast %147 : vector<16x16x64xf32> to vector<256x64xf32>
    %c1_162 = arith.constant 1 : index
    %c1_163 = arith.constant 1 : index
    %c0_164 = arith.constant 0 : index
    %149 = vector.load %arg11[%c1_162, %c1_163, %c0_164] : memref<18x18x64xf32, #tpu.memory_space<vmem>>, vector<16x16x64xf32>
    %150 = vector.shape_cast %149 : vector<16x16x64xf32> to vector<256x64xf32>
    %c1_165 = arith.constant 1 : index
    %c2_166 = arith.constant 2 : index
    %c0_167 = arith.constant 0 : index
    %151 = vector.load %arg11[%c1_165, %c2_166, %c0_167] : memref<18x18x64xf32, #tpu.memory_space<vmem>>, vector<16x16x64xf32>
    %152 = vector.shape_cast %151 : vector<16x16x64xf32> to vector<256x64xf32>
    %c2_168 = arith.constant 2 : index
    %c0_169 = arith.constant 0 : index
    %c0_170 = arith.constant 0 : index
    %153 = vector.load %arg11[%c2_168, %c0_169, %c0_170] : memref<18x18x64xf32, #tpu.memory_space<vmem>>, vector<16x16x64xf32>
    %154 = vector.shape_cast %153 : vector<16x16x64xf32> to vector<256x64xf32>
    %c2_171 = arith.constant 2 : index
    %c1_172 = arith.constant 1 : index
    %c0_173 = arith.constant 0 : index
    %155 = vector.load %arg11[%c2_171, %c1_172, %c0_173] : memref<18x18x64xf32, #tpu.memory_space<vmem>>, vector<16x16x64xf32>
    %156 = vector.shape_cast %155 : vector<16x16x64xf32> to vector<256x64xf32>
    %c2_174 = arith.constant 2 : index
    %c2_175 = arith.constant 2 : index
    %c0_176 = arith.constant 0 : index
    %157 = vector.load %arg11[%c2_174, %c2_175, %c0_176] : memref<18x18x64xf32, #tpu.memory_space<vmem>>, vector<16x16x64xf32>
    %158 = vector.shape_cast %157 : vector<16x16x64xf32> to vector<256x64xf32>
    %159 = tpu.concatenate %142, %144, %146, %148, %150, %152, %154, %156, %158 in 1 : vector<256x64xf32>, vector<256x64xf32>, vector<256x64xf32>, vector<256x64xf32>, vector<256x64xf32>, vector<256x64xf32>, vector<256x64xf32>, vector<256x64xf32>, vector<256x64xf32> -> vector<256x576xf32>
    %c0_177 = arith.constant 0 : index
    %c0_178 = arith.constant 0 : index
    %160 = vector.load %arg7[%c0_177, %c0_178] : memref<576x4xf32, #tpu.memory_space<vmem>>, vector<576x4xf32>
    %cst_179 = arith.constant dense<0.000000e+00> : vector<256x4xf32>
    %161 = tpu.matmul %159, %160, %cst_179 {dimension_numbers = #tpu.dot_dimension_numbers<[1], [0], [0], [1], [0, 0, 1, 1], [], []>} : vector<256x576xf32>, vector<576x4xf32>, vector<256x4xf32> -> vector<256x4xf32>
    %162 = arith.addf %102, %161 : vector<256x4xf32>
    %163 = vector.shape_cast %162 : vector<256x4xf32> to vector<1x256x4xf32>
    %c0_180 = arith.constant 0 : index
    %c0_181 = arith.constant 0 : index
    %c0_182 = arith.constant 0 : index
    %164 = vector.load %arg9[%c0_180, %c0_181, %c0_182] : memref<1x256x4xf32, #tpu.memory_space<vmem>>, vector<1x256x4xf32>
    tpu.vector_store %arg9[%c0_180, %c0_181, %c0_182], %163 {strides = array<i32>} : memref<1x256x4xf32, #tpu.memory_space<vmem>>, vector<1x256x4xf32>,
    return
  }
  func.func @transform_0(%arg0: i32) -> (i32, i32, i32, i32) {
    %c0_i32 = arith.constant 0 : i32
    %c0_i32_0 = arith.constant 0 : i32
    %c0_i32_1 = arith.constant 0 : i32
    %c0_i32_2 = arith.constant 0 : i32
    return %arg0, %c0_i32, %c0_i32_0, %c0_i32_1 : i32, i32, i32, i32
  }
  func.func @transform_1(%arg0: i32) -> (i32, i32, i32) {
    %c0_i32 = arith.constant 0 : i32
    %c0_i32_0 = arith.constant 0 : i32
    %c0_i32_1 = arith.constant 0 : i32
    %c0_i32_2 = arith.constant 0 : i32
    return %c0_i32, %c0_i32_0, %c0_i32_1 : i32, i32, i32
  }
  func.func @transform_2(%arg0: i32) -> (i32, i32) {
    %c0_i32 = arith.constant 0 : i32
    %c0_i32_0 = arith.constant 0 : i32
    %c0_i32_1 = arith.constant 0 : i32
    return %c0_i32, %c0_i32_0 : i32, i32
  }
  func.func @transform_3(%arg0: i32) -> (i32, i32) {
    %c0_i32 = arith.constant 0 : i32
    %c0_i32_0 = arith.constant 0 : i32
    %c0_i32_1 = arith.constant 0 : i32
    return %c0_i32, %c0_i32_0 : i32, i32
  }
  func.func @transform_4(%arg0: i32) -> (i32, i32) {
    %c0_i32 = arith.constant 0 : i32
    %c0_i32_0 = arith.constant 0 : i32
    %c0_i32_1 = arith.constant 0 : i32
    return %c0_i32, %c0_i32_0 : i32, i32
  }
  func.func @transform_5(%arg0: i32) -> (i32, i32, i32) {
    %c0_i32 = arith.constant 0 : i32
    %c0_i32_0 = arith.constant 0 : i32
    %c0_i32_1 = arith.constant 0 : i32
    %c0_i32_2 = arith.constant 0 : i32
    return %c0_i32, %c0_i32_0, %c0_i32_1 : i32, i32, i32
  }
  func.func @transform_6(%arg0: i32) -> (i32, i32) {
    %c0_i32 = arith.constant 0 : i32
    %c0_i32_0 = arith.constant 0 : i32
    %c0_i32_1 = arith.constant 0 : i32
    return %c0_i32, %c0_i32_0 : i32, i32
  }
  func.func @transform_7(%arg0: i32) -> (i32, i32) {
    %c0_i32 = arith.constant 0 : i32
    %c0_i32_0 = arith.constant 0 : i32
    %c0_i32_1 = arith.constant 0 : i32
    return %c0_i32, %c0_i32_0 : i32, i32
  }
  func.func @transform_8(%arg0: i32) -> (i32, i32, i32) {
    %c0_i32 = arith.constant 0 : i32
    %c0_i32_0 = arith.constant 0 : i32
    %c0_i32_1 = arith.constant 0 : i32
    return %arg0, %c0_i32, %c0_i32_0 : i32, i32, i32
  }
}

</mosaic_0001>

<llo_original>
// kernel: resblock_forward.1
$region0: #{resblock_forward.1}
  #allocation0 [shape = 'u32[]', space=smem, size = 0x4, offset = 0x4, fixed_abs, tag = 'smem constant byte address 0x4 - core index']
  #allocation1 [shape = 'u32[144,128]{1,0:T(1,128)}', space=vmem, size = 0x12000, scoped, tag = 'internal scratch']
  #allocation2 [shape = 'f32[18,18,4]{2,1,0:T(8,128)}', space=vmem, size = 0x36000, scoped, tag = 'scratch operand']
  #allocation3 [shape = 'f32[18,18,64]{2,1,0:T(8,128)}', space=vmem, size = 0x36000, scoped, tag = 'scratch operand']
  %s0 = inlined_call_operand.vmem [shape: f32[2,16,16,4], index: 0, kind: input, shape index: {}]
  %s1 = inlined_call_operand.vmem [shape: f32[9,4,64], index: 1, kind: input, shape index: {}]
  %s2 = inlined_call_operand.vmem [shape: f32[1,64], index: 2, kind: input, shape index: {}]
  %s3 = inlined_call_operand.vmem [shape: f32[576,64], index: 3, kind: input, shape index: {}]
  %s4 = inlined_call_operand.vmem [shape: f32[1,64], index: 4, kind: input, shape index: {}]
  %s5 = inlined_call_operand.vmem [shape: f32[9,4,4], index: 5, kind: input, shape index: {}]
  %s6 = inlined_call_operand.vmem [shape: f32[576,4], index: 6, kind: input, shape index: {}]
  %s7 = inlined_call_operand.vmem [shape: f32[1,4], index: 7, kind: input, shape index: {}]
  %s8 = inlined_call_operand.vmem [shape: f32[2,256,4], index: 8, kind: output, shape index: {}]
  %s9 = sld [smem:[#allocation0]]
  $region65: #{resblock_forward.1} parent=0
    _
  %s11 = ssub.s32 1, %s9
  %s12 = scalar_select 0, %s11, %s9
  loop: start=0, step=1, limit=4
  $region2: #{resblock_forward.1} parent=0 // loop_pre_header
    _
  $region3: #{resblock_forward.1} parent=0 // loop_header
    %s14 = sphi 0, %s18
    %p15 = scmp.ge.s32.totalorder %s14, 4
    %s24 = sphi 0, %s26
    %s27 = sphi 0, %s24
    %s28 = sphi 0, %s27
    %s44 = sphi 0, %s28
    %s48 = sphi 0, %s48
    %s50 = sphi 0, %s48
    %s51 = sphi 0, %s50
    %s65 = sphi 0, %s51
    %s69 = sphi 0, %s69
    %s71 = sphi 0, %s69
    %s72 = sphi 0, %s71
    %s86 = sphi 0, %s72
    %s90 = sphi 0, %s90
    %s92 = sphi 0, %s90
    %s93 = sphi 0, %s92
    %s107 = sphi 0, %s93
    %s111 = sphi 0, %s111
    %s113 = sphi 0, %s111
    %s114 = sphi 0, %s113
    %s128 = sphi 0, %s114
    %s132 = sphi 0, %s132
    %s134 = sphi 0, %s132
    %s135 = sphi 0, %s134
    %s149 = sphi 0, %s135
    %s153 = sphi 0, %s153
    %s155 = sphi 0, %s153
    %s156 = sphi 0, %s155
    %s170 = sphi 0, %s156
    %s174 = sphi 0, %s174
    %s176 = sphi 0, %s174
    %s177 = sphi 0, %s176
    %s191 = sphi 0, %s177
    %s197 = sphi 0, %s199
    %s200 = sphi 0, %s197
    %s201 = sphi 0, %s200
    %s217 = sphi 0, %s201
  $region4: #{resblock_forward.1} parent=0 // loop_header_branch
    %17 = sbr.rel (%p15) target = $region8
  $region5: #{resblock_forward.1} parent=0 // loop_body
    %s19 = ssub.s32 %s14, 1
    %s20 = ssub.s32 %s14, 2
    %s21 = sadd.s32 %s14, 1
    %s22 = ssub.s32 %s14, %s21
    %p23 = scmp.eq.s32.totalorder %s22, 0
    %s25 = sadd.s32 %s24, 1
    %s26 = scalar_select %p23, %s24, %s25
    %p29 = pneg %p23
    %p30 = scmp.eq.s32.totalorder %s14, 1
    %p31 = por %p29, %p30
    %p32 = scmp.ne.s32.totalorder %s24, %s27
    %p33 = scmp.eq.s32.totalorder %s14, 0
    %p34 = por %p32, %p33
    %p35 = scmp.ne.s32.totalorder %s24, %s27
    %p36 = scmp.eq.s32.totalorder %s19, 1
    %p37 = por %p35, %p36
    %p38 = scmp.ne.s32.totalorder %s27, %s28
    %p39 = scmp.eq.s32.totalorder %s19, 0
    %p40 = por %p38, %p39
    %p41 = scmp.ne.s32.totalorder %s27, %s28
    %p42 = scmp.eq.s32.totalorder %s20, 1
    %p43 = por %p41, %p42
    %p45 = scmp.ne.s32.totalorder %s28, %s44
    %p46 = scmp.eq.s32.totalorder %s20, 0
    %p47 = por %p45, %p46
    %s49 = sadd.s32 %s48, 1
    %p52 = scmp.eq.s32.totalorder %s14, 1
    %p53 = scmp.ne.s32.totalorder %s48, %s50
    %p54 = scmp.eq.s32.totalorder %s14, 0
    %p55 = por %p53, %p54
    %p56 = scmp.ne.s32.totalorder %s48, %s50
    %p57 = scmp.eq.s32.totalorder %s19, 1
    %p58 = por %p56, %p57
    %p59 = scmp.ne.s32.totalorder %s50, %s51
    %p60 = scmp.eq.s32.totalorder %s19, 0
    %p61 = por %p59, %p60
    %p62 = scmp.ne.s32.totalorder %s50, %s51
    %p63 = scmp.eq.s32.totalorder %s20, 1
    %p64 = por %p62, %p63
    %p66 = scmp.ne.s32.totalorder %s51, %s65
    %p67 = scmp.eq.s32.totalorder %s20, 0
    %p68 = por %p66, %p67
    %s70 = sadd.s32 %s69, 1
    %p73 = scmp.eq.s32.totalorder %s14, 1
    %p74 = scmp.ne.s32.totalorder %s69, %s71
    %p75 = scmp.eq.s32.totalorder %s14, 0
    %p76 = por %p74, %p75
    %p77 = scmp.ne.s32.totalorder %s69, %s71
    %p78 = scmp.eq.s32.totalorder %s19, 1
    %p79 = por %p77, %p78
    %p80 = scmp.ne.s32.totalorder %s71, %s72
    %p81 = scmp.eq.s32.totalorder %s19, 0
    %p82 = por %p80, %p81
    %p83 = scmp.ne.s32.totalorder %s71, %s72
    %p84 = scmp.eq.s32.totalorder %s20, 1
    %p85 = por %p83, %p84
    %p87 = scmp.ne.s32.totalorder %s72, %s86
    %p88 = scmp.eq.s32.totalorder %s20, 0
    %p89 = por %p87, %p88
    %s91 = sadd.s32 %s90, 1
    %p94 = scmp.eq.s32.totalorder %s14, 1
    %p95 = scmp.ne.s32.totalorder %s90, %s92
    %p96 = scmp.eq.s32.totalorder %s14, 0
    %p97 = por %p95, %p96
    %p98 = scmp.ne.s32.totalorder %s90, %s92
    %p99 = scmp.eq.s32.totalorder %s19, 1
    %p100 = por %p98, %p99
    %p101 = scmp.ne.s32.totalorder %s92, %s93
    %p102 = scmp.eq.s32.totalorder %s19, 0
    %p103 = por %p101, %p102
    %p104 = scmp.ne.s32.totalorder %s92, %s93
    %p105 = scmp.eq.s32.totalorder %s20, 1
    %p106 = por %p104, %p105
    %p108 = scmp.ne.s32.totalorder %s93, %s107
    %p109 = scmp.eq.s32.totalorder %s20, 0
    %p110 = por %p108, %p109
    %s112 = sadd.s32 %s111, 1
    %p115 = scmp.eq.s32.totalorder %s14, 1
    %p116 = scmp.ne.s32.totalorder %s111, %s113
    %p117 = scmp.eq.s32.totalorder %s14, 0
    %p118 = por %p116, %p117
    %p119 = scmp.ne.s32.totalorder %s111, %s113
    %p120 = scmp.eq.s32.totalorder %s19, 1
    %p121 = por %p119, %p120
    %p122 = scmp.ne.s32.totalorder %s113, %s114
    %p123 = scmp.eq.s32.totalorder %s19, 0
    %p124 = por %p122, %p123
    %p125 = scmp.ne.s32.totalorder %s113, %s114
    %p126 = scmp.eq.s32.totalorder %s20, 1
    %p127 = por %p125, %p126
    %p129 = scmp.ne.s32.totalorder %s114, %s128
    %p130 = scmp.eq.s32.totalorder %s20, 0
    %p131 = por %p129, %p130
    %s133 = sadd.s32 %s132, 1
    %p136 = scmp.eq.s32.totalorder %s14, 1
    %p137 = scmp.ne.s32.totalorder %s132, %s134
    %p138 = scmp.eq.s32.totalorder %s14, 0
    %p139 = por %p137, %p138
    %p140 = scmp.ne.s32.totalorder %s132, %s134
    %p141 = scmp.eq.s32.totalorder %s19, 1
    %p142 = por %p140, %p141
    %p143 = scmp.ne.s32.totalorder %s134, %s135
    %p144 = scmp.eq.s32.totalorder %s19, 0
    %p145 = por %p143, %p144
    %p146 = scmp.ne.s32.totalorder %s134, %s135
    %p147 = scmp.eq.s32.totalorder %s20, 1
    %p148 = por %p146, %p147
    %p150 = scmp.ne.s32.totalorder %s135, %s149
    %p151 = scmp.eq.s32.totalorder %s20, 0
    %p152 = por %p150, %p151
    %s154 = sadd.s32 %s153, 1
    %p157 = scmp.eq.s32.totalorder %s14, 1
    %p158 = scmp.ne.s32.totalorder %s153, %s155
    %p159 = scmp.eq.s32.totalorder %s14, 0
    %p160 = por %p158, %p159
    %p161 = scmp.ne.s32.totalorder %s153, %s155
    %p162 = scmp.eq.s32.totalorder %s19, 1
    %p163 = por %p161, %p162
    %p164 = scmp.ne.s32.totalorder %s155, %s156
    %p165 = scmp.eq.s32.totalorder %s19, 0
    %p166 = por %p164, %p165
    %p167 = scmp.ne.s32.totalorder %s155, %s156
    %p168 = scmp.eq.s32.totalorder %s20, 1
    %p169 = por %p167, %p168
    %p171 = scmp.ne.s32.totalorder %s156, %s170
    %p172 = scmp.eq.s32.totalorder %s20, 0
    %p173 = por %p171, %p172
    %s175 = sadd.s32 %s174, 1
    %p178 = scmp.eq.s32.totalorder %s14, 1
    %p179 = scmp.ne.s32.totalorder %s174, %s176
    %p180 = scmp.eq.s32.totalorder %s14, 0
    %p181 = por %p179, %p180
    %p182 = scmp.ne.s32.totalorder %s174, %s176
    %p183 = scmp.eq.s32.totalorder %s19, 1
    %p184 = por %p182, %p183
    %p185 = scmp.ne.s32.totalorder %s176, %s177
    %p186 = scmp.eq.s32.totalorder %s19, 0
    %p187 = por %p185, %p186
    %p188 = scmp.ne.s32.totalorder %s176, %s177
    %p189 = scmp.eq.s32.totalorder %s20, 1
    %p190 = por %p188, %p189
    %p192 = scmp.ne.s32.totalorder %s177, %s191
    %p193 = scmp.eq.s32.totalorder %s20, 0
    %p194 = por %p192, %p193
    %s195 = ssub.s32 %s14, %s21
    %p196 = scmp.eq.s32.totalorder %s195, 0
    %s198 = sadd.s32 %s197, 1
    %s199 = scalar_select %p196, %s197, %s198
    %p202 = pneg %p196
    %p203 = scmp.eq.s32.totalorder %s14, 1
    %p204 = por %p202, %p203
    %p205 = scmp.ne.s32.totalorder %s197, %s200
    %p206 = scmp.eq.s32.totalorder %s14, 0
    %p207 = por %p205, %p206
    %p208 = scmp.ne.s32.totalorder %s197, %s200
    %p209 = scmp.eq.s32.totalorder %s19, 1
    %p210 = por %p208, %p209
    %p211 = scmp.ne.s32.totalorder %s200, %s201
    %p212 = scmp.eq.s32.totalorder %s19, 0
    %p213 = por %p211, %p212
    %p214 = scmp.ne.s32.totalorder %s200, %s201
    %p215 = scmp.eq.s32.totalorder %s20, 1
    %p216 = por %p214, %p215
    %p218 = scmp.ne.s32.totalorder %s201, %s217
    %p219 = scmp.eq.s32.totalorder %s20, 0
    %p220 = por %p218, %p219
    %p221 = scmp.le.s32.totalorder 1, %s14
    %p222 = scmp.lt.s32.totalorder %s14, 3
    %p223 = pnand %p221, %p222
    %p224 = pneg %p223
    // Predicated region
    $region9: #{resblock_forward.1} parent=5 // pred_check
      _
    $region10: #{resblock_forward.1} parent=5 // pred_check_branch
      %226 = sbr.rel (%p223) target = $region12
    $region11: #{resblock_forward.1} parent=5 // pred_region
      %s227 = ssub.s32 %s14, 1
      // Predicated region
      $region13: #{resblock_forward.1} parent=11 // pred_check
        %p228 = pneg %p61
      $region14: #{resblock_forward.1} parent=11 // pred_check_branch
        %230 = sbr.rel (%p228) target = $region16
      $region15: #{resblock_forward.1} parent=11 // pred_region
        _
      $region16: #{resblock_forward.1} parent=11 // pred_fallthru
        _
      // Predicated region
      $region17: #{resblock_forward.1} parent=11 // pred_check
        %p231 = pneg %p82
      $region18: #{resblock_forward.1} parent=11 // pred_check_branch
        %233 = sbr.rel (%p231) target = $region20
      $region19: #{resblock_forward.1} parent=11 // pred_region
        _
      $region20: #{resblock_forward.1} parent=11 // pred_fallthru
        _
      // Predicated region
      $region21: #{resblock_forward.1} parent=11 // pred_check
        %p234 = pneg %p103
      $region22: #{resblock_forward.1} parent=11 // pred_check_branch
        %236 = sbr.rel (%p234) target = $region24
      $region23: #{resblock_forward.1} parent=11 // pred_region
        _
      $region24: #{resblock_forward.1} parent=11 // pred_fallthru
        _
      // Predicated region
      $region25: #{resblock_forward.1} parent=11 // pred_check
        %p237 = pneg %p124
      $region26: #{resblock_forward.1} parent=11 // pred_check_branch
        %239 = sbr.rel (%p237) target = $region28
      $region27: #{resblock_forward.1} parent=11 // pred_region
        _
      $region28: #{resblock_forward.1} parent=11 // pred_fallthru
        _
      // Predicated region
      $region29: #{resblock_forward.1} parent=11 // pred_check
        %p240 = pneg %p145
      $region30: #{resblock_forward.1} parent=11 // pred_check_branch
        %242 = sbr.rel (%p240) target = $region32
      $region31: #{resblock_forward.1} parent=11 // pred_region
        _
      $region32: #{resblock_forward.1} parent=11 // pred_fallthru
        _
      // Predicated region
      $region33: #{resblock_forward.1} parent=11 // pred_check
        %p243 = pneg %p166
      $region34: #{resblock_forward.1} parent=11 // pred_check_branch
        %245 = sbr.rel (%p243) target = $region36
      $region35: #{resblock_forward.1} parent=11 // pred_region
        _
      $region36: #{resblock_forward.1} parent=11 // pred_fallthru
        _
      // Predicated region
      $region37: #{resblock_forward.1} parent=11 // pred_check
        %p246 = pneg %p187
      $region38: #{resblock_forward.1} parent=11 // pred_check_branch
        %248 = sbr.rel (%p246) target = $region40
      $region39: #{resblock_forward.1} parent=11 // pred_region
        _
      $region40: #{resblock_forward.1} parent=11 // pred_fallthru
        _
    $region12: #{resblock_forward.1} parent=5 // pred_fallthru
      _
    %p249 = scmp.lt.s32.totalorder %s14, 2
    // Predicated region
    $region41: #{resblock_forward.1} parent=5 // pred_check
      %p250 = pneg %p249
    $region42: #{resblock_forward.1} parent=5 // pred_check_branch
      %252 = sbr.rel (%p250) target = $region44
    $region43: #{resblock_forward.1} parent=5 // pred_region
      // Predicated region
      $region45: #{resblock_forward.1} parent=43 // pred_check
        %p253 = pneg %p34
      $region46: #{resblock_forward.1} parent=43 // pred_check_branch
        %255 = sbr.rel (%p253) target = $region48
      $region47: #{resblock_forward.1} parent=43 // pred_region
        %p256 = scmp.lt.s32.totalorder %s14, 1
        %s257 = scalar_select %p256, %s14, 1
        %s258 = smul.addr %s257, 32
        %s259 = smul.addr %s258, 8
        %s260 = scalar_lea.vmem %s0, %s259
      $region48: #{resblock_forward.1} parent=43 // pred_fallthru
        _
    $region44: #{resblock_forward.1} parent=5 // pred_fallthru
      _
    %p261 = scmp.le.s32.totalorder 1, %s14
    %p262 = scmp.lt.s32.totalorder %s14, 3
    %p263 = pnand %p261, %p262
    %p264 = pneg %p263
    // Predicated region
    $region49: #{resblock_forward.1} parent=5 // pred_check
      _
    $region50: #{resblock_forward.1} parent=5 // pred_check_branch
      %266 = sbr.rel (%p263) target = $region52
    $region51: #{resblock_forward.1} parent=5 // pred_region
      %s267 = ssub.s32 %s14, 1
      %p268 = scmp.lt.s32.totalorder %s19, 1
      %s269 = scalar_select %p268, %s19, 1
      %s270 = smul.addr %s269, 32
      %s271 = smul.addr %s270, 8
      %s272 = scalar_lea.vmem %s0, %s271
      %p273 = pneg %p40
      %p274 = pneg %p37
      %p275 = pneg %p61
      %p276 = pneg %p58
      %p277 = pneg %p82
      %p278 = pneg %p79
      %p279 = pneg %p103
      %p280 = pneg %p100
      %p281 = pneg %p124
      %p282 = pneg %p121
      %p283 = pneg %p145
      %p284 = pneg %p142
      %p285 = pneg %p166
      %p286 = pneg %p163
      %p287 = pneg %p187
      %p288 = pneg %p184
      %p289 = pneg %p213
      %p290 = pneg %p210
      %p291 = scmp.lt.s32.totalorder %s19, 1
      %s292 = scalar_select %p291, %s19, 1
      %s293 = smul.addr %s292, 32
      %s294 = smul.addr %s293, 8
      %s295 = scalar_lea.vmem %s8, %s294
      %p296 = scmp.lt.s32.totalorder %s19, 1
      %s297 = scalar_select %p296, %s19, 1
      %s298 = smul.addr %s297, 32
      %s299 = smul.addr %s298, 8
      %s300 = scalar_lea.vmem %s0, %s299
      %p301 = scmp.lt.s32.totalorder %s19, 1
      %s302 = scalar_select %p301, %s19, 1
      %s303 = smul.addr %s302, 32
      %s304 = smul.addr %s303, 8
      %s305 = scalar_lea.vmem %s8, %s304
      %vm306 = vcmask 31744
      %307 = vst.msk [vmem:[#allocation2] sm:$0xff] %vm306, 0.0
      %308 = vst.msk [vmem:[#allocation2 + $0x8] sm:$0xff] %vm306, 0.0
      %vm309 = vcmask 25600
      %310 = vst.msk [vmem:[#allocation2 + $0x10] sm:$0x3] %vm309, 0.0
      %311 = vst.msk [vmem:[#allocation2 + $0x18] sm:$0xff] %vm306, 0.0
      %312 = vst.msk [vmem:[#allocation2 + $0x20] sm:$0xff] %vm306, 0.0
      %313 = vst.msk [vmem:[#allocation2 + $0x28] sm:$0x3] %vm309, 0.0
      %314 = vst.msk [vmem:[#allocation2 + $0x30] sm:$0xff] %vm306, 0.0
      %315 = vst.msk [vmem:[#allocation2 + $0x38] sm:$0xff] %vm306, 0.0
      %316 = vst.msk [vmem:[#allocation2 + $0x40] sm:$0x3] %vm309, 0.0
      %317 = vst.msk [vmem:[#allocation2 + $0x48] sm:$0xff] %vm306, 0.0
      %318 = vst.msk [vmem:[#allocation2 + $0x50] sm:$0xff] %vm306, 0.0
      %319 = vst.msk [vmem:[#allocation2 + $0x58] sm:$0x3] %vm309, 0.0
      %320 = vst.msk [vmem:[#allocation2 + $0x60] sm:$0xff] %vm306, 0.0
      %321 = vst.msk [vmem:[#allocation2 + $0x68] sm:$0xff] %vm306, 0.0
      %322 = vst.msk [vmem:[#allocation2 + $0x70] sm:$0x3] %vm309, 0.0
      %323 = vst.msk [vmem:[#allocation2 + $0x78] sm:$0xff] %vm306, 0.0
      %324 = vst.msk [vmem:[#allocation2 + $0x80] sm:$0xff] %vm306, 0.0
      %325 = vst.msk [vmem:[#allocation2 + $0x88] sm:$0x3] %vm309, 0.0
      %326 = vst.msk [vmem:[#allocation2 + $0x90] sm:$0xff] %vm306, 0.0
      %327 = vst.msk [vmem:[#allocation2 + $0x98] sm:$0xff] %vm306, 0.0
      %328 = vst.msk [vmem:[#allocation2 + $0xa0] sm:$0x3] %vm309, 0.0
      %329 = vst.msk [vmem:[#allocation2 + $0xa8] sm:$0xff] %vm306, 0.0
      %330 = vst.msk [vmem:[#allocation2 + $0xb0] sm:$0xff] %vm306, 0.0
      %331 = vst.msk [vmem:[#allocation2 + $0xb8] sm:$0x3] %vm309, 0.0
      %332 = vst.msk [vmem:[#allocation2 + $0xc0] sm:$0xff] %vm306, 0.0
      %333 = vst.msk [vmem:[#allocation2 + $0xc8] sm:$0xff] %vm306, 0.0
      %334 = vst.msk [vmem:[#allocation2 + $0xd0] sm:$0x3] %vm309, 0.0
      %335 = vst.msk [vmem:[#allocation2 + $0xd8] sm:$0xff] %vm306, 0.0
      %336 = vst.msk [vmem:[#allocation2 + $0xe0] sm:$0xff] %vm306, 0.0
      %337 = vst.msk [vmem:[#allocation2 + $0xe8] sm:$0x3] %vm309, 0.0
      %338 = vst.msk [vmem:[#allocation2 + $0xf0] sm:$0xff] %vm306, 0.0
      %339 = vst.msk [vmem:[#allocation2 + $0xf8] sm:$0xff] %vm306, 0.0
      %340 = vst.msk [vmem:[#allocation2 + $0x100] sm:$0x3] %vm309, 0.0
      %341 = vst.msk [vmem:[#allocation2 + $0x108] sm:$0xff] %vm306, 0.0
      %342 = vst.msk [vmem:[#allocation2 + $0x110] sm:$0xff] %vm306, 0.0
      %343 = vst.msk [vmem:[#allocation2 + $0x118] sm:$0x3] %vm309, 0.0
      %344 = vst.msk [vmem:[#allocation2 + $0x120] sm:$0xff] %vm306, 0.0
      %345 = vst.msk [vmem:[#allocation2 + $0x128] sm:$0xff] %vm306, 0.0
      %346 = vst.msk [vmem:[#allocation2 + $0x130] sm:$0x3] %vm309, 0.0
      %347 = vst.msk [vmem:[#allocation2 + $0x138] sm:$0xff] %vm306, 0.0
      %348 = vst.msk [vmem:[#allocation2 + $0x140] sm:$0xff] %vm306, 0.0
      %349 = vst.msk [vmem:[#allocation2 + $0x148] sm:$0x3] %vm309, 0.0
      %350 = vst.msk [vmem:[#allocation2 + $0x150] sm:$0xff] %vm306, 0.0
      %351 = vst.msk [vmem:[#allocation2 + $0x158] sm:$0xff] %vm306, 0.0
      %352 = vst.msk [vmem:[#allocation2 + $0x160] sm:$0x3] %vm309, 0.0
      %353 = vst.msk [vmem:[#allocation2 + $0x168] sm:$0xff] %vm306, 0.0
      %354 = vst.msk [vmem:[#allocation2 + $0x170] sm:$0xff] %vm306, 0.0
      %355 = vst.msk [vmem:[#allocation2 + $0x178] sm:$0x3] %vm309, 0.0
      %356 = vst.msk [vmem:[#allocation2 + $0x180] sm:$0xff] %vm306, 0.0
      %357 = vst.msk [vmem:[#allocation2 + $0x188] sm:$0xff] %vm306, 0.0
      %358 = vst.msk [vmem:[#allocation2 + $0x190] sm:$0x3] %vm309, 0.0
      %359 = vst.msk [vmem:[#allocation2 + $0x198] sm:$0xff] %vm306, 0.0
      %360 = vst.msk [vmem:[#allocation2 + $0x1a0] sm:$0xff] %vm306, 0.0
      %361 = vst.msk [vmem:[#allocation2 + $0x1a8] sm:$0x3] %vm309, 0.0
      %vm362 = vcmask 523264
      %363 = vst.msk [vmem:[#allocation3] sm:$0xff] %vm362, 0.0
      %364 = vst.msk [vmem:[#allocation3 + $0x8] sm:$0xff] %vm362, 0.0
      %vm365 = vcmask 517120
      %366 = vst.msk [vmem:[#allocation3 + $0x10] sm:$0x3] %vm365, 0.0
      %367 = vst.msk [vmem:[#allocation3 + $0x18] sm:$0xff] %vm362, 0.0
      %368 = vst.msk [vmem:[#allocation3 + $0x20] sm:$0xff] %vm362, 0.0
      %369 = vst.msk [vmem:[#allocation3 + $0x28] sm:$0x3] %vm365, 0.0
      %370 = vst.msk [vmem:[#allocation3 + $0x30] sm:$0xff] %vm362, 0.0
      %371 = vst.msk [vmem:[#allocation3 + $0x38] sm:$0xff] %vm362, 0.0
      %372 = vst.msk [vmem:[#allocation3 + $0x40] sm:$0x3] %vm365, 0.0
      %373 = vst.msk [vmem:[#allocation3 + $0x48] sm:$0xff] %vm362, 0.0
      %374 = vst.msk [vmem:[#allocation3 + $0x50] sm:$0xff] %vm362, 0.0
      %375 = vst.msk [vmem:[#allocation3 + $0x58] sm:$0x3] %vm365, 0.0
      %376 = vst.msk [vmem:[#allocation3 + $0x60] sm:$0xff] %vm362, 0.0
      %377 = vst.msk [vmem:[#allocation3 + $0x68] sm:$0xff] %vm362, 0.0
      %378 = vst.msk [vmem:[#allocation3 + $0x70] sm:$0x3] %vm365, 0.0
      %379 = vst.msk [vmem:[#allocation3 + $0x78] sm:$0xff] %vm362, 0.0
      %380 = vst.msk [vmem:[#allocation3 + $0x80] sm:$0xff] %vm362, 0.0
      %381 = vst.msk [vmem:[#allocation3 + $0x88] sm:$0x3] %vm365, 0.0
      %382 = vst.msk [vmem:[#allocation3 + $0x90] sm:$0xff] %vm362, 0.0
      %383 = vst.msk [vmem:[#allocation3 + $0x98] sm:$0xff] %vm362, 0.0
      %384 = vst.msk [vmem:[#allocation3 + $0xa0] sm:$0x3] %vm365, 0.0
      %385 = vst.msk [vmem:[#allocation3 + $0xa8] sm:$0xff] %vm362, 0.0
      %386 = vst.msk [vmem:[#allocation3 + $0xb0] sm:$0xff] %vm362, 0.0
      %387 = vst.msk [vmem:[#allocation3 + $0xb8] sm:$0x3] %vm365, 0.0
      %388 = vst.msk [vmem:[#allocation3 + $0xc0] sm:$0xff] %vm362, 0.0
      %389 = vst.msk [vmem:[#allocation3 + $0xc8] sm:$0xff] %vm362, 0.0
      %390 = vst.msk [vmem:[#allocation3 + $0xd0] sm:$0x3] %vm365, 0.0
      %391 = vst.msk [vmem:[#allocation3 + $0xd8] sm:$0xff] %vm362, 0.0
      %392 = vst.msk [vmem:[#allocation3 + $0xe0] sm:$0xff] %vm362, 0.0
      %393 = vst.msk [vmem:[#allocation3 + $0xe8] sm:$0x3] %vm365, 0.0
      %394 = vst.msk [vmem:[#allocation3 + $0xf0] sm:$0xff] %vm362, 0.0
      %395 = vst.msk [vmem:[#allocation3 + $0xf8] sm:$0xff] %vm362, 0.0
      %396 = vst.msk [vmem:[#allocation3 + $0x100] sm:$0x3] %vm365, 0.0
      %397 = vst.msk [vmem:[#allocation3 + $0x108] sm:$0xff] %vm362, 0.0
      %398 = vst.msk [vmem:[#allocation3 + $0x110] sm:$0xff] %vm362, 0.0
      %399 = vst.msk [vmem:[#allocation3 + $0x118] sm:$0x3] %vm365, 0.0
      %400 = vst.msk [vmem:[#allocation3 + $0x120] sm:$0xff] %vm362, 0.0
      %401 = vst.msk [vmem:[#allocation3 + $0x128] sm:$0xff] %vm362, 0.0
      %402 = vst.msk [vmem:[#allocation3 + $0x130] sm:$0x3] %vm365, 0.0
      %403 = vst.msk [vmem:[#allocation3 + $0x138] sm:$0xff] %vm362, 0.0
      %404 = vst.msk [vmem:[#allocation3 + $0x140] sm:$0xff] %vm362, 0.0
      %405 = vst.msk [vmem:[#allocation3 + $0x148] sm:$0x3] %vm365, 0.0
      %406 = vst.msk [vmem:[#allocation3 + $0x150] sm:$0xff] %vm362, 0.0
      %407 = vst.msk [vmem:[#allocation3 + $0x158] sm:$0xff] %vm362, 0.0
      %408 = vst.msk [vmem:[#allocation3 + $0x160] sm:$0x3] %vm365, 0.0
      %409 = vst.msk [vmem:[#allocation3 + $0x168] sm:$0xff] %vm362, 0.0
      %410 = vst.msk [vmem:[#allocation3 + $0x170] sm:$0xff] %vm362, 0.0
      %411 = vst.msk [vmem:[#allocation3 + $0x178] sm:$0x3] %vm365, 0.0
      %412 = vst.msk [vmem:[#allocation3 + $0x180] sm:$0xff] %vm362, 0.0
      %413 = vst.msk [vmem:[#allocation3 + $0x188] sm:$0xff] %vm362, 0.0
      %414 = vst.msk [vmem:[#allocation3 + $0x190] sm:$0x3] %vm365, 0.0
      %415 = vst.msk [vmem:[#allocation3 + $0x198] sm:$0xff] %vm362, 0.0
      %416 = vst.msk [vmem:[#allocation3 + $0x1a0] sm:$0xff] %vm362, 0.0
      %417 = vst.msk [vmem:[#allocation3 + $0x1a8] sm:$0x3] %vm365, 0.0
      %v418 = vld [vmem:[%s300] sm:$0xff]
      %v419 = vld [vmem:[%s300 + $0x8] sm:$0xff]
      %v420 = vld [vmem:[%s300 + $0x10] sm:$0xff]
      %v421 = vld [vmem:[%s300 + $0x18] sm:$0xff]
      %v422 = vld [vmem:[%s300 + $0x20] sm:$0xff]
      %v423 = vld [vmem:[%s300 + $0x28] sm:$0xff]
      %v424 = vld [vmem:[%s300 + $0x30] sm:$0xff]
      %v425 = vld [vmem:[%s300 + $0x38] sm:$0xff]
      %v426 = vld [vmem:[%s300 + $0x40] sm:$0xff]
      %v427 = vld [vmem:[%s300 + $0x48] sm:$0xff]
      %v428 = vld [vmem:[%s300 + $0x50] sm:$0xff]
      %v429 = vld [vmem:[%s300 + $0x58] sm:$0xff]
      %v430 = vld [vmem:[%s300 + $0x60] sm:$0xff]
      %v431 = vld [vmem:[%s300 + $0x68] sm:$0xff]
      %v432 = vld [vmem:[%s300 + $0x70] sm:$0xff]
      %v433 = vld [vmem:[%s300 + $0x78] sm:$0xff]
      %v434 = vld [vmem:[%s300 + $0x80] sm:$0xff]
      %v435 = vld [vmem:[%s300 + $0x88] sm:$0xff]
      %v436 = vld [vmem:[%s300 + $0x90] sm:$0xff]
      %v437 = vld [vmem:[%s300 + $0x98] sm:$0xff]
      %v438 = vld [vmem:[%s300 + $0xa0] sm:$0xff]
      %v439 = vld [vmem:[%s300 + $0xa8] sm:$0xff]
      %v440 = vld [vmem:[%s300 + $0xb0] sm:$0xff]
      %v441 = vld [vmem:[%s300 + $0xb8] sm:$0xff]
      %v442 = vld [vmem:[%s300 + $0xc0] sm:$0xff]
      %v443 = vld [vmem:[%s300 + $0xc8] sm:$0xff]
      %v444 = vld [vmem:[%s300 + $0xd0] sm:$0xff]
      %v445 = vld [vmem:[%s300 + $0xd8] sm:$0xff]
      %v446 = vld [vmem:[%s300 + $0xe0] sm:$0xff]
      %v447 = vld [vmem:[%s300 + $0xe8] sm:$0xff]
      %v448 = vld [vmem:[%s300 + $0xf0] sm:$0xff]
      %v449 = vld [vmem:[%s300 + $0xf8] sm:$0xff]
      %s450 = scalar_lea.vmem [#allocation2], 24
      %451 = vst.msk [vmem:[%s450 + $0x1] sm:$0xff] %vm306, %v418
      %452 = vst.msk [vmem:[%s450 + $0x9] sm:$0xff] %vm306, %v419
      %453 = vst.msk [vmem:[%s450 + $0x19] sm:$0xff] %vm306, %v420
      %454 = vst.msk [vmem:[%s450 + $0x21] sm:$0xff] %vm306, %v421
      %455 = vst.msk [vmem:[%s450 + $0x31] sm:$0xff] %vm306, %v422
      %456 = vst.msk [vmem:[%s450 + $0x39] sm:$0xff] %vm306, %v423
      %457 = vst.msk [vmem:[%s450 + $0x49] sm:$0xff] %vm306, %v424
      %458 = vst.msk [vmem:[%s450 + $0x51] sm:$0xff] %vm306, %v425
      %459 = vst.msk [vmem:[%s450 + $0x61] sm:$0xff] %vm306, %v426
      %460 = vst.msk [vmem:[%s450 + $0x69] sm:$0xff] %vm306, %v427
      %461 = vst.msk [vmem:[%s450 + $0x79] sm:$0xff] %vm306, %v428
      %462 = vst.msk [vmem:[%s450 + $0x81] sm:$0xff] %vm306, %v429
      %463 = vst.msk [vmem:[%s450 + $0x91] sm:$0xff] %vm306, %v430
      %464 = vst.msk [vmem:[%s450 + $0x99] sm:$0xff] %vm306, %v431
      %465 = vst.msk [vmem:[%s450 + $0xa9] sm:$0xff] %vm306, %v432
      %466 = vst.msk [vmem:[%s450 + $0xb1] sm:$0xff] %vm306, %v433
      %467 = vst.msk [vmem:[%s450 + $0xc1] sm:$0xff] %vm306, %v434
      %468 = vst.msk [vmem:[%s450 + $0xc9] sm:$0xff] %vm306, %v435
      %469 = vst.msk [vmem:[%s450 + $0xd9] sm:$0xff] %vm306, %v436
      %470 = vst.msk [vmem:[%s450 + $0xe1] sm:$0xff] %vm306, %v437
      %471 = vst.msk [vmem:[%s450 + $0xf1] sm:$0xff] %vm306, %v438
      %472 = vst.msk [vmem:[%s450 + $0xf9] sm:$0xff] %vm306, %v439
      %473 = vst.msk [vmem:[%s450 + $0x109] sm:$0xff] %vm306, %v440
      %474 = vst.msk [vmem:[%s450 + $0x111] sm:$0xff] %vm306, %v441
      %475 = vst.msk [vmem:[%s450 + $0x121] sm:$0xff] %vm306, %v442
      %476 = vst.msk [vmem:[%s450 + $0x129] sm:$0xff] %vm306, %v443
      %477 = vst.msk [vmem:[%s450 + $0x139] sm:$0xff] %vm306, %v444
      %478 = vst.msk [vmem:[%s450 + $0x141] sm:$0xff] %vm306, %v445
      %479 = vst.msk [vmem:[%s450 + $0x151] sm:$0xff] %vm306, %v446
      %480 = vst.msk [vmem:[%s450 + $0x159] sm:$0xff] %vm306, %v447
      %481 = vst.msk [vmem:[%s450 + $0x169] sm:$0xff] %vm306, %v448
      %482 = vst.msk [vmem:[%s450 + $0x171] sm:$0xff] %vm306, %v449
      %v483 = vld [vmem:[%s2] sm:$0x1]
      %v485 = vlaneseq
      %v486 = vshrl.u32 %v485, 7
      %v487 = vsub.s32 0, %v486
      %v488 = vrot.slane %v483, %v487
      %v490 = vld [vmem:[%s7] sm:$0x1]
      %v492 = vlaneseq
      %v493 = vshrl.u32 %v492, 7
      %v494 = vsub.s32 0, %v493
      %v495 = vrot.slane %v490, %v494
      %v497 = vld [vmem:[#allocation2] sm:$0xff]
      %v498 = vld [vmem:[#allocation2 + $0x8] sm:$0xff]
      %v499 = vld [vmem:[#allocation2 + $0x18] sm:$0xff]
      %v500 = vld [vmem:[#allocation2 + $0x20] sm:$0xff]
      %v501 = vld [vmem:[#allocation2 + $0x30] sm:$0xff]
      %v502 = vld [vmem:[#allocation2 + $0x38] sm:$0xff]
      %v503 = vld [vmem:[#allocation2 + $0x48] sm:$0xff]
      %v504 = vld [vmem:[#allocation2 + $0x50] sm:$0xff]
      %v505 = vld [vmem:[#allocation2 + $0x60] sm:$0xff]
      %v506 = vld [vmem:[#allocation2 + $0x68] sm:$0xff]
      %v507 = vld [vmem:[#allocation2 + $0x78] sm:$0xff]
      %v508 = vld [vmem:[#allocation2 + $0x80] sm:$0xff]
      %v509 = vld [vmem:[#allocation2 + $0x90] sm:$0xff]
      %v510 = vld [vmem:[#allocation2 + $0x98] sm:$0xff]
      %v511 = vld [vmem:[#allocation2 + $0xa8] sm:$0xff]
      %v512 = vld [vmem:[#allocation2 + $0xb0] sm:$0xff]
      %v513 = vld [vmem:[#allocation2 + $0xc0] sm:$0xff]
      %v514 = vld [vmem:[#allocation2 + $0xc8] sm:$0xff]
      %v515 = vld [vmem:[#allocation2 + $0xd8] sm:$0xff]
      %v516 = vld [vmem:[#allocation2 + $0xe0] sm:$0xff]
      %v517 = vld [vmem:[#allocation2 + $0xf0] sm:$0xff]
      %v518 = vld [vmem:[#allocation2 + $0xf8] sm:$0xff]
      %v519 = vld [vmem:[#allocation2 + $0x108] sm:$0xff]
      %v520 = vld [vmem:[#allocation2 + $0x110] sm:$0xff]
      %v521 = vld [vmem:[#allocation2 + $0x120] sm:$0xff]
      %v522 = vld [vmem:[#allocation2 + $0x128] sm:$0xff]
      %v523 = vld [vmem:[#allocation2 + $0x138] sm:$0xff]
      %v524 = vld [vmem:[#allocation2 + $0x140] sm:$0xff]
      %v525 = vld [vmem:[#allocation2 + $0x150] sm:$0xff]
      %v526 = vld [vmem:[#allocation2 + $0x158] sm:$0xff]
      %v527 = vld [vmem:[#allocation2 + $0x168] sm:$0xff]
      %v528 = vld [vmem:[#allocation2 + $0x170] sm:$0xff]
      %v529 = vld [vmem:[%s1] sm:$0xf]
      %v531 = vsel %vm306, %v497, 0
      %v534 = vsel %vm306, %v498, 0
      %v537 = vsel %vm306, %v499, 0
      %v540 = vsel %vm306, %v500, 0
      %v543 = vsel %vm306, %v501, 0
      %v546 = vsel %vm306, %v502, 0
      %v549 = vsel %vm306, %v503, 0
      %v552 = vsel %vm306, %v504, 0
      %v555 = vsel %vm306, %v505, 0
      %v558 = vsel %vm306, %v506, 0
      %v561 = vsel %vm306, %v507, 0
      %v564 = vsel %vm306, %v508, 0
      %v567 = vsel %vm306, %v509, 0
      %v570 = vsel %vm306, %v510, 0
      %v573 = vsel %vm306, %v511, 0
      %v576 = vsel %vm306, %v512, 0
      %v579 = vsel %vm306, %v513, 0
      %v582 = vsel %vm306, %v514, 0
      %v585 = vsel %vm306, %v515, 0
      %v588 = vsel %vm306, %v516, 0
      %v591 = vsel %vm306, %v517, 0
      %v594 = vsel %vm306, %v518, 0
      %v597 = vsel %vm306, %v519, 0
      %v600 = vsel %vm306, %v520, 0
      %v603 = vsel %vm306, %v521, 0
      %v606 = vsel %vm306, %v522, 0
      %v609 = vsel %vm306, %v523, 0
      %v612 = vsel %vm306, %v524, 0
      %v615 = vsel %vm306, %v525, 0
      %v618 = vsel %vm306, %v526, 0
      %v621 = vsel %vm306, %v527, 0
      %v624 = vsel %vm306, %v528, 0
      %vm626 = vcmask 1043456
      %v628 = vsel %vm626, %v529, 0
      %630 = vmatprep.subr.mxu0 0.0
      %631 = vmatpush1.msra.mxu0 %v628
      %632 = vmatprep.subr.mxu0 0.0
      %633 = vmatpush1.msra.mxu0 0.0
      %634 = vmatprep.subr.mxu0 0.0
      %635 = vmatpush1.msra.mxu0 0.0
      %636 = vmatprep.subr.mxu0 0.0
      %637 = vmatpush1.msra.mxu0 0.0
      %638 = vmatprep.subr.mxu0 0.0
      %639 = vmatpush1.msra.mxu0 0.0
      %640 = vmatprep.subr.mxu0 0.0
      %641 = vmatpush1.msra.mxu0 0.0
      %642 = vmatprep.subr.mxu0 0.0
      %643 = vmatpush1.msra.mxu0 0.0
      %644 = vmatprep.subr.mxu0 0.0
      %645 = vmatpush1.msra.mxu0 0.0
      %646 = vmatprep.subr.mxu0 0.0
      %647 = vmatpush1.msra.mxu0 0.0
      %648 = vmatprep.subr.mxu0 0.0
      %649 = vmatpush1.msra.mxu0 0.0
      %650 = vmatprep.subr.mxu0 0.0
      %651 = vmatpush1.msra.mxu0 0.0
      %652 = vmatprep.subr.mxu0 0.0
      %653 = vmatpush1.msra.mxu0 0.0
      %654 = vmatprep.subr.mxu0 0.0
      %655 = vmatpush1.msra.mxu0 0.0
      %656 = vmatprep.subr.mxu0 0.0
      %657 = vmatpush1.msra.mxu0 0.0
      %658 = vmatprep.subr.mxu0 0.0
      %659 = vmatpush1.msra.mxu0 0.0
      %660 = vmatprep.subr.mxu0 0.0
      %661 = vmatpush1.msra.mxu0 0.0
      %662 = vmatprep.subr.mxu0 0.0
      %663 = vmatpush1.msra.mxu0 0.0
      %664 = vmatprep.subr.mxu0 0.0
      %665 = vmatpush1.msra.mxu0 0.0
      %666 = vmatprep.subr.mxu0 0.0
      %667 = vmatpush1.msra.mxu0 0.0
      %668 = vmatprep.subr.mxu0 0.0
      %669 = vmatpush1.msra.mxu0 0.0
      %670 = vmatprep.subr.mxu0 0.0
      %671 = vmatpush1.msra.mxu0 0.0
      %672 = vmatprep.subr.mxu0 0.0
      %673 = vmatpush1.msra.mxu0 0.0
      %674 = vmatprep.subr.mxu0 0.0
      %675 = vmatpush1.msra.mxu0 0.0
      %676 = vmatprep.subr.mxu0 0.0
      %677 = vmatpush1.msra.mxu0 0.0
      %678 = vmatprep.subr.mxu0 0.0
      %679 = vmatpush1.msra.mxu0 0.0
      %680 = vmatprep.subr.mxu0 0.0
      %681 = vmatpush1.msra.mxu0 0.0
      %682 = vmatprep.subr.mxu0 0.0
      %683 = vmatpush1.msra.mxu0 0.0
      %684 = vmatprep.subr.mxu0 0.0
      %685 = vmatpush1.msra.mxu0 0.0
      %686 = vmatprep.subr.mxu0 0.0
      %687 = vmatpush1.msra.mxu0 0.0
      %688 = vmatprep.subr.mxu0 0.0
      %689 = vmatpush1.msra.mxu0 0.0
      %690 = vmatprep.subr.mxu0 0.0
      %691 = vmatpush1.msra.mxu0 0.0
      %692 = vmatprep.subr.mxu0 0.0
      %693 = vmatpush1.msra.mxu0 0.0
      %694 = vmatprep.mubr.f32.mxu0 0.0
      %695 = vmatmul.mubr.f32.gmra.mrb[0].mxu0 %v531
      %v696 = vpop.f32.mrb[0].mxu0
      %v697 = vadd.f32 0.0, %v696
      %v698 = vpop.f32.mrb[0].mxu0
      %699 = vmatprep.mubr.f32.mxu0 0.0
      %700 = vmatmul.mubr.f32.gmra.mrb[0].mxu0 %v534
      %v701 = vpop.f32.mrb[0].mxu0
      %v702 = vadd.f32 0.0, %v701
      %v703 = vpop.f32.mrb[0].mxu0
      %704 = vmatprep.mubr.f32.mxu0 0.0
      %705 = vmatmul.mubr.f32.gmra.mrb[0].mxu0 %v537
      %v706 = vpop.f32.mrb[0].mxu0
      %v707 = vadd.f32 0.0, %v706
      %v708 = vpop.f32.mrb[0].mxu0
      %709 = vmatprep.mubr.f32.mxu0 0.0
      %710 = vmatmul.mubr.f32.gmra.mrb[0].mxu0 %v540
      %v711 = vpop.f32.mrb[0].mxu0
      %v712 = vadd.f32 0.0, %v711
      %v713 = vpop.f32.mrb[0].mxu0
      %714 = vmatprep.mubr.f32.mxu0 0.0
      %715 = vmatmul.mubr.f32.gmra.mrb[0].mxu0 %v543
      %v716 = vpop.f32.mrb[0].mxu0
      %v717 = vadd.f32 0.0, %v716
      %v718 = vpop.f32.mrb[0].mxu0
      %719 = vmatprep.mubr.f32.mxu0 0.0
      %720 = vmatmul.mubr.f32.gmra.mrb[0].mxu0 %v546
      %v721 = vpop.f32.mrb[0].mxu0
      %v722 = vadd.f32 0.0, %v721
      %v723 = vpop.f32.mrb[0].mxu0
      %724 = vmatprep.mubr.f32.mxu0 0.0
      %725 = vmatmul.mubr.f32.gmra.mrb[0].mxu0 %v549
      %v726 = vpop.f32.mrb[0].mxu0
      %v727 = vadd.f32 0.0, %v726
      %v728 = vpop.f32.mrb[0].mxu0
      %729 = vmatprep.mubr.f32.mxu0 0.0
      %730 = vmatmul.mubr.f32.gmra.mrb[0].mxu0 %v552
      %v731 = vpop.f32.mrb[0].mxu0
      %v732 = vadd.f32 0.0, %v731
      %v733 = vpop.f32.mrb[0].mxu0
      %734 = vmatprep.mubr.f32.mxu0 0.0
      %735 = vmatmul.mubr.f32.gmra.mrb[0].mxu0 %v555
      %v736 = vpop.f32.mrb[0].mxu0
      %v737 = vadd.f32 0.0, %v736
      %v738 = vpop.f32.mrb[0].mxu0
      %739 = vmatprep.mubr.f32.mxu0 0.0
      %740 = vmatmul.mubr.f32.gmra.mrb[0].mxu0 %v558
      %v741 = vpop.f32.mrb[0].mxu0
      %v742 = vadd.f32 0.0, %v741
      %v743 = vpop.f32.mrb[0].mxu0
      %744 = vmatprep.mubr.f32.mxu0 0.0
      %745 = vmatmul.mubr.f32.gmra.mrb[0].mxu0 %v561
      %v746 = vpop.f32.mrb[0].mxu0
      %v747 = vadd.f32 0.0, %v746
      %v748 = vpop.f32.mrb[0].mxu0
      %749 = vmatprep.mubr.f32.mxu0 0.0
      %750 = vmatmul.mubr.f32.gmra.mrb[0].mxu0 %v564
      %v751 = vpop.f32.mrb[0].mxu0
      %v752 = vadd.f32 0.0, %v751
      %v753 = vpop.f32.mrb[0].mxu0
      %754 = vmatprep.mubr.f32.mxu0 0.0
      %755 = vmatmul.mubr.f32.gmra.mrb[0].mxu0 %v567
      %v756 = vpop.f32.mrb[0].mxu0
      %v757 = vadd.f32 0.0, %v756
      %v758 = vpop.f32.mrb[0].mxu0
      %759 = vmatprep.mubr.f32.mxu0 0.0
      %760 = vmatmul.mubr.f32.gmra.mrb[0].mxu0 %v570
      %v761 = vpop.f32.mrb[0].mxu0
      %v762 = vadd.f32 0.0, %v761
      %v763 = vpop.f32.mrb[0].mxu0
      %764 = vmatprep.mubr.f32.mxu0 0.0
      %765 = vmatmul.mubr.f32.gmra.mrb[0].mxu0 %v573
      %v766 = vpop.f32.mrb[0].mxu0
      %v767 = vadd.f32 0.0, %v766
      %v768 = vpop.f32.mrb[0].mxu0
      %769 = vmatprep.mubr.f32.mxu0 0.0
      %770 = vmatmul.mubr.f32.gmra.mrb[0].mxu0 %v576
      %v771 = vpop.f32.mrb[0].mxu0
      %v772 = vadd.f32 0.0, %v771
      %v773 = vpop.f32.mrb[0].mxu0
      %774 = vmatprep.mubr.f32.mxu0 0.0
      %775 = vmatmul.mubr.f32.gmra.mrb[0].mxu0 %v579
      %v776 = vpop.f32.mrb[0].mxu0
      %v777 = vadd.f32 0.0, %v776
      %v778 = vpop.f32.mrb[0].mxu0
      %779 = vmatprep.mubr.f32.mxu0 0.0
      %780 = vmatmul.mubr.f32.gmra.mrb[0].mxu0 %v582
      %v781 = vpop.f32.mrb[0].mxu0
      %v782 = vadd.f32 0.0, %v781
      %v783 = vpop.f32.mrb[0].mxu0
      %784 = vmatprep.mubr.f32.mxu0 0.0
      %785 = vmatmul.mubr.f32.gmra.mrb[0].mxu0 %v585
      %v786 = vpop.f32.mrb[0].mxu0
      %v787 = vadd.f32 0.0, %v786
      %v788 = vpop.f32.mrb[0].mxu0
      %789 = vmatprep.mubr.f32.mxu0 0.0
      %790 = vmatmul.mubr.f32.gmra.mrb[0].mxu0 %v588
      %v791 = vpop.f32.mrb[0].mxu0
      %v792 = vadd.f32 0.0, %v791
      %v793 = vpop.f32.mrb[0].mxu0
      %794 = vmatprep.mubr.f32.mxu0 0.0
      %795 = vmatmul.mubr.f32.gmra.mrb[0].mxu0 %v591
      %v796 = vpop.f32.mrb[0].mxu0
      %v797 = vadd.f32 0.0, %v796
      %v798 = vpop.f32.mrb[0].mxu0
      %799 = vmatprep.mubr.f32.mxu0 0.0
      %800 = vmatmul.mubr.f32.gmra.mrb[0].mxu0 %v594
      %v801 = vpop.f32.mrb[0].mxu0
      %v802 = vadd.f32 0.0, %v801
      %v803 = vpop.f32.mrb[0].mxu0
      %804 = vmatprep.mubr.f32.mxu0 0.0
      %805 = vmatmul.mubr.f32.gmra.mrb[0].mxu0 %v597
      %v806 = vpop.f32.mrb[0].mxu0
      %v807 = vadd.f32 0.0, %v806
      %v808 = vpop.f32.mrb[0].mxu0
      %809 = vmatprep.mubr.f32.mxu0 0.0
      %810 = vmatmul.mubr.f32.gmra.mrb[0].mxu0 %v600
      %v811 = vpop.f32.mrb[0].mxu0
      %v812 = vadd.f32 0.0, %v811
      %v813 = vpop.f32.mrb[0].mxu0
      %814 = vmatprep.mubr.f32.mxu0 0.0
      %815 = vmatmul.mubr.f32.gmra.mrb[0].mxu0 %v603
      %v816 = vpop.f32.mrb[0].mxu0
      %v817 = vadd.f32 0.0, %v816
      %v818 = vpop.f32.mrb[0].mxu0
      %819 = vmatprep.mubr.f32.mxu0 0.0
      %820 = vmatmul.mubr.f32.gmra.mrb[0].mxu0 %v606
      %v821 = vpop.f32.mrb[0].mxu0
      %v822 = vadd.f32 0.0, %v821
      %v823 = vpop.f32.mrb[0].mxu0
      %824 = vmatprep.mubr.f32.mxu0 0.0
      %825 = vmatmul.mubr.f32.gmra.mrb[0].mxu0 %v609
      %v826 = vpop.f32.mrb[0].mxu0
      %v827 = vadd.f32 0.0, %v826
      %v828 = vpop.f32.mrb[0].mxu0
      %829 = vmatprep.mubr.f32.mxu0 0.0
      %830 = vmatmul.mubr.f32.gmra.mrb[0].mxu0 %v612
      %v831 = vpop.f32.mrb[0].mxu0
      %v832 = vadd.f32 0.0, %v831
      %v833 = vpop.f32.mrb[0].mxu0
      %834 = vmatprep.mubr.f32.mxu0 0.0
      %835 = vmatmul.mubr.f32.gmra.mrb[0].mxu0 %v615
      %v836 = vpop.f32.mrb[0].mxu0
      %v837 = vadd.f32 0.0, %v836
      %v838 = vpop.f32.mrb[0].mxu0
      %839 = vmatprep.mubr.f32.mxu0 0.0
      %840 = vmatmul.mubr.f32.gmra.mrb[0].mxu0 %v618
      %v841 = vpop.f32.mrb[0].mxu0
      %v842 = vadd.f32 0.0, %v841
      %v843 = vpop.f32.mrb[0].mxu0
      %844 = vmatprep.mubr.f32.mxu0 0.0
      %845 = vmatmul.mubr.f32.gmra.mrb[0].mxu0 %v621
      %v846 = vpop.f32.mrb[0].mxu0
      %v847 = vadd.f32 0.0, %v846
      %v848 = vpop.f32.mrb[0].mxu0
      %849 = vmatprep.mubr.f32.mxu0 0.0
      %850 = vmatmul.mubr.f32.gmra.mrb[0].mxu0 %v624
      %v851 = vpop.f32.mrb[0].mxu0
      %v852 = vadd.f32 0.0, %v851
      %v853 = vpop.f32.mrb[0].mxu0
      %854 = vdwg.mxu0
      %v855 = vadd.f32 %v488, %v697
      %v856 = vadd.f32 %v488, %v702
      %v857 = vadd.f32 %v488, %v707
      %v858 = vadd.f32 %v488, %v712
      %v859 = vadd.f32 %v488, %v717
      %v860 = vadd.f32 %v488, %v722
      %v861 = vadd.f32 %v488, %v727
      %v862 = vadd.f32 %v488, %v732
      %v863 = vadd.f32 %v488, %v737
      %v864 = vadd.f32 %v488, %v742
      %v865 = vadd.f32 %v488, %v747
      %v866 = vadd.f32 %v488, %v752
      %v867 = vadd.f32 %v488, %v757
      %v868 = vadd.f32 %v488, %v762
      %v869 = vadd.f32 %v488, %v767
      %v870 = vadd.f32 %v488, %v772
      %v871 = vadd.f32 %v488, %v777
      %v872 = vadd.f32 %v488, %v782
      %v873 = vadd.f32 %v488, %v787
      %v874 = vadd.f32 %v488, %v792
      %v875 = vadd.f32 %v488, %v797
      %v876 = vadd.f32 %v488, %v802
      %v877 = vadd.f32 %v488, %v807
      %v878 = vadd.f32 %v488, %v812
      %v879 = vadd.f32 %v488, %v817
      %v880 = vadd.f32 %v488, %v822
      %v881 = vadd.f32 %v488, %v827
      %v882 = vadd.f32 %v488, %v832
      %v883 = vadd.f32 %v488, %v837
      %v884 = vadd.f32 %v488, %v842
      %v885 = vadd.f32 %v488, %v847
      %v886 = vadd.f32 %v488, %v852
      %v887 = vld [vmem:[%s5] sm:$0xf]
      %v889 = vsel %vm626, %v887, 0
      %891 = vmatprep.subr.mxu0 0.0
      %892 = vmatpush1.msra.mxu0 %v889
      %893 = vmatprep.subr.mxu0 0.0
      %894 = vmatpush1.msra.mxu0 0.0
      %895 = vmatprep.subr.mxu0 0.0
      %896 = vmatpush1.msra.mxu0 0.0
      %897 = vmatprep.subr.mxu0 0.0
      %898 = vmatpush1.msra.mxu0 0.0
      %899 = vmatprep.subr.mxu0 0.0
      %900 = vmatpush1.msra.mxu0 0.0
      %901 = vmatprep.subr.mxu0 0.0
      %902 = vmatpush1.msra.mxu0 0.0
      %903 = vmatprep.subr.mxu0 0.0
      %904 = vmatpush1.msra.mxu0 0.0
      %905 = vmatprep.subr.mxu0 0.0
      %906 = vmatpush1.msra.mxu0 0.0
      %907 = vmatprep.subr.mxu0 0.0
      %908 = vmatpush1.msra.mxu0 0.0
      %909 = vmatprep.subr.mxu0 0.0
      %910 = vmatpush1.msra.mxu0 0.0
      %911 = vmatprep.subr.mxu0 0.0
      %912 = vmatpush1.msra.mxu0 0.0
      %913 = vmatprep.subr.mxu0 0.0
      %914 = vmatpush1.msra.mxu0 0.0
      %915 = vmatprep.subr.mxu0 0.0
      %916 = vmatpush1.msra.mxu0 0.0
      %917 = vmatprep.subr.mxu0 0.0
      %918 = vmatpush1.msra.mxu0 0.0
      %919 = vmatprep.subr.mxu0 0.0
      %920 = vmatpush1.msra.mxu0 0.0
      %921 = vmatprep.subr.mxu0 0.0
      %922 = vmatpush1.msra.mxu0 0.0
      %923 = vmatprep.subr.mxu0 0.0
      %924 = vmatpush1.msra.mxu0 0.0
      %925 = vmatprep.subr.mxu0 0.0
      %926 = vmatpush1.msra.mxu0 0.0
      %927 = vmatprep.subr.mxu0 0.0
      %928 = vmatpush1.msra.mxu0 0.0
      %929 = vmatprep.subr.mxu0 0.0
      %930 = vmatpush1.msra.mxu0 0.0
      %931 = vmatprep.subr.mxu0 0.0
      %932 = vmatpush1.msra.mxu0 0.0
      %933 = vmatprep.subr.mxu0 0.0
      %934 = vmatpush1.msra.mxu0 0.0
      %935 = vmatprep.subr.mxu0 0.0
      %936 = vmatpush1.msra.mxu0 0.0
      %937 = vmatprep.subr.mxu0 0.0
      %938 = vmatpush1.msra.mxu0 0.0
      %939 = vmatprep.subr.mxu0 0.0
      %940 = vmatpush1.msra.mxu0 0.0
      %941 = vmatprep.subr.mxu0 0.0
      %942 = vmatpush1.msra.mxu0 0.0
      %943 = vmatprep.subr.mxu0 0.0
      %944 = vmatpush1.msra.mxu0 0.0
      %945 = vmatprep.subr.mxu0 0.0
      %946 = vmatpush1.msra.mxu0 0.0
      %947 = vmatprep.subr.mxu0 0.0
      %948 = vmatpush1.msra.mxu0 0.0
      %949 = vmatprep.subr.mxu0 0.0
      %950 = vmatpush1.msra.mxu0 0.0
      %951 = vmatprep.subr.mxu0 0.0
      %952 = vmatpush1.msra.mxu0 0.0
      %953 = vmatprep.subr.mxu0 0.0
      %954 = vmatpush1.msra.mxu0 0.0
      %955 = vmatprep.mubr.f32.mxu0 0.0
      %956 = vmatmul.mubr.f32.gmra.mrb[0].mxu0 %v531
      %v957 = vpop.f32.mrb[0].mxu0
      %v958 = vadd.f32 0.0, %v957
      %v959 = vpop.f32.mrb[0].mxu0
      %960 = vmatprep.mubr.f32.mxu0 0.0
      %961 = vmatmul.mubr.f32.gmra.mrb[0].mxu0 %v534
      %v962 = vpop.f32.mrb[0].mxu0
      %v963 = vadd.f32 0.0, %v962
      %v964 = vpop.f32.mrb[0].mxu0
      %965 = vmatprep.mubr.f32.mxu0 0.0
      %966 = vmatmul.mubr.f32.gmra.mrb[0].mxu0 %v537
      %v967 = vpop.f32.mrb[0].mxu0
      %v968 = vadd.f32 0.0, %v967
      %v969 = vpop.f32.mrb[0].mxu0
      %970 = vmatprep.mubr.f32.mxu0 0.0
      %971 = vmatmul.mubr.f32.gmra.mrb[0].mxu0 %v540
      %v972 = vpop.f32.mrb[0].mxu0
      %v973 = vadd.f32 0.0, %v972
      %v974 = vpop.f32.mrb[0].mxu0
      %975 = vmatprep.mubr.f32.mxu0 0.0
      %976 = vmatmul.mubr.f32.gmra.mrb[0].mxu0 %v543
      %v977 = vpop.f32.mrb[0].mxu0
      %v978 = vadd.f32 0.0, %v977
      %v979 = vpop.f32.mrb[0].mxu0
      %980 = vmatprep.mubr.f32.mxu0 0.0
      %981 = vmatmul.mubr.f32.gmra.mrb[0].mxu0 %v546
      %v982 = vpop.f32.mrb[0].mxu0
      %v983 = vadd.f32 0.0, %v982
      %v984 = vpop.f32.mrb[0].mxu0
      %985 = vmatprep.mubr.f32.mxu0 0.0
      %986 = vmatmul.mubr.f32.gmra.mrb[0].mxu0 %v549
      %v987 = vpop.f32.mrb[0].mxu0
      %v988 = vadd.f32 0.0, %v987
      %v989 = vpop.f32.mrb[0].mxu0
      %990 = vmatprep.mubr.f32.mxu0 0.0
      %991 = vmatmul.mubr.f32.gmra.mrb[0].mxu0 %v552
      %v992 = vpop.f32.mrb[0].mxu0
      %v993 = vadd.f32 0.0, %v992
      %v994 = vpop.f32.mrb[0].mxu0
      %995 = vmatprep.mubr.f32.mxu0 0.0
      %996 = vmatmul.mubr.f32.gmra.mrb[0].mxu0 %v555
      %v997 = vpop.f32.mrb[0].mxu0
      %v998 = vadd.f32 0.0, %v997
      %v999 = vpop.f32.mrb[0].mxu0
      %1000 = vmatprep.mubr.f32.mxu0 0.0
      %1001 = vmatmul.mubr.f32.gmra.mrb[0].mxu0 %v558
      %v1002 = vpop.f32.mrb[0].mxu0
      %v1003 = vadd.f32 0.0, %v1002
      %v1004 = vpop.f32.mrb[0].mxu0
      %1005 = vmatprep.mubr.f32.mxu0 0.0
      %1006 = vmatmul.mubr.f32.gmra.mrb[0].mxu0 %v561
      %v1007 = vpop.f32.mrb[0].mxu0
      %v1008 = vadd.f32 0.0, %v1007
      %v1009 = vpop.f32.mrb[0].mxu0
      %1010 = vmatprep.mubr.f32.mxu0 0.0
      %1011 = vmatmul.mubr.f32.gmra.mrb[0].mxu0 %v564
      %v1012 = vpop.f32.mrb[0].mxu0
      %v1013 = vadd.f32 0.0, %v1012
      %v1014 = vpop.f32.mrb[0].mxu0
      %1015 = vmatprep.mubr.f32.mxu0 0.0
      %1016 = vmatmul.mubr.f32.gmra.mrb[0].mxu0 %v567
      %v1017 = vpop.f32.mrb[0].mxu0
      %v1018 = vadd.f32 0.0, %v1017
      %v1019 = vpop.f32.mrb[0].mxu0
      %1020 = vmatprep.mubr.f32.mxu0 0.0
      %1021 = vmatmul.mubr.f32.gmra.mrb[0].mxu0 %v570
      %v1022 = vpop.f32.mrb[0].mxu0
      %v1023 = vadd.f32 0.0, %v1022
      %v1024 = vpop.f32.mrb[0].mxu0
      %1025 = vmatprep.mubr.f32.mxu0 0.0
      %1026 = vmatmul.mubr.f32.gmra.mrb[0].mxu0 %v573
      %v1027 = vpop.f32.mrb[0].mxu0
      %v1028 = vadd.f32 0.0, %v1027
      %v1029 = vpop.f32.mrb[0].mxu0
      %1030 = vmatprep.mubr.f32.mxu0 0.0
      %1031 = vmatmul.mubr.f32.gmra.mrb[0].mxu0 %v576
      %v1032 = vpop.f32.mrb[0].mxu0
      %v1033 = vadd.f32 0.0, %v1032
      %v1034 = vpop.f32.mrb[0].mxu0
      %1035 = vmatprep.mubr.f32.mxu0 0.0
      %1036 = vmatmul.mubr.f32.gmra.mrb[0].mxu0 %v579
      %v1037 = vpop.f32.mrb[0].mxu0
      %v1038 = vadd.f32 0.0, %v1037
      %v1039 = vpop.f32.mrb[0].mxu0
      %1040 = vmatprep.mubr.f32.mxu0 0.0
      %1041 = vmatmul.mubr.f32.gmra.mrb[0].mxu0 %v582
      %v1042 = vpop.f32.mrb[0].mxu0
      %v1043 = vadd.f32 0.0, %v1042
      %v1044 = vpop.f32.mrb[0].mxu0
      %1045 = vmatprep.mubr.f32.mxu0 0.0
      %1046 = vmatmul.mubr.f32.gmra.mrb[0].mxu0 %v585
      %v1047 = vpop.f32.mrb[0].mxu0
      %v1048 = vadd.f32 0.0, %v1047
      %v1049 = vpop.f32.mrb[0].mxu0
      %1050 = vmatprep.mubr.f32.mxu0 0.0
      %1051 = vmatmul.mubr.f32.gmra.mrb[0].mxu0 %v588
      %v1052 = vpop.f32.mrb[0].mxu0
      %v1053 = vadd.f32 0.0, %v1052
      %v1054 = vpop.f32.mrb[0].mxu0
      %1055 = vmatprep.mubr.f32.mxu0 0.0
      %1056 = vmatmul.mubr.f32.gmra.mrb[0].mxu0 %v591
      %v1057 = vpop.f32.mrb[0].mxu0
      %v1058 = vadd.f32 0.0, %v1057
      %v1059 = vpop.f32.mrb[0].mxu0
      %1060 = vmatprep.mubr.f32.mxu0 0.0
      %1061 = vmatmul.mubr.f32.gmra.mrb[0].mxu0 %v594
      %v1062 = vpop.f32.mrb[0].mxu0
      %v1063 = vadd.f32 0.0, %v1062
      %v1064 = vpop.f32.mrb[0].mxu0
      %1065 = vmatprep.mubr.f32.mxu0 0.0
      %1066 = vmatmul.mubr.f32.gmra.mrb[0].mxu0 %v597
      %v1067 = vpop.f32.mrb[0].mxu0
      %v1068 = vadd.f32 0.0, %v1067
      %v1069 = vpop.f32.mrb[0].mxu0
      %1070 = vmatprep.mubr.f32.mxu0 0.0
      %1071 = vmatmul.mubr.f32.gmra.mrb[0].mxu0 %v600
      %v1072 = vpop.f32.mrb[0].mxu0
      %v1073 = vadd.f32 0.0, %v1072
      %v1074 = vpop.f32.mrb[0].mxu0
      %1075 = vmatprep.mubr.f32.mxu0 0.0
      %1076 = vmatmul.mubr.f32.gmra.mrb[0].mxu0 %v603
      %v1077 = vpop.f32.mrb[0].mxu0
      %v1078 = vadd.f32 0.0, %v1077
      %v1079 = vpop.f32.mrb[0].mxu0
      %1080 = vmatprep.mubr.f32.mxu0 0.0
      %1081 = vmatmul.mubr.f32.gmra.mrb[0].mxu0 %v606
      %v1082 = vpop.f32.mrb[0].mxu0
      %v1083 = vadd.f32 0.0, %v1082
      %v1084 = vpop.f32.mrb[0].mxu0
      %1085 = vmatprep.mubr.f32.mxu0 0.0
      %1086 = vmatmul.mubr.f32.gmra.mrb[0].mxu0 %v609
      %v1087 = vpop.f32.mrb[0].mxu0
      %v1088 = vadd.f32 0.0, %v1087
      %v1089 = vpop.f32.mrb[0].mxu0
      %1090 = vmatprep.mubr.f32.mxu0 0.0
      %1091 = vmatmul.mubr.f32.gmra.mrb[0].mxu0 %v612
      %v1092 = vpop.f32.mrb[0].mxu0
      %v1093 = vadd.f32 0.0, %v1092
      %v1094 = vpop.f32.mrb[0].mxu0
      %1095 = vmatprep.mubr.f32.mxu0 0.0
      %1096 = vmatmul.mubr.f32.gmra.mrb[0].mxu0 %v615
      %v1097 = vpop.f32.mrb[0].mxu0
      %v1098 = vadd.f32 0.0, %v1097
      %v1099 = vpop.f32.mrb[0].mxu0
      %1100 = vmatprep.mubr.f32.mxu0 0.0
      %1101 = vmatmul.mubr.f32.gmra.mrb[0].mxu0 %v618
      %v1102 = vpop.f32.mrb[0].mxu0
      %v1103 = vadd.f32 0.0, %v1102
      %v1104 = vpop.f32.mrb[0].mxu0
      %1105 = vmatprep.mubr.f32.mxu0 0.0
      %1106 = vmatmul.mubr.f32.gmra.mrb[0].mxu0 %v621
      %v1107 = vpop.f32.mrb[0].mxu0
      %v1108 = vadd.f32 0.0, %v1107
      %v1109 = vpop.f32.mrb[0].mxu0
      %1110 = vmatprep.mubr.f32.mxu0 0.0
      %1111 = vmatmul.mubr.f32.gmra.mrb[0].mxu0 %v624
      %v1112 = vpop.f32.mrb[0].mxu0
      %v1113 = vadd.f32 0.0, %v1112
      %v1114 = vpop.f32.mrb[0].mxu0
      %1115 = vdwg.mxu0
      %v1116 = vadd.f32 %v495, %v958
      %v1117 = vadd.f32 %v495, %v963
      %v1118 = vadd.f32 %v495, %v968
      %v1119 = vadd.f32 %v495, %v973
      %v1120 = vadd.f32 %v495, %v978
      %v1121 = vadd.f32 %v495, %v983
      %v1122 = vadd.f32 %v495, %v988
      %v1123 = vadd.f32 %v495, %v993
      %v1124 = vadd.f32 %v495, %v998
      %v1125 = vadd.f32 %v495, %v1003
      %v1126 = vadd.f32 %v495, %v1008
      %v1127 = vadd.f32 %v495, %v1013
      %v1128 = vadd.f32 %v495, %v1018
      %v1129 = vadd.f32 %v495, %v1023
      %v1130 = vadd.f32 %v495, %v1028
      %v1131 = vadd.f32 %v495, %v1033
      %v1132 = vadd.f32 %v495, %v1038
      %v1133 = vadd.f32 %v495, %v1043
      %v1134 = vadd.f32 %v495, %v1048
      %v1135 = vadd.f32 %v495, %v1053
      %v1136 = vadd.f32 %v495, %v1058
      %v1137 = vadd.f32 %v495, %v1063
      %v1138 = vadd.f32 %v495, %v1068
      %v1139 = vadd.f32 %v495, %v1073
      %v1140 = vadd.f32 %v495, %v1078
      %v1141 = vadd.f32 %v495, %v1083
      %v1142 = vadd.f32 %v495, %v1088
      %v1143 = vadd.f32 %v495, %v1093
      %v1144 = vadd.f32 %v495, %v1098
      %v1145 = vadd.f32 %v495, %v1103
      %v1146 = vadd.f32 %v495, %v1108
      %v1147 = vadd.f32 %v495, %v1113
      %v1148 = vld [vmem:[#allocation2 + $0x1] sm:$0xff]
      %v1149 = vld [vmem:[#allocation2 + $0x9] sm:$0xff]
      %v1150 = vld [vmem:[#allocation2 + $0x19] sm:$0xff]
      %v1151 = vld [vmem:[#allocation2 + $0x21] sm:$0xff]
      %v1152 = vld [vmem:[#allocation2 + $0x31] sm:$0xff]
      %v1153 = vld [vmem:[#allocation2 + $0x39] sm:$0xff]
      %v1154 = vld [vmem:[#allocation2 + $0x49] sm:$0xff]
      %v1155 = vld [vmem:[#allocation2 + $0x51] sm:$0xff]
      %v1156 = vld [vmem:[#allocation2 + $0x61] sm:$0xff]
      %v1157 = vld [vmem:[#allocation2 + $0x69] sm:$0xff]
      %v1158 = vld [vmem:[#allocation2 + $0x79] sm:$0xff]
      %v1159 = vld [vmem:[#allocation2 + $0x81] sm:$0xff]
      %v1160 = vld [vmem:[#allocation2 + $0x91] sm:$0xff]
      %v1161 = vld [vmem:[#allocation2 + $0x99] sm:$0xff]
      %v1162 = vld [vmem:[#allocation2 + $0xa9] sm:$0xff]
      %v1163 = vld [vmem:[#allocation2 + $0xb1] sm:$0xff]
      %v1164 = vld [vmem:[#allocation2 + $0xc1] sm:$0xff]
      %v1165 = vld [vmem:[#allocation2 + $0xc9] sm:$0xff]
      %v1166 = vld [vmem:[#allocation2 + $0xd9] sm:$0xff]
      %v1167 = vld [vmem:[#allocation2 + $0xe1] sm:$0xff]
      %v1168 = vld [vmem:[#allocation2 + $0xf1] sm:$0xff]
      %v1169 = vld [vmem:[#allocation2 + $0xf9] sm:$0xff]
      %v1170 = vld [vmem:[#allocation2 + $0x109] sm:$0xff]
      %v1171 = vld [vmem:[#allocation2 + $0x111] sm:$0xff]
      %v1172 = vld [vmem:[#allocation2 + $0x121] sm:$0xff]
      %v1173 = vld [vmem:[#allocation2 + $0x129] sm:$0xff]
      %v1174 = vld [vmem:[#allocation2 + $0x139] sm:$0xff]
      %v1175 = vld [vmem:[#allocation2 + $0x141] sm:$0xff]
      %v1176 = vld [vmem:[#allocation2 + $0x151] sm:$0xff]
      %v1177 = vld [vmem:[#allocation2 + $0x159] sm:$0xff]
      %v1178 = vld [vmem:[#allocation2 + $0x169] sm:$0xff]
      %v1179 = vld [vmem:[#allocation2 + $0x171] sm:$0xff]
      %s1180 = scalar_lea.vmem %s1, 4
      %v1181 = vld [vmem:[%s1180] sm:$0xf]
      %v1183 = vsel %vm306, %v1148, 0
      %v1186 = vsel %vm306, %v1149, 0
      %v1189 = vsel %vm306, %v1150, 0
      %v1192 = vsel %vm306, %v1151, 0
      %v1195 = vsel %vm306, %v1152, 0
      %v1198 = vsel %vm306, %v1153, 0
      %v1201 = vsel %vm306, %v1154, 0
      %v1204 = vsel %vm306, %v1155, 0
      %v1207 = vsel %vm306, %v1156, 0
      %v1210 = vsel %vm306, %v1157, 0
      %v1213 = vsel %vm306, %v1158, 0
      %v1216 = vsel %vm306, %v1159, 0
      %v1219 = vsel %vm306, %v1160, 0
      %v1222 = vsel %vm306, %v1161, 0
      %v1225 = vsel %vm306, %v1162, 0
      %v1228 = vsel %vm306, %v1163, 0
      %v1231 = vsel %vm306, %v1164, 0
      %v1234 = vsel %vm306, %v1165, 0
      %v1237 = vsel %vm306, %v1166, 0
      %v1240 = vsel %vm306, %v1167, 0
      %v1243 = vsel %vm306, %v1168, 0
      %v1246 = vsel %vm306, %v1169, 0
      %v1249 = vsel %vm306, %v1170, 0
      %v1252 = vsel %vm306, %v1171, 0
      %v1255 = vsel %vm306, %v1172, 0
      %v1258 = vsel %vm306, %v1173, 0
      %v1261 = vsel %vm306, %v1174, 0
      %v1264 = vsel %vm306, %v1175, 0
      %v1267 = vsel %vm306, %v1176, 0
      %v1270 = vsel %vm306, %v1177, 0
      %v1273 = vsel %vm306, %v1178, 0
      %v1276 = vsel %vm306, %v1179, 0
      %v1279 = vsel %vm626, %v1181, 0
      %1281 = vmatprep.subr.mxu0 0.0
      %1282 = vmatpush1.msra.mxu0 %v1279
      %1283 = vmatprep.subr.mxu0 0.0
      %1284 = vmatpush1.msra.mxu0 0.0
      %1285 = vmatprep.subr.mxu0 0.0
      %1286 = vmatpush1.msra.mxu0 0.0
      %1287 = vmatprep.subr.mxu0 0.0
      %1288 = vmatpush1.msra.mxu0 0.0
      %1289 = vmatprep.subr.mxu0 0.0
      %1290 = vmatpush1.msra.mxu0 0.0
      %1291 = vmatprep.subr.mxu0 0.0
      %1292 = vmatpush1.msra.mxu0 0.0
      %1293 = vmatprep.subr.mxu0 0.0
      %1294 = vmatpush1.msra.mxu0 0.0
      %1295 = vmatprep.subr.mxu0 0.0
      %1296 = vmatpush1.msra.mxu0 0.0
      %1297 = vmatprep.subr.mxu0 0.0
      %1298 = vmatpush1.msra.mxu0 0.0
      %1299 = vmatprep.subr.mxu0 0.0
      %1300 = vmatpush1.msra.mxu0 0.0
      %1301 = vmatprep.subr.mxu0 0.0
      %1302 = vmatpush1.msra.mxu0 0.0
      %1303 = vmatprep.subr.mxu0 0.0
      %1304 = vmatpush1.msra.mxu0 0.0
      %1305 = vmatprep.subr.mxu0 0.0
      %1306 = vmatpush1.msra.mxu0 0.0
      %1307 = vmatprep.subr.mxu0 0.0
      %1308 = vmatpush1.msra.mxu0 0.0
      %1309 = vmatprep.subr.mxu0 0.0
      %1310 = vmatpush1.msra.mxu0 0.0
      %1311 = vmatprep.subr.mxu0 0.0
      %1312 = vmatpush1.msra.mxu0 0.0
      %1313 = vmatprep.subr.mxu0 0.0
      %1314 = vmatpush1.msra.mxu0 0.0
      %1315 = vmatprep.subr.mxu0 0.0
      %1316 = vmatpush1.msra.mxu0 0.0
      %1317 = vmatprep.subr.mxu0 0.0
      %1318 = vmatpush1.msra.mxu0 0.0
      %1319 = vmatprep.subr.mxu0 0.0
      %1320 = vmatpush1.msra.mxu0 0.0
      %1321 = vmatprep.subr.mxu0 0.0
      %1322 = vmatpush1.msra.mxu0 0.0
      %1323 = vmatprep.subr.mxu0 0.0
      %1324 = vmatpush1.msra.mxu0 0.0
      %1325 = vmatprep.subr.mxu0 0.0
      %1326 = vmatpush1.msra.mxu0 0.0
      %1327 = vmatprep.subr.mxu0 0.0
      %1328 = vmatpush1.msra.mxu0 0.0
      %1329 = vmatprep.subr.mxu0 0.0
      %1330 = vmatpush1.msra.mxu0 0.0
      %1331 = vmatprep.subr.mxu0 0.0
      %1332 = vmatpush1.msra.mxu0 0.0
      %1333 = vmatprep.subr.mxu0 0.0
      %1334 = vmatpush1.msra.mxu0 0.0
      %1335 = vmatprep.subr.mxu0 0.0
      %1336 = vmatpush1.msra.mxu0 0.0
      %1337 = vmatprep.subr.mxu0 0.0
      %1338 = vmatpush1.msra.mxu0 0.0
      %1339 = vmatprep.subr.mxu0 0.0
      %1340 = vmatpush1.msra.mxu0 0.0
      %1341 = vmatprep.subr.mxu0 0.0
      %1342 = vmatpush1.msra.mxu0 0.0
      %1343 = vmatprep.subr.mxu0 0.0
      %1344 = vmatpush1.msra.mxu0 0.0
      %1345 = vmatprep.mubr.f32.mxu0 0.0
      %1346 = vmatmul.mubr.f32.gmra.mrb[0].mxu0 %v1183
      %v1347 = vpop.f32.mrb[0].mxu0
      %v1348 = vadd.f32 0.0, %v1347
      %v1349 = vpop.f32.mrb[0].mxu0
      %1350 = vmatprep.mubr.f32.mxu0 0.0
      %1351 = vmatmul.mubr.f32.gmra.mrb[0].mxu0 %v1186
      %v1352 = vpop.f32.mrb[0].mxu0
      %v1353 = vadd.f32 0.0, %v1352
      %v1354 = vpop.f32.mrb[0].mxu0
      %1355 = vmatprep.mubr.f32.mxu0 0.0
      %1356 = vmatmul.mubr.f32.gmra.mrb[0].mxu0 %v1189
      %v1357 = vpop.f32.mrb[0].mxu0
      %v1358 = vadd.f32 0.0, %v1357
      %v1359 = vpop.f32.mrb[0].mxu0
      %1360 = vmatprep.mubr.f32.mxu0 0.0
      %1361 = vmatmul.mubr.f32.gmra.mrb[0].mxu0 %v1192
      %v1362 = vpop.f32.mrb[0].mxu0
      %v1363 = vadd.f32 0.0, %v1362
      %v1364 = vpop.f32.mrb[0].mxu0
      %1365 = vmatprep.mubr.f32.mxu0 0.0
      %1366 = vmatmul.mubr.f32.gmra.mrb[0].mxu0 %v1195
      %v1367 = vpop.f32.mrb[0].mxu0
      %v1368 = vadd.f32 0.0, %v1367
      %v1369 = vpop.f32.mrb[0].mxu0
      %1370 = vmatprep.mubr.f32.mxu0 0.0
      %1371 = vmatmul.mubr.f32.gmra.mrb[0].mxu0 %v1198
      %v1372 = vpop.f32.mrb[0].mxu0
      %v1373 = vadd.f32 0.0, %v1372
      %v1374 = vpop.f32.mrb[0].mxu0
      %1375 = vmatprep.mubr.f32.mxu0 0.0
      %1376 = vmatmul.mubr.f32.gmra.mrb[0].mxu0 %v1201
      %v1377 = vpop.f32.mrb[0].mxu0
      %v1378 = vadd.f32 0.0, %v1377
      %v1379 = vpop.f32.mrb[0].mxu0
      %1380 = vmatprep.mubr.f32.mxu0 0.0
      %1381 = vmatmul.mubr.f32.gmra.mrb[0].mxu0 %v1204
      %v1382 = vpop.f32.mrb[0].mxu0
      %v1383 = vadd.f32 0.0, %v1382
      %v1384 = vpop.f32.mrb[0].mxu0
      %1385 = vmatprep.mubr.f32.mxu0 0.0
      %1386 = vmatmul.mubr.f32.gmra.mrb[0].mxu0 %v1207
      %v1387 = vpop.f32.mrb[0].mxu0
      %v1388 = vadd.f32 0.0, %v1387
      %v1389 = vpop.f32.mrb[0].mxu0
      %1390 = vmatprep.mubr.f32.mxu0 0.0
      %1391 = vmatmul.mubr.f32.gmra.mrb[0].mxu0 %v1210
      %v1392 = vpop.f32.mrb[0].mxu0
      %v1393 = vadd.f32 0.0, %v1392
      %v1394 = vpop.f32.mrb[0].mxu0
      %1395 = vmatprep.mubr.f32.mxu0 0.0
      %1396 = vmatmul.mubr.f32.gmra.mrb[0].mxu0 %v1213
      %v1397 = vpop.f32.mrb[0].mxu0
      %v1398 = vadd.f32 0.0, %v1397
      %v1399 = vpop.f32.mrb[0].mxu0
      %1400 = vmatprep.mubr.f32.mxu0 0.0
      %1401 = vmatmul.mubr.f32.gmra.mrb[0].mxu0 %v1216
      %v1402 = vpop.f32.mrb[0].mxu0
      %v1403 = vadd.f32 0.0, %v1402
      %v1404 = vpop.f32.mrb[0].mxu0
      %1405 = vmatprep.mubr.f32.mxu0 0.0
      %1406 = vmatmul.mubr.f32.gmra.mrb[0].mxu0 %v1219
      %v1407 = vpop.f32.mrb[0].mxu0
      %v1408 = vadd.f32 0.0, %v1407
      %v1409 = vpop.f32.mrb[0].mxu0
      %1410 = vmatprep.mubr.f32.mxu0 0.0
      %1411 = vmatmul.mubr.f32.gmra.mrb[0].mxu0 %v1222
      %v1412 = vpop.f32.mrb[0].mxu0
      %v1413 = vadd.f32 0.0, %v1412
      %v1414 = vpop.f32.mrb[0].mxu0
      %1415 = vmatprep.mubr.f32.mxu0 0.0
      %1416 = vmatmul.mubr.f32.gmra.mrb[0].mxu0 %v1225
      %v1417 = vpop.f32.mrb[0].mxu0
      %v1418 = vadd.f32 0.0, %v1417
      %v1419 = vpop.f32.mrb[0].mxu0
      %1420 = vmatprep.mubr.f32.mxu0 0.0
      %1421 = vmatmul.mubr.f32.gmra.mrb[0].mxu0 %v1228
      %v1422 = vpop.f32.mrb[0].mxu0
      %v1423 = vadd.f32 0.0, %v1422
      %v1424 = vpop.f32.mrb[0].mxu0
      %1425 = vmatprep.mubr.f32.mxu0 0.0
      %1426 = vmatmul.mubr.f32.gmra.mrb[0].mxu0 %v1231
      %v1427 = vpop.f32.mrb[0].mxu0
      %v1428 = vadd.f32 0.0, %v1427
      %v1429 = vpop.f32.mrb[0].mxu0
      %1430 = vmatprep.mubr.f32.mxu0 0.0
      %1431 = vmatmul.mubr.f32.gmra.mrb[0].mxu0 %v1234
      %v1432 = vpop.f32.mrb[0].mxu0
      %v1433 = vadd.f32 0.0, %v1432
      %v1434 = vpop.f32.mrb[0].mxu0
      %1435 = vmatprep.mubr.f32.mxu0 0.0
      %1436 = vmatmul.mubr.f32.gmra.mrb[0].mxu0 %v1237
      %v1437 = vpop.f32.mrb[0].mxu0
      %v1438 = vadd.f32 0.0, %v1437
      %v1439 = vpop.f32.mrb[0].mxu0
      %1440 = vmatprep.mubr.f32.mxu0 0.0
      %1441 = vmatmul.mubr.f32.gmra.mrb[0].mxu0 %v1240
      %v1442 = vpop.f32.mrb[0].mxu0
      %v1443 = vadd.f32 0.0, %v1442
      %v1444 = vpop.f32.mrb[0].mxu0
      %1445 = vmatprep.mubr.f32.mxu0 0.0
      %1446 = vmatmul.mubr.f32.gmra.mrb[0].mxu0 %v1243
      %v1447 = vpop.f32.mrb[0].mxu0
      %v1448 = vadd.f32 0.0, %v1447
      %v1449 = vpop.f32.mrb[0].mxu0
      %1450 = vmatprep.mubr.f32.mxu0 0.0
      %1451 = vmatmul.mubr.f32.gmra.mrb[0].mxu0 %v1246
      %v1452 = vpop.f32.mrb[0].mxu0
      %v1453 = vadd.f32 0.0, %v1452
      %v1454 = vpop.f32.mrb[0].mxu0
      %1455 = vmatprep.mubr.f32.mxu0 0.0
      %1456 = vmatmul.mubr.f32.gmra.mrb[0].mxu0 %v1249
      %v1457 = vpop.f32.mrb[0].mxu0
      %v1458 = vadd.f32 0.0, %v1457
      %v1459 = vpop.f32.mrb[0].mxu0
      %1460 = vmatprep.mubr.f32.mxu0 0.0
      %1461 = vmatmul.mubr.f32.gmra.mrb[0].mxu0 %v1252
      %v1462 = vpop.f32.mrb[0].mxu0
      %v1463 = vadd.f32 0.0, %v1462
      %v1464 = vpop.f32.mrb[0].mxu0
      %1465 = vmatprep.mubr.f32.mxu0 0.0
      %1466 = vmatmul.mubr.f32.gmra.mrb[0].mxu0 %v1255
      %v1467 = vpop.f32.mrb[0].mxu0
      %v1468 = vadd.f32 0.0, %v1467
      %v1469 = vpop.f32.mrb[0].mxu0
      %1470 = vmatprep.mubr.f32.mxu0 0.0
      %1471 = vmatmul.mubr.f32.gmra.mrb[0].mxu0 %v1258
      %v1472 = vpop.f32.mrb[0].mxu0
      %v1473 = vadd.f32 0.0, %v1472
      %v1474 = vpop.f32.mrb[0].mxu0
      %1475 = vmatprep.mubr.f32.mxu0 0.0
      %1476 = vmatmul.mubr.f32.gmra.mrb[0].mxu0 %v1261
      %v1477 = vpop.f32.mrb[0].mxu0
      %v1478 = vadd.f32 0.0, %v1477
      %v1479 = vpop.f32.mrb[0].mxu0
      %1480 = vmatprep.mubr.f32.mxu0 0.0
      %1481 = vmatmul.mubr.f32.gmra.mrb[0].mxu0 %v1264
      %v1482 = vpop.f32.mrb[0].mxu0
      %v1483 = vadd.f32 0.0, %v1482
      %v1484 = vpop.f32.mrb[0].mxu0
      %1485 = vmatprep.mubr.f32.mxu0 0.0
      %1486 = vmatmul.mubr.f32.gmra.mrb[0].mxu0 %v1267
      %v1487 = vpop.f32.mrb[0].mxu0
      %v1488 = vadd.f32 0.0, %v1487
      %v1489 = vpop.f32.mrb[0].mxu0
      %1490 = vmatprep.mubr.f32.mxu0 0.0
      %1491 = vmatmul.mubr.f32.gmra.mrb[0].mxu0 %v1270
      %v1492 = vpop.f32.mrb[0].mxu0
      %v1493 = vadd.f32 0.0, %v1492
      %v1494 = vpop.f32.mrb[0].mxu0
      %1495 = vmatprep.mubr.f32.mxu0 0.0
      %1496 = vmatmul.mubr.f32.gmra.mrb[0].mxu0 %v1273
      %v1497 = vpop.f32.mrb[0].mxu0
      %v1498 = vadd.f32 0.0, %v1497
      %v1499 = vpop.f32.mrb[0].mxu0
      %1500 = vmatprep.mubr.f32.mxu0 0.0
      %1501 = vmatmul.mubr.f32.gmra.mrb[0].mxu0 %v1276
      %v1502 = vpop.f32.mrb[0].mxu0
      %v1503 = vadd.f32 0.0, %v1502
      %v1504 = vpop.f32.mrb[0].mxu0
      %1505 = vdwg.mxu0
      %v1506 = vadd.f32 %v855, %v1348
      %v1507 = vadd.f32 %v856, %v1353
      %v1508 = vadd.f32 %v857, %v1358
      %v1509 = vadd.f32 %v858, %v1363
      %v1510 = vadd.f32 %v859, %v1368
      %v1511 = vadd.f32 %v860, %v1373
      %v1512 = vadd.f32 %v861, %v1378
      %v1513 = vadd.f32 %v862, %v1383
      %v1514 = vadd.f32 %v863, %v1388
      %v1515 = vadd.f32 %v864, %v1393
      %v1516 = vadd.f32 %v865, %v1398
      %v1517 = vadd.f32 %v866, %v1403
      %v1518 = vadd.f32 %v867, %v1408
      %v1519 = vadd.f32 %v868, %v1413
      %v1520 = vadd.f32 %v869, %v1418
      %v1521 = vadd.f32 %v870, %v1423
      %v1522 = vadd.f32 %v871, %v1428
      %v1523 = vadd.f32 %v872, %v1433
      %v1524 = vadd.f32 %v873, %v1438
      %v1525 = vadd.f32 %v874, %v1443
      %v1526 = vadd.f32 %v875, %v1448
      %v1527 = vadd.f32 %v876, %v1453
      %v1528 = vadd.f32 %v877, %v1458
      %v1529 = vadd.f32 %v878, %v1463
      %v1530 = vadd.f32 %v879, %v1468
      %v1531 = vadd.f32 %v880, %v1473
      %v1532 = vadd.f32 %v881, %v1478
      %v1533 = vadd.f32 %v882, %v1483
      %v1534 = vadd.f32 %v883, %v1488
      %v1535 = vadd.f32 %v884, %v1493
      %v1536 = vadd.f32 %v885, %v1498
      %v1537 = vadd.f32 %v886, %v1503
      %s1538 = scalar_lea.vmem %s5, 4
      %v1539 = vld [vmem:[%s1538] sm:$0xf]
      %v1541 = vsel %vm626, %v1539, 0
      %1543 = vmatprep.subr.mxu0 0.0
      %1544 = vmatpush1.msra.mxu0 %v1541
      %1545 = vmatprep.subr.mxu0 0.0
      %1546 = vmatpush1.msra.mxu0 0.0
      %1547 = vmatprep.subr.mxu0 0.0
      %1548 = vmatpush1.msra.mxu0 0.0
      %1549 = vmatprep.subr.mxu0 0.0
      %1550 = vmatpush1.msra.mxu0 0.0
      %1551 = vmatprep.subr.mxu0 0.0
      %1552 = vmatpush1.msra.mxu0 0.0
      %1553 = vmatprep.subr.mxu0 0.0
      %1554 = vmatpush1.msra.mxu0 0.0
      %1555 = vmatprep.subr.mxu0 0.0
      %1556 = vmatpush1.msra.mxu0 0.0
      %1557 = vmatprep.subr.mxu0 0.0
      %1558 = vmatpush1.msra.mxu0 0.0
      %1559 = vmatprep.subr.mxu0 0.0
      %1560 = vmatpush1.msra.mxu0 0.0
      %1561 = vmatprep.subr.mxu0 0.0
      %1562 = vmatpush1.msra.mxu0 0.0
      %1563 = vmatprep.subr.mxu0 0.0
      %1564 = vmatpush1.msra.mxu0 0.0
      %1565 = vmatprep.subr.mxu0 0.0
      %1566 = vmatpush1.msra.mxu0 0.0
      %1567 = vmatprep.subr.mxu0 0.0
      %1568 = vmatpush1.msra.mxu0 0.0
      %1569 = vmatprep.subr.mxu0 0.0
      %1570 = vmatpush1.msra.mxu0 0.0
      %1571 = vmatprep.subr.mxu0 0.0
      %1572 = vmatpush1.msra.mxu0 0.0
      %1573 = vmatprep.subr.mxu0 0.0
      %1574 = vmatpush1.msra.mxu0 0.0
      %1575 = vmatprep.subr.mxu0 0.0
      %1576 = vmatpush1.msra.mxu0 0.0
      %1577 = vmatprep.subr.mxu0 0.0
      %1578 = vmatpush1.msra.mxu0 0.0
      %1579 = vmatprep.subr.mxu0 0.0
      %1580 = vmatpush1.msra.mxu0 0.0
      %1581 = vmatprep.subr.mxu0 0.0
      %1582 = vmatpush1.msra.mxu0 0.0
      %1583 = vmatprep.subr.mxu0 0.0
      %1584 = vmatpush1.msra.mxu0 0.0
      %1585 = vmatprep.subr.mxu0 0.0
      %1586 = vmatpush1.msra.mxu0 0.0
      %1587 = vmatprep.subr.mxu0 0.0
      %1588 = vmatpush1.msra.mxu0 0.0
      %1589 = vmatprep.subr.mxu0 0.0
      %1590 = vmatpush1.msra.mxu0 0.0
      %1591 = vmatprep.subr.mxu0 0.0
      %1592 = vmatpush1.msra.mxu0 0.0
      %1593 = vmatprep.subr.mxu0 0.0
      %1594 = vmatpush1.msra.mxu0 0.0
      %1595 = vmatprep.subr.mxu0 0.0
      %1596 = vmatpush1.msra.mxu0 0.0
      %1597 = vmatprep.subr.mxu0 0.0
      %1598 = vmatpush1.msra.mxu0 0.0
      %1599 = vmatprep.subr.mxu0 0.0
      %1600 = vmatpush1.msra.mxu0 0.0
      %1601 = vmatprep.subr.mxu0 0.0
      %1602 = vmatpush1.msra.mxu0 0.0
      %1603 = vmatprep.subr.mxu0 0.0
      %1604 = vmatpush1.msra.mxu0 0.0
      %1605 = vmatprep.subr.mxu0 0.0
      %1606 = vmatpush1.msra.mxu0 0.0
      %1607 = vmatprep.mubr.f32.mxu0 0.0
      %1608 = vmatmul.mubr.f32.gmra.mrb[0].mxu0 %v1183
      %v1609 = vpop.f32.mrb[0].mxu0
      %v1610 = vadd.f32 0.0, %v1609
      %v1611 = vpop.f32.mrb[0].mxu0
      %1612 = vmatprep.mubr.f32.mxu0 0.0
      %1613 = vmatmul.mubr.f32.gmra.mrb[0].mxu0 %v1186
      %v1614 = vpop.f32.mrb[0].mxu0
      %v1615 = vadd.f32 0.0, %v1614
      %v1616 = vpop.f32.mrb[0].mxu0
      %1617 = vmatprep.mubr.f32.mxu0 0.0
      %1618 = vmatmul.mubr.f32.gmra.mrb[0].mxu0 %v1189
      %v1619 = vpop.f32.mrb[0].mxu0
      %v1620 = vadd.f32 0.0, %v1619
      %v1621 = vpop.f32.mrb[0].mxu0
      %1622 = vmatprep.mubr.f32.mxu0 0.0
      %1623 = vmatmul.mubr.f32.gmra.mrb[0].mxu0 %v1192
      %v1624 = vpop.f32.mrb[0].mxu0
      %v1625 = vadd.f32 0.0, %v1624
      %v1626 = vpop.f32.mrb[0].mxu0
      %1627 = vmatprep.mubr.f32.mxu0 0.0
      %1628 = vmatmul.mubr.f32.gmra.mrb[0].mxu0 %v1195
      %v1629 = vpop.f32.mrb[0].mxu0
      %v1630 = vadd.f32 0.0, %v1629
      %v1631 = vpop.f32.mrb[0].mxu0
      %1632 = vmatprep.mubr.f32.mxu0 0.0
      %1633 = vmatmul.mubr.f32.gmra.mrb[0].mxu0 %v1198
      %v1634 = vpop.f32.mrb[0].mxu0
      %v1635 = vadd.f32 0.0, %v1634
      %v1636 = vpop.f32.mrb[0].mxu0
      %1637 = vmatprep.mubr.f32.mxu0 0.0
      %1638 = vmatmul.mubr.f32.gmra.mrb[0].mxu0 %v1201
      %v1639 = vpop.f32.mrb[0].mxu0
      %v1640 = vadd.f32 0.0, %v1639
      %v1641 = vpop.f32.mrb[0].mxu0
      %1642 = vmatprep.mubr.f32.mxu0 0.0
      %1643 = vmatmul.mubr.f32.gmra.mrb[0].mxu0 %v1204
      %v1644 = vpop.f32.mrb[0].mxu0
      %v1645 = vadd.f32 0.0, %v1644
      %v1646 = vpop.f32.mrb[0].mxu0
      %1647 = vmatprep.mubr.f32.mxu0 0.0
      %1648 = vmatmul.mubr.f32.gmra.mrb[0].mxu0 %v1207
      %v1649 = vpop.f32.mrb[0].mxu0
      %v1650 = vadd.f32 0.0, %v1649
      %v1651 = vpop.f32.mrb[0].mxu0
      %1652 = vmatprep.mubr.f32.mxu0 0.0
      %1653 = vmatmul.mubr.f32.gmra.mrb[0].mxu0 %v1210
      %v1654 = vpop.f32.mrb[0].mxu0
      %v1655 = vadd.f32 0.0, %v1654
      %v1656 = vpop.f32.mrb[0].mxu0
      %1657 = vmatprep.mubr.f32.mxu0 0.0
      %1658 = vmatmul.mubr.f32.gmra.mrb[0].mxu0 %v1213
      %v1659 = vpop.f32.mrb[0].mxu0
      %v1660 = vadd.f32 0.0, %v1659
      %v1661 = vpop.f32.mrb[0].mxu0
      %1662 = vmatprep.mubr.f32.mxu0 0.0
      %1663 = vmatmul.mubr.f32.gmra.mrb[0].mxu0 %v1216
      %v1664 = vpop.f32.mrb[0].mxu0
      %v1665 = vadd.f32 0.0, %v1664
      %v1666 = vpop.f32.mrb[0].mxu0
      %1667 = vmatprep.mubr.f32.mxu0 0.0
      %1668 = vmatmul.mubr.f32.gmra.mrb[0].mxu0 %v1219
      %v1669 = vpop.f32.mrb[0].mxu0
      %v1670 = vadd.f32 0.0, %v1669
      %v1671 = vpop.f32.mrb[0].mxu0
      %1672 = vmatprep.mubr.f32.mxu0 0.0
      %1673 = vmatmul.mubr.f32.gmra.mrb[0].mxu0 %v1222
      %v1674 = vpop.f32.mrb[0].mxu0
      %v1675 = vadd.f32 0.0, %v1674
      %v1676 = vpop.f32.mrb[0].mxu0
      %1677 = vmatprep.mubr.f32.mxu0 0.0
      %1678 = vmatmul.mubr.f32.gmra.mrb[0].mxu0 %v1225
      %v1679 = vpop.f32.mrb[0].mxu0
      %v1680 = vadd.f32 0.0, %v1679
      %v1681 = vpop.f32.mrb[0].mxu0
      %1682 = vmatprep.mubr.f32.mxu0 0.0
      %1683 = vmatmul.mubr.f32.gmra.mrb[0].mxu0 %v1228
      %v1684 = vpop.f32.mrb[0].mxu0
      %v1685 = vadd.f32 0.0, %v1684
      %v1686 = vpop.f32.mrb[0].mxu0
      %1687 = vmatprep.mubr.f32.mxu0 0.0
      %1688 = vmatmul.mubr.f32.gmra.mrb[0].mxu0 %v1231
      %v1689 = vpop.f32.mrb[0].mxu0
      %v1690 = vadd.f32 0.0, %v1689
      %v1691 = vpop.f32.mrb[0].mxu0
      %1692 = vmatprep.mubr.f32.mxu0 0.0
      %1693 = vmatmul.mubr.f32.gmra.mrb[0].mxu0 %v1234
      %v1694 = vpop.f32.mrb[0].mxu0
      %v1695 = vadd.f32 0.0, %v1694
      %v1696 = vpop.f32.mrb[0].mxu0
      %1697 = vmatprep.mubr.f32.mxu0 0.0
      %1698 = vmatmul.mubr.f32.gmra.mrb[0].mxu0 %v1237
      %v1699 = vpop.f32.mrb[0].mxu0
      %v1700 = vadd.f32 0.0, %v1699
      %v1701 = vpop.f32.mrb[0].mxu0
      %1702 = vmatprep.mubr.f32.mxu0 0.0
      %1703 = vmatmul.mubr.f32.gmra.mrb[0].mxu0 %v1240
      %v1704 = vpop.f32.mrb[0].mxu0
      %v1705 = vadd.f32 0.0, %v1704
      %v1706 = vpop.f32.mrb[0].mxu0
      %1707 = vmatprep.mubr.f32.mxu0 0.0
      %1708 = vmatmul.mubr.f32.gmra.mrb[0].mxu0 %v1243
      %v1709 = vpop.f32.mrb[0].mxu0
      %v1710 = vadd.f32 0.0, %v1709
      %v1711 = vpop.f32.mrb[0].mxu0
      %1712 = vmatprep.mubr.f32.mxu0 0.0
      %1713 = vmatmul.mubr.f32.gmra.mrb[0].mxu0 %v1246
      %v1714 = vpop.f32.mrb[0].mxu0
      %v1715 = vadd.f32 0.0, %v1714
      %v1716 = vpop.f32.mrb[0].mxu0
      %1717 = vmatprep.mubr.f32.mxu0 0.0
      %1718 = vmatmul.mubr.f32.gmra.mrb[0].mxu0 %v1249
      %v1719 = vpop.f32.mrb[0].mxu0
      %v1720 = vadd.f32 0.0, %v1719
      %v1721 = vpop.f32.mrb[0].mxu0
      %1722 = vmatprep.mubr.f32.mxu0 0.0
      %1723 = vmatmul.mubr.f32.gmra.mrb[0].mxu0 %v1252
      %v1724 = vpop.f32.mrb[0].mxu0
      %v1725 = vadd.f32 0.0, %v1724
      %v1726 = vpop.f32.mrb[0].mxu0
      %1727 = vmatprep.mubr.f32.mxu0 0.0
      %1728 = vmatmul.mubr.f32.gmra.mrb[0].mxu0 %v1255
      %v1729 = vpop.f32.mrb[0].mxu0
      %v1730 = vadd.f32 0.0, %v1729
      %v1731 = vpop.f32.mrb[0].mxu0
      %1732 = vmatprep.mubr.f32.mxu0 0.0
      %1733 = vmatmul.mubr.f32.gmra.mrb[0].mxu0 %v1258
      %v1734 = vpop.f32.mrb[0].mxu0
      %v1735 = vadd.f32 0.0, %v1734
      %v1736 = vpop.f32.mrb[0].mxu0
      %1737 = vmatprep.mubr.f32.mxu0 0.0
      %1738 = vmatmul.mubr.f32.gmra.mrb[0].mxu0 %v1261
      %v1739 = vpop.f32.mrb[0].mxu0
      %v1740 = vadd.f32 0.0, %v1739
      %v1741 = vpop.f32.mrb[0].mxu0
      %1742 = vmatprep.mubr.f32.mxu0 0.0
      %1743 = vmatmul.mubr.f32.gmra.mrb[0].mxu0 %v1264
      %v1744 = vpop.f32.mrb[0].mxu0
      %v1745 = vadd.f32 0.0, %v1744
      %v1746 = vpop.f32.mrb[0].mxu0
      %1747 = vmatprep.mubr.f32.mxu0 0.0
      %1748 = vmatmul.mubr.f32.gmra.mrb[0].mxu0 %v1267
      %v1749 = vpop.f32.mrb[0].mxu0
      %v1750 = vadd.f32 0.0, %v1749
      %v1751 = vpop.f32.mrb[0].mxu0
      %1752 = vmatprep.mubr.f32.mxu0 0.0
      %1753 = vmatmul.mubr.f32.gmra.mrb[0].mxu0 %v1270
      %v1754 = vpop.f32.mrb[0].mxu0
      %v1755 = vadd.f32 0.0, %v1754
      %v1756 = vpop.f32.mrb[0].mxu0
      %1757 = vmatprep.mubr.f32.mxu0 0.0
      %1758 = vmatmul.mubr.f32.gmra.mrb[0].mxu0 %v1273
      %v1759 = vpop.f32.mrb[0].mxu0
      %v1760 = vadd.f32 0.0, %v1759
      %v1761 = vpop.f32.mrb[0].mxu0
      %1762 = vmatprep.mubr.f32.mxu0 0.0
      %1763 = vmatmul.mubr.f32.gmra.mrb[0].mxu0 %v1276
      %v1764 = vpop.f32.mrb[0].mxu0
      %v1765 = vadd.f32 0.0, %v1764
      %v1766 = vpop.f32.mrb[0].mxu0
      %1767 = vdwg.mxu0
      %v1768 = vadd.f32 %v1116, %v1610
      %v1769 = vadd.f32 %v1117, %v1615
      %v1770 = vadd.f32 %v1118, %v1620
      %v1771 = vadd.f32 %v1119, %v1625
      %v1772 = vadd.f32 %v1120, %v1630
      %v1773 = vadd.f32 %v1121, %v1635
      %v1774 = vadd.f32 %v1122, %v1640
      %v1775 = vadd.f32 %v1123, %v1645
      %v1776 = vadd.f32 %v1124, %v1650
      %v1777 = vadd.f32 %v1125, %v1655
      %v1778 = vadd.f32 %v1126, %v1660
      %v1779 = vadd.f32 %v1127, %v1665
      %v1780 = vadd.f32 %v1128, %v1670
      %v1781 = vadd.f32 %v1129, %v1675
      %v1782 = vadd.f32 %v1130, %v1680
      %v1783 = vadd.f32 %v1131, %v1685
      %v1784 = vadd.f32 %v1132, %v1690
      %v1785 = vadd.f32 %v1133, %v1695
      %v1786 = vadd.f32 %v1134, %v1700
      %v1787 = vadd.f32 %v1135, %v1705
      %v1788 = vadd.f32 %v1136, %v1710
      %v1789 = vadd.f32 %v1137, %v1715
      %v1790 = vadd.f32 %v1138, %v1720
      %v1791 = vadd.f32 %v1139, %v1725
      %v1792 = vadd.f32 %v1140, %v1730
      %v1793 = vadd.f32 %v1141, %v1735
      %v1794 = vadd.f32 %v1142, %v1740
      %v1795 = vadd.f32 %v1143, %v1745
      %v1796 = vadd.f32 %v1144, %v1750
      %v1797 = vadd.f32 %v1145, %v1755
      %v1798 = vadd.f32 %v1146, %v1760
      %v1799 = vadd.f32 %v1147, %v1765
      %v1800 = vld [vmem:[#allocation2 + $0x2] sm:$0xff]
      %v1801 = vld [vmem:[#allocation2 + $0xa] sm:$0xff]
      %v1802 = vld [vmem:[#allocation2 + $0x1a] sm:$0xff]
      %v1803 = vld [vmem:[#allocation2 + $0x22] sm:$0xff]
      %v1804 = vld [vmem:[#allocation2 + $0x32] sm:$0xff]
      %v1805 = vld [vmem:[#allocation2 + $0x3a] sm:$0xff]
      %v1806 = vld [vmem:[#allocation2 + $0x4a] sm:$0xff]
      %v1807 = vld [vmem:[#allocation2 + $0x52] sm:$0xff]
      %v1808 = vld [vmem:[#allocation2 + $0x62] sm:$0xff]
      %v1809 = vld [vmem:[#allocation2 + $0x6a] sm:$0xff]
      %v1810 = vld [vmem:[#allocation2 + $0x7a] sm:$0xff]
      %v1811 = vld [vmem:[#allocation2 + $0x82] sm:$0xff]
      %v1812 = vld [vmem:[#allocation2 + $0x92] sm:$0xff]
      %v1813 = vld [vmem:[#allocation2 + $0x9a] sm:$0xff]
      %v1814 = vld [vmem:[#allocation2 + $0xaa] sm:$0xff]
      %v1815 = vld [vmem:[#allocation2 + $0xb2] sm:$0xff]
      %v1816 = vld [vmem:[#allocation2 + $0xc2] sm:$0xff]
      %v1817 = vld [vmem:[#allocation2 + $0xca] sm:$0xff]
      %v1818 = vld [vmem:[#allocation2 + $0xda] sm:$0xff]
      %v1819 = vld [vmem:[#allocation2 + $0xe2] sm:$0xff]
      %v1820 = vld [vmem:[#allocation2 + $0xf2] sm:$0xff]
      %v1821 = vld [vmem:[#allocation2 + $0xfa] sm:$0xff]
      %v1822 = vld [vmem:[#allocation2 + $0x10a] sm:$0xff]
      %v1823 = vld [vmem:[#allocation2 + $0x112] sm:$0xff]
      %v1824 = vld [vmem:[#allocation2 + $0x122] sm:$0xff]
      %v1825 = vld [vmem:[#allocation2 + $0x12a] sm:$0xff]
      %v1826 = vld [vmem:[#allocation2 + $0x13a] sm:$0xff]
      %v1827 = vld [vmem:[#allocation2 + $0x142] sm:$0xff]
      %v1828 = vld [vmem:[#allocation2 + $0x152] sm:$0xff]
      %v1829 = vld [vmem:[#allocation2 + $0x15a] sm:$0xff]
      %v1830 = vld [vmem:[#allocation2 + $0x16a] sm:$0xff]
      %v1831 = vld [vmem:[#allocation2 + $0x172] sm:$0xff]
      %s1832 = scalar_lea.vmem %s1, 8
      %v1833 = vld [vmem:[%s1832] sm:$0xf]
      %v1835 = vsel %vm306, %v1800, 0
      %v1838 = vsel %vm306, %v1801, 0
      %v1841 = vsel %vm306, %v1802, 0
      %v1844 = vsel %vm306, %v1803, 0
      %v1847 = vsel %vm306, %v1804, 0
      %v1850 = vsel %vm306, %v1805, 0
      %v1853 = vsel %vm306, %v1806, 0
      %v1856 = vsel %vm306, %v1807, 0
      %v1859 = vsel %vm306, %v1808, 0
      %v1862 = vsel %vm306, %v1809, 0
      %v1865 = vsel %vm306, %v1810, 0
      %v1868 = vsel %vm306, %v1811, 0
      %v1871 = vsel %vm306, %v1812, 0
      %v1874 = vsel %vm306, %v1813, 0
      %v1877 = vsel %vm306, %v1814, 0
      %v1880 = vsel %vm306, %v1815, 0
      %v1883 = vsel %vm306, %v1816, 0
      %v1886 = vsel %vm306, %v1817, 0
      %v1889 = vsel %vm306, %v1818, 0
      %v1892 = vsel %vm306, %v1819, 0
      %v1895 = vsel %vm306, %v1820, 0
      %v1898 = vsel %vm306, %v1821, 0
      %v1901 = vsel %vm306, %v1822, 0
      %v1904 = vsel %vm306, %v1823, 0
      %v1907 = vsel %vm306, %v1824, 0
      %v1910 = vsel %vm306, %v1825, 0
      %v1913 = vsel %vm306, %v1826, 0
      %v1916 = vsel %vm306, %v1827, 0
      %v1919 = vsel %vm306, %v1828, 0
      %v1922 = vsel %vm306, %v1829, 0
      %v1925 = vsel %vm306, %v1830, 0
      %v1928 = vsel %vm306, %v1831, 0
      %v1931 = vsel %vm626, %v1833, 0
      %1933 = vmatprep.subr.mxu0 0.0
      %1934 = vmatpush1.msra.mxu0 %v1931
      %1935 = vmatprep.subr.mxu0 0.0
      %1936 = vmatpush1.msra.mxu0 0.0
      %1937 = vmatprep.subr.mxu0 0.0
      %1938 = vmatpush1.msra.mxu0 0.0
      %1939 = vmatprep.subr.mxu0 0.0
      %1940 = vmatpush1.msra.mxu0 0.0
      %1941 = vmatprep.subr.mxu0 0.0
      %1942 = vmatpush1.msra.mxu0 0.0
      %1943 = vmatprep.subr.mxu0 0.0
      %1944 = vmatpush1.msra.mxu0 0.0
      %1945 = vmatprep.subr.mxu0 0.0
      %1946 = vmatpush1.msra.mxu0 0.0
      %1947 = vmatprep.subr.mxu0 0.0
      %1948 = vmatpush1.msra.mxu0 0.0
      %1949 = vmatprep.subr.mxu0 0.0
      %1950 = vmatpush1.msra.mxu0 0.0
      %1951 = vmatprep.subr.mxu0 0.0
      %1952 = vmatpush1.msra.mxu0 0.0
      %1953 = vmatprep.subr.mxu0 0.0
      %1954 = vmatpush1.msra.mxu0 0.0
      %1955 = vmatprep.subr.mxu0 0.0
      %1956 = vmatpush1.msra.mxu0 0.0
      %1957 = vmatprep.subr.mxu0 0.0
      %1958 = vmatpush1.msra.mxu0 0.0
      %1959 = vmatprep.subr.mxu0 0.0
      %1960 = vmatpush1.msra.mxu0 0.0
      %1961 = vmatprep.subr.mxu0 0.0
      %1962 = vmatpush1.msra.mxu0 0.0
      %1963 = vmatprep.subr.mxu0 0.0
      %1964 = vmatpush1.msra.mxu0 0.0
      %1965 = vmatprep.subr.mxu0 0.0
      %1966 = vmatpush1.msra.mxu0 0.0
      %1967 = vmatprep.subr.mxu0 0.0
      %1968 = vmatpush1.msra.mxu0 0.0
      %1969 = vmatprep.subr.mxu0 0.0
      %1970 = vmatpush1.msra.mxu0 0.0
      %1971 = vmatprep.subr.mxu0 0.0
      %1972 = vmatpush1.msra.mxu0 0.0
      %1973 = vmatprep.subr.mxu0 0.0
      %1974 = vmatpush1.msra.mxu0 0.0
      %1975 = vmatprep.subr.mxu0 0.0
      %1976 = vmatpush1.msra.mxu0 0.0
      %1977 = vmatprep.subr.mxu0 0.0
      %1978 = vmatpush1.msra.mxu0 0.0
      %1979 = vmatprep.subr.mxu0 0.0
      %1980 = vmatpush1.msra.mxu0 0.0
      %1981 = vmatprep.subr.mxu0 0.0
      %1982 = vmatpush1.msra.mxu0 0.0
      %1983 = vmatprep.subr.mxu0 0.0
      %1984 = vmatpush1.msra.mxu0 0.0
      %1985 = vmatprep.subr.mxu0 0.0
      %1986 = vmatpush1.msra.mxu0 0.0
      %1987 = vmatprep.subr.mxu0 0.0
      %1988 = vmatpush1.msra.mxu0 0.0
      %1989 = vmatprep.subr.mxu0 0.0
      %1990 = vmatpush1.msra.mxu0 0.0
      %1991 = vmatprep.subr.mxu0 0.0
      %1992 = vmatpush1.msra.mxu0 0.0
      %1993 = vmatprep.subr.mxu0 0.0
      %1994 = vmatpush1.msra.mxu0 0.0
      %1995 = vmatprep.subr.mxu0 0.0
      %1996 = vmatpush1.msra.mxu0 0.0
      %1997 = vmatprep.mubr.f32.mxu0 0.0
      %1998 = vmatmul.mubr.f32.gmra.mrb[0].mxu0 %v1835
      %v1999 = vpop.f32.mrb[0].mxu0
      %v2000 = vadd.f32 0.0, %v1999
      %v2001 = vpop.f32.mrb[0].mxu0
      %2002 = vmatprep.mubr.f32.mxu0 0.0
      %2003 = vmatmul.mubr.f32.gmra.mrb[0].mxu0 %v1838
      %v2004 = vpop.f32.mrb[0].mxu0
      %v2005 = vadd.f32 0.0, %v2004
      %v2006 = vpop.f32.mrb[0].mxu0
      %2007 = vmatprep.mubr.f32.mxu0 0.0
      %2008 = vmatmul.mubr.f32.gmra.mrb[0].mxu0 %v1841
      %v2009 = vpop.f32.mrb[0].mxu0
      %v2010 = vadd.f32 0.0, %v2009
      %v2011 = vpop.f32.mrb[0].mxu0
      %2012 = vmatprep.mubr.f32.mxu0 0.0
      %2013 = vmatmul.mubr.f32.gmra.mrb[0].mxu0 %v1844
      %v2014 = vpop.f32.mrb[0].mxu0
      %v2015 = vadd.f32 0.0, %v2014
      %v2016 = vpop.f32.mrb[0].mxu0
      %2017 = vmatprep.mubr.f32.mxu0 0.0
      %2018 = vmatmul.mubr.f32.gmra.mrb[0].mxu0 %v1847
      %v2019 = vpop.f32.mrb[0].mxu0
      %v2020 = vadd.f32 0.0, %v2019
      %v2021 = vpop.f32.mrb[0].mxu0
      %2022 = vmatprep.mubr.f32.mxu0 0.0
      %2023 = vmatmul.mubr.f32.gmra.mrb[0].mxu0 %v1850
      %v2024 = vpop.f32.mrb[0].mxu0
      %v2025 = vadd.f32 0.0, %v2024
      %v2026 = vpop.f32.mrb[0].mxu0
      %2027 = vmatprep.mubr.f32.mxu0 0.0
      %2028 = vmatmul.mubr.f32.gmra.mrb[0].mxu0 %v1853
      %v2029 = vpop.f32.mrb[0].mxu0
      %v2030 = vadd.f32 0.0, %v2029
      %v2031 = vpop.f32.mrb[0].mxu0
      %2032 = vmatprep.mubr.f32.mxu0 0.0
      %2033 = vmatmul.mubr.f32.gmra.mrb[0].mxu0 %v1856
      %v2034 = vpop.f32.mrb[0].mxu0
      %v2035 = vadd.f32 0.0, %v2034
      %v2036 = vpop.f32.mrb[0].mxu0
      %2037 = vmatprep.mubr.f32.mxu0 0.0
      %2038 = vmatmul.mubr.f32.gmra.mrb[0].mxu0 %v1859
      %v2039 = vpop.f32.mrb[0].mxu0
      %v2040 = vadd.f32 0.0, %v2039
      %v2041 = vpop.f32.mrb[0].mxu0
      %2042 = vmatprep.mubr.f32.mxu0 0.0
      %2043 = vmatmul.mubr.f32.gmra.mrb[0].mxu0 %v1862
      %v2044 = vpop.f32.mrb[0].mxu0
      %v2045 = vadd.f32 0.0, %v2044
      %v2046 = vpop.f32.mrb[0].mxu0
      %2047 = vmatprep.mubr.f32.mxu0 0.0
      %2048 = vmatmul.mubr.f32.gmra.mrb[0].mxu0 %v1865
      %v2049 = vpop.f32.mrb[0].mxu0
      %v2050 = vadd.f32 0.0, %v2049
      %v2051 = vpop.f32.mrb[0].mxu0
      %2052 = vmatprep.mubr.f32.mxu0 0.0
      %2053 = vmatmul.mubr.f32.gmra.mrb[0].mxu0 %v1868
      %v2054 = vpop.f32.mrb[0].mxu0
      %v2055 = vadd.f32 0.0, %v2054
      %v2056 = vpop.f32.mrb[0].mxu0
      %2057 = vmatprep.mubr.f32.mxu0 0.0
      %2058 = vmatmul.mubr.f32.gmra.mrb[0].mxu0 %v1871
      %v2059 = vpop.f32.mrb[0].mxu0
      %v2060 = vadd.f32 0.0, %v2059
      %v2061 = vpop.f32.mrb[0].mxu0
      %2062 = vmatprep.mubr.f32.mxu0 0.0
      %2063 = vmatmul.mubr.f32.gmra.mrb[0].mxu0 %v1874
      %v2064 = vpop.f32.mrb[0].mxu0
      %v2065 = vadd.f32 0.0, %v2064
      %v2066 = vpop.f32.mrb[0].mxu0
      %2067 = vmatprep.mubr.f32.mxu0 0.0
      %2068 = vmatmul.mubr.f32.gmra.mrb[0].mxu0 %v1877
      %v2069 = vpop.f32.mrb[0].mxu0
      %v2070 = vadd.f32 0.0, %v2069
      %v2071 = vpop.f32.mrb[0].mxu0
      %2072 = vmatprep.mubr.f32.mxu0 0.0
      %2073 = vmatmul.mubr.f32.gmra.mrb[0].mxu0 %v1880
      %v2074 = vpop.f32.mrb[0].mxu0
      %v2075 = vadd.f32 0.0, %v2074
      %v2076 = vpop.f32.mrb[0].mxu0
      %2077 = vmatprep.mubr.f32.mxu0 0.0
      %2078 = vmatmul.mubr.f32.gmra.mrb[0].mxu0 %v1883
      %v2079 = vpop.f32.mrb[0].mxu0
      %v2080 = vadd.f32 0.0, %v2079
      %v2081 = vpop.f32.mrb[0].mxu0
      %2082 = vmatprep.mubr.f32.mxu0 0.0
      %2083 = vmatmul.mubr.f32.gmra.mrb[0].mxu0 %v1886
      %v2084 = vpop.f32.mrb[0].mxu0
      %v2085 = vadd.f32 0.0, %v2084
      %v2086 = vpop.f32.mrb[0].mxu0
      %2087 = vmatprep.mubr.f32.mxu0 0.0
      %2088 = vmatmul.mubr.f32.gmra.mrb[0].mxu0 %v1889
      %v2089 = vpop.f32.mrb[0].mxu0
      %v2090 = vadd.f32 0.0, %v2089
      %v2091 = vpop.f32.mrb[0].mxu0
      %2092 = vmatprep.mubr.f32.mxu0 0.0
      %2093 = vmatmul.mubr.f32.gmra.mrb[0].mxu0 %v1892
      %v2094 = vpop.f32.mrb[0].mxu0
      %v2095 = vadd.f32 0.0, %v2094
      %v2096 = vpop.f32.mrb[0].mxu0
      %2097 = vmatprep.mubr.f32.mxu0 0.0
      %2098 = vmatmul.mubr.f32.gmra.mrb[0].mxu0 %v1895
      %v2099 = vpop.f32.mrb[0].mxu0
      %v2100 = vadd.f32 0.0, %v2099
      %v2101 = vpop.f32.mrb[0].mxu0
      %2102 = vmatprep.mubr.f32.mxu0 0.0
      %2103 = vmatmul.mubr.f32.gmra.mrb[0].mxu0 %v1898
      %v2104 = vpop.f32.mrb[0].mxu0
      %v2105 = vadd.f32 0.0, %v2104
      %v2106 = vpop.f32.mrb[0].mxu0
      %2107 = vmatprep.mubr.f32.mxu0 0.0
      %2108 = vmatmul.mubr.f32.gmra.mrb[0].mxu0 %v1901
      %v2109 = vpop.f32.mrb[0].mxu0
      %v2110 = vadd.f32 0.0, %v2109
      %v2111 = vpop.f32.mrb[0].mxu0
      %2112 = vmatprep.mubr.f32.mxu0 0.0
      %2113 = vmatmul.mubr.f32.gmra.mrb[0].mxu0 %v1904
      %v2114 = vpop.f32.mrb[0].mxu0
      %v2115 = vadd.f32 0.0, %v2114
      %v2116 = vpop.f32.mrb[0].mxu0
      %2117 = vmatprep.mubr.f32.mxu0 0.0
      %2118 = vmatmul.mubr.f32.gmra.mrb[0].mxu0 %v1907
      %v2119 = vpop.f32.mrb[0].mxu0
      %v2120 = vadd.f32 0.0, %v2119
      %v2121 = vpop.f32.mrb[0].mxu0
      %2122 = vmatprep.mubr.f32.mxu0 0.0
      %2123 = vmatmul.mubr.f32.gmra.mrb[0].mxu0 %v1910
      %v2124 = vpop.f32.mrb[0].mxu0
      %v2125 = vadd.f32 0.0, %v2124
      %v2126 = vpop.f32.mrb[0].mxu0
      %2127 = vmatprep.mubr.f32.mxu0 0.0
      %2128 = vmatmul.mubr.f32.gmra.mrb[0].mxu0 %v1913
      %v2129 = vpop.f32.mrb[0].mxu0
      %v2130 = vadd.f32 0.0, %v2129
      %v2131 = vpop.f32.mrb[0].mxu0
      %2132 = vmatprep.mubr.f32.mxu0 0.0
      %2133 = vmatmul.mubr.f32.gmra.mrb[0].mxu0 %v1916
      %v2134 = vpop.f32.mrb[0].mxu0
      %v2135 = vadd.f32 0.0, %v2134
      %v2136 = vpop.f32.mrb[0].mxu0
      %2137 = vmatprep.mubr.f32.mxu0 0.0
      %2138 = vmatmul.mubr.f32.gmra.mrb[0].mxu0 %v1919
      %v2139 = vpop.f32.mrb[0].mxu0
      %v2140 = vadd.f32 0.0, %v2139
      %v2141 = vpop.f32.mrb[0].mxu0
      %2142 = vmatprep.mubr.f32.mxu0 0.0
      %2143 = vmatmul.mubr.f32.gmra.mrb[0].mxu0 %v1922
      %v2144 = vpop.f32.mrb[0].mxu0
      %v2145 = vadd.f32 0.0, %v2144
      %v2146 = vpop.f32.mrb[0].mxu0
      %2147 = vmatprep.mubr.f32.mxu0 0.0
      %2148 = vmatmul.mubr.f32.gmra.mrb[0].mxu0 %v1925
      %v2149 = vpop.f32.mrb[0].mxu0
      %v2150 = vadd.f32 0.0, %v2149
      %v2151 = vpop.f32.mrb[0].mxu0
      %2152 = vmatprep.mubr.f32.mxu0 0.0
      %2153 = vmatmul.mubr.f32.gmra.mrb[0].mxu0 %v1928
      %v2154 = vpop.f32.mrb[0].mxu0
      %v2155 = vadd.f32 0.0, %v2154
      %v2156 = vpop.f32.mrb[0].mxu0
      %2157 = vdwg.mxu0
      %v2158 = vadd.f32 %v1506, %v2000
      %v2159 = vadd.f32 %v1507, %v2005
      %v2160 = vadd.f32 %v1508, %v2010
      %v2161 = vadd.f32 %v1509, %v2015
      %v2162 = vadd.f32 %v1510, %v2020
      %v2163 = vadd.f32 %v1511, %v2025
      %v2164 = vadd.f32 %v1512, %v2030
      %v2165 = vadd.f32 %v1513, %v2035
      %v2166 = vadd.f32 %v1514, %v2040
      %v2167 = vadd.f32 %v1515, %v2045
      %v2168 = vadd.f32 %v1516, %v2050
      %v2169 = vadd.f32 %v1517, %v2055
      %v2170 = vadd.f32 %v1518, %v2060
      %v2171 = vadd.f32 %v1519, %v2065
      %v2172 = vadd.f32 %v1520, %v2070
      %v2173 = vadd.f32 %v1521, %v2075
      %v2174 = vadd.f32 %v1522, %v2080
      %v2175 = vadd.f32 %v1523, %v2085
      %v2176 = vadd.f32 %v1524, %v2090
      %v2177 = vadd.f32 %v1525, %v2095
      %v2178 = vadd.f32 %v1526, %v2100
      %v2179 = vadd.f32 %v1527, %v2105
      %v2180 = vadd.f32 %v1528, %v2110
      %v2181 = vadd.f32 %v1529, %v2115
      %v2182 = vadd.f32 %v1530, %v2120
      %v2183 = vadd.f32 %v1531, %v2125
      %v2184 = vadd.f32 %v1532, %v2130
      %v2185 = vadd.f32 %v1533, %v2135
      %v2186 = vadd.f32 %v1534, %v2140
      %v2187 = vadd.f32 %v1535, %v2145
      %v2188 = vadd.f32 %v1536, %v2150
      %v2189 = vadd.f32 %v1537, %v2155
      %s2190 = scalar_lea.vmem %s5, 8
      %v2191 = vld [vmem:[%s2190] sm:$0xf]
      %v2193 = vsel %vm626, %v2191, 0
      %2195 = vmatprep.subr.mxu0 0.0
      %2196 = vmatpush1.msra.mxu0 %v2193
      %2197 = vmatprep.subr.mxu0 0.0
      %2198 = vmatpush1.msra.mxu0 0.0
      %2199 = vmatprep.subr.mxu0 0.0
      %2200 = vmatpush1.msra.mxu0 0.0
      %2201 = vmatprep.subr.mxu0 0.0
      %2202 = vmatpush1.msra.mxu0 0.0
      %2203 = vmatprep.subr.mxu0 0.0
      %2204 = vmatpush1.msra.mxu0 0.0
      %2205 = vmatprep.subr.mxu0 0.0
      %2206 = vmatpush1.msra.mxu0 0.0
      %2207 = vmatprep.subr.mxu0 0.0
      %2208 = vmatpush1.msra.mxu0 0.0
      %2209 = vmatprep.subr.mxu0 0.0
      %2210 = vmatpush1.msra.mxu0 0.0
      %2211 = vmatprep.subr.mxu0 0.0
      %2212 = vmatpush1.msra.mxu0 0.0
      %2213 = vmatprep.subr.mxu0 0.0
      %2214 = vmatpush1.msra.mxu0 0.0
      %2215 = vmatprep.subr.mxu0 0.0
      %2216 = vmatpush1.msra.mxu0 0.0
      %2217 = vmatprep.subr.mxu0 0.0
      %2218 = vmatpush1.msra.mxu0 0.0
      %2219 = vmatprep.subr.mxu0 0.0
      %2220 = vmatpush1.msra.mxu0 0.0
      %2221 = vmatprep.subr.mxu0 0.0
      %2222 = vmatpush1.msra.mxu0 0.0
      %2223 = vmatprep.subr.mxu0 0.0
      %2224 = vmatpush1.msra.mxu0 0.0
      %2225 = vmatprep.subr.mxu0 0.0
      %2226 = vmatpush1.msra.mxu0 0.0
      %2227 = vmatprep.subr.mxu0 0.0
      %2228 = vmatpush1.msra.mxu0 0.0
      %2229 = vmatprep.subr.mxu0 0.0
      %2230 = vmatpush1.msra.mxu0 0.0
      %2231 = vmatprep.subr.mxu0 0.0
      %2232 = vmatpush1.msra.mxu0 0.0
      %2233 = vmatprep.subr.mxu0 0.0
      %2234 = vmatpush1.msra.mxu0 0.0
      %2235 = vmatprep.subr.mxu0 0.0
      %2236 = vmatpush1.msra.mxu0 0.0
      %2237 = vmatprep.subr.mxu0 0.0
      %2238 = vmatpush1.msra.mxu0 0.0
      %2239 = vmatprep.subr.mxu0 0.0
      %2240 = vmatpush1.msra.mxu0 0.0
      %2241 = vmatprep.subr.mxu0 0.0
      %2242 = vmatpush1.msra.mxu0 0.0
      %2243 = vmatprep.subr.mxu0 0.0
      %2244 = vmatpush1.msra.mxu0 0.0
      %2245 = vmatprep.subr.mxu0 0.0
      %2246 = vmatpush1.msra.mxu0 0.0
      %2247 = vmatprep.subr.mxu0 0.0
      %2248 = vmatpush1.msra.mxu0 0.0
      %2249 = vmatprep.subr.mxu0 0.0
      %2250 = vmatpush1.msra.mxu0 0.0
      %2251 = vmatprep.subr.mxu0 0.0
      %2252 = vmatpush1.msra.mxu0 0.0
      %2253 = vmatprep.subr.mxu0 0.0
      %2254 = vmatpush1.msra.mxu0 0.0
      %2255 = vmatprep.subr.mxu0 0.0
      %2256 = vmatpush1.msra.mxu0 0.0
      %2257 = vmatprep.subr.mxu0 0.0
      %2258 = vmatpush1.msra.mxu0 0.0
      %2259 = vmatprep.mubr.f32.mxu0 0.0
      %2260 = vmatmul.mubr.f32.gmra.mrb[0].mxu0 %v1835
      %v2261 = vpop.f32.mrb[0].mxu0
      %v2262 = vadd.f32 0.0, %v2261
      %v2263 = vpop.f32.mrb[0].mxu0
      %2264 = vmatprep.mubr.f32.mxu0 0.0
      %2265 = vmatmul.mubr.f32.gmra.mrb[0].mxu0 %v1838
      %v2266 = vpop.f32.mrb[0].mxu0
      %v2267 = vadd.f32 0.0, %v2266
      %v2268 = vpop.f32.mrb[0].mxu0
      %2269 = vmatprep.mubr.f32.mxu0 0.0
      %2270 = vmatmul.mubr.f32.gmra.mrb[0].mxu0 %v1841
      %v2271 = vpop.f32.mrb[0].mxu0
      %v2272 = vadd.f32 0.0, %v2271
      %v2273 = vpop.f32.mrb[0].mxu0
      %2274 = vmatprep.mubr.f32.mxu0 0.0
      %2275 = vmatmul.mubr.f32.gmra.mrb[0].mxu0 %v1844
      %v2276 = vpop.f32.mrb[0].mxu0
      %v2277 = vadd.f32 0.0, %v2276
      %v2278 = vpop.f32.mrb[0].mxu0
      %2279 = vmatprep.mubr.f32.mxu0 0.0
      %2280 = vmatmul.mubr.f32.gmra.mrb[0].mxu0 %v1847
      %v2281 = vpop.f32.mrb[0].mxu0
      %v2282 = vadd.f32 0.0, %v2281
      %v2283 = vpop.f32.mrb[0].mxu0
      %2284 = vmatprep.mubr.f32.mxu0 0.0
      %2285 = vmatmul.mubr.f32.gmra.mrb[0].mxu0 %v1850
      %v2286 = vpop.f32.mrb[0].mxu0
      %v2287 = vadd.f32 0.0, %v2286
      %v2288 = vpop.f32.mrb[0].mxu0
      %2289 = vmatprep.mubr.f32.mxu0 0.0
      %2290 = vmatmul.mubr.f32.gmra.mrb[0].mxu0 %v1853
      %v2291 = vpop.f32.mrb[0].mxu0
      %v2292 = vadd.f32 0.0, %v2291
      %v2293 = vpop.f32.mrb[0].mxu0
      %2294 = vmatprep.mubr.f32.mxu0 0.0
      %2295 = vmatmul.mubr.f32.gmra.mrb[0].mxu0 %v1856
      %v2296 = vpop.f32.mrb[0].mxu0
      %v2297 = vadd.f32 0.0, %v2296
      %v2298 = vpop.f32.mrb[0].mxu0
      %2299 = vmatprep.mubr.f32.mxu0 0.0
      %2300 = vmatmul.mubr.f32.gmra.mrb[0].mxu0 %v1859
      %v2301 = vpop.f32.mrb[0].mxu0
      %v2302 = vadd.f32 0.0, %v2301
      %v2303 = vpop.f32.mrb[0].mxu0
      %2304 = vmatprep.mubr.f32.mxu0 0.0
      %2305 = vmatmul.mubr.f32.gmra.mrb[0].mxu0 %v1862
      %v2306 = vpop.f32.mrb[0].mxu0
      %v2307 = vadd.f32 0.0, %v2306
      %v2308 = vpop.f32.mrb[0].mxu0
      %2309 = vmatprep.mubr.f32.mxu0 0.0
      %2310 = vmatmul.mubr.f32.gmra.mrb[0].mxu0 %v1865
      %v2311 = vpop.f32.mrb[0].mxu0
      %v2312 = vadd.f32 0.0, %v2311
      %v2313 = vpop.f32.mrb[0].mxu0
      %2314 = vmatprep.mubr.f32.mxu0 0.0
      %2315 = vmatmul.mubr.f32.gmra.mrb[0].mxu0 %v1868
      %v2316 = vpop.f32.mrb[0].mxu0
      %v2317 = vadd.f32 0.0, %v2316
      %v2318 = vpop.f32.mrb[0].mxu0
      %2319 = vmatprep.mubr.f32.mxu0 0.0
      %2320 = vmatmul.mubr.f32.gmra.mrb[0].mxu0 %v1871
      %v2321 = vpop.f32.mrb[0].mxu0
      %v2322 = vadd.f32 0.0, %v2321
      %v2323 = vpop.f32.mrb[0].mxu0
      %2324 = vmatprep.mubr.f32.mxu0 0.0
      %2325 = vmatmul.mubr.f32.gmra.mrb[0].mxu0 %v1874
      %v2326 = vpop.f32.mrb[0].mxu0
      %v2327 = vadd.f32 0.0, %v2326
      %v2328 = vpop.f32.mrb[0].mxu0
      %2329 = vmatprep.mubr.f32.mxu0 0.0
      %2330 = vmatmul.mubr.f32.gmra.mrb[0].mxu0 %v1877
      %v2331 = vpop.f32.mrb[0].mxu0
      %v2332 = vadd.f32 0.0, %v2331
      %v2333 = vpop.f32.mrb[0].mxu0
      %2334 = vmatprep.mubr.f32.mxu0 0.0
      %2335 = vmatmul.mubr.f32.gmra.mrb[0].mxu0 %v1880
      %v2336 = vpop.f32.mrb[0].mxu0
      %v2337 = vadd.f32 0.0, %v2336
      %v2338 = vpop.f32.mrb[0].mxu0
      %2339 = vmatprep.mubr.f32.mxu0 0.0
      %2340 = vmatmul.mubr.f32.gmra.mrb[0].mxu0 %v1883
      %v2341 = vpop.f32.mrb[0].mxu0
      %v2342 = vadd.f32 0.0, %v2341
      %v2343 = vpop.f32.mrb[0].mxu0
      %2344 = vmatprep.mubr.f32.mxu0 0.0
      %2345 = vmatmul.mubr.f32.gmra.mrb[0].mxu0 %v1886
      %v2346 = vpop.f32.mrb[0].mxu0
      %v2347 = vadd.f32 0.0, %v2346
      %v2348 = vpop.f32.mrb[0].mxu0
      %2349 = vmatprep.mubr.f32.mxu0 0.0
      %2350 = vmatmul.mubr.f32.gmra.mrb[0].mxu0 %v1889
      %v2351 = vpop.f32.mrb[0].mxu0
      %v2352 = vadd.f32 0.0, %v2351
      %v2353 = vpop.f32.mrb[0].mxu0
      %2354 = vmatprep.mubr.f32.mxu0 0.0
      %2355 = vmatmul.mubr.f32.gmra.mrb[0].mxu0 %v1892
      %v2356 = vpop.f32.mrb[0].mxu0
      %v2357 = vadd.f32 0.0, %v2356
      %v2358 = vpop.f32.mrb[0].mxu0
      %2359 = vmatprep.mubr.f32.mxu0 0.0
      %2360 = vmatmul.mubr.f32.gmra.mrb[0].mxu0 %v1895
      %v2361 = vpop.f32.mrb[0].mxu0
      %v2362 = vadd.f32 0.0, %v2361
      %v2363 = vpop.f32.mrb[0].mxu0
      %2364 = vmatprep.mubr.f32.mxu0 0.0
      %2365 = vmatmul.mubr.f32.gmra.mrb[0].mxu0 %v1898
      %v2366 = vpop.f32.mrb[0].mxu0
      %v2367 = vadd.f32 0.0, %v2366
      %v2368 = vpop.f32.mrb[0].mxu0
      %2369 = vmatprep.mubr.f32.mxu0 0.0
      %2370 = vmatmul.mubr.f32.gmra.mrb[0].mxu0 %v1901
      %v2371 = vpop.f32.mrb[0].mxu0
      %v2372 = vadd.f32 0.0, %v2371
      %v2373 = vpop.f32.mrb[0].mxu0
      %2374 = vmatprep.mubr.f32.mxu0 0.0
      %2375 = vmatmul.mubr.f32.gmra.mrb[0].mxu0 %v1904
      %v2376 = vpop.f32.mrb[0].mxu0
      %v2377 = vadd.f32 0.0, %v2376
      %v2378 = vpop.f32.mrb[0].mxu0
      %2379 = vmatprep.mubr.f32.mxu0 0.0
      %2380 = vmatmul.mubr.f32.gmra.mrb[0].mxu0 %v1907
      %v2381 = vpop.f32.mrb[0].mxu0
      %v2382 = vadd.f32 0.0, %v2381
      %v2383 = vpop.f32.mrb[0].mxu0
      %2384 = vmatprep.mubr.f32.mxu0 0.0
      %2385 = vmatmul.mubr.f32.gmra.mrb[0].mxu0 %v1910
      %v2386 = vpop.f32.mrb[0].mxu0
      %v2387 = vadd.f32 0.0, %v2386
      %v2388 = vpop.f32.mrb[0].mxu0
      %2389 = vmatprep.mubr.f32.mxu0 0.0
      %2390 = vmatmul.mubr.f32.gmra.mrb[0].mxu0 %v1913
      %v2391 = vpop.f32.mrb[0].mxu0
      %v2392 = vadd.f32 0.0, %v2391
      %v2393 = vpop.f32.mrb[0].mxu0
      %2394 = vmatprep.mubr.f32.mxu0 0.0
      %2395 = vmatmul.mubr.f32.gmra.mrb[0].mxu0 %v1916
      %v2396 = vpop.f32.mrb[0].mxu0
      %v2397 = vadd.f32 0.0, %v2396
      %v2398 = vpop.f32.mrb[0].mxu0
      %2399 = vmatprep.mubr.f32.mxu0 0.0
      %2400 = vmatmul.mubr.f32.gmra.mrb[0].mxu0 %v1919
      %v2401 = vpop.f32.mrb[0].mxu0
      %v2402 = vadd.f32 0.0, %v2401
      %v2403 = vpop.f32.mrb[0].mxu0
      %2404 = vmatprep.mubr.f32.mxu0 0.0
      %2405 = vmatmul.mubr.f32.gmra.mrb[0].mxu0 %v1922
      %v2406 = vpop.f32.mrb[0].mxu0
      %v2407 = vadd.f32 0.0, %v2406
      %v2408 = vpop.f32.mrb[0].mxu0
      %2409 = vmatprep.mubr.f32.mxu0 0.0
      %2410 = vmatmul.mubr.f32.gmra.mrb[0].mxu0 %v1925
      %v2411 = vpop.f32.mrb[0].mxu0
      %v2412 = vadd.f32 0.0, %v2411
      %v2413 = vpop.f32.mrb[0].mxu0
      %2414 = vmatprep.mubr.f32.mxu0 0.0
      %2415 = vmatmul.mubr.f32.gmra.mrb[0].mxu0 %v1928
      %v2416 = vpop.f32.mrb[0].mxu0
      %v2417 = vadd.f32 0.0, %v2416
      %v2418 = vpop.f32.mrb[0].mxu0
      %2419 = vdwg.mxu0
      %v2420 = vadd.f32 %v1768, %v2262
      %v2421 = vadd.f32 %v1769, %v2267
      %v2422 = vadd.f32 %v1770, %v2272
      %v2423 = vadd.f32 %v1771, %v2277
      %v2424 = vadd.f32 %v1772, %v2282
      %v2425 = vadd.f32 %v1773, %v2287
      %v2426 = vadd.f32 %v1774, %v2292
      %v2427 = vadd.f32 %v1775, %v2297
      %v2428 = vadd.f32 %v1776, %v2302
      %v2429 = vadd.f32 %v1777, %v2307
      %v2430 = vadd.f32 %v1778, %v2312
      %v2431 = vadd.f32 %v1779, %v2317
      %v2432 = vadd.f32 %v1780, %v2322
      %v2433 = vadd.f32 %v1781, %v2327
      %v2434 = vadd.f32 %v1782, %v2332
      %v2435 = vadd.f32 %v1783, %v2337
      %v2436 = vadd.f32 %v1784, %v2342
      %v2437 = vadd.f32 %v1785, %v2347
      %v2438 = vadd.f32 %v1786, %v2352
      %v2439 = vadd.f32 %v1787, %v2357
      %v2440 = vadd.f32 %v1788, %v2362
      %v2441 = vadd.f32 %v1789, %v2367
      %v2442 = vadd.f32 %v1790, %v2372
      %v2443 = vadd.f32 %v1791, %v2377
      %v2444 = vadd.f32 %v1792, %v2382
      %v2445 = vadd.f32 %v1793, %v2387
      %v2446 = vadd.f32 %v1794, %v2392
      %v2447 = vadd.f32 %v1795, %v2397
      %v2448 = vadd.f32 %v1796, %v2402
      %v2449 = vadd.f32 %v1797, %v2407
      %v2450 = vadd.f32 %v1798, %v2412
      %v2451 = vadd.f32 %v1799, %v2417
      %v2452 = vld [vmem:[%s450] sm:$0xff]
      %v2453 = vld [vmem:[%s450 + $0x8] sm:$0xff]
      %v2454 = vld [vmem:[%s450 + $0x18] sm:$0xff]
      %v2455 = vld [vmem:[%s450 + $0x20] sm:$0xff]
      %v2456 = vld [vmem:[%s450 + $0x30] sm:$0xff]
      %v2457 = vld [vmem:[%s450 + $0x38] sm:$0xff]
      %v2458 = vld [vmem:[%s450 + $0x48] sm:$0xff]
      %v2459 = vld [vmem:[%s450 + $0x50] sm:$0xff]
      %v2460 = vld [vmem:[%s450 + $0x60] sm:$0xff]
      %v2461 = vld [vmem:[%s450 + $0x68] sm:$0xff]
      %v2462 = vld [vmem:[%s450 + $0x78] sm:$0xff]
      %v2463 = vld [vmem:[%s450 + $0x80] sm:$0xff]
      %v2464 = vld [vmem:[%s450 + $0x90] sm:$0xff]
      %v2465 = vld [vmem:[%s450 + $0x98] sm:$0xff]
      %v2466 = vld [vmem:[%s450 + $0xa8] sm:$0xff]
      %v2467 = vld [vmem:[%s450 + $0xb0] sm:$0xff]
      %v2468 = vld [vmem:[%s450 + $0xc0] sm:$0xff]
      %v2469 = vld [vmem:[%s450 + $0xc8] sm:$0xff]
      %v2470 = vld [vmem:[%s450 + $0xd8] sm:$0xff]
      %v2471 = vld [vmem:[%s450 + $0xe0] sm:$0xff]
      %v2472 = vld [vmem:[%s450 + $0xf0] sm:$0xff]
      %v2473 = vld [vmem:[%s450 + $0xf8] sm:$0xff]
      %v2474 = vld [vmem:[%s450 + $0x108] sm:$0xff]
      %v2475 = vld [vmem:[%s450 + $0x110] sm:$0xff]
      %v2476 = vld [vmem:[%s450 + $0x120] sm:$0xff]
      %v2477 = vld [vmem:[%s450 + $0x128] sm:$0xff]
      %v2478 = vld [vmem:[%s450 + $0x138] sm:$0xff]
      %v2479 = vld [vmem:[%s450 + $0x140] sm:$0xff]
      %v2480 = vld [vmem:[%s450 + $0x150] sm:$0xff]
      %v2481 = vld [vmem:[%s450 + $0x158] sm:$0xff]
      %v2482 = vld [vmem:[%s450 + $0x168] sm:$0xff]
      %v2483 = vld [vmem:[%s450 + $0x170] sm:$0xff]
      %s2484 = scalar_lea.vmem %s1, 12
      %v2485 = vld [vmem:[%s2484] sm:$0xf]
      %v2487 = vsel %vm306, %v2452, 0
      %v2490 = vsel %vm306, %v2453, 0
      %v2493 = vsel %vm306, %v2454, 0
      %v2496 = vsel %vm306, %v2455, 0
      %v2499 = vsel %vm306, %v2456, 0
      %v2502 = vsel %vm306, %v2457, 0
      %v2505 = vsel %vm306, %v2458, 0
      %v2508 = vsel %vm306, %v2459, 0
      %v2511 = vsel %vm306, %v2460, 0
      %v2514 = vsel %vm306, %v2461, 0
      %v2517 = vsel %vm306, %v2462, 0
      %v2520 = vsel %vm306, %v2463, 0
      %v2523 = vsel %vm306, %v2464, 0
      %v2526 = vsel %vm306, %v2465, 0
      %v2529 = vsel %vm306, %v2466, 0
      %v2532 = vsel %vm306, %v2467, 0
      %v2535 = vsel %vm306, %v2468, 0
      %v2538 = vsel %vm306, %v2469, 0
      %v2541 = vsel %vm306, %v2470, 0
      %v2544 = vsel %vm306, %v2471, 0
      %v2547 = vsel %vm306, %v2472, 0
      %v2550 = vsel %vm306, %v2473, 0
      %v2553 = vsel %vm306, %v2474, 0
      %v2556 = vsel %vm306, %v2475, 0
      %v2559 = vsel %vm306, %v2476, 0
      %v2562 = vsel %vm306, %v2477, 0
      %v2565 = vsel %vm306, %v2478, 0
      %v2568 = vsel %vm306, %v2479, 0
      %v2571 = vsel %vm306, %v2480, 0
      %v2574 = vsel %vm306, %v2481, 0
      %v2577 = vsel %vm306, %v2482, 0
      %v2580 = vsel %vm306, %v2483, 0
      %v2583 = vsel %vm626, %v2485, 0
      %2585 = vmatprep.subr.mxu0 0.0
      %2586 = vmatpush1.msra.mxu0 %v2583
      %2587 = vmatprep.subr.mxu0 0.0
      %2588 = vmatpush1.msra.mxu0 0.0
      %2589 = vmatprep.subr.mxu0 0.0
      %2590 = vmatpush1.msra.mxu0 0.0
      %2591 = vmatprep.subr.mxu0 0.0
      %2592 = vmatpush1.msra.mxu0 0.0
      %2593 = vmatprep.subr.mxu0 0.0
      %2594 = vmatpush1.msra.mxu0 0.0
      %2595 = vmatprep.subr.mxu0 0.0
      %2596 = vmatpush1.msra.mxu0 0.0
      %2597 = vmatprep.subr.mxu0 0.0
      %2598 = vmatpush1.msra.mxu0 0.0
      %2599 = vmatprep.subr.mxu0 0.0
      %2600 = vmatpush1.msra.mxu0 0.0
      %2601 = vmatprep.subr.mxu0 0.0
      %2602 = vmatpush1.msra.mxu0 0.0
      %2603 = vmatprep.subr.mxu0 0.0
      %2604 = vmatpush1.msra.mxu0 0.0
      %2605 = vmatprep.subr.mxu0 0.0
      %2606 = vmatpush1.msra.mxu0 0.0
      %2607 = vmatprep.subr.mxu0 0.0
      %2608 = vmatpush1.msra.mxu0 0.0
      %2609 = vmatprep.subr.mxu0 0.0
      %2610 = vmatpush1.msra.mxu0 0.0
      %2611 = vmatprep.subr.mxu0 0.0
      %2612 = vmatpush1.msra.mxu0 0.0
      %2613 = vmatprep.subr.mxu0 0.0
      %2614 = vmatpush1.msra.mxu0 0.0
      %2615 = vmatprep.subr.mxu0 0.0
      %2616 = vmatpush1.msra.mxu0 0.0
      %2617 = vmatprep.subr.mxu0 0.0
      %2618 = vmatpush1.msra.mxu0 0.0
      %2619 = vmatprep.subr.mxu0 0.0
      %2620 = vmatpush1.msra.mxu0 0.0
      %2621 = vmatprep.subr.mxu0 0.0
      %2622 = vmatpush1.msra.mxu0 0.0
      %2623 = vmatprep.subr.mxu0 0.0
      %2624 = vmatpush1.msra.mxu0 0.0
      %2625 = vmatprep.subr.mxu0 0.0
      %2626 = vmatpush1.msra.mxu0 0.0
      %2627 = vmatprep.subr.mxu0 0.0
      %2628 = vmatpush1.msra.mxu0 0.0
      %2629 = vmatprep.subr.mxu0 0.0
      %2630 = vmatpush1.msra.mxu0 0.0
      %2631 = vmatprep.subr.mxu0 0.0
      %2632 = vmatpush1.msra.mxu0 0.0
      %2633 = vmatprep.subr.mxu0 0.0
      %2634 = vmatpush1.msra.mxu0 0.0
      %2635 = vmatprep.subr.mxu0 0.0
      %2636 = vmatpush1.msra.mxu0 0.0
      %2637 = vmatprep.subr.mxu0 0.0
      %2638 = vmatpush1.msra.mxu0 0.0
      %2639 = vmatprep.subr.mxu0 0.0
      %2640 = vmatpush1.msra.mxu0 0.0
      %2641 = vmatprep.subr.mxu0 0.0
      %2642 = vmatpush1.msra.mxu0 0.0
      %2643 = vmatprep.subr.mxu0 0.0
      %2644 = vmatpush1.msra.mxu0 0.0
      %2645 = vmatprep.subr.mxu0 0.0
      %2646 = vmatpush1.msra.mxu0 0.0
      %2647 = vmatprep.subr.mxu0 0.0
      %2648 = vmatpush1.msra.mxu0 0.0
      %2649 = vmatprep.mubr.f32.mxu0 0.0
      %2650 = vmatmul.mubr.f32.gmra.mrb[0].mxu0 %v2487
      %v2651 = vpop.f32.mrb[0].mxu0
      %v2652 = vadd.f32 0.0, %v2651
      %v2653 = vpop.f32.mrb[0].mxu0
      %2654 = vmatprep.mubr.f32.mxu0 0.0
      %2655 = vmatmul.mubr.f32.gmra.mrb[0].mxu0 %v2490
      %v2656 = vpop.f32.mrb[0].mxu0
      %v2657 = vadd.f32 0.0, %v2656
      %v2658 = vpop.f32.mrb[0].mxu0
      %2659 = vmatprep.mubr.f32.mxu0 0.0
      %2660 = vmatmul.mubr.f32.gmra.mrb[0].mxu0 %v2493
      %v2661 = vpop.f32.mrb[0].mxu0
      %v2662 = vadd.f32 0.0, %v2661
      %v2663 = vpop.f32.mrb[0].mxu0
      %2664 = vmatprep.mubr.f32.mxu0 0.0
      %2665 = vmatmul.mubr.f32.gmra.mrb[0].mxu0 %v2496
      %v2666 = vpop.f32.mrb[0].mxu0
      %v2667 = vadd.f32 0.0, %v2666
      %v2668 = vpop.f32.mrb[0].mxu0
      %2669 = vmatprep.mubr.f32.mxu0 0.0
      %2670 = vmatmul.mubr.f32.gmra.mrb[0].mxu0 %v2499
      %v2671 = vpop.f32.mrb[0].mxu0
      %v2672 = vadd.f32 0.0, %v2671
      %v2673 = vpop.f32.mrb[0].mxu0
      %2674 = vmatprep.mubr.f32.mxu0 0.0
      %2675 = vmatmul.mubr.f32.gmra.mrb[0].mxu0 %v2502
      %v2676 = vpop.f32.mrb[0].mxu0
      %v2677 = vadd.f32 0.0, %v2676
      %v2678 = vpop.f32.mrb[0].mxu0
      %2679 = vmatprep.mubr.f32.mxu0 0.0
      %2680 = vmatmul.mubr.f32.gmra.mrb[0].mxu0 %v2505
      %v2681 = vpop.f32.mrb[0].mxu0
      %v2682 = vadd.f32 0.0, %v2681
      %v2683 = vpop.f32.mrb[0].mxu0
      %2684 = vmatprep.mubr.f32.mxu0 0.0
      %2685 = vmatmul.mubr.f32.gmra.mrb[0].mxu0 %v2508
      %v2686 = vpop.f32.mrb[0].mxu0
      %v2687 = vadd.f32 0.0, %v2686
      %v2688 = vpop.f32.mrb[0].mxu0
      %2689 = vmatprep.mubr.f32.mxu0 0.0
      %2690 = vmatmul.mubr.f32.gmra.mrb[0].mxu0 %v2511
      %v2691 = vpop.f32.mrb[0].mxu0
      %v2692 = vadd.f32 0.0, %v2691
      %v2693 = vpop.f32.mrb[0].mxu0
      %2694 = vmatprep.mubr.f32.mxu0 0.0
      %2695 = vmatmul.mubr.f32.gmra.mrb[0].mxu0 %v2514
      %v2696 = vpop.f32.mrb[0].mxu0
      %v2697 = vadd.f32 0.0, %v2696
      %v2698 = vpop.f32.mrb[0].mxu0
      %2699 = vmatprep.mubr.f32.mxu0 0.0
      %2700 = vmatmul.mubr.f32.gmra.mrb[0].mxu0 %v2517
      %v2701 = vpop.f32.mrb[0].mxu0
      %v2702 = vadd.f32 0.0, %v2701
      %v2703 = vpop.f32.mrb[0].mxu0
      %2704 = vmatprep.mubr.f32.mxu0 0.0
      %2705 = vmatmul.mubr.f32.gmra.mrb[0].mxu0 %v2520
      %v2706 = vpop.f32.mrb[0].mxu0
      %v2707 = vadd.f32 0.0, %v2706
      %v2708 = vpop.f32.mrb[0].mxu0
      %2709 = vmatprep.mubr.f32.mxu0 0.0
      %2710 = vmatmul.mubr.f32.gmra.mrb[0].mxu0 %v2523
      %v2711 = vpop.f32.mrb[0].mxu0
      %v2712 = vadd.f32 0.0, %v2711
      %v2713 = vpop.f32.mrb[0].mxu0
      %2714 = vmatprep.mubr.f32.mxu0 0.0
      %2715 = vmatmul.mubr.f32.gmra.mrb[0].mxu0 %v2526
      %v2716 = vpop.f32.mrb[0].mxu0
      %v2717 = vadd.f32 0.0, %v2716
      %v2718 = vpop.f32.mrb[0].mxu0
      %2719 = vmatprep.mubr.f32.mxu0 0.0
      %2720 = vmatmul.mubr.f32.gmra.mrb[0].mxu0 %v2529
      %v2721 = vpop.f32.mrb[0].mxu0
      %v2722 = vadd.f32 0.0, %v2721
      %v2723 = vpop.f32.mrb[0].mxu0
      %2724 = vmatprep.mubr.f32.mxu0 0.0
      %2725 = vmatmul.mubr.f32.gmra.mrb[0].mxu0 %v2532
      %v2726 = vpop.f32.mrb[0].mxu0
      %v2727 = vadd.f32 0.0, %v2726
      %v2728 = vpop.f32.mrb[0].mxu0
      %2729 = vmatprep.mubr.f32.mxu0 0.0
      %2730 = vmatmul.mubr.f32.gmra.mrb[0].mxu0 %v2535
      %v2731 = vpop.f32.mrb[0].mxu0
      %v2732 = vadd.f32 0.0, %v2731
      %v2733 = vpop.f32.mrb[0].mxu0
      %2734 = vmatprep.mubr.f32.mxu0 0.0
      %2735 = vmatmul.mubr.f32.gmra.mrb[0].mxu0 %v2538
      %v2736 = vpop.f32.mrb[0].mxu0
      %v2737 = vadd.f32 0.0, %v2736
      %v2738 = vpop.f32.mrb[0].mxu0
      %2739 = vmatprep.mubr.f32.mxu0 0.0
      %2740 = vmatmul.mubr.f32.gmra.mrb[0].mxu0 %v2541
      %v2741 = vpop.f32.mrb[0].mxu0
      %v2742 = vadd.f32 0.0, %v2741
      %v2743 = vpop.f32.mrb[0].mxu0
      %2744 = vmatprep.mubr.f32.mxu0 0.0
      %2745 = vmatmul.mubr.f32.gmra.mrb[0].mxu0 %v2544
      %v2746 = vpop.f32.mrb[0].mxu0
      %v2747 = vadd.f32 0.0, %v2746
      %v2748 = vpop.f32.mrb[0].mxu0
      %2749 = vmatprep.mubr.f32.mxu0 0.0
      %2750 = vmatmul.mubr.f32.gmra.mrb[0].mxu0 %v2547
      %v2751 = vpop.f32.mrb[0].mxu0
      %v2752 = vadd.f32 0.0, %v2751
      %v2753 = vpop.f32.mrb[0].mxu0
      %2754 = vmatprep.mubr.f32.mxu0 0.0
      %2755 = vmatmul.mubr.f32.gmra.mrb[0].mxu0 %v2550
      %v2756 = vpop.f32.mrb[0].mxu0
      %v2757 = vadd.f32 0.0, %v2756
      %v2758 = vpop.f32.mrb[0].mxu0
      %2759 = vmatprep.mubr.f32.mxu0 0.0
      %2760 = vmatmul.mubr.f32.gmra.mrb[0].mxu0 %v2553
      %v2761 = vpop.f32.mrb[0].mxu0
      %v2762 = vadd.f32 0.0, %v2761
      %v2763 = vpop.f32.mrb[0].mxu0
      %2764 = vmatprep.mubr.f32.mxu0 0.0
      %2765 = vmatmul.mubr.f32.gmra.mrb[0].mxu0 %v2556
      %v2766 = vpop.f32.mrb[0].mxu0
      %v2767 = vadd.f32 0.0, %v2766
      %v2768 = vpop.f32.mrb[0].mxu0
      %2769 = vmatprep.mubr.f32.mxu0 0.0
      %2770 = vmatmul.mubr.f32.gmra.mrb[0].mxu0 %v2559
      %v2771 = vpop.f32.mrb[0].mxu0
      %v2772 = vadd.f32 0.0, %v2771
      %v2773 = vpop.f32.mrb[0].mxu0
      %2774 = vmatprep.mubr.f32.mxu0 0.0
      %2775 = vmatmul.mubr.f32.gmra.mrb[0].mxu0 %v2562
      %v2776 = vpop.f32.mrb[0].mxu0
      %v2777 = vadd.f32 0.0, %v2776
      %v2778 = vpop.f32.mrb[0].mxu0
      %2779 = vmatprep.mubr.f32.mxu0 0.0
      %2780 = vmatmul.mubr.f32.gmra.mrb[0].mxu0 %v2565
      %v2781 = vpop.f32.mrb[0].mxu0
      %v2782 = vadd.f32 0.0, %v2781
      %v2783 = vpop.f32.mrb[0].mxu0
      %2784 = vmatprep.mubr.f32.mxu0 0.0
      %2785 = vmatmul.mubr.f32.gmra.mrb[0].mxu0 %v2568
      %v2786 = vpop.f32.mrb[0].mxu0
      %v2787 = vadd.f32 0.0, %v2786
      %v2788 = vpop.f32.mrb[0].mxu0
      %2789 = vmatprep.mubr.f32.mxu0 0.0
      %2790 = vmatmul.mubr.f32.gmra.mrb[0].mxu0 %v2571
      %v2791 = vpop.f32.mrb[0].mxu0
      %v2792 = vadd.f32 0.0, %v2791
      %v2793 = vpop.f32.mrb[0].mxu0
      %2794 = vmatprep.mubr.f32.mxu0 0.0
      %2795 = vmatmul.mubr.f32.gmra.mrb[0].mxu0 %v2574
      %v2796 = vpop.f32.mrb[0].mxu0
      %v2797 = vadd.f32 0.0, %v2796
      %v2798 = vpop.f32.mrb[0].mxu0
      %2799 = vmatprep.mubr.f32.mxu0 0.0
      %2800 = vmatmul.mubr.f32.gmra.mrb[0].mxu0 %v2577
      %v2801 = vpop.f32.mrb[0].mxu0
      %v2802 = vadd.f32 0.0, %v2801
      %v2803 = vpop.f32.mrb[0].mxu0
      %2804 = vmatprep.mubr.f32.mxu0 0.0
      %2805 = vmatmul.mubr.f32.gmra.mrb[0].mxu0 %v2580
      %v2806 = vpop.f32.mrb[0].mxu0
      %v2807 = vadd.f32 0.0, %v2806
      %v2808 = vpop.f32.mrb[0].mxu0
      %2809 = vdwg.mxu0
      %v2810 = vadd.f32 %v2158, %v2652
      %v2811 = vadd.f32 %v2159, %v2657
      %v2812 = vadd.f32 %v2160, %v2662
      %v2813 = vadd.f32 %v2161, %v2667
      %v2814 = vadd.f32 %v2162, %v2672
      %v2815 = vadd.f32 %v2163, %v2677
      %v2816 = vadd.f32 %v2164, %v2682
      %v2817 = vadd.f32 %v2165, %v2687
      %v2818 = vadd.f32 %v2166, %v2692
      %v2819 = vadd.f32 %v2167, %v2697
      %v2820 = vadd.f32 %v2168, %v2702
      %v2821 = vadd.f32 %v2169, %v2707
      %v2822 = vadd.f32 %v2170, %v2712
      %v2823 = vadd.f32 %v2171, %v2717
      %v2824 = vadd.f32 %v2172, %v2722
      %v2825 = vadd.f32 %v2173, %v2727
      %v2826 = vadd.f32 %v2174, %v2732
      %v2827 = vadd.f32 %v2175, %v2737
      %v2828 = vadd.f32 %v2176, %v2742
      %v2829 = vadd.f32 %v2177, %v2747
      %v2830 = vadd.f32 %v2178, %v2752
      %v2831 = vadd.f32 %v2179, %v2757
      %v2832 = vadd.f32 %v2180, %v2762
      %v2833 = vadd.f32 %v2181, %v2767
      %v2834 = vadd.f32 %v2182, %v2772
      %v2835 = vadd.f32 %v2183, %v2777
      %v2836 = vadd.f32 %v2184, %v2782
      %v2837 = vadd.f32 %v2185, %v2787
      %v2838 = vadd.f32 %v2186, %v2792
      %v2839 = vadd.f32 %v2187, %v2797
      %v2840 = vadd.f32 %v2188, %v2802
      %v2841 = vadd.f32 %v2189, %v2807
      %s2842 = scalar_lea.vmem %s5, 12
      %v2843 = vld [vmem:[%s2842] sm:$0xf]
      %v2845 = vsel %vm626, %v2843, 0
      %2847 = vmatprep.subr.mxu0 0.0
      %2848 = vmatpush1.msra.mxu0 %v2845
      %2849 = vmatprep.subr.mxu0 0.0
      %2850 = vmatpush1.msra.mxu0 0.0
      %2851 = vmatprep.subr.mxu0 0.0
      %2852 = vmatpush1.msra.mxu0 0.0
      %2853 = vmatprep.subr.mxu0 0.0
      %2854 = vmatpush1.msra.mxu0 0.0
      %2855 = vmatprep.subr.mxu0 0.0
      %2856 = vmatpush1.msra.mxu0 0.0
      %2857 = vmatprep.subr.mxu0 0.0
      %2858 = vmatpush1.msra.mxu0 0.0
      %2859 = vmatprep.subr.mxu0 0.0
      %2860 = vmatpush1.msra.mxu0 0.0
      %2861 = vmatprep.subr.mxu0 0.0
      %2862 = vmatpush1.msra.mxu0 0.0
      %2863 = vmatprep.subr.mxu0 0.0
      %2864 = vmatpush1.msra.mxu0 0.0
      %2865 = vmatprep.subr.mxu0 0.0
      %2866 = vmatpush1.msra.mxu0 0.0
      %2867 = vmatprep.subr.mxu0 0.0
      %2868 = vmatpush1.msra.mxu0 0.0
      %2869 = vmatprep.subr.mxu0 0.0
      %2870 = vmatpush1.msra.mxu0 0.0
      %2871 = vmatprep.subr.mxu0 0.0
      %2872 = vmatpush1.msra.mxu0 0.0
      %2873 = vmatprep.subr.mxu0 0.0
      %2874 = vmatpush1.msra.mxu0 0.0
      %2875 = vmatprep.subr.mxu0 0.0
      %2876 = vmatpush1.msra.mxu0 0.0
      %2877 = vmatprep.subr.mxu0 0.0
      %2878 = vmatpush1.msra.mxu0 0.0
      %2879 = vmatprep.subr.mxu0 0.0
      %2880 = vmatpush1.msra.mxu0 0.0
      %2881 = vmatprep.subr.mxu0 0.0
      %2882 = vmatpush1.msra.mxu0 0.0
      %2883 = vmatprep.subr.mxu0 0.0
      %2884 = vmatpush1.msra.mxu0 0.0
      %2885 = vmatprep.subr.mxu0 0.0
      %2886 = vmatpush1.msra.mxu0 0.0
      %2887 = vmatprep.subr.mxu0 0.0
      %2888 = vmatpush1.msra.mxu0 0.0
      %2889 = vmatprep.subr.mxu0 0.0
      %2890 = vmatpush1.msra.mxu0 0.0
      %2891 = vmatprep.subr.mxu0 0.0
      %2892 = vmatpush1.msra.mxu0 0.0
      %2893 = vmatprep.subr.mxu0 0.0
      %2894 = vmatpush1.msra.mxu0 0.0
      %2895 = vmatprep.subr.mxu0 0.0
      %2896 = vmatpush1.msra.mxu0 0.0
      %2897 = vmatprep.subr.mxu0 0.0
      %2898 = vmatpush1.msra.mxu0 0.0
      %2899 = vmatprep.subr.mxu0 0.0
      %2900 = vmatpush1.msra.mxu0 0.0
      %2901 = vmatprep.subr.mxu0 0.0
      %2902 = vmatpush1.msra.mxu0 0.0
      %2903 = vmatprep.subr.mxu0 0.0
      %2904 = vmatpush1.msra.mxu0 0.0
      %2905 = vmatprep.subr.mxu0 0.0
      %2906 = vmatpush1.msra.mxu0 0.0
      %2907 = vmatprep.subr.mxu0 0.0
      %2908 = vmatpush1.msra.mxu0 0.0
      %2909 = vmatprep.subr.mxu0 0.0
      %2910 = vmatpush1.msra.mxu0 0.0
      %2911 = vmatprep.mubr.f32.mxu0 0.0
      %2912 = vmatmul.mubr.f32.gmra.mrb[0].mxu0 %v2487
      %v2913 = vpop.f32.mrb[0].mxu0
      %v2914 = vadd.f32 0.0, %v2913
      %v2915 = vpop.f32.mrb[0].mxu0
      %2916 = vmatprep.mubr.f32.mxu0 0.0
      %2917 = vmatmul.mubr.f32.gmra.mrb[0].mxu0 %v2490
      %v2918 = vpop.f32.mrb[0].mxu0
      %v2919 = vadd.f32 0.0, %v2918
      %v2920 = vpop.f32.mrb[0].mxu0
      %2921 = vmatprep.mubr.f32.mxu0 0.0
      %2922 = vmatmul.mubr.f32.gmra.mrb[0].mxu0 %v2493
      %v2923 = vpop.f32.mrb[0].mxu0
      %v2924 = vadd.f32 0.0, %v2923
      %v2925 = vpop.f32.mrb[0].mxu0
      %2926 = vmatprep.mubr.f32.mxu0 0.0
      %2927 = vmatmul.mubr.f32.gmra.mrb[0].mxu0 %v2496
      %v2928 = vpop.f32.mrb[0].mxu0
      %v2929 = vadd.f32 0.0, %v2928
      %v2930 = vpop.f32.mrb[0].mxu0
      %2931 = vmatprep.mubr.f32.mxu0 0.0
      %2932 = vmatmul.mubr.f32.gmra.mrb[0].mxu0 %v2499
      %v2933 = vpop.f32.mrb[0].mxu0
      %v2934 = vadd.f32 0.0, %v2933
      %v2935 = vpop.f32.mrb[0].mxu0
      %2936 = vmatprep.mubr.f32.mxu0 0.0
      %2937 = vmatmul.mubr.f32.gmra.mrb[0].mxu0 %v2502
      %v2938 = vpop.f32.mrb[0].mxu0
      %v2939 = vadd.f32 0.0, %v2938
      %v2940 = vpop.f32.mrb[0].mxu0
      %2941 = vmatprep.mubr.f32.mxu0 0.0
      %2942 = vmatmul.mubr.f32.gmra.mrb[0].mxu0 %v2505
      %v2943 = vpop.f32.mrb[0].mxu0
      %v2944 = vadd.f32 0.0, %v2943
      %v2945 = vpop.f32.mrb[0].mxu0
      %2946 = vmatprep.mubr.f32.mxu0 0.0
      %2947 = vmatmul.mubr.f32.gmra.mrb[0].mxu0 %v2508
      %v2948 = vpop.f32.mrb[0].mxu0
      %v2949 = vadd.f32 0.0, %v2948
      %v2950 = vpop.f32.mrb[0].mxu0
      %2951 = vmatprep.mubr.f32.mxu0 0.0
      %2952 = vmatmul.mubr.f32.gmra.mrb[0].mxu0 %v2511
      %v2953 = vpop.f32.mrb[0].mxu0
      %v2954 = vadd.f32 0.0, %v2953
      %v2955 = vpop.f32.mrb[0].mxu0
      %2956 = vmatprep.mubr.f32.mxu0 0.0
      %2957 = vmatmul.mubr.f32.gmra.mrb[0].mxu0 %v2514
      %v2958 = vpop.f32.mrb[0].mxu0
      %v2959 = vadd.f32 0.0, %v2958
      %v2960 = vpop.f32.mrb[0].mxu0
      %2961 = vmatprep.mubr.f32.mxu0 0.0
      %2962 = vmatmul.mubr.f32.gmra.mrb[0].mxu0 %v2517
      %v2963 = vpop.f32.mrb[0].mxu0
      %v2964 = vadd.f32 0.0, %v2963
      %v2965 = vpop.f32.mrb[0].mxu0
      %2966 = vmatprep.mubr.f32.mxu0 0.0
      %2967 = vmatmul.mubr.f32.gmra.mrb[0].mxu0 %v2520
      %v2968 = vpop.f32.mrb[0].mxu0
      %v2969 = vadd.f32 0.0, %v2968
      %v2970 = vpop.f32.mrb[0].mxu0
      %2971 = vmatprep.mubr.f32.mxu0 0.0
      %2972 = vmatmul.mubr.f32.gmra.mrb[0].mxu0 %v2523
      %v2973 = vpop.f32.mrb[0].mxu0
      %v2974 = vadd.f32 0.0, %v2973
      %v2975 = vpop.f32.mrb[0].mxu0
      %2976 = vmatprep.mubr.f32.mxu0 0.0
      %2977 = vmatmul.mubr.f32.gmra.mrb[0].mxu0 %v2526
      %v2978 = vpop.f32.mrb[0].mxu0
      %v2979 = vadd.f32 0.0, %v2978
      %v2980 = vpop.f32.mrb[0].mxu0
      %2981 = vmatprep.mubr.f32.mxu0 0.0
      %2982 = vmatmul.mubr.f32.gmra.mrb[0].mxu0 %v2529
      %v2983 = vpop.f32.mrb[0].mxu0
      %v2984 = vadd.f32 0.0, %v2983
      %v2985 = vpop.f32.mrb[0].mxu0
      %2986 = vmatprep.mubr.f32.mxu0 0.0
      %2987 = vmatmul.mubr.f32.gmra.mrb[0].mxu0 %v2532
      %v2988 = vpop.f32.mrb[0].mxu0
      %v2989 = vadd.f32 0.0, %v2988
      %v2990 = vpop.f32.mrb[0].mxu0
      %2991 = vmatprep.mubr.f32.mxu0 0.0
      %2992 = vmatmul.mubr.f32.gmra.mrb[0].mxu0 %v2535
      %v2993 = vpop.f32.mrb[0].mxu0
      %v2994 = vadd.f32 0.0, %v2993
      %v2995 = vpop.f32.mrb[0].mxu0
      %2996 = vmatprep.mubr.f32.mxu0 0.0
      %2997 = vmatmul.mubr.f32.gmra.mrb[0].mxu0 %v2538
      %v2998 = vpop.f32.mrb[0].mxu0
      %v2999 = vadd.f32 0.0, %v2998
      %v3000 = vpop.f32.mrb[0].mxu0
      %3001 = vmatprep.mubr.f32.mxu0 0.0
      %3002 = vmatmul.mubr.f32.gmra.mrb[0].mxu0 %v2541
      %v3003 = vpop.f32.mrb[0].mxu0
      %v3004 = vadd.f32 0.0, %v3003
      %v3005 = vpop.f32.mrb[0].mxu0
      %3006 = vmatprep.mubr.f32.mxu0 0.0
      %3007 = vmatmul.mubr.f32.gmra.mrb[0].mxu0 %v2544
      %v3008 = vpop.f32.mrb[0].mxu0
      %v3009 = vadd.f32 0.0, %v3008
      %v3010 = vpop.f32.mrb[0].mxu0
      %3011 = vmatprep.mubr.f32.mxu0 0.0
      %3012 = vmatmul.mubr.f32.gmra.mrb[0].mxu0 %v2547
      %v3013 = vpop.f32.mrb[0].mxu0
      %v3014 = vadd.f32 0.0, %v3013
      %v3015 = vpop.f32.mrb[0].mxu0
      %3016 = vmatprep.mubr.f32.mxu0 0.0
      %3017 = vmatmul.mubr.f32.gmra.mrb[0].mxu0 %v2550
      %v3018 = vpop.f32.mrb[0].mxu0
      %v3019 = vadd.f32 0.0, %v3018
      %v3020 = vpop.f32.mrb[0].mxu0
      %3021 = vmatprep.mubr.f32.mxu0 0.0
      %3022 = vmatmul.mubr.f32.gmra.mrb[0].mxu0 %v2553
      %v3023 = vpop.f32.mrb[0].mxu0
      %v3024 = vadd.f32 0.0, %v3023
      %v3025 = vpop.f32.mrb[0].mxu0
      %3026 = vmatprep.mubr.f32.mxu0 0.0
      %3027 = vmatmul.mubr.f32.gmra.mrb[0].mxu0 %v2556
      %v3028 = vpop.f32.mrb[0].mxu0
      %v3029 = vadd.f32 0.0, %v3028
      %v3030 = vpop.f32.mrb[0].mxu0
      %3031 = vmatprep.mubr.f32.mxu0 0.0
      %3032 = vmatmul.mubr.f32.gmra.mrb[0].mxu0 %v2559
      %v3033 = vpop.f32.mrb[0].mxu0
      %v3034 = vadd.f32 0.0, %v3033
      %v3035 = vpop.f32.mrb[0].mxu0
      %3036 = vmatprep.mubr.f32.mxu0 0.0
      %3037 = vmatmul.mubr.f32.gmra.mrb[0].mxu0 %v2562
      %v3038 = vpop.f32.mrb[0].mxu0
      %v3039 = vadd.f32 0.0, %v3038
      %v3040 = vpop.f32.mrb[0].mxu0
      %3041 = vmatprep.mubr.f32.mxu0 0.0
      %3042 = vmatmul.mubr.f32.gmra.mrb[0].mxu0 %v2565
      %v3043 = vpop.f32.mrb[0].mxu0
      %v3044 = vadd.f32 0.0, %v3043
      %v3045 = vpop.f32.mrb[0].mxu0
      %3046 = vmatprep.mubr.f32.mxu0 0.0
      %3047 = vmatmul.mubr.f32.gmra.mrb[0].mxu0 %v2568
      %v3048 = vpop.f32.mrb[0].mxu0
      %v3049 = vadd.f32 0.0, %v3048
      %v3050 = vpop.f32.mrb[0].mxu0
      %3051 = vmatprep.mubr.f32.mxu0 0.0
      %3052 = vmatmul.mubr.f32.gmra.mrb[0].mxu0 %v2571
      %v3053 = vpop.f32.mrb[0].mxu0
      %v3054 = vadd.f32 0.0, %v3053
      %v3055 = vpop.f32.mrb[0].mxu0
      %3056 = vmatprep.mubr.f32.mxu0 0.0
      %3057 = vmatmul.mubr.f32.gmra.mrb[0].mxu0 %v2574
      %v3058 = vpop.f32.mrb[0].mxu0
      %v3059 = vadd.f32 0.0, %v3058
      %v3060 = vpop.f32.mrb[0].mxu0
      %3061 = vmatprep.mubr.f32.mxu0 0.0
      %3062 = vmatmul.mubr.f32.gmra.mrb[0].mxu0 %v2577
      %v3063 = vpop.f32.mrb[0].mxu0
      %v3064 = vadd.f32 0.0, %v3063
      %v3065 = vpop.f32.mrb[0].mxu0
      %3066 = vmatprep.mubr.f32.mxu0 0.0
      %3067 = vmatmul.mubr.f32.gmra.mrb[0].mxu0 %v2580
      %v3068 = vpop.f32.mrb[0].mxu0
      %v3069 = vadd.f32 0.0, %v3068
      %v3070 = vpop.f32.mrb[0].mxu0
      %3071 = vdwg.mxu0
      %v3072 = vadd.f32 %v2420, %v2914
      %v3073 = vadd.f32 %v2421, %v2919
      %v3074 = vadd.f32 %v2422, %v2924
      %v3075 = vadd.f32 %v2423, %v2929
      %v3076 = vadd.f32 %v2424, %v2934
      %v3077 = vadd.f32 %v2425, %v2939
      %v3078 = vadd.f32 %v2426, %v2944
      %v3079 = vadd.f32 %v2427, %v2949
      %v3080 = vadd.f32 %v2428, %v2954
      %v3081 = vadd.f32 %v2429, %v2959
      %v3082 = vadd.f32 %v2430, %v2964
      %v3083 = vadd.f32 %v2431, %v2969
      %v3084 = vadd.f32 %v2432, %v2974
      %v3085 = vadd.f32 %v2433, %v2979
      %v3086 = vadd.f32 %v2434, %v2984
      %v3087 = vadd.f32 %v2435, %v2989
      %v3088 = vadd.f32 %v2436, %v2994
      %v3089 = vadd.f32 %v2437, %v2999
      %v3090 = vadd.f32 %v2438, %v3004
      %v3091 = vadd.f32 %v2439, %v3009
      %v3092 = vadd.f32 %v2440, %v3014
      %v3093 = vadd.f32 %v2441, %v3019
      %v3094 = vadd.f32 %v2442, %v3024
      %v3095 = vadd.f32 %v2443, %v3029
      %v3096 = vadd.f32 %v2444, %v3034
      %v3097 = vadd.f32 %v2445, %v3039
      %v3098 = vadd.f32 %v2446, %v3044
      %v3099 = vadd.f32 %v2447, %v3049
      %v3100 = vadd.f32 %v2448, %v3054
      %v3101 = vadd.f32 %v2449, %v3059
      %v3102 = vadd.f32 %v2450, %v3064
      %v3103 = vadd.f32 %v2451, %v3069
      %v3104 = vld [vmem:[%s450 + $0x1] sm:$0xff]
      %v3105 = vld [vmem:[%s450 + $0x9] sm:$0xff]
      %v3106 = vld [vmem:[%s450 + $0x19] sm:$0xff]
      %v3107 = vld [vmem:[%s450 + $0x21] sm:$0xff]
      %v3108 = vld [vmem:[%s450 + $0x31] sm:$0xff]
      %v3109 = vld [vmem:[%s450 + $0x39] sm:$0xff]
      %v3110 = vld [vmem:[%s450 + $0x49] sm:$0xff]
      %v3111 = vld [vmem:[%s450 + $0x51] sm:$0xff]
      %v3112 = vld [vmem:[%s450 + $0x61] sm:$0xff]
      %v3113 = vld [vmem:[%s450 + $0x69] sm:$0xff]
      %v3114 = vld [vmem:[%s450 + $0x79] sm:$0xff]
      %v3115 = vld [vmem:[%s450 + $0x81] sm:$0xff]
      %v3116 = vld [vmem:[%s450 + $0x91] sm:$0xff]
      %v3117 = vld [vmem:[%s450 + $0x99] sm:$0xff]
      %v3118 = vld [vmem:[%s450 + $0xa9] sm:$0xff]
      %v3119 = vld [vmem:[%s450 + $0xb1] sm:$0xff]
      %v3120 = vld [vmem:[%s450 + $0xc1] sm:$0xff]
      %v3121 = vld [vmem:[%s450 + $0xc9] sm:$0xff]
      %v3122 = vld [vmem:[%s450 + $0xd9] sm:$0xff]
      %v3123 = vld [vmem:[%s450 + $0xe1] sm:$0xff]
      %v3124 = vld [vmem:[%s450 + $0xf1] sm:$0xff]
      %v3125 = vld [vmem:[%s450 + $0xf9] sm:$0xff]
      %v3126 = vld [vmem:[%s450 + $0x109] sm:$0xff]
      %v3127 = vld [vmem:[%s450 + $0x111] sm:$0xff]
      %v3128 = vld [vmem:[%s450 + $0x121] sm:$0xff]
      %v3129 = vld [vmem:[%s450 + $0x129] sm:$0xff]
      %v3130 = vld [vmem:[%s450 + $0x139] sm:$0xff]
      %v3131 = vld [vmem:[%s450 + $0x141] sm:$0xff]
      %v3132 = vld [vmem:[%s450 + $0x151] sm:$0xff]
      %v3133 = vld [vmem:[%s450 + $0x159] sm:$0xff]
      %v3134 = vld [vmem:[%s450 + $0x169] sm:$0xff]
      %v3135 = vld [vmem:[%s450 + $0x171] sm:$0xff]
      %s3136 = scalar_lea.vmem %s1, 16
      %v3137 = vld [vmem:[%s3136] sm:$0xf]
      %v3139 = vsel %vm306, %v3104, 0
      %v3142 = vsel %vm306, %v3105, 0
      %v3145 = vsel %vm306, %v3106, 0
      %v3148 = vsel %vm306, %v3107, 0
      %v3151 = vsel %vm306, %v3108, 0
      %v3154 = vsel %vm306, %v3109, 0
      %v3157 = vsel %vm306, %v3110, 0
      %v3160 = vsel %vm306, %v3111, 0
      %v3163 = vsel %vm306, %v3112, 0
      %v3166 = vsel %vm306, %v3113, 0
      %v3169 = vsel %vm306, %v3114, 0
      %v3172 = vsel %vm306, %v3115, 0
      %v3175 = vsel %vm306, %v3116, 0
      %v3178 = vsel %vm306, %v3117, 0
      %v3181 = vsel %vm306, %v3118, 0
      %v3184 = vsel %vm306, %v3119, 0
      %v3187 = vsel %vm306, %v3120, 0
      %v3190 = vsel %vm306, %v3121, 0
      %v3193 = vsel %vm306, %v3122, 0
      %v3196 = vsel %vm306, %v3123, 0
      %v3199 = vsel %vm306, %v3124, 0
      %v3202 = vsel %vm306, %v3125, 0
      %v3205 = vsel %vm306, %v3126, 0
      %v3208 = vsel %vm306, %v3127, 0
      %v3211 = vsel %vm306, %v3128, 0
      %v3214 = vsel %vm306, %v3129, 0
      %v3217 = vsel %vm306, %v3130, 0
      %v3220 = vsel %vm306, %v3131, 0
      %v3223 = vsel %vm306, %v3132, 0
      %v3226 = vsel %vm306, %v3133, 0
      %v3229 = vsel %vm306, %v3134, 0
      %v3232 = vsel %vm306, %v3135, 0
      %v3235 = vsel %vm626, %v3137, 0
      %3237 = vmatprep.subr.mxu0 0.0
      %3238 = vmatpush1.msra.mxu0 %v3235
      %3239 = vmatprep.subr.mxu0 0.0
      %3240 = vmatpush1.msra.mxu0 0.0
      %3241 = vmatprep.subr.mxu0 0.0
      %3242 = vmatpush1.msra.mxu0 0.0
      %3243 = vmatprep.subr.mxu0 0.0
      %3244 = vmatpush1.msra.mxu0 0.0
      %3245 = vmatprep.subr.mxu0 0.0
      %3246 = vmatpush1.msra.mxu0 0.0
      %3247 = vmatprep.subr.mxu0 0.0
      %3248 = vmatpush1.msra.mxu0 0.0
      %3249 = vmatprep.subr.mxu0 0.0
      %3250 = vmatpush1.msra.mxu0 0.0
      %3251 = vmatprep.subr.mxu0 0.0
      %3252 = vmatpush1.msra.mxu0 0.0
      %3253 = vmatprep.subr.mxu0 0.0
      %3254 = vmatpush1.msra.mxu0 0.0
      %3255 = vmatprep.subr.mxu0 0.0
      %3256 = vmatpush1.msra.mxu0 0.0
      %3257 = vmatprep.subr.mxu0 0.0
      %3258 = vmatpush1.msra.mxu0 0.0
      %3259 = vmatprep.subr.mxu0 0.0
      %3260 = vmatpush1.msra.mxu0 0.0
      %3261 = vmatprep.subr.mxu0 0.0
      %3262 = vmatpush1.msra.mxu0 0.0
      %3263 = vmatprep.subr.mxu0 0.0
      %3264 = vmatpush1.msra.mxu0 0.0
      %3265 = vmatprep.subr.mxu0 0.0
      %3266 = vmatpush1.msra.mxu0 0.0
      %3267 = vmatprep.subr.mxu0 0.0
      %3268 = vmatpush1.msra.mxu0 0.0
      %3269 = vmatprep.subr.mxu0 0.0
      %3270 = vmatpush1.msra.mxu0 0.0
      %3271 = vmatprep.subr.mxu0 0.0
      %3272 = vmatpush1.msra.mxu0 0.0
      %3273 = vmatprep.subr.mxu0 0.0
      %3274 = vmatpush1.msra.mxu0 0.0
      %3275 = vmatprep.subr.mxu0 0.0
      %3276 = vmatpush1.msra.mxu0 0.0
      %3277 = vmatprep.subr.mxu0 0.0
      %3278 = vmatpush1.msra.mxu0 0.0
      %3279 = vmatprep.subr.mxu0 0.0
      %3280 = vmatpush1.msra.mxu0 0.0
      %3281 = vmatprep.subr.mxu0 0.0
      %3282 = vmatpush1.msra.mxu0 0.0
      %3283 = vmatprep.subr.mxu0 0.0
      %3284 = vmatpush1.msra.mxu0 0.0
      %3285 = vmatprep.subr.mxu0 0.0
      %3286 = vmatpush1.msra.mxu0 0.0
      %3287 = vmatprep.subr.mxu0 0.0
      %3288 = vmatpush1.msra.mxu0 0.0
      %3289 = vmatprep.subr.mxu0 0.0
      %3290 = vmatpush1.msra.mxu0 0.0
      %3291 = vmatprep.subr.mxu0 0.0
      %3292 = vmatpush1.msra.mxu0 0.0
      %3293 = vmatprep.subr.mxu0 0.0
      %3294 = vmatpush1.msra.mxu0 0.0
      %3295 = vmatprep.subr.mxu0 0.0
      %3296 = vmatpush1.msra.mxu0 0.0
      %3297 = vmatprep.subr.mxu0 0.0
      %3298 = vmatpush1.msra.mxu0 0.0
      %3299 = vmatprep.subr.mxu0 0.0
      %3300 = vmatpush1.msra.mxu0 0.0
      %3301 = vmatprep.mubr.f32.mxu0 0.0
      %3302 = vmatmul.mubr.f32.gmra.mrb[0].mxu0 %v3139
      %v3303 = vpop.f32.mrb[0].mxu0
      %v3304 = vadd.f32 0.0, %v3303
      %v3305 = vpop.f32.mrb[0].mxu0
      %3306 = vmatprep.mubr.f32.mxu0 0.0
      %3307 = vmatmul.mubr.f32.gmra.mrb[0].mxu0 %v3142
      %v3308 = vpop.f32.mrb[0].mxu0
      %v3309 = vadd.f32 0.0, %v3308
      %v3310 = vpop.f32.mrb[0].mxu0
      %3311 = vmatprep.mubr.f32.mxu0 0.0
      %3312 = vmatmul.mubr.f32.gmra.mrb[0].mxu0 %v3145
      %v3313 = vpop.f32.mrb[0].mxu0
      %v3314 = vadd.f32 0.0, %v3313
      %v3315 = vpop.f32.mrb[0].mxu0
      %3316 = vmatprep.mubr.f32.mxu0 0.0
      %3317 = vmatmul.mubr.f32.gmra.mrb[0].mxu0 %v3148
      %v3318 = vpop.f32.mrb[0].mxu0
      %v3319 = vadd.f32 0.0, %v3318
      %v3320 = vpop.f32.mrb[0].mxu0
      %3321 = vmatprep.mubr.f32.mxu0 0.0
      %3322 = vmatmul.mubr.f32.gmra.mrb[0].mxu0 %v3151
      %v3323 = vpop.f32.mrb[0].mxu0
      %v3324 = vadd.f32 0.0, %v3323
      %v3325 = vpop.f32.mrb[0].mxu0
      %3326 = vmatprep.mubr.f32.mxu0 0.0
      %3327 = vmatmul.mubr.f32.gmra.mrb[0].mxu0 %v3154
      %v3328 = vpop.f32.mrb[0].mxu0
      %v3329 = vadd.f32 0.0, %v3328
      %v3330 = vpop.f32.mrb[0].mxu0
      %3331 = vmatprep.mubr.f32.mxu0 0.0
      %3332 = vmatmul.mubr.f32.gmra.mrb[0].mxu0 %v3157
      %v3333 = vpop.f32.mrb[0].mxu0
      %v3334 = vadd.f32 0.0, %v3333
      %v3335 = vpop.f32.mrb[0].mxu0
      %3336 = vmatprep.mubr.f32.mxu0 0.0
      %3337 = vmatmul.mubr.f32.gmra.mrb[0].mxu0 %v3160
      %v3338 = vpop.f32.mrb[0].mxu0
      %v3339 = vadd.f32 0.0, %v3338
      %v3340 = vpop.f32.mrb[0].mxu0
      %3341 = vmatprep.mubr.f32.mxu0 0.0
      %3342 = vmatmul.mubr.f32.gmra.mrb[0].mxu0 %v3163
      %v3343 = vpop.f32.mrb[0].mxu0
      %v3344 = vadd.f32 0.0, %v3343
      %v3345 = vpop.f32.mrb[0].mxu0
      %3346 = vmatprep.mubr.f32.mxu0 0.0
      %3347 = vmatmul.mubr.f32.gmra.mrb[0].mxu0 %v3166
      %v3348 = vpop.f32.mrb[0].mxu0
      %v3349 = vadd.f32 0.0, %v3348
      %v3350 = vpop.f32.mrb[0].mxu0
      %3351 = vmatprep.mubr.f32.mxu0 0.0
      %3352 = vmatmul.mubr.f32.gmra.mrb[0].mxu0 %v3169
      %v3353 = vpop.f32.mrb[0].mxu0
      %v3354 = vadd.f32 0.0, %v3353
      %v3355 = vpop.f32.mrb[0].mxu0
      %3356 = vmatprep.mubr.f32.mxu0 0.0
      %3357 = vmatmul.mubr.f32.gmra.mrb[0].mxu0 %v3172
      %v3358 = vpop.f32.mrb[0].mxu0
      %v3359 = vadd.f32 0.0, %v3358
      %v3360 = vpop.f32.mrb[0].mxu0
      %3361 = vmatprep.mubr.f32.mxu0 0.0
      %3362 = vmatmul.mubr.f32.gmra.mrb[0].mxu0 %v3175
      %v3363 = vpop.f32.mrb[0].mxu0
      %v3364 = vadd.f32 0.0, %v3363
      %v3365 = vpop.f32.mrb[0].mxu0
      %3366 = vmatprep.mubr.f32.mxu0 0.0
      %3367 = vmatmul.mubr.f32.gmra.mrb[0].mxu0 %v3178
      %v3368 = vpop.f32.mrb[0].mxu0
      %v3369 = vadd.f32 0.0, %v3368
      %v3370 = vpop.f32.mrb[0].mxu0
      %3371 = vmatprep.mubr.f32.mxu0 0.0
      %3372 = vmatmul.mubr.f32.gmra.mrb[0].mxu0 %v3181
      %v3373 = vpop.f32.mrb[0].mxu0
      %v3374 = vadd.f32 0.0, %v3373
      %v3375 = vpop.f32.mrb[0].mxu0
      %3376 = vmatprep.mubr.f32.mxu0 0.0
      %3377 = vmatmul.mubr.f32.gmra.mrb[0].mxu0 %v3184
      %v3378 = vpop.f32.mrb[0].mxu0
      %v3379 = vadd.f32 0.0, %v3378
      %v3380 = vpop.f32.mrb[0].mxu0
      %3381 = vmatprep.mubr.f32.mxu0 0.0
      %3382 = vmatmul.mubr.f32.gmra.mrb[0].mxu0 %v3187
      %v3383 = vpop.f32.mrb[0].mxu0
      %v3384 = vadd.f32 0.0, %v3383
      %v3385 = vpop.f32.mrb[0].mxu0
      %3386 = vmatprep.mubr.f32.mxu0 0.0
      %3387 = vmatmul.mubr.f32.gmra.mrb[0].mxu0 %v3190
      %v3388 = vpop.f32.mrb[0].mxu0
      %v3389 = vadd.f32 0.0, %v3388
      %v3390 = vpop.f32.mrb[0].mxu0
      %3391 = vmatprep.mubr.f32.mxu0 0.0
      %3392 = vmatmul.mubr.f32.gmra.mrb[0].mxu0 %v3193
      %v3393 = vpop.f32.mrb[0].mxu0
      %v3394 = vadd.f32 0.0, %v3393
      %v3395 = vpop.f32.mrb[0].mxu0
      %3396 = vmatprep.mubr.f32.mxu0 0.0
      %3397 = vmatmul.mubr.f32.gmra.mrb[0].mxu0 %v3196
      %v3398 = vpop.f32.mrb[0].mxu0
      %v3399 = vadd.f32 0.0, %v3398
      %v3400 = vpop.f32.mrb[0].mxu0
      %3401 = vmatprep.mubr.f32.mxu0 0.0
      %3402 = vmatmul.mubr.f32.gmra.mrb[0].mxu0 %v3199
      %v3403 = vpop.f32.mrb[0].mxu0
      %v3404 = vadd.f32 0.0, %v3403
      %v3405 = vpop.f32.mrb[0].mxu0
      %3406 = vmatprep.mubr.f32.mxu0 0.0
      %3407 = vmatmul.mubr.f32.gmra.mrb[0].mxu0 %v3202
      %v3408 = vpop.f32.mrb[0].mxu0
      %v3409 = vadd.f32 0.0, %v3408
      %v3410 = vpop.f32.mrb[0].mxu0
      %3411 = vmatprep.mubr.f32.mxu0 0.0
      %3412 = vmatmul.mubr.f32.gmra.mrb[0].mxu0 %v3205
      %v3413 = vpop.f32.mrb[0].mxu0
      %v3414 = vadd.f32 0.0, %v3413
      %v3415 = vpop.f32.mrb[0].mxu0
      %3416 = vmatprep.mubr.f32.mxu0 0.0
      %3417 = vmatmul.mubr.f32.gmra.mrb[0].mxu0 %v3208
      %v3418 = vpop.f32.mrb[0].mxu0
      %v3419 = vadd.f32 0.0, %v3418
      %v3420 = vpop.f32.mrb[0].mxu0
      %3421 = vmatprep.mubr.f32.mxu0 0.0
      %3422 = vmatmul.mubr.f32.gmra.mrb[0].mxu0 %v3211
      %v3423 = vpop.f32.mrb[0].mxu0
      %v3424 = vadd.f32 0.0, %v3423
      %v3425 = vpop.f32.mrb[0].mxu0
      %3426 = vmatprep.mubr.f32.mxu0 0.0
      %3427 = vmatmul.mubr.f32.gmra.mrb[0].mxu0 %v3214
      %v3428 = vpop.f32.mrb[0].mxu0
      %v3429 = vadd.f32 0.0, %v3428
      %v3430 = vpop.f32.mrb[0].mxu0
      %3431 = vmatprep.mubr.f32.mxu0 0.0
      %3432 = vmatmul.mubr.f32.gmra.mrb[0].mxu0 %v3217
      %v3433 = vpop.f32.mrb[0].mxu0
      %v3434 = vadd.f32 0.0, %v3433
      %v3435 = vpop.f32.mrb[0].mxu0
      %3436 = vmatprep.mubr.f32.mxu0 0.0
      %3437 = vmatmul.mubr.f32.gmra.mrb[0].mxu0 %v3220
      %v3438 = vpop.f32.mrb[0].mxu0
      %v3439 = vadd.f32 0.0, %v3438
      %v3440 = vpop.f32.mrb[0].mxu0
      %3441 = vmatprep.mubr.f32.mxu0 0.0
      %3442 = vmatmul.mubr.f32.gmra.mrb[0].mxu0 %v3223
      %v3443 = vpop.f32.mrb[0].mxu0
      %v3444 = vadd.f32 0.0, %v3443
      %v3445 = vpop.f32.mrb[0].mxu0
      %3446 = vmatprep.mubr.f32.mxu0 0.0
      %3447 = vmatmul.mubr.f32.gmra.mrb[0].mxu0 %v3226
      %v3448 = vpop.f32.mrb[0].mxu0
      %v3449 = vadd.f32 0.0, %v3448
      %v3450 = vpop.f32.mrb[0].mxu0
      %3451 = vmatprep.mubr.f32.mxu0 0.0
      %3452 = vmatmul.mubr.f32.gmra.mrb[0].mxu0 %v3229
      %v3453 = vpop.f32.mrb[0].mxu0
      %v3454 = vadd.f32 0.0, %v3453
      %v3455 = vpop.f32.mrb[0].mxu0
      %3456 = vmatprep.mubr.f32.mxu0 0.0
      %3457 = vmatmul.mubr.f32.gmra.mrb[0].mxu0 %v3232
      %v3458 = vpop.f32.mrb[0].mxu0
      %v3459 = vadd.f32 0.0, %v3458
      %v3460 = vpop.f32.mrb[0].mxu0
      %3461 = vdwg.mxu0
      %v3462 = vadd.f32 %v2810, %v3304
      %v3463 = vadd.f32 %v2811, %v3309
      %v3464 = vadd.f32 %v2812, %v3314
      %v3465 = vadd.f32 %v2813, %v3319
      %v3466 = vadd.f32 %v2814, %v3324
      %v3467 = vadd.f32 %v2815, %v3329
      %v3468 = vadd.f32 %v2816, %v3334
      %v3469 = vadd.f32 %v2817, %v3339
      %v3470 = vadd.f32 %v2818, %v3344
      %v3471 = vadd.f32 %v2819, %v3349
      %v3472 = vadd.f32 %v2820, %v3354
      %v3473 = vadd.f32 %v2821, %v3359
      %v3474 = vadd.f32 %v2822, %v3364
      %v3475 = vadd.f32 %v2823, %v3369
      %v3476 = vadd.f32 %v2824, %v3374
      %v3477 = vadd.f32 %v2825, %v3379
      %v3478 = vadd.f32 %v2826, %v3384
      %v3479 = vadd.f32 %v2827, %v3389
      %v3480 = vadd.f32 %v2828, %v3394
      %v3481 = vadd.f32 %v2829, %v3399
      %v3482 = vadd.f32 %v2830, %v3404
      %v3483 = vadd.f32 %v2831, %v3409
      %v3484 = vadd.f32 %v2832, %v3414
      %v3485 = vadd.f32 %v2833, %v3419
      %v3486 = vadd.f32 %v2834, %v3424
      %v3487 = vadd.f32 %v2835, %v3429
      %v3488 = vadd.f32 %v2836, %v3434
      %v3489 = vadd.f32 %v2837, %v3439
      %v3490 = vadd.f32 %v2838, %v3444
      %v3491 = vadd.f32 %v2839, %v3449
      %v3492 = vadd.f32 %v2840, %v3454
      %v3493 = vadd.f32 %v2841, %v3459
      %s3494 = scalar_lea.vmem %s5, 16
      %v3495 = vld [vmem:[%s3494] sm:$0xf]
      %v3497 = vsel %vm626, %v3495, 0
      %3499 = vmatprep.subr.mxu0 0.0
      %3500 = vmatpush1.msra.mxu0 %v3497
      %3501 = vmatprep.subr.mxu0 0.0
      %3502 = vmatpush1.msra.mxu0 0.0
      %3503 = vmatprep.subr.mxu0 0.0
      %3504 = vmatpush1.msra.mxu0 0.0
      %3505 = vmatprep.subr.mxu0 0.0
      %3506 = vmatpush1.msra.mxu0 0.0
      %3507 = vmatprep.subr.mxu0 0.0
      %3508 = vmatpush1.msra.mxu0 0.0
      %3509 = vmatprep.subr.mxu0 0.0
      %3510 = vmatpush1.msra.mxu0 0.0
      %3511 = vmatprep.subr.mxu0 0.0
      %3512 = vmatpush1.msra.mxu0 0.0
      %3513 = vmatprep.subr.mxu0 0.0
      %3514 = vmatpush1.msra.mxu0 0.0
      %3515 = vmatprep.subr.mxu0 0.0
      %3516 = vmatpush1.msra.mxu0 0.0
      %3517 = vmatprep.subr.mxu0 0.0
      %3518 = vmatpush1.msra.mxu0 0.0
      %3519 = vmatprep.subr.mxu0 0.0
      %3520 = vmatpush1.msra.mxu0 0.0
      %3521 = vmatprep.subr.mxu0 0.0
      %3522 = vmatpush1.msra.mxu0 0.0
      %3523 = vmatprep.subr.mxu0 0.0
      %3524 = vmatpush1.msra.mxu0 0.0
      %3525 = vmatprep.subr.mxu0 0.0
      %3526 = vmatpush1.msra.mxu0 0.0
      %3527 = vmatprep.subr.mxu0 0.0
      %3528 = vmatpush1.msra.mxu0 0.0
      %3529 = vmatprep.subr.mxu0 0.0
      %3530 = vmatpush1.msra.mxu0 0.0
      %3531 = vmatprep.subr.mxu0 0.0
      %3532 = vmatpush1.msra.mxu0 0.0
      %3533 = vmatprep.subr.mxu0 0.0
      %3534 = vmatpush1.msra.mxu0 0.0
      %3535 = vmatprep.subr.mxu0 0.0
      %3536 = vmatpush1.msra.mxu0 0.0
      %3537 = vmatprep.subr.mxu0 0.0
      %3538 = vmatpush1.msra.mxu0 0.0
      %3539 = vmatprep.subr.mxu0 0.0
      %3540 = vmatpush1.msra.mxu0 0.0
      %3541 = vmatprep.subr.mxu0 0.0
      %3542 = vmatpush1.msra.mxu0 0.0
      %3543 = vmatprep.subr.mxu0 0.0
      %3544 = vmatpush1.msra.mxu0 0.0
      %3545 = vmatprep.subr.mxu0 0.0
      %3546 = vmatpush1.msra.mxu0 0.0
      %3547 = vmatprep.subr.mxu0 0.0
      %3548 = vmatpush1.msra.mxu0 0.0
      %3549 = vmatprep.subr.mxu0 0.0
      %3550 = vmatpush1.msra.mxu0 0.0
      %3551 = vmatprep.subr.mxu0 0.0
      %3552 = vmatpush1.msra.mxu0 0.0
      %3553 = vmatprep.subr.mxu0 0.0
      %3554 = vmatpush1.msra.mxu0 0.0
      %3555 = vmatprep.subr.mxu0 0.0
      %3556 = vmatpush1.msra.mxu0 0.0
      %3557 = vmatprep.subr.mxu0 0.0
      %3558 = vmatpush1.msra.mxu0 0.0
      %3559 = vmatprep.subr.mxu0 0.0
      %3560 = vmatpush1.msra.mxu0 0.0
      %3561 = vmatprep.subr.mxu0 0.0
      %3562 = vmatpush1.msra.mxu0 0.0
      %3563 = vmatprep.mubr.f32.mxu0 0.0
      %3564 = vmatmul.mubr.f32.gmra.mrb[0].mxu0 %v3139
      %v3565 = vpop.f32.mrb[0].mxu0
      %v3566 = vadd.f32 0.0, %v3565
      %v3567 = vpop.f32.mrb[0].mxu0
      %3568 = vmatprep.mubr.f32.mxu0 0.0
      %3569 = vmatmul.mubr.f32.gmra.mrb[0].mxu0 %v3142
      %v3570 = vpop.f32.mrb[0].mxu0
      %v3571 = vadd.f32 0.0, %v3570
      %v3572 = vpop.f32.mrb[0].mxu0
      %3573 = vmatprep.mubr.f32.mxu0 0.0
      %3574 = vmatmul.mubr.f32.gmra.mrb[0].mxu0 %v3145
      %v3575 = vpop.f32.mrb[0].mxu0
      %v3576 = vadd.f32 0.0, %v3575
      %v3577 = vpop.f32.mrb[0].mxu0
      %3578 = vmatprep.mubr.f32.mxu0 0.0
      %3579 = vmatmul.mubr.f32.gmra.mrb[0].mxu0 %v3148
      %v3580 = vpop.f32.mrb[0].mxu0
      %v3581 = vadd.f32 0.0, %v3580
      %v3582 = vpop.f32.mrb[0].mxu0
      %3583 = vmatprep.mubr.f32.mxu0 0.0
      %3584 = vmatmul.mubr.f32.gmra.mrb[0].mxu0 %v3151
      %v3585 = vpop.f32.mrb[0].mxu0
      %v3586 = vadd.f32 0.0, %v3585
      %v3587 = vpop.f32.mrb[0].mxu0
      %3588 = vmatprep.mubr.f32.mxu0 0.0
      %3589 = vmatmul.mubr.f32.gmra.mrb[0].mxu0 %v3154
      %v3590 = vpop.f32.mrb[0].mxu0
      %v3591 = vadd.f32 0.0, %v3590
      %v3592 = vpop.f32.mrb[0].mxu0
      %3593 = vmatprep.mubr.f32.mxu0 0.0
      %3594 = vmatmul.mubr.f32.gmra.mrb[0].mxu0 %v3157
      %v3595 = vpop.f32.mrb[0].mxu0
      %v3596 = vadd.f32 0.0, %v3595
      %v3597 = vpop.f32.mrb[0].mxu0
      %3598 = vmatprep.mubr.f32.mxu0 0.0
      %3599 = vmatmul.mubr.f32.gmra.mrb[0].mxu0 %v3160
      %v3600 = vpop.f32.mrb[0].mxu0
      %v3601 = vadd.f32 0.0, %v3600
      %v3602 = vpop.f32.mrb[0].mxu0
      %3603 = vmatprep.mubr.f32.mxu0 0.0
      %3604 = vmatmul.mubr.f32.gmra.mrb[0].mxu0 %v3163
      %v3605 = vpop.f32.mrb[0].mxu0
      %v3606 = vadd.f32 0.0, %v3605
      %v3607 = vpop.f32.mrb[0].mxu0
      %3608 = vmatprep.mubr.f32.mxu0 0.0
      %3609 = vmatmul.mubr.f32.gmra.mrb[0].mxu0 %v3166
      %v3610 = vpop.f32.mrb[0].mxu0
      %v3611 = vadd.f32 0.0, %v3610
      %v3612 = vpop.f32.mrb[0].mxu0
      %3613 = vmatprep.mubr.f32.mxu0 0.0
      %3614 = vmatmul.mubr.f32.gmra.mrb[0].mxu0 %v3169
      %v3615 = vpop.f32.mrb[0].mxu0
      %v3616 = vadd.f32 0.0, %v3615
      %v3617 = vpop.f32.mrb[0].mxu0
      %3618 = vmatprep.mubr.f32.mxu0 0.0
      %3619 = vmatmul.mubr.f32.gmra.mrb[0].mxu0 %v3172
      %v3620 = vpop.f32.mrb[0].mxu0
      %v3621 = vadd.f32 0.0, %v3620
      %v3622 = vpop.f32.mrb[0].mxu0
      %3623 = vmatprep.mubr.f32.mxu0 0.0
      %3624 = vmatmul.mubr.f32.gmra.mrb[0].mxu0 %v3175
      %v3625 = vpop.f32.mrb[0].mxu0
      %v3626 = vadd.f32 0.0, %v3625
      %v3627 = vpop.f32.mrb[0].mxu0
      %3628 = vmatprep.mubr.f32.mxu0 0.0
      %3629 = vmatmul.mubr.f32.gmra.mrb[0].mxu0 %v3178
      %v3630 = vpop.f32.mrb[0].mxu0
      %v3631 = vadd.f32 0.0, %v3630
      %v3632 = vpop.f32.mrb[0].mxu0
      %3633 = vmatprep.mubr.f32.mxu0 0.0
      %3634 = vmatmul.mubr.f32.gmra.mrb[0].mxu0 %v3181
      %v3635 = vpop.f32.mrb[0].mxu0
      %v3636 = vadd.f32 0.0, %v3635
      %v3637 = vpop.f32.mrb[0].mxu0
      %3638 = vmatprep.mubr.f32.mxu0 0.0
      %3639 = vmatmul.mubr.f32.gmra.mrb[0].mxu0 %v3184
      %v3640 = vpop.f32.mrb[0].mxu0
      %v3641 = vadd.f32 0.0, %v3640
      %v3642 = vpop.f32.mrb[0].mxu0
      %3643 = vmatprep.mubr.f32.mxu0 0.0
      %3644 = vmatmul.mubr.f32.gmra.mrb[0].mxu0 %v3187
      %v3645 = vpop.f32.mrb[0].mxu0
      %v3646 = vadd.f32 0.0, %v3645
      %v3647 = vpop.f32.mrb[0].mxu0
      %3648 = vmatprep.mubr.f32.mxu0 0.0
      %3649 = vmatmul.mubr.f32.gmra.mrb[0].mxu0 %v3190
      %v3650 = vpop.f32.mrb[0].mxu0
      %v3651 = vadd.f32 0.0, %v3650
      %v3652 = vpop.f32.mrb[0].mxu0
      %3653 = vmatprep.mubr.f32.mxu0 0.0
      %3654 = vmatmul.mubr.f32.gmra.mrb[0].mxu0 %v3193
      %v3655 = vpop.f32.mrb[0].mxu0
      %v3656 = vadd.f32 0.0, %v3655
      %v3657 = vpop.f32.mrb[0].mxu0
      %3658 = vmatprep.mubr.f32.mxu0 0.0
      %3659 = vmatmul.mubr.f32.gmra.mrb[0].mxu0 %v3196
      %v3660 = vpop.f32.mrb[0].mxu0
      %v3661 = vadd.f32 0.0, %v3660
      %v3662 = vpop.f32.mrb[0].mxu0
      %3663 = vmatprep.mubr.f32.mxu0 0.0
      %3664 = vmatmul.mubr.f32.gmra.mrb[0].mxu0 %v3199
      %v3665 = vpop.f32.mrb[0].mxu0
      %v3666 = vadd.f32 0.0, %v3665
      %v3667 = vpop.f32.mrb[0].mxu0
      %3668 = vmatprep.mubr.f32.mxu0 0.0
      %3669 = vmatmul.mubr.f32.gmra.mrb[0].mxu0 %v3202
      %v3670 = vpop.f32.mrb[0].mxu0
      %v3671 = vadd.f32 0.0, %v3670
      %v3672 = vpop.f32.mrb[0].mxu0
      %3673 = vmatprep.mubr.f32.mxu0 0.0
      %3674 = vmatmul.mubr.f32.gmra.mrb[0].mxu0 %v3205
      %v3675 = vpop.f32.mrb[0].mxu0
      %v3676 = vadd.f32 0.0, %v3675
      %v3677 = vpop.f32.mrb[0].mxu0
      %3678 = vmatprep.mubr.f32.mxu0 0.0
      %3679 = vmatmul.mubr.f32.gmra.mrb[0].mxu0 %v3208
      %v3680 = vpop.f32.mrb[0].mxu0
      %v3681 = vadd.f32 0.0, %v3680
      %v3682 = vpop.f32.mrb[0].mxu0
      %3683 = vmatprep.mubr.f32.mxu0 0.0
      %3684 = vmatmul.mubr.f32.gmra.mrb[0].mxu0 %v3211
      %v3685 = vpop.f32.mrb[0].mxu0
      %v3686 = vadd.f32 0.0, %v3685
      %v3687 = vpop.f32.mrb[0].mxu0
      %3688 = vmatprep.mubr.f32.mxu0 0.0
      %3689 = vmatmul.mubr.f32.gmra.mrb[0].mxu0 %v3214
      %v3690 = vpop.f32.mrb[0].mxu0
      %v3691 = vadd.f32 0.0, %v3690
      %v3692 = vpop.f32.mrb[0].mxu0
      %3693 = vmatprep.mubr.f32.mxu0 0.0
      %3694 = vmatmul.mubr.f32.gmra.mrb[0].mxu0 %v3217
      %v3695 = vpop.f32.mrb[0].mxu0
      %v3696 = vadd.f32 0.0, %v3695
      %v3697 = vpop.f32.mrb[0].mxu0
      %3698 = vmatprep.mubr.f32.mxu0 0.0
      %3699 = vmatmul.mubr.f32.gmra.mrb[0].mxu0 %v3220
      %v3700 = vpop.f32.mrb[0].mxu0
      %v3701 = vadd.f32 0.0, %v3700
      %v3702 = vpop.f32.mrb[0].mxu0
      %3703 = vmatprep.mubr.f32.mxu0 0.0
      %3704 = vmatmul.mubr.f32.gmra.mrb[0].mxu0 %v3223
      %v3705 = vpop.f32.mrb[0].mxu0
      %v3706 = vadd.f32 0.0, %v3705
      %v3707 = vpop.f32.mrb[0].mxu0
      %3708 = vmatprep.mubr.f32.mxu0 0.0
      %3709 = vmatmul.mubr.f32.gmra.mrb[0].mxu0 %v3226
      %v3710 = vpop.f32.mrb[0].mxu0
      %v3711 = vadd.f32 0.0, %v3710
      %v3712 = vpop.f32.mrb[0].mxu0
      %3713 = vmatprep.mubr.f32.mxu0 0.0
      %3714 = vmatmul.mubr.f32.gmra.mrb[0].mxu0 %v3229
      %v3715 = vpop.f32.mrb[0].mxu0
      %v3716 = vadd.f32 0.0, %v3715
      %v3717 = vpop.f32.mrb[0].mxu0
      %3718 = vmatprep.mubr.f32.mxu0 0.0
      %3719 = vmatmul.mubr.f32.gmra.mrb[0].mxu0 %v3232
      %v3720 = vpop.f32.mrb[0].mxu0
      %v3721 = vadd.f32 0.0, %v3720
      %v3722 = vpop.f32.mrb[0].mxu0
      %3723 = vdwg.mxu0
      %v3724 = vadd.f32 %v3072, %v3566
      %v3725 = vadd.f32 %v3073, %v3571
      %v3726 = vadd.f32 %v3074, %v3576
      %v3727 = vadd.f32 %v3075, %v3581
      %v3728 = vadd.f32 %v3076, %v3586
      %v3729 = vadd.f32 %v3077, %v3591
      %v3730 = vadd.f32 %v3078, %v3596
      %v3731 = vadd.f32 %v3079, %v3601
      %v3732 = vadd.f32 %v3080, %v3606
      %v3733 = vadd.f32 %v3081, %v3611
      %v3734 = vadd.f32 %v3082, %v3616
      %v3735 = vadd.f32 %v3083, %v3621
      %v3736 = vadd.f32 %v3084, %v3626
      %v3737 = vadd.f32 %v3085, %v3631
      %v3738 = vadd.f32 %v3086, %v3636
      %v3739 = vadd.f32 %v3087, %v3641
      %v3740 = vadd.f32 %v3088, %v3646
      %v3741 = vadd.f32 %v3089, %v3651
      %v3742 = vadd.f32 %v3090, %v3656
      %v3743 = vadd.f32 %v3091, %v3661
      %v3744 = vadd.f32 %v3092, %v3666
      %v3745 = vadd.f32 %v3093, %v3671
      %v3746 = vadd.f32 %v3094, %v3676
      %v3747 = vadd.f32 %v3095, %v3681
      %v3748 = vadd.f32 %v3096, %v3686
      %v3749 = vadd.f32 %v3097, %v3691
      %v3750 = vadd.f32 %v3098, %v3696
      %v3751 = vadd.f32 %v3099, %v3701
      %v3752 = vadd.f32 %v3100, %v3706
      %v3753 = vadd.f32 %v3101, %v3711
      %v3754 = vadd.f32 %v3102, %v3716
      %v3755 = vadd.f32 %v3103, %v3721
      %v3756 = vld [vmem:[%s450 + $0x2] sm:$0xff]
      %v3757 = vld [vmem:[%s450 + $0xa] sm:$0xff]
      %v3758 = vld [vmem:[%s450 + $0x1a] sm:$0xff]
      %v3759 = vld [vmem:[%s450 + $0x22] sm:$0xff]
      %v3760 = vld [vmem:[%s450 + $0x32] sm:$0xff]
      %v3761 = vld [vmem:[%s450 + $0x3a] sm:$0xff]
      %v3762 = vld [vmem:[%s450 + $0x4a] sm:$0xff]
      %v3763 = vld [vmem:[%s450 + $0x52] sm:$0xff]
      %v3764 = vld [vmem:[%s450 + $0x62] sm:$0xff]
      %v3765 = vld [vmem:[%s450 + $0x6a] sm:$0xff]
      %v3766 = vld [vmem:[%s450 + $0x7a] sm:$0xff]
      %v3767 = vld [vmem:[%s450 + $0x82] sm:$0xff]
      %v3768 = vld [vmem:[%s450 + $0x92] sm:$0xff]
      %v3769 = vld [vmem:[%s450 + $0x9a] sm:$0xff]
      %v3770 = vld [vmem:[%s450 + $0xaa] sm:$0xff]
      %v3771 = vld [vmem:[%s450 + $0xb2] sm:$0xff]
      %v3772 = vld [vmem:[%s450 + $0xc2] sm:$0xff]
      %v3773 = vld [vmem:[%s450 + $0xca] sm:$0xff]
      %v3774 = vld [vmem:[%s450 + $0xda] sm:$0xff]
      %v3775 = vld [vmem:[%s450 + $0xe2] sm:$0xff]
      %v3776 = vld [vmem:[%s450 + $0xf2] sm:$0xff]
      %v3777 = vld [vmem:[%s450 + $0xfa] sm:$0xff]
      %v3778 = vld [vmem:[%s450 + $0x10a] sm:$0xff]
      %v3779 = vld [vmem:[%s450 + $0x112] sm:$0xff]
      %v3780 = vld [vmem:[%s450 + $0x122] sm:$0xff]
      %v3781 = vld [vmem:[%s450 + $0x12a] sm:$0xff]
      %v3782 = vld [vmem:[%s450 + $0x13a] sm:$0xff]
      %v3783 = vld [vmem:[%s450 + $0x142] sm:$0xff]
      %v3784 = vld [vmem:[%s450 + $0x152] sm:$0xff]
      %v3785 = vld [vmem:[%s450 + $0x15a] sm:$0xff]
      %v3786 = vld [vmem:[%s450 + $0x16a] sm:$0xff]
      %v3787 = vld [vmem:[%s450 + $0x172] sm:$0xff]
      %s3788 = scalar_lea.vmem %s1, 20
      %v3789 = vld [vmem:[%s3788] sm:$0xf]
      %v3791 = vsel %vm306, %v3756, 0
      %v3794 = vsel %vm306, %v3757, 0
      %v3797 = vsel %vm306, %v3758, 0
      %v3800 = vsel %vm306, %v3759, 0
      %v3803 = vsel %vm306, %v3760, 0
      %v3806 = vsel %vm306, %v3761, 0
      %v3809 = vsel %vm306, %v3762, 0
      %v3812 = vsel %vm306, %v3763, 0
      %v3815 = vsel %vm306, %v3764, 0
      %v3818 = vsel %vm306, %v3765, 0
      %v3821 = vsel %vm306, %v3766, 0
      %v3824 = vsel %vm306, %v3767, 0
      %v3827 = vsel %vm306, %v3768, 0
      %v3830 = vsel %vm306, %v3769, 0
      %v3833 = vsel %vm306, %v3770, 0
      %v3836 = vsel %vm306, %v3771, 0
      %v3839 = vsel %vm306, %v3772, 0
      %v3842 = vsel %vm306, %v3773, 0
      %v3845 = vsel %vm306, %v3774, 0
      %v3848 = vsel %vm306, %v3775, 0
      %v3851 = vsel %vm306, %v3776, 0
      %v3854 = vsel %vm306, %v3777, 0
      %v3857 = vsel %vm306, %v3778, 0
      %v3860 = vsel %vm306, %v3779, 0
      %v3863 = vsel %vm306, %v3780, 0
      %v3866 = vsel %vm306, %v3781, 0
      %v3869 = vsel %vm306, %v3782, 0
      %v3872 = vsel %vm306, %v3783, 0
      %v3875 = vsel %vm306, %v3784, 0
      %v3878 = vsel %vm306, %v3785, 0
      %v3881 = vsel %vm306, %v3786, 0
      %v3884 = vsel %vm306, %v3787, 0
      %v3887 = vsel %vm626, %v3789, 0
      %3889 = vmatprep.subr.mxu0 0.0
      %3890 = vmatpush1.msra.mxu0 %v3887
      %3891 = vmatprep.subr.mxu0 0.0
      %3892 = vmatpush1.msra.mxu0 0.0
      %3893 = vmatprep.subr.mxu0 0.0
      %3894 = vmatpush1.msra.mxu0 0.0
      %3895 = vmatprep.subr.mxu0 0.0
      %3896 = vmatpush1.msra.mxu0 0.0
      %3897 = vmatprep.subr.mxu0 0.0
      %3898 = vmatpush1.msra.mxu0 0.0
      %3899 = vmatprep.subr.mxu0 0.0
      %3900 = vmatpush1.msra.mxu0 0.0
      %3901 = vmatprep.subr.mxu0 0.0
      %3902 = vmatpush1.msra.mxu0 0.0
      %3903 = vmatprep.subr.mxu0 0.0
      %3904 = vmatpush1.msra.mxu0 0.0
      %3905 = vmatprep.subr.mxu0 0.0
      %3906 = vmatpush1.msra.mxu0 0.0
      %3907 = vmatprep.subr.mxu0 0.0
      %3908 = vmatpush1.msra.mxu0 0.0
      %3909 = vmatprep.subr.mxu0 0.0
      %3910 = vmatpush1.msra.mxu0 0.0
      %3911 = vmatprep.subr.mxu0 0.0
      %3912 = vmatpush1.msra.mxu0 0.0
      %3913 = vmatprep.subr.mxu0 0.0
      %3914 = vmatpush1.msra.mxu0 0.0
      %3915 = vmatprep.subr.mxu0 0.0
      %3916 = vmatpush1.msra.mxu0 0.0
      %3917 = vmatprep.subr.mxu0 0.0
      %3918 = vmatpush1.msra.mxu0 0.0
      %3919 = vmatprep.subr.mxu0 0.0
      %3920 = vmatpush1.msra.mxu0 0.0
      %3921 = vmatprep.subr.mxu0 0.0
      %3922 = vmatpush1.msra.mxu0 0.0
      %3923 = vmatprep.subr.mxu0 0.0
      %3924 = vmatpush1.msra.mxu0 0.0
      %3925 = vmatprep.subr.mxu0 0.0
      %3926 = vmatpush1.msra.mxu0 0.0
      %3927 = vmatprep.subr.mxu0 0.0
      %3928 = vmatpush1.msra.mxu0 0.0
      %3929 = vmatprep.subr.mxu0 0.0
      %3930 = vmatpush1.msra.mxu0 0.0
      %3931 = vmatprep.subr.mxu0 0.0
      %3932 = vmatpush1.msra.mxu0 0.0
      %3933 = vmatprep.subr.mxu0 0.0
      %3934 = vmatpush1.msra.mxu0 0.0
      %3935 = vmatprep.subr.mxu0 0.0
      %3936 = vmatpush1.msra.mxu0 0.0
      %3937 = vmatprep.subr.mxu0 0.0
      %3938 = vmatpush1.msra.mxu0 0.0
      %3939 = vmatprep.subr.mxu0 0.0
      %3940 = vmatpush1.msra.mxu0 0.0
      %3941 = vmatprep.subr.mxu0 0.0
      %3942 = vmatpush1.msra.mxu0 0.0
      %3943 = vmatprep.subr.mxu0 0.0
      %3944 = vmatpush1.msra.mxu0 0.0
      %3945 = vmatprep.subr.mxu0 0.0
      %3946 = vmatpush1.msra.mxu0 0.0
      %3947 = vmatprep.subr.mxu0 0.0
      %3948 = vmatpush1.msra.mxu0 0.0
      %3949 = vmatprep.subr.mxu0 0.0
      %3950 = vmatpush1.msra.mxu0 0.0
      %3951 = vmatprep.subr.mxu0 0.0
      %3952 = vmatpush1.msra.mxu0 0.0
      %3953 = vmatprep.mubr.f32.mxu0 0.0
      %3954 = vmatmul.mubr.f32.gmra.mrb[0].mxu0 %v3791
      %v3955 = vpop.f32.mrb[0].mxu0
      %v3956 = vadd.f32 0.0, %v3955
      %v3957 = vpop.f32.mrb[0].mxu0
      %3958 = vmatprep.mubr.f32.mxu0 0.0
      %3959 = vmatmul.mubr.f32.gmra.mrb[0].mxu0 %v3794
      %v3960 = vpop.f32.mrb[0].mxu0
      %v3961 = vadd.f32 0.0, %v3960
      %v3962 = vpop.f32.mrb[0].mxu0
      %3963 = vmatprep.mubr.f32.mxu0 0.0
      %3964 = vmatmul.mubr.f32.gmra.mrb[0].mxu0 %v3797
      %v3965 = vpop.f32.mrb[0].mxu0
      %v3966 = vadd.f32 0.0, %v3965
      %v3967 = vpop.f32.mrb[0].mxu0
      %3968 = vmatprep.mubr.f32.mxu0 0.0
      %3969 = vmatmul.mubr.f32.gmra.mrb[0].mxu0 %v3800
      %v3970 = vpop.f32.mrb[0].mxu0
      %v3971 = vadd.f32 0.0, %v3970
      %v3972 = vpop.f32.mrb[0].mxu0
      %3973 = vmatprep.mubr.f32.mxu0 0.0
      %3974 = vmatmul.mubr.f32.gmra.mrb[0].mxu0 %v3803
      %v3975 = vpop.f32.mrb[0].mxu0
      %v3976 = vadd.f32 0.0, %v3975
      %v3977 = vpop.f32.mrb[0].mxu0
      %3978 = vmatprep.mubr.f32.mxu0 0.0
      %3979 = vmatmul.mubr.f32.gmra.mrb[0].mxu0 %v3806
      %v3980 = vpop.f32.mrb[0].mxu0
      %v3981 = vadd.f32 0.0, %v3980
      %v3982 = vpop.f32.mrb[0].mxu0
      %3983 = vmatprep.mubr.f32.mxu0 0.0
      %3984 = vmatmul.mubr.f32.gmra.mrb[0].mxu0 %v3809
      %v3985 = vpop.f32.mrb[0].mxu0
      %v3986 = vadd.f32 0.0, %v3985
      %v3987 = vpop.f32.mrb[0].mxu0
      %3988 = vmatprep.mubr.f32.mxu0 0.0
      %3989 = vmatmul.mubr.f32.gmra.mrb[0].mxu0 %v3812
      %v3990 = vpop.f32.mrb[0].mxu0
      %v3991 = vadd.f32 0.0, %v3990
      %v3992 = vpop.f32.mrb[0].mxu0
      %3993 = vmatprep.mubr.f32.mxu0 0.0
      %3994 = vmatmul.mubr.f32.gmra.mrb[0].mxu0 %v3815
      %v3995 = vpop.f32.mrb[0].mxu0
      %v3996 = vadd.f32 0.0, %v3995
      %v3997 = vpop.f32.mrb[0].mxu0
      %3998 = vmatprep.mubr.f32.mxu0 0.0
      %3999 = vmatmul.mubr.f32.gmra.mrb[0].mxu0 %v3818
      %v4000 = vpop.f32.mrb[0].mxu0
      %v4001 = vadd.f32 0.0, %v4000
      %v4002 = vpop.f32.mrb[0].mxu0
      %4003 = vmatprep.mubr.f32.mxu0 0.0
      %4004 = vmatmul.mubr.f32.gmra.mrb[0].mxu0 %v3821
      %v4005 = vpop.f32.mrb[0].mxu0
      %v4006 = vadd.f32 0.0, %v4005
      %v4007 = vpop.f32.mrb[0].mxu0
      %4008 = vmatprep.mubr.f32.mxu0 0.0
      %4009 = vmatmul.mubr.f32.gmra.mrb[0].mxu0 %v3824
      %v4010 = vpop.f32.mrb[0].mxu0
      %v4011 = vadd.f32 0.0, %v4010
      %v4012 = vpop.f32.mrb[0].mxu0
      %4013 = vmatprep.mubr.f32.mxu0 0.0
      %4014 = vmatmul.mubr.f32.gmra.mrb[0].mxu0 %v3827
      %v4015 = vpop.f32.mrb[0].mxu0
      %v4016 = vadd.f32 0.0, %v4015
      %v4017 = vpop.f32.mrb[0].mxu0
      %4018 = vmatprep.mubr.f32.mxu0 0.0
      %4019 = vmatmul.mubr.f32.gmra.mrb[0].mxu0 %v3830
      %v4020 = vpop.f32.mrb[0].mxu0
      %v4021 = vadd.f32 0.0, %v4020
      %v4022 = vpop.f32.mrb[0].mxu0
      %4023 = vmatprep.mubr.f32.mxu0 0.0
      %4024 = vmatmul.mubr.f32.gmra.mrb[0].mxu0 %v3833
      %v4025 = vpop.f32.mrb[0].mxu0
      %v4026 = vadd.f32 0.0, %v4025
      %v4027 = vpop.f32.mrb[0].mxu0
      %4028 = vmatprep.mubr.f32.mxu0 0.0
      %4029 = vmatmul.mubr.f32.gmra.mrb[0].mxu0 %v3836
      %v4030 = vpop.f32.mrb[0].mxu0
      %v4031 = vadd.f32 0.0, %v4030
      %v4032 = vpop.f32.mrb[0].mxu0
      %4033 = vmatprep.mubr.f32.mxu0 0.0
      %4034 = vmatmul.mubr.f32.gmra.mrb[0].mxu0 %v3839
      %v4035 = vpop.f32.mrb[0].mxu0
      %v4036 = vadd.f32 0.0, %v4035
      %v4037 = vpop.f32.mrb[0].mxu0
      %4038 = vmatprep.mubr.f32.mxu0 0.0
      %4039 = vmatmul.mubr.f32.gmra.mrb[0].mxu0 %v3842
      %v4040 = vpop.f32.mrb[0].mxu0
      %v4041 = vadd.f32 0.0, %v4040
      %v4042 = vpop.f32.mrb[0].mxu0
      %4043 = vmatprep.mubr.f32.mxu0 0.0
      %4044 = vmatmul.mubr.f32.gmra.mrb[0].mxu0 %v3845
      %v4045 = vpop.f32.mrb[0].mxu0
      %v4046 = vadd.f32 0.0, %v4045
      %v4047 = vpop.f32.mrb[0].mxu0
      %4048 = vmatprep.mubr.f32.mxu0 0.0
      %4049 = vmatmul.mubr.f32.gmra.mrb[0].mxu0 %v3848
      %v4050 = vpop.f32.mrb[0].mxu0
      %v4051 = vadd.f32 0.0, %v4050
      %v4052 = vpop.f32.mrb[0].mxu0
      %4053 = vmatprep.mubr.f32.mxu0 0.0
      %4054 = vmatmul.mubr.f32.gmra.mrb[0].mxu0 %v3851
      %v4055 = vpop.f32.mrb[0].mxu0
      %v4056 = vadd.f32 0.0, %v4055
      %v4057 = vpop.f32.mrb[0].mxu0
      %4058 = vmatprep.mubr.f32.mxu0 0.0
      %4059 = vmatmul.mubr.f32.gmra.mrb[0].mxu0 %v3854
      %v4060 = vpop.f32.mrb[0].mxu0
      %v4061 = vadd.f32 0.0, %v4060
      %v4062 = vpop.f32.mrb[0].mxu0
      %4063 = vmatprep.mubr.f32.mxu0 0.0
      %4064 = vmatmul.mubr.f32.gmra.mrb[0].mxu0 %v3857
      %v4065 = vpop.f32.mrb[0].mxu0
      %v4066 = vadd.f32 0.0, %v4065
      %v4067 = vpop.f32.mrb[0].mxu0
      %4068 = vmatprep.mubr.f32.mxu0 0.0
      %4069 = vmatmul.mubr.f32.gmra.mrb[0].mxu0 %v3860
      %v4070 = vpop.f32.mrb[0].mxu0
      %v4071 = vadd.f32 0.0, %v4070
      %v4072 = vpop.f32.mrb[0].mxu0
      %4073 = vmatprep.mubr.f32.mxu0 0.0
      %4074 = vmatmul.mubr.f32.gmra.mrb[0].mxu0 %v3863
      %v4075 = vpop.f32.mrb[0].mxu0
      %v4076 = vadd.f32 0.0, %v4075
      %v4077 = vpop.f32.mrb[0].mxu0
      %4078 = vmatprep.mubr.f32.mxu0 0.0
      %4079 = vmatmul.mubr.f32.gmra.mrb[0].mxu0 %v3866
      %v4080 = vpop.f32.mrb[0].mxu0
      %v4081 = vadd.f32 0.0, %v4080
      %v4082 = vpop.f32.mrb[0].mxu0
      %4083 = vmatprep.mubr.f32.mxu0 0.0
      %4084 = vmatmul.mubr.f32.gmra.mrb[0].mxu0 %v3869
      %v4085 = vpop.f32.mrb[0].mxu0
      %v4086 = vadd.f32 0.0, %v4085
      %v4087 = vpop.f32.mrb[0].mxu0
      %4088 = vmatprep.mubr.f32.mxu0 0.0
      %4089 = vmatmul.mubr.f32.gmra.mrb[0].mxu0 %v3872
      %v4090 = vpop.f32.mrb[0].mxu0
      %v4091 = vadd.f32 0.0, %v4090
      %v4092 = vpop.f32.mrb[0].mxu0
      %4093 = vmatprep.mubr.f32.mxu0 0.0
      %4094 = vmatmul.mubr.f32.gmra.mrb[0].mxu0 %v3875
      %v4095 = vpop.f32.mrb[0].mxu0
      %v4096 = vadd.f32 0.0, %v4095
      %v4097 = vpop.f32.mrb[0].mxu0
      %4098 = vmatprep.mubr.f32.mxu0 0.0
      %4099 = vmatmul.mubr.f32.gmra.mrb[0].mxu0 %v3878
      %v4100 = vpop.f32.mrb[0].mxu0
      %v4101 = vadd.f32 0.0, %v4100
      %v4102 = vpop.f32.mrb[0].mxu0
      %4103 = vmatprep.mubr.f32.mxu0 0.0
      %4104 = vmatmul.mubr.f32.gmra.mrb[0].mxu0 %v3881
      %v4105 = vpop.f32.mrb[0].mxu0
      %v4106 = vadd.f32 0.0, %v4105
      %v4107 = vpop.f32.mrb[0].mxu0
      %4108 = vmatprep.mubr.f32.mxu0 0.0
      %4109 = vmatmul.mubr.f32.gmra.mrb[0].mxu0 %v3884
      %v4110 = vpop.f32.mrb[0].mxu0
      %v4111 = vadd.f32 0.0, %v4110
      %v4112 = vpop.f32.mrb[0].mxu0
      %4113 = vdwg.mxu0
      %v4114 = vadd.f32 %v3462, %v3956
      %v4115 = vadd.f32 %v3463, %v3961
      %v4116 = vadd.f32 %v3464, %v3966
      %v4117 = vadd.f32 %v3465, %v3971
      %v4118 = vadd.f32 %v3466, %v3976
      %v4119 = vadd.f32 %v3467, %v3981
      %v4120 = vadd.f32 %v3468, %v3986
      %v4121 = vadd.f32 %v3469, %v3991
      %v4122 = vadd.f32 %v3470, %v3996
      %v4123 = vadd.f32 %v3471, %v4001
      %v4124 = vadd.f32 %v3472, %v4006
      %v4125 = vadd.f32 %v3473, %v4011
      %v4126 = vadd.f32 %v3474, %v4016
      %v4127 = vadd.f32 %v3475, %v4021
      %v4128 = vadd.f32 %v3476, %v4026
      %v4129 = vadd.f32 %v3477, %v4031
      %v4130 = vadd.f32 %v3478, %v4036
      %v4131 = vadd.f32 %v3479, %v4041
      %v4132 = vadd.f32 %v3480, %v4046
      %v4133 = vadd.f32 %v3481, %v4051
      %v4134 = vadd.f32 %v3482, %v4056
      %v4135 = vadd.f32 %v3483, %v4061
      %v4136 = vadd.f32 %v3484, %v4066
      %v4137 = vadd.f32 %v3485, %v4071
      %v4138 = vadd.f32 %v3486, %v4076
      %v4139 = vadd.f32 %v3487, %v4081
      %v4140 = vadd.f32 %v3488, %v4086
      %v4141 = vadd.f32 %v3489, %v4091
      %v4142 = vadd.f32 %v3490, %v4096
      %v4143 = vadd.f32 %v3491, %v4101
      %v4144 = vadd.f32 %v3492, %v4106
      %v4145 = vadd.f32 %v3493, %v4111
      %s4146 = scalar_lea.vmem %s5, 20
      %v4147 = vld [vmem:[%s4146] sm:$0xf]
      %v4149 = vsel %vm626, %v4147, 0
      %4151 = vmatprep.subr.mxu0 0.0
      %4152 = vmatpush1.msra.mxu0 %v4149
      %4153 = vmatprep.subr.mxu0 0.0
      %4154 = vmatpush1.msra.mxu0 0.0
      %4155 = vmatprep.subr.mxu0 0.0
      %4156 = vmatpush1.msra.mxu0 0.0
      %4157 = vmatprep.subr.mxu0 0.0
      %4158 = vmatpush1.msra.mxu0 0.0
      %4159 = vmatprep.subr.mxu0 0.0
      %4160 = vmatpush1.msra.mxu0 0.0
      %4161 = vmatprep.subr.mxu0 0.0
      %4162 = vmatpush1.msra.mxu0 0.0
      %4163 = vmatprep.subr.mxu0 0.0
      %4164 = vmatpush1.msra.mxu0 0.0
      %4165 = vmatprep.subr.mxu0 0.0
      %4166 = vmatpush1.msra.mxu0 0.0
      %4167 = vmatprep.subr.mxu0 0.0
      %4168 = vmatpush1.msra.mxu0 0.0
      %4169 = vmatprep.subr.mxu0 0.0
      %4170 = vmatpush1.msra.mxu0 0.0
      %4171 = vmatprep.subr.mxu0 0.0
      %4172 = vmatpush1.msra.mxu0 0.0
      %4173 = vmatprep.subr.mxu0 0.0
      %4174 = vmatpush1.msra.mxu0 0.0
      %4175 = vmatprep.subr.mxu0 0.0
      %4176 = vmatpush1.msra.mxu0 0.0
      %4177 = vmatprep.subr.mxu0 0.0
      %4178 = vmatpush1.msra.mxu0 0.0
      %4179 = vmatprep.subr.mxu0 0.0
      %4180 = vmatpush1.msra.mxu0 0.0
      %4181 = vmatprep.subr.mxu0 0.0
      %4182 = vmatpush1.msra.mxu0 0.0
      %4183 = vmatprep.subr.mxu0 0.0
      %4184 = vmatpush1.msra.mxu0 0.0
      %4185 = vmatprep.subr.mxu0 0.0
      %4186 = vmatpush1.msra.mxu0 0.0
      %4187 = vmatprep.subr.mxu0 0.0
      %4188 = vmatpush1.msra.mxu0 0.0
      %4189 = vmatprep.subr.mxu0 0.0
      %4190 = vmatpush1.msra.mxu0 0.0
      %4191 = vmatprep.subr.mxu0 0.0
      %4192 = vmatpush1.msra.mxu0 0.0
      %4193 = vmatprep.subr.mxu0 0.0
      %4194 = vmatpush1.msra.mxu0 0.0
      %4195 = vmatprep.subr.mxu0 0.0
      %4196 = vmatpush1.msra.mxu0 0.0
      %4197 = vmatprep.subr.mxu0 0.0
      %4198 = vmatpush1.msra.mxu0 0.0
      %4199 = vmatprep.subr.mxu0 0.0
      %4200 = vmatpush1.msra.mxu0 0.0
      %4201 = vmatprep.subr.mxu0 0.0
      %4202 = vmatpush1.msra.mxu0 0.0
      %4203 = vmatprep.subr.mxu0 0.0
      %4204 = vmatpush1.msra.mxu0 0.0
      %4205 = vmatprep.subr.mxu0 0.0
      %4206 = vmatpush1.msra.mxu0 0.0
      %4207 = vmatprep.subr.mxu0 0.0
      %4208 = vmatpush1.msra.mxu0 0.0
      %4209 = vmatprep.subr.mxu0 0.0
      %4210 = vmatpush1.msra.mxu0 0.0
      %4211 = vmatprep.subr.mxu0 0.0
      %4212 = vmatpush1.msra.mxu0 0.0
      %4213 = vmatprep.subr.mxu0 0.0
      %4214 = vmatpush1.msra.mxu0 0.0
      %4215 = vmatprep.mubr.f32.mxu0 0.0
      %4216 = vmatmul.mubr.f32.gmra.mrb[0].mxu0 %v3791
      %v4217 = vpop.f32.mrb[0].mxu0
      %v4218 = vadd.f32 0.0, %v4217
      %v4219 = vpop.f32.mrb[0].mxu0
      %4220 = vmatprep.mubr.f32.mxu0 0.0
      %4221 = vmatmul.mubr.f32.gmra.mrb[0].mxu0 %v3794
      %v4222 = vpop.f32.mrb[0].mxu0
      %v4223 = vadd.f32 0.0, %v4222
      %v4224 = vpop.f32.mrb[0].mxu0
      %4225 = vmatprep.mubr.f32.mxu0 0.0
      %4226 = vmatmul.mubr.f32.gmra.mrb[0].mxu0 %v3797
      %v4227 = vpop.f32.mrb[0].mxu0
      %v4228 = vadd.f32 0.0, %v4227
      %v4229 = vpop.f32.mrb[0].mxu0
      %4230 = vmatprep.mubr.f32.mxu0 0.0
      %4231 = vmatmul.mubr.f32.gmra.mrb[0].mxu0 %v3800
      %v4232 = vpop.f32.mrb[0].mxu0
      %v4233 = vadd.f32 0.0, %v4232
      %v4234 = vpop.f32.mrb[0].mxu0
      %4235 = vmatprep.mubr.f32.mxu0 0.0
      %4236 = vmatmul.mubr.f32.gmra.mrb[0].mxu0 %v3803
      %v4237 = vpop.f32.mrb[0].mxu0
      %v4238 = vadd.f32 0.0, %v4237
      %v4239 = vpop.f32.mrb[0].mxu0
      %4240 = vmatprep.mubr.f32.mxu0 0.0
      %4241 = vmatmul.mubr.f32.gmra.mrb[0].mxu0 %v3806
      %v4242 = vpop.f32.mrb[0].mxu0
      %v4243 = vadd.f32 0.0, %v4242
      %v4244 = vpop.f32.mrb[0].mxu0
      %4245 = vmatprep.mubr.f32.mxu0 0.0
      %4246 = vmatmul.mubr.f32.gmra.mrb[0].mxu0 %v3809
      %v4247 = vpop.f32.mrb[0].mxu0
      %v4248 = vadd.f32 0.0, %v4247
      %v4249 = vpop.f32.mrb[0].mxu0
      %4250 = vmatprep.mubr.f32.mxu0 0.0
      %4251 = vmatmul.mubr.f32.gmra.mrb[0].mxu0 %v3812
      %v4252 = vpop.f32.mrb[0].mxu0
      %v4253 = vadd.f32 0.0, %v4252
      %v4254 = vpop.f32.mrb[0].mxu0
      %4255 = vmatprep.mubr.f32.mxu0 0.0
      %4256 = vmatmul.mubr.f32.gmra.mrb[0].mxu0 %v3815
      %v4257 = vpop.f32.mrb[0].mxu0
      %v4258 = vadd.f32 0.0, %v4257
      %v4259 = vpop.f32.mrb[0].mxu0
      %4260 = vmatprep.mubr.f32.mxu0 0.0
      %4261 = vmatmul.mubr.f32.gmra.mrb[0].mxu0 %v3818
      %v4262 = vpop.f32.mrb[0].mxu0
      %v4263 = vadd.f32 0.0, %v4262
      %v4264 = vpop.f32.mrb[0].mxu0
      %4265 = vmatprep.mubr.f32.mxu0 0.0
      %4266 = vmatmul.mubr.f32.gmra.mrb[0].mxu0 %v3821
      %v4267 = vpop.f32.mrb[0].mxu0
      %v4268 = vadd.f32 0.0, %v4267
      %v4269 = vpop.f32.mrb[0].mxu0
      %4270 = vmatprep.mubr.f32.mxu0 0.0
      %4271 = vmatmul.mubr.f32.gmra.mrb[0].mxu0 %v3824
      %v4272 = vpop.f32.mrb[0].mxu0
      %v4273 = vadd.f32 0.0, %v4272
      %v4274 = vpop.f32.mrb[0].mxu0
      %4275 = vmatprep.mubr.f32.mxu0 0.0
      %4276 = vmatmul.mubr.f32.gmra.mrb[0].mxu0 %v3827
      %v4277 = vpop.f32.mrb[0].mxu0
      %v4278 = vadd.f32 0.0, %v4277
      %v4279 = vpop.f32.mrb[0].mxu0
      %4280 = vmatprep.mubr.f32.mxu0 0.0
      %4281 = vmatmul.mubr.f32.gmra.mrb[0].mxu0 %v3830
      %v4282 = vpop.f32.mrb[0].mxu0
      %v4283 = vadd.f32 0.0, %v4282
      %v4284 = vpop.f32.mrb[0].mxu0
      %4285 = vmatprep.mubr.f32.mxu0 0.0
      %4286 = vmatmul.mubr.f32.gmra.mrb[0].mxu0 %v3833
      %v4287 = vpop.f32.mrb[0].mxu0
      %v4288 = vadd.f32 0.0, %v4287
      %v4289 = vpop.f32.mrb[0].mxu0
      %4290 = vmatprep.mubr.f32.mxu0 0.0
      %4291 = vmatmul.mubr.f32.gmra.mrb[0].mxu0 %v3836
      %v4292 = vpop.f32.mrb[0].mxu0
      %v4293 = vadd.f32 0.0, %v4292
      %v4294 = vpop.f32.mrb[0].mxu0
      %4295 = vmatprep.mubr.f32.mxu0 0.0
      %4296 = vmatmul.mubr.f32.gmra.mrb[0].mxu0 %v3839
      %v4297 = vpop.f32.mrb[0].mxu0
      %v4298 = vadd.f32 0.0, %v4297
      %v4299 = vpop.f32.mrb[0].mxu0
      %4300 = vmatprep.mubr.f32.mxu0 0.0
      %4301 = vmatmul.mubr.f32.gmra.mrb[0].mxu0 %v3842
      %v4302 = vpop.f32.mrb[0].mxu0
      %v4303 = vadd.f32 0.0, %v4302
      %v4304 = vpop.f32.mrb[0].mxu0
      %4305 = vmatprep.mubr.f32.mxu0 0.0
      %4306 = vmatmul.mubr.f32.gmra.mrb[0].mxu0 %v3845
      %v4307 = vpop.f32.mrb[0].mxu0
      %v4308 = vadd.f32 0.0, %v4307
      %v4309 = vpop.f32.mrb[0].mxu0
      %4310 = vmatprep.mubr.f32.mxu0 0.0
      %4311 = vmatmul.mubr.f32.gmra.mrb[0].mxu0 %v3848
      %v4312 = vpop.f32.mrb[0].mxu0
      %v4313 = vadd.f32 0.0, %v4312
      %v4314 = vpop.f32.mrb[0].mxu0
      %4315 = vmatprep.mubr.f32.mxu0 0.0
      %4316 = vmatmul.mubr.f32.gmra.mrb[0].mxu0 %v3851
      %v4317 = vpop.f32.mrb[0].mxu0
      %v4318 = vadd.f32 0.0, %v4317
      %v4319 = vpop.f32.mrb[0].mxu0
      %4320 = vmatprep.mubr.f32.mxu0 0.0
      %4321 = vmatmul.mubr.f32.gmra.mrb[0].mxu0 %v3854
      %v4322 = vpop.f32.mrb[0].mxu0
      %v4323 = vadd.f32 0.0, %v4322
      %v4324 = vpop.f32.mrb[0].mxu0
      %4325 = vmatprep.mubr.f32.mxu0 0.0
      %4326 = vmatmul.mubr.f32.gmra.mrb[0].mxu0 %v3857
      %v4327 = vpop.f32.mrb[0].mxu0
      %v4328 = vadd.f32 0.0, %v4327
      %v4329 = vpop.f32.mrb[0].mxu0
      %4330 = vmatprep.mubr.f32.mxu0 0.0
      %4331 = vmatmul.mubr.f32.gmra.mrb[0].mxu0 %v3860
      %v4332 = vpop.f32.mrb[0].mxu0
      %v4333 = vadd.f32 0.0, %v4332
      %v4334 = vpop.f32.mrb[0].mxu0
      %4335 = vmatprep.mubr.f32.mxu0 0.0
      %4336 = vmatmul.mubr.f32.gmra.mrb[0].mxu0 %v3863
      %v4337 = vpop.f32.mrb[0].mxu0
      %v4338 = vadd.f32 0.0, %v4337
      %v4339 = vpop.f32.mrb[0].mxu0
      %4340 = vmatprep.mubr.f32.mxu0 0.0
      %4341 = vmatmul.mubr.f32.gmra.mrb[0].mxu0 %v3866
      %v4342 = vpop.f32.mrb[0].mxu0
      %v4343 = vadd.f32 0.0, %v4342
      %v4344 = vpop.f32.mrb[0].mxu0
      %4345 = vmatprep.mubr.f32.mxu0 0.0
      %4346 = vmatmul.mubr.f32.gmra.mrb[0].mxu0 %v3869
      %v4347 = vpop.f32.mrb[0].mxu0
      %v4348 = vadd.f32 0.0, %v4347
      %v4349 = vpop.f32.mrb[0].mxu0
      %4350 = vmatprep.mubr.f32.mxu0 0.0
      %4351 = vmatmul.mubr.f32.gmra.mrb[0].mxu0 %v3872
      %v4352 = vpop.f32.mrb[0].mxu0
      %v4353 = vadd.f32 0.0, %v4352
      %v4354 = vpop.f32.mrb[0].mxu0
      %4355 = vmatprep.mubr.f32.mxu0 0.0
      %4356 = vmatmul.mubr.f32.gmra.mrb[0].mxu0 %v3875
      %v4357 = vpop.f32.mrb[0].mxu0
      %v4358 = vadd.f32 0.0, %v4357
      %v4359 = vpop.f32.mrb[0].mxu0
      %4360 = vmatprep.mubr.f32.mxu0 0.0
      %4361 = vmatmul.mubr.f32.gmra.mrb[0].mxu0 %v3878
      %v4362 = vpop.f32.mrb[0].mxu0
      %v4363 = vadd.f32 0.0, %v4362
      %v4364 = vpop.f32.mrb[0].mxu0
      %4365 = vmatprep.mubr.f32.mxu0 0.0
      %4366 = vmatmul.mubr.f32.gmra.mrb[0].mxu0 %v3881
      %v4367 = vpop.f32.mrb[0].mxu0
      %v4368 = vadd.f32 0.0, %v4367
      %v4369 = vpop.f32.mrb[0].mxu0
      %4370 = vmatprep.mubr.f32.mxu0 0.0
      %4371 = vmatmul.mubr.f32.gmra.mrb[0].mxu0 %v3884
      %v4372 = vpop.f32.mrb[0].mxu0
      %v4373 = vadd.f32 0.0, %v4372
      %v4374 = vpop.f32.mrb[0].mxu0
      %4375 = vdwg.mxu0
      %v4376 = vadd.f32 %v3724, %v4218
      %v4377 = vadd.f32 %v3725, %v4223
      %v4378 = vadd.f32 %v3726, %v4228
      %v4379 = vadd.f32 %v3727, %v4233
      %v4380 = vadd.f32 %v3728, %v4238
      %v4381 = vadd.f32 %v3729, %v4243
      %v4382 = vadd.f32 %v3730, %v4248
      %v4383 = vadd.f32 %v3731, %v4253
      %v4384 = vadd.f32 %v3732, %v4258
      %v4385 = vadd.f32 %v3733, %v4263
      %v4386 = vadd.f32 %v3734, %v4268
      %v4387 = vadd.f32 %v3735, %v4273
      %v4388 = vadd.f32 %v3736, %v4278
      %v4389 = vadd.f32 %v3737, %v4283
      %v4390 = vadd.f32 %v3738, %v4288
      %v4391 = vadd.f32 %v3739, %v4293
      %v4392 = vadd.f32 %v3740, %v4298
      %v4393 = vadd.f32 %v3741, %v4303
      %v4394 = vadd.f32 %v3742, %v4308
      %v4395 = vadd.f32 %v3743, %v4313
      %v4396 = vadd.f32 %v3744, %v4318
      %v4397 = vadd.f32 %v3745, %v4323
      %v4398 = vadd.f32 %v3746, %v4328
      %v4399 = vadd.f32 %v3747, %v4333
      %v4400 = vadd.f32 %v3748, %v4338
      %v4401 = vadd.f32 %v3749, %v4343
      %v4402 = vadd.f32 %v3750, %v4348
      %v4403 = vadd.f32 %v3751, %v4353
      %v4404 = vadd.f32 %v3752, %v4358
      %v4405 = vadd.f32 %v3753, %v4363
      %v4406 = vadd.f32 %v3754, %v4368
      %v4407 = vadd.f32 %v3755, %v4373
      %s4408 = scalar_lea.vmem [#allocation2], 48
      %v4409 = vld [vmem:[%s4408] sm:$0xff]
      %v4410 = vld [vmem:[%s4408 + $0x8] sm:$0xff]
      %v4411 = vld [vmem:[%s4408 + $0x18] sm:$0xff]
      %v4412 = vld [vmem:[%s4408 + $0x20] sm:$0xff]
      %v4413 = vld [vmem:[%s4408 + $0x30] sm:$0xff]
      %v4414 = vld [vmem:[%s4408 + $0x38] sm:$0xff]
      %v4415 = vld [vmem:[%s4408 + $0x48] sm:$0xff]
      %v4416 = vld [vmem:[%s4408 + $0x50] sm:$0xff]
      %v4417 = vld [vmem:[%s4408 + $0x60] sm:$0xff]
      %v4418 = vld [vmem:[%s4408 + $0x68] sm:$0xff]
      %v4419 = vld [vmem:[%s4408 + $0x78] sm:$0xff]
      %v4420 = vld [vmem:[%s4408 + $0x80] sm:$0xff]
      %v4421 = vld [vmem:[%s4408 + $0x90] sm:$0xff]
      %v4422 = vld [vmem:[%s4408 + $0x98] sm:$0xff]
      %v4423 = vld [vmem:[%s4408 + $0xa8] sm:$0xff]
      %v4424 = vld [vmem:[%s4408 + $0xb0] sm:$0xff]
      %v4425 = vld [vmem:[%s4408 + $0xc0] sm:$0xff]
      %v4426 = vld [vmem:[%s4408 + $0xc8] sm:$0xff]
      %v4427 = vld [vmem:[%s4408 + $0xd8] sm:$0xff]
      %v4428 = vld [vmem:[%s4408 + $0xe0] sm:$0xff]
      %v4429 = vld [vmem:[%s4408 + $0xf0] sm:$0xff]
      %v4430 = vld [vmem:[%s4408 + $0xf8] sm:$0xff]
      %v4431 = vld [vmem:[%s4408 + $0x108] sm:$0xff]
      %v4432 = vld [vmem:[%s4408 + $0x110] sm:$0xff]
      %v4433 = vld [vmem:[%s4408 + $0x120] sm:$0xff]
      %v4434 = vld [vmem:[%s4408 + $0x128] sm:$0xff]
      %v4435 = vld [vmem:[%s4408 + $0x138] sm:$0xff]
      %v4436 = vld [vmem:[%s4408 + $0x140] sm:$0xff]
      %v4437 = vld [vmem:[%s4408 + $0x150] sm:$0xff]
      %v4438 = vld [vmem:[%s4408 + $0x158] sm:$0xff]
      %v4439 = vld [vmem:[%s4408 + $0x168] sm:$0xff]
      %v4440 = vld [vmem:[%s4408 + $0x170] sm:$0xff]
      %s4441 = scalar_lea.vmem %s1, 24
      %v4442 = vld [vmem:[%s4441] sm:$0xf]
      %v4444 = vsel %vm306, %v4409, 0
      %v4447 = vsel %vm306, %v4410, 0
      %v4450 = vsel %vm306, %v4411, 0
      %v4453 = vsel %vm306, %v4412, 0
      %v4456 = vsel %vm306, %v4413, 0
      %v4459 = vsel %vm306, %v4414, 0
      %v4462 = vsel %vm306, %v4415, 0
      %v4465 = vsel %vm306, %v4416, 0
      %v4468 = vsel %vm306, %v4417, 0
      %v4471 = vsel %vm306, %v4418, 0
      %v4474 = vsel %vm306, %v4419, 0
      %v4477 = vsel %vm306, %v4420, 0
      %v4480 = vsel %vm306, %v4421, 0
      %v4483 = vsel %vm306, %v4422, 0
      %v4486 = vsel %vm306, %v4423, 0
      %v4489 = vsel %vm306, %v4424, 0
      %v4492 = vsel %vm306, %v4425, 0
      %v4495 = vsel %vm306, %v4426, 0
      %v4498 = vsel %vm306, %v4427, 0
      %v4501 = vsel %vm306, %v4428, 0
      %v4504 = vsel %vm306, %v4429, 0
      %v4507 = vsel %vm306, %v4430, 0
      %v4510 = vsel %vm306, %v4431, 0
      %v4513 = vsel %vm306, %v4432, 0
      %v4516 = vsel %vm306, %v4433, 0
      %v4519 = vsel %vm306, %v4434, 0
      %v4522 = vsel %vm306, %v4435, 0
      %v4525 = vsel %vm306, %v4436, 0
      %v4528 = vsel %vm306, %v4437, 0
      %v4531 = vsel %vm306, %v4438, 0
      %v4534 = vsel %vm306, %v4439, 0
      %v4537 = vsel %vm306, %v4440, 0
      %v4540 = vsel %vm626, %v4442, 0
      %4542 = vmatprep.subr.mxu0 0.0
      %4543 = vmatpush1.msra.mxu0 %v4540
      %4544 = vmatprep.subr.mxu0 0.0
      %4545 = vmatpush1.msra.mxu0 0.0
      %4546 = vmatprep.subr.mxu0 0.0
      %4547 = vmatpush1.msra.mxu0 0.0
      %4548 = vmatprep.subr.mxu0 0.0
      %4549 = vmatpush1.msra.mxu0 0.0
      %4550 = vmatprep.subr.mxu0 0.0
      %4551 = vmatpush1.msra.mxu0 0.0
      %4552 = vmatprep.subr.mxu0 0.0
      %4553 = vmatpush1.msra.mxu0 0.0
      %4554 = vmatprep.subr.mxu0 0.0
      %4555 = vmatpush1.msra.mxu0 0.0
      %4556 = vmatprep.subr.mxu0 0.0
      %4557 = vmatpush1.msra.mxu0 0.0
      %4558 = vmatprep.subr.mxu0 0.0
      %4559 = vmatpush1.msra.mxu0 0.0
      %4560 = vmatprep.subr.mxu0 0.0
      %4561 = vmatpush1.msra.mxu0 0.0
      %4562 = vmatprep.subr.mxu0 0.0
      %4563 = vmatpush1.msra.mxu0 0.0
      %4564 = vmatprep.subr.mxu0 0.0
      %4565 = vmatpush1.msra.mxu0 0.0
      %4566 = vmatprep.subr.mxu0 0.0
      %4567 = vmatpush1.msra.mxu0 0.0
      %4568 = vmatprep.subr.mxu0 0.0
      %4569 = vmatpush1.msra.mxu0 0.0
      %4570 = vmatprep.subr.mxu0 0.0
      %4571 = vmatpush1.msra.mxu0 0.0
      %4572 = vmatprep.subr.mxu0 0.0
      %4573 = vmatpush1.msra.mxu0 0.0
      %4574 = vmatprep.subr.mxu0 0.0
      %4575 = vmatpush1.msra.mxu0 0.0
      %4576 = vmatprep.subr.mxu0 0.0
      %4577 = vmatpush1.msra.mxu0 0.0
      %4578 = vmatprep.subr.mxu0 0.0
      %4579 = vmatpush1.msra.mxu0 0.0
      %4580 = vmatprep.subr.mxu0 0.0
      %4581 = vmatpush1.msra.mxu0 0.0
      %4582 = vmatprep.subr.mxu0 0.0
      %4583 = vmatpush1.msra.mxu0 0.0
      %4584 = vmatprep.subr.mxu0 0.0
      %4585 = vmatpush1.msra.mxu0 0.0
      %4586 = vmatprep.subr.mxu0 0.0
      %4587 = vmatpush1.msra.mxu0 0.0
      %4588 = vmatprep.subr.mxu0 0.0
      %4589 = vmatpush1.msra.mxu0 0.0
      %4590 = vmatprep.subr.mxu0 0.0
      %4591 = vmatpush1.msra.mxu0 0.0
      %4592 = vmatprep.subr.mxu0 0.0
      %4593 = vmatpush1.msra.mxu0 0.0
      %4594 = vmatprep.subr.mxu0 0.0
      %4595 = vmatpush1.msra.mxu0 0.0
      %4596 = vmatprep.subr.mxu0 0.0
      %4597 = vmatpush1.msra.mxu0 0.0
      %4598 = vmatprep.subr.mxu0 0.0
      %4599 = vmatpush1.msra.mxu0 0.0
      %4600 = vmatprep.subr.mxu0 0.0
      %4601 = vmatpush1.msra.mxu0 0.0
      %4602 = vmatprep.subr.mxu0 0.0
      %4603 = vmatpush1.msra.mxu0 0.0
      %4604 = vmatprep.subr.mxu0 0.0
      %4605 = vmatpush1.msra.mxu0 0.0
      %4606 = vmatprep.mubr.f32.mxu0 0.0
      %4607 = vmatmul.mubr.f32.gmra.mrb[0].mxu0 %v4444
      %v4608 = vpop.f32.mrb[0].mxu0
      %v4609 = vadd.f32 0.0, %v4608
      %v4610 = vpop.f32.mrb[0].mxu0
      %4611 = vmatprep.mubr.f32.mxu0 0.0
      %4612 = vmatmul.mubr.f32.gmra.mrb[0].mxu0 %v4447
      %v4613 = vpop.f32.mrb[0].mxu0
      %v4614 = vadd.f32 0.0, %v4613
      %v4615 = vpop.f32.mrb[0].mxu0
      %4616 = vmatprep.mubr.f32.mxu0 0.0
      %4617 = vmatmul.mubr.f32.gmra.mrb[0].mxu0 %v4450
      %v4618 = vpop.f32.mrb[0].mxu0
      %v4619 = vadd.f32 0.0, %v4618
      %v4620 = vpop.f32.mrb[0].mxu0
      %4621 = vmatprep.mubr.f32.mxu0 0.0
      %4622 = vmatmul.mubr.f32.gmra.mrb[0].mxu0 %v4453
      %v4623 = vpop.f32.mrb[0].mxu0
      %v4624 = vadd.f32 0.0, %v4623
      %v4625 = vpop.f32.mrb[0].mxu0
      %4626 = vmatprep.mubr.f32.mxu0 0.0
      %4627 = vmatmul.mubr.f32.gmra.mrb[0].mxu0 %v4456
      %v4628 = vpop.f32.mrb[0].mxu0
      %v4629 = vadd.f32 0.0, %v4628
      %v4630 = vpop.f32.mrb[0].mxu0
      %4631 = vmatprep.mubr.f32.mxu0 0.0
      %4632 = vmatmul.mubr.f32.gmra.mrb[0].mxu0 %v4459
      %v4633 = vpop.f32.mrb[0].mxu0
      %v4634 = vadd.f32 0.0, %v4633
      %v4635 = vpop.f32.mrb[0].mxu0
      %4636 = vmatprep.mubr.f32.mxu0 0.0
      %4637 = vmatmul.mubr.f32.gmra.mrb[0].mxu0 %v4462
      %v4638 = vpop.f32.mrb[0].mxu0
      %v4639 = vadd.f32 0.0, %v4638
      %v4640 = vpop.f32.mrb[0].mxu0
      %4641 = vmatprep.mubr.f32.mxu0 0.0
      %4642 = vmatmul.mubr.f32.gmra.mrb[0].mxu0 %v4465
      %v4643 = vpop.f32.mrb[0].mxu0
      %v4644 = vadd.f32 0.0, %v4643
      %v4645 = vpop.f32.mrb[0].mxu0
      %4646 = vmatprep.mubr.f32.mxu0 0.0
      %4647 = vmatmul.mubr.f32.gmra.mrb[0].mxu0 %v4468
      %v4648 = vpop.f32.mrb[0].mxu0
      %v4649 = vadd.f32 0.0, %v4648
      %v4650 = vpop.f32.mrb[0].mxu0
      %4651 = vmatprep.mubr.f32.mxu0 0.0
      %4652 = vmatmul.mubr.f32.gmra.mrb[0].mxu0 %v4471
      %v4653 = vpop.f32.mrb[0].mxu0
      %v4654 = vadd.f32 0.0, %v4653
      %v4655 = vpop.f32.mrb[0].mxu0
      %4656 = vmatprep.mubr.f32.mxu0 0.0
      %4657 = vmatmul.mubr.f32.gmra.mrb[0].mxu0 %v4474
      %v4658 = vpop.f32.mrb[0].mxu0
      %v4659 = vadd.f32 0.0, %v4658
      %v4660 = vpop.f32.mrb[0].mxu0
      %4661 = vmatprep.mubr.f32.mxu0 0.0
      %4662 = vmatmul.mubr.f32.gmra.mrb[0].mxu0 %v4477
      %v4663 = vpop.f32.mrb[0].mxu0
      %v4664 = vadd.f32 0.0, %v4663
      %v4665 = vpop.f32.mrb[0].mxu0
      %4666 = vmatprep.mubr.f32.mxu0 0.0
      %4667 = vmatmul.mubr.f32.gmra.mrb[0].mxu0 %v4480
      %v4668 = vpop.f32.mrb[0].mxu0
      %v4669 = vadd.f32 0.0, %v4668
      %v4670 = vpop.f32.mrb[0].mxu0
      %4671 = vmatprep.mubr.f32.mxu0 0.0
      %4672 = vmatmul.mubr.f32.gmra.mrb[0].mxu0 %v4483
      %v4673 = vpop.f32.mrb[0].mxu0
      %v4674 = vadd.f32 0.0, %v4673
      %v4675 = vpop.f32.mrb[0].mxu0
      %4676 = vmatprep.mubr.f32.mxu0 0.0
      %4677 = vmatmul.mubr.f32.gmra.mrb[0].mxu0 %v4486
      %v4678 = vpop.f32.mrb[0].mxu0
      %v4679 = vadd.f32 0.0, %v4678
      %v4680 = vpop.f32.mrb[0].mxu0
      %4681 = vmatprep.mubr.f32.mxu0 0.0
      %4682 = vmatmul.mubr.f32.gmra.mrb[0].mxu0 %v4489
      %v4683 = vpop.f32.mrb[0].mxu0
      %v4684 = vadd.f32 0.0, %v4683
      %v4685 = vpop.f32.mrb[0].mxu0
      %4686 = vmatprep.mubr.f32.mxu0 0.0
      %4687 = vmatmul.mubr.f32.gmra.mrb[0].mxu0 %v4492
      %v4688 = vpop.f32.mrb[0].mxu0
      %v4689 = vadd.f32 0.0, %v4688
      %v4690 = vpop.f32.mrb[0].mxu0
      %4691 = vmatprep.mubr.f32.mxu0 0.0
      %4692 = vmatmul.mubr.f32.gmra.mrb[0].mxu0 %v4495
      %v4693 = vpop.f32.mrb[0].mxu0
      %v4694 = vadd.f32 0.0, %v4693
      %v4695 = vpop.f32.mrb[0].mxu0
      %4696 = vmatprep.mubr.f32.mxu0 0.0
      %4697 = vmatmul.mubr.f32.gmra.mrb[0].mxu0 %v4498
      %v4698 = vpop.f32.mrb[0].mxu0
      %v4699 = vadd.f32 0.0, %v4698
      %v4700 = vpop.f32.mrb[0].mxu0
      %4701 = vmatprep.mubr.f32.mxu0 0.0
      %4702 = vmatmul.mubr.f32.gmra.mrb[0].mxu0 %v4501
      %v4703 = vpop.f32.mrb[0].mxu0
      %v4704 = vadd.f32 0.0, %v4703
      %v4705 = vpop.f32.mrb[0].mxu0
      %4706 = vmatprep.mubr.f32.mxu0 0.0
      %4707 = vmatmul.mubr.f32.gmra.mrb[0].mxu0 %v4504
      %v4708 = vpop.f32.mrb[0].mxu0
      %v4709 = vadd.f32 0.0, %v4708
      %v4710 = vpop.f32.mrb[0].mxu0
      %4711 = vmatprep.mubr.f32.mxu0 0.0
      %4712 = vmatmul.mubr.f32.gmra.mrb[0].mxu0 %v4507
      %v4713 = vpop.f32.mrb[0].mxu0
      %v4714 = vadd.f32 0.0, %v4713
      %v4715 = vpop.f32.mrb[0].mxu0
      %4716 = vmatprep.mubr.f32.mxu0 0.0
      %4717 = vmatmul.mubr.f32.gmra.mrb[0].mxu0 %v4510
      %v4718 = vpop.f32.mrb[0].mxu0
      %v4719 = vadd.f32 0.0, %v4718
      %v4720 = vpop.f32.mrb[0].mxu0
      %4721 = vmatprep.mubr.f32.mxu0 0.0
      %4722 = vmatmul.mubr.f32.gmra.mrb[0].mxu0 %v4513
      %v4723 = vpop.f32.mrb[0].mxu0
      %v4724 = vadd.f32 0.0, %v4723
      %v4725 = vpop.f32.mrb[0].mxu0
      %4726 = vmatprep.mubr.f32.mxu0 0.0
      %4727 = vmatmul.mubr.f32.gmra.mrb[0].mxu0 %v4516
      %v4728 = vpop.f32.mrb[0].mxu0
      %v4729 = vadd.f32 0.0, %v4728
      %v4730 = vpop.f32.mrb[0].mxu0
      %4731 = vmatprep.mubr.f32.mxu0 0.0
      %4732 = vmatmul.mubr.f32.gmra.mrb[0].mxu0 %v4519
      %v4733 = vpop.f32.mrb[0].mxu0
      %v4734 = vadd.f32 0.0, %v4733
      %v4735 = vpop.f32.mrb[0].mxu0
      %4736 = vmatprep.mubr.f32.mxu0 0.0
      %4737 = vmatmul.mubr.f32.gmra.mrb[0].mxu0 %v4522
      %v4738 = vpop.f32.mrb[0].mxu0
      %v4739 = vadd.f32 0.0, %v4738
      %v4740 = vpop.f32.mrb[0].mxu0
      %4741 = vmatprep.mubr.f32.mxu0 0.0
      %4742 = vmatmul.mubr.f32.gmra.mrb[0].mxu0 %v4525
      %v4743 = vpop.f32.mrb[0].mxu0
      %v4744 = vadd.f32 0.0, %v4743
      %v4745 = vpop.f32.mrb[0].mxu0
      %4746 = vmatprep.mubr.f32.mxu0 0.0
      %4747 = vmatmul.mubr.f32.gmra.mrb[0].mxu0 %v4528
      %v4748 = vpop.f32.mrb[0].mxu0
      %v4749 = vadd.f32 0.0, %v4748
      %v4750 = vpop.f32.mrb[0].mxu0
      %4751 = vmatprep.mubr.f32.mxu0 0.0
      %4752 = vmatmul.mubr.f32.gmra.mrb[0].mxu0 %v4531
      %v4753 = vpop.f32.mrb[0].mxu0
      %v4754 = vadd.f32 0.0, %v4753
      %v4755 = vpop.f32.mrb[0].mxu0
      %4756 = vmatprep.mubr.f32.mxu0 0.0
      %4757 = vmatmul.mubr.f32.gmra.mrb[0].mxu0 %v4534
      %v4758 = vpop.f32.mrb[0].mxu0
      %v4759 = vadd.f32 0.0, %v4758
      %v4760 = vpop.f32.mrb[0].mxu0
      %4761 = vmatprep.mubr.f32.mxu0 0.0
      %4762 = vmatmul.mubr.f32.gmra.mrb[0].mxu0 %v4537
      %v4763 = vpop.f32.mrb[0].mxu0
      %v4764 = vadd.f32 0.0, %v4763
      %v4765 = vpop.f32.mrb[0].mxu0
      %4766 = vdwg.mxu0
      %v4767 = vadd.f32 %v4114, %v4609
      %v4768 = vadd.f32 %v4115, %v4614
      %v4769 = vadd.f32 %v4116, %v4619
      %v4770 = vadd.f32 %v4117, %v4624
      %v4771 = vadd.f32 %v4118, %v4629
      %v4772 = vadd.f32 %v4119, %v4634
      %v4773 = vadd.f32 %v4120, %v4639
      %v4774 = vadd.f32 %v4121, %v4644
      %v4775 = vadd.f32 %v4122, %v4649
      %v4776 = vadd.f32 %v4123, %v4654
      %v4777 = vadd.f32 %v4124, %v4659
      %v4778 = vadd.f32 %v4125, %v4664
      %v4779 = vadd.f32 %v4126, %v4669
      %v4780 = vadd.f32 %v4127, %v4674
      %v4781 = vadd.f32 %v4128, %v4679
      %v4782 = vadd.f32 %v4129, %v4684
      %v4783 = vadd.f32 %v4130, %v4689
      %v4784 = vadd.f32 %v4131, %v4694
      %v4785 = vadd.f32 %v4132, %v4699
      %v4786 = vadd.f32 %v4133, %v4704
      %v4787 = vadd.f32 %v4134, %v4709
      %v4788 = vadd.f32 %v4135, %v4714
      %v4789 = vadd.f32 %v4136, %v4719
      %v4790 = vadd.f32 %v4137, %v4724
      %v4791 = vadd.f32 %v4138, %v4729
      %v4792 = vadd.f32 %v4139, %v4734
      %v4793 = vadd.f32 %v4140, %v4739
      %v4794 = vadd.f32 %v4141, %v4744
      %v4795 = vadd.f32 %v4142, %v4749
      %v4796 = vadd.f32 %v4143, %v4754
      %v4797 = vadd.f32 %v4144, %v4759
      %v4798 = vadd.f32 %v4145, %v4764
      %s4799 = scalar_lea.vmem %s5, 24
      %v4800 = vld [vmem:[%s4799] sm:$0xf]
      %v4802 = vsel %vm626, %v4800, 0
      %4804 = vmatprep.subr.mxu0 0.0
      %4805 = vmatpush1.msra.mxu0 %v4802
      %4806 = vmatprep.subr.mxu0 0.0
      %4807 = vmatpush1.msra.mxu0 0.0
      %4808 = vmatprep.subr.mxu0 0.0
      %4809 = vmatpush1.msra.mxu0 0.0
      %4810 = vmatprep.subr.mxu0 0.0
      %4811 = vmatpush1.msra.mxu0 0.0
      %4812 = vmatprep.subr.mxu0 0.0
      %4813 = vmatpush1.msra.mxu0 0.0
      %4814 = vmatprep.subr.mxu0 0.0
      %4815 = vmatpush1.msra.mxu0 0.0
      %4816 = vmatprep.subr.mxu0 0.0
      %4817 = vmatpush1.msra.mxu0 0.0
      %4818 = vmatprep.subr.mxu0 0.0
      %4819 = vmatpush1.msra.mxu0 0.0
      %4820 = vmatprep.subr.mxu0 0.0
      %4821 = vmatpush1.msra.mxu0 0.0
      %4822 = vmatprep.subr.mxu0 0.0
      %4823 = vmatpush1.msra.mxu0 0.0
      %4824 = vmatprep.subr.mxu0 0.0
      %4825 = vmatpush1.msra.mxu0 0.0
      %4826 = vmatprep.subr.mxu0 0.0
      %4827 = vmatpush1.msra.mxu0 0.0
      %4828 = vmatprep.subr.mxu0 0.0
      %4829 = vmatpush1.msra.mxu0 0.0
      %4830 = vmatprep.subr.mxu0 0.0
      %4831 = vmatpush1.msra.mxu0 0.0
      %4832 = vmatprep.subr.mxu0 0.0
      %4833 = vmatpush1.msra.mxu0 0.0
      %4834 = vmatprep.subr.mxu0 0.0
      %4835 = vmatpush1.msra.mxu0 0.0
      %4836 = vmatprep.subr.mxu0 0.0
      %4837 = vmatpush1.msra.mxu0 0.0
      %4838 = vmatprep.subr.mxu0 0.0
      %4839 = vmatpush1.msra.mxu0 0.0
      %4840 = vmatprep.subr.mxu0 0.0
      %4841 = vmatpush1.msra.mxu0 0.0
      %4842 = vmatprep.subr.mxu0 0.0
      %4843 = vmatpush1.msra.mxu0 0.0
      %4844 = vmatprep.subr.mxu0 0.0
      %4845 = vmatpush1.msra.mxu0 0.0
      %4846 = vmatprep.subr.mxu0 0.0
      %4847 = vmatpush1.msra.mxu0 0.0
      %4848 = vmatprep.subr.mxu0 0.0
      %4849 = vmatpush1.msra.mxu0 0.0
      %4850 = vmatprep.subr.mxu0 0.0
      %4851 = vmatpush1.msra.mxu0 0.0
      %4852 = vmatprep.subr.mxu0 0.0
      %4853 = vmatpush1.msra.mxu0 0.0
      %4854 = vmatprep.subr.mxu0 0.0
      %4855 = vmatpush1.msra.mxu0 0.0
      %4856 = vmatprep.subr.mxu0 0.0
      %4857 = vmatpush1.msra.mxu0 0.0
      %4858 = vmatprep.subr.mxu0 0.0
      %4859 = vmatpush1.msra.mxu0 0.0
      %4860 = vmatprep.subr.mxu0 0.0
      %4861 = vmatpush1.msra.mxu0 0.0
      %4862 = vmatprep.subr.mxu0 0.0
      %4863 = vmatpush1.msra.mxu0 0.0
      %4864 = vmatprep.subr.mxu0 0.0
      %4865 = vmatpush1.msra.mxu0 0.0
      %4866 = vmatprep.subr.mxu0 0.0
      %4867 = vmatpush1.msra.mxu0 0.0
      %4868 = vmatprep.mubr.f32.mxu0 0.0
      %4869 = vmatmul.mubr.f32.gmra.mrb[0].mxu0 %v4444
      %v4870 = vpop.f32.mrb[0].mxu0
      %v4871 = vadd.f32 0.0, %v4870
      %v4872 = vpop.f32.mrb[0].mxu0
      %4873 = vmatprep.mubr.f32.mxu0 0.0
      %4874 = vmatmul.mubr.f32.gmra.mrb[0].mxu0 %v4447
      %v4875 = vpop.f32.mrb[0].mxu0
      %v4876 = vadd.f32 0.0, %v4875
      %v4877 = vpop.f32.mrb[0].mxu0
      %4878 = vmatprep.mubr.f32.mxu0 0.0
      %4879 = vmatmul.mubr.f32.gmra.mrb[0].mxu0 %v4450
      %v4880 = vpop.f32.mrb[0].mxu0
      %v4881 = vadd.f32 0.0, %v4880
      %v4882 = vpop.f32.mrb[0].mxu0
      %4883 = vmatprep.mubr.f32.mxu0 0.0
      %4884 = vmatmul.mubr.f32.gmra.mrb[0].mxu0 %v4453
      %v4885 = vpop.f32.mrb[0].mxu0
      %v4886 = vadd.f32 0.0, %v4885
      %v4887 = vpop.f32.mrb[0].mxu0
      %4888 = vmatprep.mubr.f32.mxu0 0.0
      %4889 = vmatmul.mubr.f32.gmra.mrb[0].mxu0 %v4456
      %v4890 = vpop.f32.mrb[0].mxu0
      %v4891 = vadd.f32 0.0, %v4890
      %v4892 = vpop.f32.mrb[0].mxu0
      %4893 = vmatprep.mubr.f32.mxu0 0.0
      %4894 = vmatmul.mubr.f32.gmra.mrb[0].mxu0 %v4459
      %v4895 = vpop.f32.mrb[0].mxu0
      %v4896 = vadd.f32 0.0, %v4895
      %v4897 = vpop.f32.mrb[0].mxu0
      %4898 = vmatprep.mubr.f32.mxu0 0.0
      %4899 = vmatmul.mubr.f32.gmra.mrb[0].mxu0 %v4462
      %v4900 = vpop.f32.mrb[0].mxu0
      %v4901 = vadd.f32 0.0, %v4900
      %v4902 = vpop.f32.mrb[0].mxu0
      %4903 = vmatprep.mubr.f32.mxu0 0.0
      %4904 = vmatmul.mubr.f32.gmra.mrb[0].mxu0 %v4465
      %v4905 = vpop.f32.mrb[0].mxu0
      %v4906 = vadd.f32 0.0, %v4905
      %v4907 = vpop.f32.mrb[0].mxu0
      %4908 = vmatprep.mubr.f32.mxu0 0.0
      %4909 = vmatmul.mubr.f32.gmra.mrb[0].mxu0 %v4468
      %v4910 = vpop.f32.mrb[0].mxu0
      %v4911 = vadd.f32 0.0, %v4910
      %v4912 = vpop.f32.mrb[0].mxu0
      %4913 = vmatprep.mubr.f32.mxu0 0.0
      %4914 = vmatmul.mubr.f32.gmra.mrb[0].mxu0 %v4471
      %v4915 = vpop.f32.mrb[0].mxu0
      %v4916 = vadd.f32 0.0, %v4915
      %v4917 = vpop.f32.mrb[0].mxu0
      %4918 = vmatprep.mubr.f32.mxu0 0.0
      %4919 = vmatmul.mubr.f32.gmra.mrb[0].mxu0 %v4474
      %v4920 = vpop.f32.mrb[0].mxu0
      %v4921 = vadd.f32 0.0, %v4920
      %v4922 = vpop.f32.mrb[0].mxu0
      %4923 = vmatprep.mubr.f32.mxu0 0.0
      %4924 = vmatmul.mubr.f32.gmra.mrb[0].mxu0 %v4477
      %v4925 = vpop.f32.mrb[0].mxu0
      %v4926 = vadd.f32 0.0, %v4925
      %v4927 = vpop.f32.mrb[0].mxu0
      %4928 = vmatprep.mubr.f32.mxu0 0.0
      %4929 = vmatmul.mubr.f32.gmra.mrb[0].mxu0 %v4480
      %v4930 = vpop.f32.mrb[0].mxu0
      %v4931 = vadd.f32 0.0, %v4930
      %v4932 = vpop.f32.mrb[0].mxu0
      %4933 = vmatprep.mubr.f32.mxu0 0.0
      %4934 = vmatmul.mubr.f32.gmra.mrb[0].mxu0 %v4483
      %v4935 = vpop.f32.mrb[0].mxu0
      %v4936 = vadd.f32 0.0, %v4935
      %v4937 = vpop.f32.mrb[0].mxu0
      %4938 = vmatprep.mubr.f32.mxu0 0.0
      %4939 = vmatmul.mubr.f32.gmra.mrb[0].mxu0 %v4486
      %v4940 = vpop.f32.mrb[0].mxu0
      %v4941 = vadd.f32 0.0, %v4940
      %v4942 = vpop.f32.mrb[0].mxu0
      %4943 = vmatprep.mubr.f32.mxu0 0.0
      %4944 = vmatmul.mubr.f32.gmra.mrb[0].mxu0 %v4489
      %v4945 = vpop.f32.mrb[0].mxu0
      %v4946 = vadd.f32 0.0, %v4945
      %v4947 = vpop.f32.mrb[0].mxu0
      %4948 = vmatprep.mubr.f32.mxu0 0.0
      %4949 = vmatmul.mubr.f32.gmra.mrb[0].mxu0 %v4492
      %v4950 = vpop.f32.mrb[0].mxu0
      %v4951 = vadd.f32 0.0, %v4950
      %v4952 = vpop.f32.mrb[0].mxu0
      %4953 = vmatprep.mubr.f32.mxu0 0.0
      %4954 = vmatmul.mubr.f32.gmra.mrb[0].mxu0 %v4495
      %v4955 = vpop.f32.mrb[0].mxu0
      %v4956 = vadd.f32 0.0, %v4955
      %v4957 = vpop.f32.mrb[0].mxu0
      %4958 = vmatprep.mubr.f32.mxu0 0.0
      %4959 = vmatmul.mubr.f32.gmra.mrb[0].mxu0 %v4498
      %v4960 = vpop.f32.mrb[0].mxu0
      %v4961 = vadd.f32 0.0, %v4960
      %v4962 = vpop.f32.mrb[0].mxu0
      %4963 = vmatprep.mubr.f32.mxu0 0.0
      %4964 = vmatmul.mubr.f32.gmra.mrb[0].mxu0 %v4501
      %v4965 = vpop.f32.mrb[0].mxu0
      %v4966 = vadd.f32 0.0, %v4965
      %v4967 = vpop.f32.mrb[0].mxu0
      %4968 = vmatprep.mubr.f32.mxu0 0.0
      %4969 = vmatmul.mubr.f32.gmra.mrb[0].mxu0 %v4504
      %v4970 = vpop.f32.mrb[0].mxu0
      %v4971 = vadd.f32 0.0, %v4970
      %v4972 = vpop.f32.mrb[0].mxu0
      %4973 = vmatprep.mubr.f32.mxu0 0.0
      %4974 = vmatmul.mubr.f32.gmra.mrb[0].mxu0 %v4507
      %v4975 = vpop.f32.mrb[0].mxu0
      %v4976 = vadd.f32 0.0, %v4975
      %v4977 = vpop.f32.mrb[0].mxu0
      %4978 = vmatprep.mubr.f32.mxu0 0.0
      %4979 = vmatmul.mubr.f32.gmra.mrb[0].mxu0 %v4510
      %v4980 = vpop.f32.mrb[0].mxu0
      %v4981 = vadd.f32 0.0, %v4980
      %v4982 = vpop.f32.mrb[0].mxu0
      %4983 = vmatprep.mubr.f32.mxu0 0.0
      %4984 = vmatmul.mubr.f32.gmra.mrb[0].mxu0 %v4513
      %v4985 = vpop.f32.mrb[0].mxu0
      %v4986 = vadd.f32 0.0, %v4985
      %v4987 = vpop.f32.mrb[0].mxu0
      %4988 = vmatprep.mubr.f32.mxu0 0.0
      %4989 = vmatmul.mubr.f32.gmra.mrb[0].mxu0 %v4516
      %v4990 = vpop.f32.mrb[0].mxu0
      %v4991 = vadd.f32 0.0, %v4990
      %v4992 = vpop.f32.mrb[0].mxu0
      %4993 = vmatprep.mubr.f32.mxu0 0.0
      %4994 = vmatmul.mubr.f32.gmra.mrb[0].mxu0 %v4519
      %v4995 = vpop.f32.mrb[0].mxu0
      %v4996 = vadd.f32 0.0, %v4995
      %v4997 = vpop.f32.mrb[0].mxu0
      %4998 = vmatprep.mubr.f32.mxu0 0.0
      %4999 = vmatmul.mubr.f32.gmra.mrb[0].mxu0 %v4522
      %v5000 = vpop.f32.mrb[0].mxu0
      %v5001 = vadd.f32 0.0, %v5000
      %v5002 = vpop.f32.mrb[0].mxu0
      %5003 = vmatprep.mubr.f32.mxu0 0.0
      %5004 = vmatmul.mubr.f32.gmra.mrb[0].mxu0 %v4525
      %v5005 = vpop.f32.mrb[0].mxu0
      %v5006 = vadd.f32 0.0, %v5005
      %v5007 = vpop.f32.mrb[0].mxu0
      %5008 = vmatprep.mubr.f32.mxu0 0.0
      %5009 = vmatmul.mubr.f32.gmra.mrb[0].mxu0 %v4528
      %v5010 = vpop.f32.mrb[0].mxu0
      %v5011 = vadd.f32 0.0, %v5010
      %v5012 = vpop.f32.mrb[0].mxu0
      %5013 = vmatprep.mubr.f32.mxu0 0.0
      %5014 = vmatmul.mubr.f32.gmra.mrb[0].mxu0 %v4531
      %v5015 = vpop.f32.mrb[0].mxu0
      %v5016 = vadd.f32 0.0, %v5015
      %v5017 = vpop.f32.mrb[0].mxu0
      %5018 = vmatprep.mubr.f32.mxu0 0.0
      %5019 = vmatmul.mubr.f32.gmra.mrb[0].mxu0 %v4534
      %v5020 = vpop.f32.mrb[0].mxu0
      %v5021 = vadd.f32 0.0, %v5020
      %v5022 = vpop.f32.mrb[0].mxu0
      %5023 = vmatprep.mubr.f32.mxu0 0.0
      %5024 = vmatmul.mubr.f32.gmra.mrb[0].mxu0 %v4537
      %v5025 = vpop.f32.mrb[0].mxu0
      %v5026 = vadd.f32 0.0, %v5025
      %v5027 = vpop.f32.mrb[0].mxu0
      %5028 = vdwg.mxu0
      %v5029 = vadd.f32 %v4376, %v4871
      %v5030 = vadd.f32 %v4377, %v4876
      %v5031 = vadd.f32 %v4378, %v4881
      %v5032 = vadd.f32 %v4379, %v4886
      %v5033 = vadd.f32 %v4380, %v4891
      %v5034 = vadd.f32 %v4381, %v4896
      %v5035 = vadd.f32 %v4382, %v4901
      %v5036 = vadd.f32 %v4383, %v4906
      %v5037 = vadd.f32 %v4384, %v4911
      %v5038 = vadd.f32 %v4385, %v4916
      %v5039 = vadd.f32 %v4386, %v4921
      %v5040 = vadd.f32 %v4387, %v4926
      %v5041 = vadd.f32 %v4388, %v4931
      %v5042 = vadd.f32 %v4389, %v4936
      %v5043 = vadd.f32 %v4390, %v4941
      %v5044 = vadd.f32 %v4391, %v4946
      %v5045 = vadd.f32 %v4392, %v4951
      %v5046 = vadd.f32 %v4393, %v4956
      %v5047 = vadd.f32 %v4394, %v4961
      %v5048 = vadd.f32 %v4395, %v4966
      %v5049 = vadd.f32 %v4396, %v4971
      %v5050 = vadd.f32 %v4397, %v4976
      %v5051 = vadd.f32 %v4398, %v4981
      %v5052 = vadd.f32 %v4399, %v4986
      %v5053 = vadd.f32 %v4400, %v4991
      %v5054 = vadd.f32 %v4401, %v4996
      %v5055 = vadd.f32 %v4402, %v5001
      %v5056 = vadd.f32 %v4403, %v5006
      %v5057 = vadd.f32 %v4404, %v5011
      %v5058 = vadd.f32 %v4405, %v5016
      %v5059 = vadd.f32 %v4406, %v5021
      %v5060 = vadd.f32 %v4407, %v5026
      %v5061 = vld [vmem:[%s4408 + $0x1] sm:$0xff]
      %v5062 = vld [vmem:[%s4408 + $0x9] sm:$0xff]
      %v5063 = vld [vmem:[%s4408 + $0x19] sm:$0xff]
      %v5064 = vld [vmem:[%s4408 + $0x21] sm:$0xff]
      %v5065 = vld [vmem:[%s4408 + $0x31] sm:$0xff]
      %v5066 = vld [vmem:[%s4408 + $0x39] sm:$0xff]
      %v5067 = vld [vmem:[%s4408 + $0x49] sm:$0xff]
      %v5068 = vld [vmem:[%s4408 + $0x51] sm:$0xff]
      %v5069 = vld [vmem:[%s4408 + $0x61] sm:$0xff]
      %v5070 = vld [vmem:[%s4408 + $0x69] sm:$0xff]
      %v5071 = vld [vmem:[%s4408 + $0x79] sm:$0xff]
      %v5072 = vld [vmem:[%s4408 + $0x81] sm:$0xff]
      %v5073 = vld [vmem:[%s4408 + $0x91] sm:$0xff]
      %v5074 = vld [vmem:[%s4408 + $0x99] sm:$0xff]
      %v5075 = vld [vmem:[%s4408 + $0xa9] sm:$0xff]
      %v5076 = vld [vmem:[%s4408 + $0xb1] sm:$0xff]
      %v5077 = vld [vmem:[%s4408 + $0xc1] sm:$0xff]
      %v5078 = vld [vmem:[%s4408 + $0xc9] sm:$0xff]
      %v5079 = vld [vmem:[%s4408 + $0xd9] sm:$0xff]
      %v5080 = vld [vmem:[%s4408 + $0xe1] sm:$0xff]
      %v5081 = vld [vmem:[%s4408 + $0xf1] sm:$0xff]
      %v5082 = vld [vmem:[%s4408 + $0xf9] sm:$0xff]
      %v5083 = vld [vmem:[%s4408 + $0x109] sm:$0xff]
      %v5084 = vld [vmem:[%s4408 + $0x111] sm:$0xff]
      %v5085 = vld [vmem:[%s4408 + $0x121] sm:$0xff]
      %v5086 = vld [vmem:[%s4408 + $0x129] sm:$0xff]
      %v5087 = vld [vmem:[%s4408 + $0x139] sm:$0xff]
      %v5088 = vld [vmem:[%s4408 + $0x141] sm:$0xff]
      %v5089 = vld [vmem:[%s4408 + $0x151] sm:$0xff]
      %v5090 = vld [vmem:[%s4408 + $0x159] sm:$0xff]
      %v5091 = vld [vmem:[%s4408 + $0x169] sm:$0xff]
      %v5092 = vld [vmem:[%s4408 + $0x171] sm:$0xff]
      %s5093 = scalar_lea.vmem %s1, 28
      %v5094 = vld [vmem:[%s5093] sm:$0xf]
      %v5096 = vsel %vm306, %v5061, 0
      %v5099 = vsel %vm306, %v5062, 0
      %v5102 = vsel %vm306, %v5063, 0
      %v5105 = vsel %vm306, %v5064, 0
      %v5108 = vsel %vm306, %v5065, 0
      %v5111 = vsel %vm306, %v5066, 0
      %v5114 = vsel %vm306, %v5067, 0
      %v5117 = vsel %vm306, %v5068, 0
      %v5120 = vsel %vm306, %v5069, 0
      %v5123 = vsel %vm306, %v5070, 0
      %v5126 = vsel %vm306, %v5071, 0
      %v5129 = vsel %vm306, %v5072, 0
      %v5132 = vsel %vm306, %v5073, 0
      %v5135 = vsel %vm306, %v5074, 0
      %v5138 = vsel %vm306, %v5075, 0
      %v5141 = vsel %vm306, %v5076, 0
      %v5144 = vsel %vm306, %v5077, 0
      %v5147 = vsel %vm306, %v5078, 0
      %v5150 = vsel %vm306, %v5079, 0
      %v5153 = vsel %vm306, %v5080, 0
      %v5156 = vsel %vm306, %v5081, 0
      %v5159 = vsel %vm306, %v5082, 0
      %v5162 = vsel %vm306, %v5083, 0
      %v5165 = vsel %vm306, %v5084, 0
      %v5168 = vsel %vm306, %v5085, 0
      %v5171 = vsel %vm306, %v5086, 0
      %v5174 = vsel %vm306, %v5087, 0
      %v5177 = vsel %vm306, %v5088, 0
      %v5180 = vsel %vm306, %v5089, 0
      %v5183 = vsel %vm306, %v5090, 0
      %v5186 = vsel %vm306, %v5091, 0
      %v5189 = vsel %vm306, %v5092, 0
      %v5192 = vsel %vm626, %v5094, 0
      %5194 = vmatprep.subr.mxu0 0.0
      %5195 = vmatpush1.msra.mxu0 %v5192
      %5196 = vmatprep.subr.mxu0 0.0
      %5197 = vmatpush1.msra.mxu0 0.0
      %5198 = vmatprep.subr.mxu0 0.0
      %5199 = vmatpush1.msra.mxu0 0.0
      %5200 = vmatprep.subr.mxu0 0.0
      %5201 = vmatpush1.msra.mxu0 0.0
      %5202 = vmatprep.subr.mxu0 0.0
      %5203 = vmatpush1.msra.mxu0 0.0
      %5204 = vmatprep.subr.mxu0 0.0
      %5205 = vmatpush1.msra.mxu0 0.0
      %5206 = vmatprep.subr.mxu0 0.0
      %5207 = vmatpush1.msra.mxu0 0.0
      %5208 = vmatprep.subr.mxu0 0.0
      %5209 = vmatpush1.msra.mxu0 0.0
      %5210 = vmatprep.subr.mxu0 0.0
      %5211 = vmatpush1.msra.mxu0 0.0
      %5212 = vmatprep.subr.mxu0 0.0
      %5213 = vmatpush1.msra.mxu0 0.0
      %5214 = vmatprep.subr.mxu0 0.0
      %5215 = vmatpush1.msra.mxu0 0.0
      %5216 = vmatprep.subr.mxu0 0.0
      %5217 = vmatpush1.msra.mxu0 0.0
      %5218 = vmatprep.subr.mxu0 0.0
      %5219 = vmatpush1.msra.mxu0 0.0
      %5220 = vmatprep.subr.mxu0 0.0
      %5221 = vmatpush1.msra.mxu0 0.0
      %5222 = vmatprep.subr.mxu0 0.0
      %5223 = vmatpush1.msra.mxu0 0.0
      %5224 = vmatprep.subr.mxu0 0.0
      %5225 = vmatpush1.msra.mxu0 0.0
      %5226 = vmatprep.subr.mxu0 0.0
      %5227 = vmatpush1.msra.mxu0 0.0
      %5228 = vmatprep.subr.mxu0 0.0
      %5229 = vmatpush1.msra.mxu0 0.0
      %5230 = vmatprep.subr.mxu0 0.0
      %5231 = vmatpush1.msra.mxu0 0.0
      %5232 = vmatprep.subr.mxu0 0.0
      %5233 = vmatpush1.msra.mxu0 0.0
      %5234 = vmatprep.subr.mxu0 0.0
      %5235 = vmatpush1.msra.mxu0 0.0
      %5236 = vmatprep.subr.mxu0 0.0
      %5237 = vmatpush1.msra.mxu0 0.0
      %5238 = vmatprep.subr.mxu0 0.0
      %5239 = vmatpush1.msra.mxu0 0.0
      %5240 = vmatprep.subr.mxu0 0.0
      %5241 = vmatpush1.msra.mxu0 0.0
      %5242 = vmatprep.subr.mxu0 0.0
      %5243 = vmatpush1.msra.mxu0 0.0
      %5244 = vmatprep.subr.mxu0 0.0
      %5245 = vmatpush1.msra.mxu0 0.0
      %5246 = vmatprep.subr.mxu0 0.0
      %5247 = vmatpush1.msra.mxu0 0.0
      %5248 = vmatprep.subr.mxu0 0.0
      %5249 = vmatpush1.msra.mxu0 0.0
      %5250 = vmatprep.subr.mxu0 0.0
      %5251 = vmatpush1.msra.mxu0 0.0
      %5252 = vmatprep.subr.mxu0 0.0
      %5253 = vmatpush1.msra.mxu0 0.0
      %5254 = vmatprep.subr.mxu0 0.0
      %5255 = vmatpush1.msra.mxu0 0.0
      %5256 = vmatprep.subr.mxu0 0.0
      %5257 = vmatpush1.msra.mxu0 0.0
      %5258 = vmatprep.mubr.f32.mxu0 0.0
      %5259 = vmatmul.mubr.f32.gmra.mrb[0].mxu0 %v5096
      %v5260 = vpop.f32.mrb[0].mxu0
      %v5261 = vadd.f32 0.0, %v5260
      %v5262 = vpop.f32.mrb[0].mxu0
      %5263 = vmatprep.mubr.f32.mxu0 0.0
      %5264 = vmatmul.mubr.f32.gmra.mrb[0].mxu0 %v5099
      %v5265 = vpop.f32.mrb[0].mxu0
      %v5266 = vadd.f32 0.0, %v5265
      %v5267 = vpop.f32.mrb[0].mxu0
      %5268 = vmatprep.mubr.f32.mxu0 0.0
      %5269 = vmatmul.mubr.f32.gmra.mrb[0].mxu0 %v5102
      %v5270 = vpop.f32.mrb[0].mxu0
      %v5271 = vadd.f32 0.0, %v5270
      %v5272 = vpop.f32.mrb[0].mxu0
      %5273 = vmatprep.mubr.f32.mxu0 0.0
      %5274 = vmatmul.mubr.f32.gmra.mrb[0].mxu0 %v5105
      %v5275 = vpop.f32.mrb[0].mxu0
      %v5276 = vadd.f32 0.0, %v5275
      %v5277 = vpop.f32.mrb[0].mxu0
      %5278 = vmatprep.mubr.f32.mxu0 0.0
      %5279 = vmatmul.mubr.f32.gmra.mrb[0].mxu0 %v5108
      %v5280 = vpop.f32.mrb[0].mxu0
      %v5281 = vadd.f32 0.0, %v5280
      %v5282 = vpop.f32.mrb[0].mxu0
      %5283 = vmatprep.mubr.f32.mxu0 0.0
      %5284 = vmatmul.mubr.f32.gmra.mrb[0].mxu0 %v5111
      %v5285 = vpop.f32.mrb[0].mxu0
      %v5286 = vadd.f32 0.0, %v5285
      %v5287 = vpop.f32.mrb[0].mxu0
      %5288 = vmatprep.mubr.f32.mxu0 0.0
      %5289 = vmatmul.mubr.f32.gmra.mrb[0].mxu0 %v5114
      %v5290 = vpop.f32.mrb[0].mxu0
      %v5291 = vadd.f32 0.0, %v5290
      %v5292 = vpop.f32.mrb[0].mxu0
      %5293 = vmatprep.mubr.f32.mxu0 0.0
      %5294 = vmatmul.mubr.f32.gmra.mrb[0].mxu0 %v5117
      %v5295 = vpop.f32.mrb[0].mxu0
      %v5296 = vadd.f32 0.0, %v5295
      %v5297 = vpop.f32.mrb[0].mxu0
      %5298 = vmatprep.mubr.f32.mxu0 0.0
      %5299 = vmatmul.mubr.f32.gmra.mrb[0].mxu0 %v5120
      %v5300 = vpop.f32.mrb[0].mxu0
      %v5301 = vadd.f32 0.0, %v5300
      %v5302 = vpop.f32.mrb[0].mxu0
      %5303 = vmatprep.mubr.f32.mxu0 0.0
      %5304 = vmatmul.mubr.f32.gmra.mrb[0].mxu0 %v5123
      %v5305 = vpop.f32.mrb[0].mxu0
      %v5306 = vadd.f32 0.0, %v5305
      %v5307 = vpop.f32.mrb[0].mxu0
      %5308 = vmatprep.mubr.f32.mxu0 0.0
      %5309 = vmatmul.mubr.f32.gmra.mrb[0].mxu0 %v5126
      %v5310 = vpop.f32.mrb[0].mxu0
      %v5311 = vadd.f32 0.0, %v5310
      %v5312 = vpop.f32.mrb[0].mxu0
      %5313 = vmatprep.mubr.f32.mxu0 0.0
      %5314 = vmatmul.mubr.f32.gmra.mrb[0].mxu0 %v5129
      %v5315 = vpop.f32.mrb[0].mxu0
      %v5316 = vadd.f32 0.0, %v5315
      %v5317 = vpop.f32.mrb[0].mxu0
      %5318 = vmatprep.mubr.f32.mxu0 0.0
      %5319 = vmatmul.mubr.f32.gmra.mrb[0].mxu0 %v5132
      %v5320 = vpop.f32.mrb[0].mxu0
      %v5321 = vadd.f32 0.0, %v5320
      %v5322 = vpop.f32.mrb[0].mxu0
      %5323 = vmatprep.mubr.f32.mxu0 0.0
      %5324 = vmatmul.mubr.f32.gmra.mrb[0].mxu0 %v5135
      %v5325 = vpop.f32.mrb[0].mxu0
      %v5326 = vadd.f32 0.0, %v5325
      %v5327 = vpop.f32.mrb[0].mxu0
      %5328 = vmatprep.mubr.f32.mxu0 0.0
      %5329 = vmatmul.mubr.f32.gmra.mrb[0].mxu0 %v5138
      %v5330 = vpop.f32.mrb[0].mxu0
      %v5331 = vadd.f32 0.0, %v5330
      %v5332 = vpop.f32.mrb[0].mxu0
      %5333 = vmatprep.mubr.f32.mxu0 0.0
      %5334 = vmatmul.mubr.f32.gmra.mrb[0].mxu0 %v5141
      %v5335 = vpop.f32.mrb[0].mxu0
      %v5336 = vadd.f32 0.0, %v5335
      %v5337 = vpop.f32.mrb[0].mxu0
      %5338 = vmatprep.mubr.f32.mxu0 0.0
      %5339 = vmatmul.mubr.f32.gmra.mrb[0].mxu0 %v5144
      %v5340 = vpop.f32.mrb[0].mxu0
      %v5341 = vadd.f32 0.0, %v5340
      %v5342 = vpop.f32.mrb[0].mxu0
      %5343 = vmatprep.mubr.f32.mxu0 0.0
      %5344 = vmatmul.mubr.f32.gmra.mrb[0].mxu0 %v5147
      %v5345 = vpop.f32.mrb[0].mxu0
      %v5346 = vadd.f32 0.0, %v5345
      %v5347 = vpop.f32.mrb[0].mxu0
      %5348 = vmatprep.mubr.f32.mxu0 0.0
      %5349 = vmatmul.mubr.f32.gmra.mrb[0].mxu0 %v5150
      %v5350 = vpop.f32.mrb[0].mxu0
      %v5351 = vadd.f32 0.0, %v5350
      %v5352 = vpop.f32.mrb[0].mxu0
      %5353 = vmatprep.mubr.f32.mxu0 0.0
      %5354 = vmatmul.mubr.f32.gmra.mrb[0].mxu0 %v5153
      %v5355 = vpop.f32.mrb[0].mxu0
      %v5356 = vadd.f32 0.0, %v5355
      %v5357 = vpop.f32.mrb[0].mxu0
      %5358 = vmatprep.mubr.f32.mxu0 0.0
      %5359 = vmatmul.mubr.f32.gmra.mrb[0].mxu0 %v5156
      %v5360 = vpop.f32.mrb[0].mxu0
      %v5361 = vadd.f32 0.0, %v5360
      %v5362 = vpop.f32.mrb[0].mxu0
      %5363 = vmatprep.mubr.f32.mxu0 0.0
      %5364 = vmatmul.mubr.f32.gmra.mrb[0].mxu0 %v5159
      %v5365 = vpop.f32.mrb[0].mxu0
      %v5366 = vadd.f32 0.0, %v5365
      %v5367 = vpop.f32.mrb[0].mxu0
      %5368 = vmatprep.mubr.f32.mxu0 0.0
      %5369 = vmatmul.mubr.f32.gmra.mrb[0].mxu0 %v5162
      %v5370 = vpop.f32.mrb[0].mxu0
      %v5371 = vadd.f32 0.0, %v5370
      %v5372 = vpop.f32.mrb[0].mxu0
      %5373 = vmatprep.mubr.f32.mxu0 0.0
      %5374 = vmatmul.mubr.f32.gmra.mrb[0].mxu0 %v5165
      %v5375 = vpop.f32.mrb[0].mxu0
      %v5376 = vadd.f32 0.0, %v5375
      %v5377 = vpop.f32.mrb[0].mxu0
      %5378 = vmatprep.mubr.f32.mxu0 0.0
      %5379 = vmatmul.mubr.f32.gmra.mrb[0].mxu0 %v5168
      %v5380 = vpop.f32.mrb[0].mxu0
      %v5381 = vadd.f32 0.0, %v5380
      %v5382 = vpop.f32.mrb[0].mxu0
      %5383 = vmatprep.mubr.f32.mxu0 0.0
      %5384 = vmatmul.mubr.f32.gmra.mrb[0].mxu0 %v5171
      %v5385 = vpop.f32.mrb[0].mxu0
      %v5386 = vadd.f32 0.0, %v5385
      %v5387 = vpop.f32.mrb[0].mxu0
      %5388 = vmatprep.mubr.f32.mxu0 0.0
      %5389 = vmatmul.mubr.f32.gmra.mrb[0].mxu0 %v5174
      %v5390 = vpop.f32.mrb[0].mxu0
      %v5391 = vadd.f32 0.0, %v5390
      %v5392 = vpop.f32.mrb[0].mxu0
      %5393 = vmatprep.mubr.f32.mxu0 0.0
      %5394 = vmatmul.mubr.f32.gmra.mrb[0].mxu0 %v5177
      %v5395 = vpop.f32.mrb[0].mxu0
      %v5396 = vadd.f32 0.0, %v5395
      %v5397 = vpop.f32.mrb[0].mxu0
      %5398 = vmatprep.mubr.f32.mxu0 0.0
      %5399 = vmatmul.mubr.f32.gmra.mrb[0].mxu0 %v5180
      %v5400 = vpop.f32.mrb[0].mxu0
      %v5401 = vadd.f32 0.0, %v5400
      %v5402 = vpop.f32.mrb[0].mxu0
      %5403 = vmatprep.mubr.f32.mxu0 0.0
      %5404 = vmatmul.mubr.f32.gmra.mrb[0].mxu0 %v5183
      %v5405 = vpop.f32.mrb[0].mxu0
      %v5406 = vadd.f32 0.0, %v5405
      %v5407 = vpop.f32.mrb[0].mxu0
      %5408 = vmatprep.mubr.f32.mxu0 0.0
      %5409 = vmatmul.mubr.f32.gmra.mrb[0].mxu0 %v5186
      %v5410 = vpop.f32.mrb[0].mxu0
      %v5411 = vadd.f32 0.0, %v5410
      %v5412 = vpop.f32.mrb[0].mxu0
      %5413 = vmatprep.mubr.f32.mxu0 0.0
      %5414 = vmatmul.mubr.f32.gmra.mrb[0].mxu0 %v5189
      %v5415 = vpop.f32.mrb[0].mxu0
      %v5416 = vadd.f32 0.0, %v5415
      %v5417 = vpop.f32.mrb[0].mxu0
      %5418 = vdwg.mxu0
      %v5419 = vadd.f32 %v4767, %v5261
      %v5420 = vadd.f32 %v4768, %v5266
      %v5421 = vadd.f32 %v4769, %v5271
      %v5422 = vadd.f32 %v4770, %v5276
      %v5423 = vadd.f32 %v4771, %v5281
      %v5424 = vadd.f32 %v4772, %v5286
      %v5425 = vadd.f32 %v4773, %v5291
      %v5426 = vadd.f32 %v4774, %v5296
      %v5427 = vadd.f32 %v4775, %v5301
      %v5428 = vadd.f32 %v4776, %v5306
      %v5429 = vadd.f32 %v4777, %v5311
      %v5430 = vadd.f32 %v4778, %v5316
      %v5431 = vadd.f32 %v4779, %v5321
      %v5432 = vadd.f32 %v4780, %v5326
      %v5433 = vadd.f32 %v4781, %v5331
      %v5434 = vadd.f32 %v4782, %v5336
      %v5435 = vadd.f32 %v4783, %v5341
      %v5436 = vadd.f32 %v4784, %v5346
      %v5437 = vadd.f32 %v4785, %v5351
      %v5438 = vadd.f32 %v4786, %v5356
      %v5439 = vadd.f32 %v4787, %v5361
      %v5440 = vadd.f32 %v4788, %v5366
      %v5441 = vadd.f32 %v4789, %v5371
      %v5442 = vadd.f32 %v4790, %v5376
      %v5443 = vadd.f32 %v4791, %v5381
      %v5444 = vadd.f32 %v4792, %v5386
      %v5445 = vadd.f32 %v4793, %v5391
      %v5446 = vadd.f32 %v4794, %v5396
      %v5447 = vadd.f32 %v4795, %v5401
      %v5448 = vadd.f32 %v4796, %v5406
      %v5449 = vadd.f32 %v4797, %v5411
      %v5450 = vadd.f32 %v4798, %v5416
      %s5451 = scalar_lea.vmem %s5, 28
      %v5452 = vld [vmem:[%s5451] sm:$0xf]
      %v5454 = vsel %vm626, %v5452, 0
      %5456 = vmatprep.subr.mxu0 0.0
      %5457 = vmatpush1.msra.mxu0 %v5454
      %5458 = vmatprep.subr.mxu0 0.0
      %5459 = vmatpush1.msra.mxu0 0.0
      %5460 = vmatprep.subr.mxu0 0.0
      %5461 = vmatpush1.msra.mxu0 0.0
      %5462 = vmatprep.subr.mxu0 0.0
      %5463 = vmatpush1.msra.mxu0 0.0
      %5464 = vmatprep.subr.mxu0 0.0
      %5465 = vmatpush1.msra.mxu0 0.0
      %5466 = vmatprep.subr.mxu0 0.0
      %5467 = vmatpush1.msra.mxu0 0.0
      %5468 = vmatprep.subr.mxu0 0.0
      %5469 = vmatpush1.msra.mxu0 0.0
      %5470 = vmatprep.subr.mxu0 0.0
      %5471 = vmatpush1.msra.mxu0 0.0
      %5472 = vmatprep.subr.mxu0 0.0
      %5473 = vmatpush1.msra.mxu0 0.0
      %5474 = vmatprep.subr.mxu0 0.0
      %5475 = vmatpush1.msra.mxu0 0.0
      %5476 = vmatprep.subr.mxu0 0.0
      %5477 = vmatpush1.msra.mxu0 0.0
      %5478 = vmatprep.subr.mxu0 0.0
      %5479 = vmatpush1.msra.mxu0 0.0
      %5480 = vmatprep.subr.mxu0 0.0
      %5481 = vmatpush1.msra.mxu0 0.0
      %5482 = vmatprep.subr.mxu0 0.0
      %5483 = vmatpush1.msra.mxu0 0.0
      %5484 = vmatprep.subr.mxu0 0.0
      %5485 = vmatpush1.msra.mxu0 0.0
      %5486 = vmatprep.subr.mxu0 0.0
      %5487 = vmatpush1.msra.mxu0 0.0
      %5488 = vmatprep.subr.mxu0 0.0
      %5489 = vmatpush1.msra.mxu0 0.0
      %5490 = vmatprep.subr.mxu0 0.0
      %5491 = vmatpush1.msra.mxu0 0.0
      %5492 = vmatprep.subr.mxu0 0.0
      %5493 = vmatpush1.msra.mxu0 0.0
      %5494 = vmatprep.subr.mxu0 0.0
      %5495 = vmatpush1.msra.mxu0 0.0
      %5496 = vmatprep.subr.mxu0 0.0
      %5497 = vmatpush1.msra.mxu0 0.0
      %5498 = vmatprep.subr.mxu0 0.0
      %5499 = vmatpush1.msra.mxu0 0.0
      %5500 = vmatprep.subr.mxu0 0.0
      %5501 = vmatpush1.msra.mxu0 0.0
      %5502 = vmatprep.subr.mxu0 0.0
      %5503 = vmatpush1.msra.mxu0 0.0
      %5504 = vmatprep.subr.mxu0 0.0
      %5505 = vmatpush1.msra.mxu0 0.0
      %5506 = vmatprep.subr.mxu0 0.0
      %5507 = vmatpush1.msra.mxu0 0.0
      %5508 = vmatprep.subr.mxu0 0.0
      %5509 = vmatpush1.msra.mxu0 0.0
      %5510 = vmatprep.subr.mxu0 0.0
      %5511 = vmatpush1.msra.mxu0 0.0
      %5512 = vmatprep.subr.mxu0 0.0
      %5513 = vmatpush1.msra.mxu0 0.0
      %5514 = vmatprep.subr.mxu0 0.0
      %5515 = vmatpush1.msra.mxu0 0.0
      %5516 = vmatprep.subr.mxu0 0.0
      %5517 = vmatpush1.msra.mxu0 0.0
      %5518 = vmatprep.subr.mxu0 0.0
      %5519 = vmatpush1.msra.mxu0 0.0
      %5520 = vmatprep.mubr.f32.mxu0 0.0
      %5521 = vmatmul.mubr.f32.gmra.mrb[0].mxu0 %v5096
      %v5522 = vpop.f32.mrb[0].mxu0
      %v5523 = vadd.f32 0.0, %v5522
      %v5524 = vpop.f32.mrb[0].mxu0
      %5525 = vmatprep.mubr.f32.mxu0 0.0
      %5526 = vmatmul.mubr.f32.gmra.mrb[0].mxu0 %v5099
      %v5527 = vpop.f32.mrb[0].mxu0
      %v5528 = vadd.f32 0.0, %v5527
      %v5529 = vpop.f32.mrb[0].mxu0
      %5530 = vmatprep.mubr.f32.mxu0 0.0
      %5531 = vmatmul.mubr.f32.gmra.mrb[0].mxu0 %v5102
      %v5532 = vpop.f32.mrb[0].mxu0
      %v5533 = vadd.f32 0.0, %v5532
      %v5534 = vpop.f32.mrb[0].mxu0
      %5535 = vmatprep.mubr.f32.mxu0 0.0
      %5536 = vmatmul.mubr.f32.gmra.mrb[0].mxu0 %v5105
      %v5537 = vpop.f32.mrb[0].mxu0
      %v5538 = vadd.f32 0.0, %v5537
      %v5539 = vpop.f32.mrb[0].mxu0
      %5540 = vmatprep.mubr.f32.mxu0 0.0
      %5541 = vmatmul.mubr.f32.gmra.mrb[0].mxu0 %v5108
      %v5542 = vpop.f32.mrb[0].mxu0
      %v5543 = vadd.f32 0.0, %v5542
      %v5544 = vpop.f32.mrb[0].mxu0
      %5545 = vmatprep.mubr.f32.mxu0 0.0
      %5546 = vmatmul.mubr.f32.gmra.mrb[0].mxu0 %v5111
      %v5547 = vpop.f32.mrb[0].mxu0
      %v5548 = vadd.f32 0.0, %v5547
      %v5549 = vpop.f32.mrb[0].mxu0
      %5550 = vmatprep.mubr.f32.mxu0 0.0
      %5551 = vmatmul.mubr.f32.gmra.mrb[0].mxu0 %v5114
      %v5552 = vpop.f32.mrb[0].mxu0
      %v5553 = vadd.f32 0.0, %v5552
      %v5554 = vpop.f32.mrb[0].mxu0
      %5555 = vmatprep.mubr.f32.mxu0 0.0
      %5556 = vmatmul.mubr.f32.gmra.mrb[0].mxu0 %v5117
      %v5557 = vpop.f32.mrb[0].mxu0
      %v5558 = vadd.f32 0.0, %v5557
      %v5559 = vpop.f32.mrb[0].mxu0
      %5560 = vmatprep.mubr.f32.mxu0 0.0
      %5561 = vmatmul.mubr.f32.gmra.mrb[0].mxu0 %v5120
      %v5562 = vpop.f32.mrb[0].mxu0
      %v5563 = vadd.f32 0.0, %v5562
      %v5564 = vpop.f32.mrb[0].mxu0
      %5565 = vmatprep.mubr.f32.mxu0 0.0
      %5566 = vmatmul.mubr.f32.gmra.mrb[0].mxu0 %v5123
      %v5567 = vpop.f32.mrb[0].mxu0
      %v5568 = vadd.f32 0.0, %v5567
      %v5569 = vpop.f32.mrb[0].mxu0
      %5570 = vmatprep.mubr.f32.mxu0 0.0
      %5571 = vmatmul.mubr.f32.gmra.mrb[0].mxu0 %v5126
      %v5572 = vpop.f32.mrb[0].mxu0
      %v5573 = vadd.f32 0.0, %v5572
      %v5574 = vpop.f32.mrb[0].mxu0
      %5575 = vmatprep.mubr.f32.mxu0 0.0
      %5576 = vmatmul.mubr.f32.gmra.mrb[0].mxu0 %v5129
      %v5577 = vpop.f32.mrb[0].mxu0
      %v5578 = vadd.f32 0.0, %v5577
      %v5579 = vpop.f32.mrb[0].mxu0
      %5580 = vmatprep.mubr.f32.mxu0 0.0
      %5581 = vmatmul.mubr.f32.gmra.mrb[0].mxu0 %v5132
      %v5582 = vpop.f32.mrb[0].mxu0
      %v5583 = vadd.f32 0.0, %v5582
      %v5584 = vpop.f32.mrb[0].mxu0
      %5585 = vmatprep.mubr.f32.mxu0 0.0
      %5586 = vmatmul.mubr.f32.gmra.mrb[0].mxu0 %v5135
      %v5587 = vpop.f32.mrb[0].mxu0
      %v5588 = vadd.f32 0.0, %v5587
      %v5589 = vpop.f32.mrb[0].mxu0
      %5590 = vmatprep.mubr.f32.mxu0 0.0
      %5591 = vmatmul.mubr.f32.gmra.mrb[0].mxu0 %v5138
      %v5592 = vpop.f32.mrb[0].mxu0
      %v5593 = vadd.f32 0.0, %v5592
      %v5594 = vpop.f32.mrb[0].mxu0
      %5595 = vmatprep.mubr.f32.mxu0 0.0
      %5596 = vmatmul.mubr.f32.gmra.mrb[0].mxu0 %v5141
      %v5597 = vpop.f32.mrb[0].mxu0
      %v5598 = vadd.f32 0.0, %v5597
      %v5599 = vpop.f32.mrb[0].mxu0
      %5600 = vmatprep.mubr.f32.mxu0 0.0
      %5601 = vmatmul.mubr.f32.gmra.mrb[0].mxu0 %v5144
      %v5602 = vpop.f32.mrb[0].mxu0
      %v5603 = vadd.f32 0.0, %v5602
      %v5604 = vpop.f32.mrb[0].mxu0
      %5605 = vmatprep.mubr.f32.mxu0 0.0
      %5606 = vmatmul.mubr.f32.gmra.mrb[0].mxu0 %v5147
      %v5607 = vpop.f32.mrb[0].mxu0
      %v5608 = vadd.f32 0.0, %v5607
      %v5609 = vpop.f32.mrb[0].mxu0
      %5610 = vmatprep.mubr.f32.mxu0 0.0
      %5611 = vmatmul.mubr.f32.gmra.mrb[0].mxu0 %v5150
      %v5612 = vpop.f32.mrb[0].mxu0
      %v5613 = vadd.f32 0.0, %v5612
      %v5614 = vpop.f32.mrb[0].mxu0
      %5615 = vmatprep.mubr.f32.mxu0 0.0
      %5616 = vmatmul.mubr.f32.gmra.mrb[0].mxu0 %v5153
      %v5617 = vpop.f32.mrb[0].mxu0
      %v5618 = vadd.f32 0.0, %v5617
      %v5619 = vpop.f32.mrb[0].mxu0
      %5620 = vmatprep.mubr.f32.mxu0 0.0
      %5621 = vmatmul.mubr.f32.gmra.mrb[0].mxu0 %v5156
      %v5622 = vpop.f32.mrb[0].mxu0
      %v5623 = vadd.f32 0.0, %v5622
      %v5624 = vpop.f32.mrb[0].mxu0
      %5625 = vmatprep.mubr.f32.mxu0 0.0
      %5626 = vmatmul.mubr.f32.gmra.mrb[0].mxu0 %v5159
      %v5627 = vpop.f32.mrb[0].mxu0
      %v5628 = vadd.f32 0.0, %v5627
      %v5629 = vpop.f32.mrb[0].mxu0
      %5630 = vmatprep.mubr.f32.mxu0 0.0
      %5631 = vmatmul.mubr.f32.gmra.mrb[0].mxu0 %v5162
      %v5632 = vpop.f32.mrb[0].mxu0
      %v5633 = vadd.f32 0.0, %v5632
      %v5634 = vpop.f32.mrb[0].mxu0
      %5635 = vmatprep.mubr.f32.mxu0 0.0
      %5636 = vmatmul.mubr.f32.gmra.mrb[0].mxu0 %v5165
      %v5637 = vpop.f32.mrb[0].mxu0
      %v5638 = vadd.f32 0.0, %v5637
      %v5639 = vpop.f32.mrb[0].mxu0
      %5640 = vmatprep.mubr.f32.mxu0 0.0
      %5641 = vmatmul.mubr.f32.gmra.mrb[0].mxu0 %v5168
      %v5642 = vpop.f32.mrb[0].mxu0
      %v5643 = vadd.f32 0.0, %v5642
      %v5644 = vpop.f32.mrb[0].mxu0
      %5645 = vmatprep.mubr.f32.mxu0 0.0
      %5646 = vmatmul.mubr.f32.gmra.mrb[0].mxu0 %v5171
      %v5647 = vpop.f32.mrb[0].mxu0
      %v5648 = vadd.f32 0.0, %v5647
      %v5649 = vpop.f32.mrb[0].mxu0
      %5650 = vmatprep.mubr.f32.mxu0 0.0
      %5651 = vmatmul.mubr.f32.gmra.mrb[0].mxu0 %v5174
      %v5652 = vpop.f32.mrb[0].mxu0
      %v5653 = vadd.f32 0.0, %v5652
      %v5654 = vpop.f32.mrb[0].mxu0
      %5655 = vmatprep.mubr.f32.mxu0 0.0
      %5656 = vmatmul.mubr.f32.gmra.mrb[0].mxu0 %v5177
      %v5657 = vpop.f32.mrb[0].mxu0
      %v5658 = vadd.f32 0.0, %v5657
      %v5659 = vpop.f32.mrb[0].mxu0
      %5660 = vmatprep.mubr.f32.mxu0 0.0
      %5661 = vmatmul.mubr.f32.gmra.mrb[0].mxu0 %v5180
      %v5662 = vpop.f32.mrb[0].mxu0
      %v5663 = vadd.f32 0.0, %v5662
      %v5664 = vpop.f32.mrb[0].mxu0
      %5665 = vmatprep.mubr.f32.mxu0 0.0
      %5666 = vmatmul.mubr.f32.gmra.mrb[0].mxu0 %v5183
      %v5667 = vpop.f32.mrb[0].mxu0
      %v5668 = vadd.f32 0.0, %v5667
      %v5669 = vpop.f32.mrb[0].mxu0
      %5670 = vmatprep.mubr.f32.mxu0 0.0
      %5671 = vmatmul.mubr.f32.gmra.mrb[0].mxu0 %v5186
      %v5672 = vpop.f32.mrb[0].mxu0
      %v5673 = vadd.f32 0.0, %v5672
      %v5674 = vpop.f32.mrb[0].mxu0
      %5675 = vmatprep.mubr.f32.mxu0 0.0
      %5676 = vmatmul.mubr.f32.gmra.mrb[0].mxu0 %v5189
      %v5677 = vpop.f32.mrb[0].mxu0
      %v5678 = vadd.f32 0.0, %v5677
      %v5679 = vpop.f32.mrb[0].mxu0
      %5680 = vdwg.mxu0
      %v5681 = vadd.f32 %v5029, %v5523
      %v5682 = vadd.f32 %v5030, %v5528
      %v5683 = vadd.f32 %v5031, %v5533
      %v5684 = vadd.f32 %v5032, %v5538
      %v5685 = vadd.f32 %v5033, %v5543
      %v5686 = vadd.f32 %v5034, %v5548
      %v5687 = vadd.f32 %v5035, %v5553
      %v5688 = vadd.f32 %v5036, %v5558
      %v5689 = vadd.f32 %v5037, %v5563
      %v5690 = vadd.f32 %v5038, %v5568
      %v5691 = vadd.f32 %v5039, %v5573
      %v5692 = vadd.f32 %v5040, %v5578
      %v5693 = vadd.f32 %v5041, %v5583
      %v5694 = vadd.f32 %v5042, %v5588
      %v5695 = vadd.f32 %v5043, %v5593
      %v5696 = vadd.f32 %v5044, %v5598
      %v5697 = vadd.f32 %v5045, %v5603
      %v5698 = vadd.f32 %v5046, %v5608
      %v5699 = vadd.f32 %v5047, %v5613
      %v5700 = vadd.f32 %v5048, %v5618
      %v5701 = vadd.f32 %v5049, %v5623
      %v5702 = vadd.f32 %v5050, %v5628
      %v5703 = vadd.f32 %v5051, %v5633
      %v5704 = vadd.f32 %v5052, %v5638
      %v5705 = vadd.f32 %v5053, %v5643
      %v5706 = vadd.f32 %v5054, %v5648
      %v5707 = vadd.f32 %v5055, %v5653
      %v5708 = vadd.f32 %v5056, %v5658
      %v5709 = vadd.f32 %v5057, %v5663
      %v5710 = vadd.f32 %v5058, %v5668
      %v5711 = vadd.f32 %v5059, %v5673
      %v5712 = vadd.f32 %v5060, %v5678
      %v5713 = vld [vmem:[%s4408 + $0x2] sm:$0xff]
      %v5714 = vld [vmem:[%s4408 + $0xa] sm:$0xff]
      %v5715 = vld [vmem:[%s4408 + $0x1a] sm:$0xff]
      %v5716 = vld [vmem:[%s4408 + $0x22] sm:$0xff]
      %v5717 = vld [vmem:[%s4408 + $0x32] sm:$0xff]
      %v5718 = vld [vmem:[%s4408 + $0x3a] sm:$0xff]
      %v5719 = vld [vmem:[%s4408 + $0x4a] sm:$0xff]
      %v5720 = vld [vmem:[%s4408 + $0x52] sm:$0xff]
      %v5721 = vld [vmem:[%s4408 + $0x62] sm:$0xff]
      %v5722 = vld [vmem:[%s4408 + $0x6a] sm:$0xff]
      %v5723 = vld [vmem:[%s4408 + $0x7a] sm:$0xff]
      %v5724 = vld [vmem:[%s4408 + $0x82] sm:$0xff]
      %v5725 = vld [vmem:[%s4408 + $0x92] sm:$0xff]
      %v5726 = vld [vmem:[%s4408 + $0x9a] sm:$0xff]
      %v5727 = vld [vmem:[%s4408 + $0xaa] sm:$0xff]
      %v5728 = vld [vmem:[%s4408 + $0xb2] sm:$0xff]
      %v5729 = vld [vmem:[%s4408 + $0xc2] sm:$0xff]
      %v5730 = vld [vmem:[%s4408 + $0xca] sm:$0xff]
      %v5731 = vld [vmem:[%s4408 + $0xda] sm:$0xff]
      %v5732 = vld [vmem:[%s4408 + $0xe2] sm:$0xff]
      %v5733 = vld [vmem:[%s4408 + $0xf2] sm:$0xff]
      %v5734 = vld [vmem:[%s4408 + $0xfa] sm:$0xff]
      %v5735 = vld [vmem:[%s4408 + $0x10a] sm:$0xff]
      %v5736 = vld [vmem:[%s4408 + $0x112] sm:$0xff]
      %v5737 = vld [vmem:[%s4408 + $0x122] sm:$0xff]
      %v5738 = vld [vmem:[%s4408 + $0x12a] sm:$0xff]
      %v5739 = vld [vmem:[%s4408 + $0x13a] sm:$0xff]
      %v5740 = vld [vmem:[%s4408 + $0x142] sm:$0xff]
      %v5741 = vld [vmem:[%s4408 + $0x152] sm:$0xff]
      %v5742 = vld [vmem:[%s4408 + $0x15a] sm:$0xff]
      %v5743 = vld [vmem:[%s4408 + $0x16a] sm:$0xff]
      %v5744 = vld [vmem:[%s4408 + $0x172] sm:$0xff]
      %s5745 = scalar_lea.vmem %s1, 32
      %v5746 = vld [vmem:[%s5745] sm:$0xf]
      %v5748 = vsel %vm306, %v5713, 0
      %v5751 = vsel %vm306, %v5714, 0
      %v5754 = vsel %vm306, %v5715, 0
      %v5757 = vsel %vm306, %v5716, 0
      %v5760 = vsel %vm306, %v5717, 0
      %v5763 = vsel %vm306, %v5718, 0
      %v5766 = vsel %vm306, %v5719, 0
      %v5769 = vsel %vm306, %v5720, 0
      %v5772 = vsel %vm306, %v5721, 0
      %v5775 = vsel %vm306, %v5722, 0
      %v5778 = vsel %vm306, %v5723, 0
      %v5781 = vsel %vm306, %v5724, 0
      %v5784 = vsel %vm306, %v5725, 0
      %v5787 = vsel %vm306, %v5726, 0
      %v5790 = vsel %vm306, %v5727, 0
      %v5793 = vsel %vm306, %v5728, 0
      %v5796 = vsel %vm306, %v5729, 0
      %v5799 = vsel %vm306, %v5730, 0
      %v5802 = vsel %vm306, %v5731, 0
      %v5805 = vsel %vm306, %v5732, 0
      %v5808 = vsel %vm306, %v5733, 0
      %v5811 = vsel %vm306, %v5734, 0
      %v5814 = vsel %vm306, %v5735, 0
      %v5817 = vsel %vm306, %v5736, 0
      %v5820 = vsel %vm306, %v5737, 0
      %v5823 = vsel %vm306, %v5738, 0
      %v5826 = vsel %vm306, %v5739, 0
      %v5829 = vsel %vm306, %v5740, 0
      %v5832 = vsel %vm306, %v5741, 0
      %v5835 = vsel %vm306, %v5742, 0
      %v5838 = vsel %vm306, %v5743, 0
      %v5841 = vsel %vm306, %v5744, 0
      %v5844 = vsel %vm626, %v5746, 0
      %5846 = vmatprep.subr.mxu0 0.0
      %5847 = vmatpush1.msra.mxu0 %v5844
      %5848 = vmatprep.subr.mxu0 0.0
      %5849 = vmatpush1.msra.mxu0 0.0
      %5850 = vmatprep.subr.mxu0 0.0
      %5851 = vmatpush1.msra.mxu0 0.0
      %5852 = vmatprep.subr.mxu0 0.0
      %5853 = vmatpush1.msra.mxu0 0.0
      %5854 = vmatprep.subr.mxu0 0.0
      %5855 = vmatpush1.msra.mxu0 0.0
      %5856 = vmatprep.subr.mxu0 0.0
      %5857 = vmatpush1.msra.mxu0 0.0
      %5858 = vmatprep.subr.mxu0 0.0
      %5859 = vmatpush1.msra.mxu0 0.0
      %5860 = vmatprep.subr.mxu0 0.0
      %5861 = vmatpush1.msra.mxu0 0.0
      %5862 = vmatprep.subr.mxu0 0.0
      %5863 = vmatpush1.msra.mxu0 0.0
      %5864 = vmatprep.subr.mxu0 0.0
      %5865 = vmatpush1.msra.mxu0 0.0
      %5866 = vmatprep.subr.mxu0 0.0
      %5867 = vmatpush1.msra.mxu0 0.0
      %5868 = vmatprep.subr.mxu0 0.0
      %5869 = vmatpush1.msra.mxu0 0.0
      %5870 = vmatprep.subr.mxu0 0.0
      %5871 = vmatpush1.msra.mxu0 0.0
      %5872 = vmatprep.subr.mxu0 0.0
      %5873 = vmatpush1.msra.mxu0 0.0
      %5874 = vmatprep.subr.mxu0 0.0
      %5875 = vmatpush1.msra.mxu0 0.0
      %5876 = vmatprep.subr.mxu0 0.0
      %5877 = vmatpush1.msra.mxu0 0.0
      %5878 = vmatprep.subr.mxu0 0.0
      %5879 = vmatpush1.msra.mxu0 0.0
      %5880 = vmatprep.subr.mxu0 0.0
      %5881 = vmatpush1.msra.mxu0 0.0
      %5882 = vmatprep.subr.mxu0 0.0
      %5883 = vmatpush1.msra.mxu0 0.0
      %5884 = vmatprep.subr.mxu0 0.0
      %5885 = vmatpush1.msra.mxu0 0.0
      %5886 = vmatprep.subr.mxu0 0.0
      %5887 = vmatpush1.msra.mxu0 0.0
      %5888 = vmatprep.subr.mxu0 0.0
      %5889 = vmatpush1.msra.mxu0 0.0
      %5890 = vmatprep.subr.mxu0 0.0
      %5891 = vmatpush1.msra.mxu0 0.0
      %5892 = vmatprep.subr.mxu0 0.0
      %5893 = vmatpush1.msra.mxu0 0.0
      %5894 = vmatprep.subr.mxu0 0.0
      %5895 = vmatpush1.msra.mxu0 0.0
      %5896 = vmatprep.subr.mxu0 0.0
      %5897 = vmatpush1.msra.mxu0 0.0
      %5898 = vmatprep.subr.mxu0 0.0
      %5899 = vmatpush1.msra.mxu0 0.0
      %5900 = vmatprep.subr.mxu0 0.0
      %5901 = vmatpush1.msra.mxu0 0.0
      %5902 = vmatprep.subr.mxu0 0.0
      %5903 = vmatpush1.msra.mxu0 0.0
      %5904 = vmatprep.subr.mxu0 0.0
      %5905 = vmatpush1.msra.mxu0 0.0
      %5906 = vmatprep.subr.mxu0 0.0
      %5907 = vmatpush1.msra.mxu0 0.0
      %5908 = vmatprep.subr.mxu0 0.0
      %5909 = vmatpush1.msra.mxu0 0.0
      %5910 = vmatprep.mubr.f32.mxu0 0.0
      %5911 = vmatmul.mubr.f32.gmra.mrb[0].mxu0 %v5748
      %v5912 = vpop.f32.mrb[0].mxu0
      %v5913 = vadd.f32 0.0, %v5912
      %v5914 = vpop.f32.mrb[0].mxu0
      %5915 = vmatprep.mubr.f32.mxu0 0.0
      %5916 = vmatmul.mubr.f32.gmra.mrb[0].mxu0 %v5751
      %v5917 = vpop.f32.mrb[0].mxu0
      %v5918 = vadd.f32 0.0, %v5917
      %v5919 = vpop.f32.mrb[0].mxu0
      %5920 = vmatprep.mubr.f32.mxu0 0.0
      %5921 = vmatmul.mubr.f32.gmra.mrb[0].mxu0 %v5754
      %v5922 = vpop.f32.mrb[0].mxu0
      %v5923 = vadd.f32 0.0, %v5922
      %v5924 = vpop.f32.mrb[0].mxu0
      %5925 = vmatprep.mubr.f32.mxu0 0.0
      %5926 = vmatmul.mubr.f32.gmra.mrb[0].mxu0 %v5757
      %v5927 = vpop.f32.mrb[0].mxu0
      %v5928 = vadd.f32 0.0, %v5927
      %v5929 = vpop.f32.mrb[0].mxu0
      %5930 = vmatprep.mubr.f32.mxu0 0.0
      %5931 = vmatmul.mubr.f32.gmra.mrb[0].mxu0 %v5760
      %v5932 = vpop.f32.mrb[0].mxu0
      %v5933 = vadd.f32 0.0, %v5932
      %v5934 = vpop.f32.mrb[0].mxu0
      %5935 = vmatprep.mubr.f32.mxu0 0.0
      %5936 = vmatmul.mubr.f32.gmra.mrb[0].mxu0 %v5763
      %v5937 = vpop.f32.mrb[0].mxu0
      %v5938 = vadd.f32 0.0, %v5937
      %v5939 = vpop.f32.mrb[0].mxu0
      %5940 = vmatprep.mubr.f32.mxu0 0.0
      %5941 = vmatmul.mubr.f32.gmra.mrb[0].mxu0 %v5766
      %v5942 = vpop.f32.mrb[0].mxu0
      %v5943 = vadd.f32 0.0, %v5942
      %v5944 = vpop.f32.mrb[0].mxu0
      %5945 = vmatprep.mubr.f32.mxu0 0.0
      %5946 = vmatmul.mubr.f32.gmra.mrb[0].mxu0 %v5769
      %v5947 = vpop.f32.mrb[0].mxu0
      %v5948 = vadd.f32 0.0, %v5947
      %v5949 = vpop.f32.mrb[0].mxu0
      %5950 = vmatprep.mubr.f32.mxu0 0.0
      %5951 = vmatmul.mubr.f32.gmra.mrb[0].mxu0 %v5772
      %v5952 = vpop.f32.mrb[0].mxu0
      %v5953 = vadd.f32 0.0, %v5952
      %v5954 = vpop.f32.mrb[0].mxu0
      %5955 = vmatprep.mubr.f32.mxu0 0.0
      %5956 = vmatmul.mubr.f32.gmra.mrb[0].mxu0 %v5775
      %v5957 = vpop.f32.mrb[0].mxu0
      %v5958 = vadd.f32 0.0, %v5957
      %v5959 = vpop.f32.mrb[0].mxu0
      %5960 = vmatprep.mubr.f32.mxu0 0.0
      %5961 = vmatmul.mubr.f32.gmra.mrb[0].mxu0 %v5778
      %v5962 = vpop.f32.mrb[0].mxu0
      %v5963 = vadd.f32 0.0, %v5962
      %v5964 = vpop.f32.mrb[0].mxu0
      %5965 = vmatprep.mubr.f32.mxu0 0.0
      %5966 = vmatmul.mubr.f32.gmra.mrb[0].mxu0 %v5781
      %v5967 = vpop.f32.mrb[0].mxu0
      %v5968 = vadd.f32 0.0, %v5967
      %v5969 = vpop.f32.mrb[0].mxu0
      %5970 = vmatprep.mubr.f32.mxu0 0.0
      %5971 = vmatmul.mubr.f32.gmra.mrb[0].mxu0 %v5784
      %v5972 = vpop.f32.mrb[0].mxu0
      %v5973 = vadd.f32 0.0, %v5972
      %v5974 = vpop.f32.mrb[0].mxu0
      %5975 = vmatprep.mubr.f32.mxu0 0.0
      %5976 = vmatmul.mubr.f32.gmra.mrb[0].mxu0 %v5787
      %v5977 = vpop.f32.mrb[0].mxu0
      %v5978 = vadd.f32 0.0, %v5977
      %v5979 = vpop.f32.mrb[0].mxu0
      %5980 = vmatprep.mubr.f32.mxu0 0.0
      %5981 = vmatmul.mubr.f32.gmra.mrb[0].mxu0 %v5790
      %v5982 = vpop.f32.mrb[0].mxu0
      %v5983 = vadd.f32 0.0, %v5982
      %v5984 = vpop.f32.mrb[0].mxu0
      %5985 = vmatprep.mubr.f32.mxu0 0.0
      %5986 = vmatmul.mubr.f32.gmra.mrb[0].mxu0 %v5793
      %v5987 = vpop.f32.mrb[0].mxu0
      %v5988 = vadd.f32 0.0, %v5987
      %v5989 = vpop.f32.mrb[0].mxu0
      %5990 = vmatprep.mubr.f32.mxu0 0.0
      %5991 = vmatmul.mubr.f32.gmra.mrb[0].mxu0 %v5796
      %v5992 = vpop.f32.mrb[0].mxu0
      %v5993 = vadd.f32 0.0, %v5992
      %v5994 = vpop.f32.mrb[0].mxu0
      %5995 = vmatprep.mubr.f32.mxu0 0.0
      %5996 = vmatmul.mubr.f32.gmra.mrb[0].mxu0 %v5799
      %v5997 = vpop.f32.mrb[0].mxu0
      %v5998 = vadd.f32 0.0, %v5997
      %v5999 = vpop.f32.mrb[0].mxu0
      %6000 = vmatprep.mubr.f32.mxu0 0.0
      %6001 = vmatmul.mubr.f32.gmra.mrb[0].mxu0 %v5802
      %v6002 = vpop.f32.mrb[0].mxu0
      %v6003 = vadd.f32 0.0, %v6002
      %v6004 = vpop.f32.mrb[0].mxu0
      %6005 = vmatprep.mubr.f32.mxu0 0.0
      %6006 = vmatmul.mubr.f32.gmra.mrb[0].mxu0 %v5805
      %v6007 = vpop.f32.mrb[0].mxu0
      %v6008 = vadd.f32 0.0, %v6007
      %v6009 = vpop.f32.mrb[0].mxu0
      %6010 = vmatprep.mubr.f32.mxu0 0.0
      %6011 = vmatmul.mubr.f32.gmra.mrb[0].mxu0 %v5808
      %v6012 = vpop.f32.mrb[0].mxu0
      %v6013 = vadd.f32 0.0, %v6012
      %v6014 = vpop.f32.mrb[0].mxu0
      %6015 = vmatprep.mubr.f32.mxu0 0.0
      %6016 = vmatmul.mubr.f32.gmra.mrb[0].mxu0 %v5811
      %v6017 = vpop.f32.mrb[0].mxu0
      %v6018 = vadd.f32 0.0, %v6017
      %v6019 = vpop.f32.mrb[0].mxu0
      %6020 = vmatprep.mubr.f32.mxu0 0.0
      %6021 = vmatmul.mubr.f32.gmra.mrb[0].mxu0 %v5814
      %v6022 = vpop.f32.mrb[0].mxu0
      %v6023 = vadd.f32 0.0, %v6022
      %v6024 = vpop.f32.mrb[0].mxu0
      %6025 = vmatprep.mubr.f32.mxu0 0.0
      %6026 = vmatmul.mubr.f32.gmra.mrb[0].mxu0 %v5817
      %v6027 = vpop.f32.mrb[0].mxu0
      %v6028 = vadd.f32 0.0, %v6027
      %v6029 = vpop.f32.mrb[0].mxu0
      %6030 = vmatprep.mubr.f32.mxu0 0.0
      %6031 = vmatmul.mubr.f32.gmra.mrb[0].mxu0 %v5820
      %v6032 = vpop.f32.mrb[0].mxu0
      %v6033 = vadd.f32 0.0, %v6032
      %v6034 = vpop.f32.mrb[0].mxu0
      %6035 = vmatprep.mubr.f32.mxu0 0.0
      %6036 = vmatmul.mubr.f32.gmra.mrb[0].mxu0 %v5823
      %v6037 = vpop.f32.mrb[0].mxu0
      %v6038 = vadd.f32 0.0, %v6037
      %v6039 = vpop.f32.mrb[0].mxu0
      %6040 = vmatprep.mubr.f32.mxu0 0.0
      %6041 = vmatmul.mubr.f32.gmra.mrb[0].mxu0 %v5826
      %v6042 = vpop.f32.mrb[0].mxu0
      %v6043 = vadd.f32 0.0, %v6042
      %v6044 = vpop.f32.mrb[0].mxu0
      %6045 = vmatprep.mubr.f32.mxu0 0.0
      %6046 = vmatmul.mubr.f32.gmra.mrb[0].mxu0 %v5829
      %v6047 = vpop.f32.mrb[0].mxu0
      %v6048 = vadd.f32 0.0, %v6047
      %v6049 = vpop.f32.mrb[0].mxu0
      %6050 = vmatprep.mubr.f32.mxu0 0.0
      %6051 = vmatmul.mubr.f32.gmra.mrb[0].mxu0 %v5832
      %v6052 = vpop.f32.mrb[0].mxu0
      %v6053 = vadd.f32 0.0, %v6052
      %v6054 = vpop.f32.mrb[0].mxu0
      %6055 = vmatprep.mubr.f32.mxu0 0.0
      %6056 = vmatmul.mubr.f32.gmra.mrb[0].mxu0 %v5835
      %v6057 = vpop.f32.mrb[0].mxu0
      %v6058 = vadd.f32 0.0, %v6057
      %v6059 = vpop.f32.mrb[0].mxu0
      %6060 = vmatprep.mubr.f32.mxu0 0.0
      %6061 = vmatmul.mubr.f32.gmra.mrb[0].mxu0 %v5838
      %v6062 = vpop.f32.mrb[0].mxu0
      %v6063 = vadd.f32 0.0, %v6062
      %v6064 = vpop.f32.mrb[0].mxu0
      %6065 = vmatprep.mubr.f32.mxu0 0.0
      %6066 = vmatmul.mubr.f32.gmra.mrb[0].mxu0 %v5841
      %v6067 = vpop.f32.mrb[0].mxu0
      %v6068 = vadd.f32 0.0, %v6067
      %v6069 = vpop.f32.mrb[0].mxu0
      %6070 = vdwg.mxu0
      %v6071 = vadd.f32 %v5419, %v5913
      %v6072 = vadd.f32 %v5420, %v5918
      %v6073 = vadd.f32 %v5421, %v5923
      %v6074 = vadd.f32 %v5422, %v5928
      %v6075 = vadd.f32 %v5423, %v5933
      %v6076 = vadd.f32 %v5424, %v5938
      %v6077 = vadd.f32 %v5425, %v5943
      %v6078 = vadd.f32 %v5426, %v5948
      %v6079 = vadd.f32 %v5427, %v5953
      %v6080 = vadd.f32 %v5428, %v5958
      %v6081 = vadd.f32 %v5429, %v5963
      %v6082 = vadd.f32 %v5430, %v5968
      %v6083 = vadd.f32 %v5431, %v5973
      %v6084 = vadd.f32 %v5432, %v5978
      %v6085 = vadd.f32 %v5433, %v5983
      %v6086 = vadd.f32 %v5434, %v5988
      %v6087 = vadd.f32 %v5435, %v5993
      %v6088 = vadd.f32 %v5436, %v5998
      %v6089 = vadd.f32 %v5437, %v6003
      %v6090 = vadd.f32 %v5438, %v6008
      %v6091 = vadd.f32 %v5439, %v6013
      %v6092 = vadd.f32 %v5440, %v6018
      %v6093 = vadd.f32 %v5441, %v6023
      %v6094 = vadd.f32 %v5442, %v6028
      %v6095 = vadd.f32 %v5443, %v6033
      %v6096 = vadd.f32 %v5444, %v6038
      %v6097 = vadd.f32 %v5445, %v6043
      %v6098 = vadd.f32 %v5446, %v6048
      %v6099 = vadd.f32 %v5447, %v6053
      %v6100 = vadd.f32 %v5448, %v6058
      %v6101 = vadd.f32 %v5449, %v6063
      %v6102 = vadd.f32 %v5450, %v6068
      %s6103 = scalar_lea.vmem %s5, 32
      %v6104 = vld [vmem:[%s6103] sm:$0xf]
      %v6106 = vsel %vm626, %v6104, 0
      %6108 = vmatprep.subr.mxu0 0.0
      %6109 = vmatpush1.msra.mxu0 %v6106
      %6110 = vmatprep.subr.mxu0 0.0
      %6111 = vmatpush1.msra.mxu0 0.0
      %6112 = vmatprep.subr.mxu0 0.0
      %6113 = vmatpush1.msra.mxu0 0.0
      %6114 = vmatprep.subr.mxu0 0.0
      %6115 = vmatpush1.msra.mxu0 0.0
      %6116 = vmatprep.subr.mxu0 0.0
      %6117 = vmatpush1.msra.mxu0 0.0
      %6118 = vmatprep.subr.mxu0 0.0
      %6119 = vmatpush1.msra.mxu0 0.0
      %6120 = vmatprep.subr.mxu0 0.0
      %6121 = vmatpush1.msra.mxu0 0.0
      %6122 = vmatprep.subr.mxu0 0.0
      %6123 = vmatpush1.msra.mxu0 0.0
      %6124 = vmatprep.subr.mxu0 0.0
      %6125 = vmatpush1.msra.mxu0 0.0
      %6126 = vmatprep.subr.mxu0 0.0
      %6127 = vmatpush1.msra.mxu0 0.0
      %6128 = vmatprep.subr.mxu0 0.0
      %6129 = vmatpush1.msra.mxu0 0.0
      %6130 = vmatprep.subr.mxu0 0.0
      %6131 = vmatpush1.msra.mxu0 0.0
      %6132 = vmatprep.subr.mxu0 0.0
      %6133 = vmatpush1.msra.mxu0 0.0
      %6134 = vmatprep.subr.mxu0 0.0
      %6135 = vmatpush1.msra.mxu0 0.0
      %6136 = vmatprep.subr.mxu0 0.0
      %6137 = vmatpush1.msra.mxu0 0.0
      %6138 = vmatprep.subr.mxu0 0.0
      %6139 = vmatpush1.msra.mxu0 0.0
      %6140 = vmatprep.subr.mxu0 0.0
      %6141 = vmatpush1.msra.mxu0 0.0
      %6142 = vmatprep.subr.mxu0 0.0
      %6143 = vmatpush1.msra.mxu0 0.0
      %6144 = vmatprep.subr.mxu0 0.0
      %6145 = vmatpush1.msra.mxu0 0.0
      %6146 = vmatprep.subr.mxu0 0.0
      %6147 = vmatpush1.msra.mxu0 0.0
      %6148 = vmatprep.subr.mxu0 0.0
      %6149 = vmatpush1.msra.mxu0 0.0
      %6150 = vmatprep.subr.mxu0 0.0
      %6151 = vmatpush1.msra.mxu0 0.0
      %6152 = vmatprep.subr.mxu0 0.0
      %6153 = vmatpush1.msra.mxu0 0.0
      %6154 = vmatprep.subr.mxu0 0.0
      %6155 = vmatpush1.msra.mxu0 0.0
      %6156 = vmatprep.subr.mxu0 0.0
      %6157 = vmatpush1.msra.mxu0 0.0
      %6158 = vmatprep.subr.mxu0 0.0
      %6159 = vmatpush1.msra.mxu0 0.0
      %6160 = vmatprep.subr.mxu0 0.0
      %6161 = vmatpush1.msra.mxu0 0.0
      %6162 = vmatprep.subr.mxu0 0.0
      %6163 = vmatpush1.msra.mxu0 0.0
      %6164 = vmatprep.subr.mxu0 0.0
      %6165 = vmatpush1.msra.mxu0 0.0
      %6166 = vmatprep.subr.mxu0 0.0
      %6167 = vmatpush1.msra.mxu0 0.0
      %6168 = vmatprep.subr.mxu0 0.0
      %6169 = vmatpush1.msra.mxu0 0.0
      %6170 = vmatprep.subr.mxu0 0.0
      %6171 = vmatpush1.msra.mxu0 0.0
      %6172 = vmatprep.mubr.f32.mxu0 0.0
      %6173 = vmatmul.mubr.f32.gmra.mrb[0].mxu0 %v5748
      %v6174 = vpop.f32.mrb[0].mxu0
      %v6175 = vadd.f32 0.0, %v6174
      %v6176 = vpop.f32.mrb[0].mxu0
      %6177 = vmatprep.mubr.f32.mxu0 0.0
      %6178 = vmatmul.mubr.f32.gmra.mrb[0].mxu0 %v5751
      %v6179 = vpop.f32.mrb[0].mxu0
      %v6180 = vadd.f32 0.0, %v6179
      %v6181 = vpop.f32.mrb[0].mxu0
      %6182 = vmatprep.mubr.f32.mxu0 0.0
      %6183 = vmatmul.mubr.f32.gmra.mrb[0].mxu0 %v5754
      %v6184 = vpop.f32.mrb[0].mxu0
      %v6185 = vadd.f32 0.0, %v6184
      %v6186 = vpop.f32.mrb[0].mxu0
      %6187 = vmatprep.mubr.f32.mxu0 0.0
      %6188 = vmatmul.mubr.f32.gmra.mrb[0].mxu0 %v5757
      %v6189 = vpop.f32.mrb[0].mxu0
      %v6190 = vadd.f32 0.0, %v6189
      %v6191 = vpop.f32.mrb[0].mxu0
      %6192 = vmatprep.mubr.f32.mxu0 0.0
      %6193 = vmatmul.mubr.f32.gmra.mrb[0].mxu0 %v5760
      %v6194 = vpop.f32.mrb[0].mxu0
      %v6195 = vadd.f32 0.0, %v6194
      %v6196 = vpop.f32.mrb[0].mxu0
      %6197 = vmatprep.mubr.f32.mxu0 0.0
      %6198 = vmatmul.mubr.f32.gmra.mrb[0].mxu0 %v5763
      %v6199 = vpop.f32.mrb[0].mxu0
      %v6200 = vadd.f32 0.0, %v6199
      %v6201 = vpop.f32.mrb[0].mxu0
      %6202 = vmatprep.mubr.f32.mxu0 0.0
      %6203 = vmatmul.mubr.f32.gmra.mrb[0].mxu0 %v5766
      %v6204 = vpop.f32.mrb[0].mxu0
      %v6205 = vadd.f32 0.0, %v6204
      %v6206 = vpop.f32.mrb[0].mxu0
      %6207 = vmatprep.mubr.f32.mxu0 0.0
      %6208 = vmatmul.mubr.f32.gmra.mrb[0].mxu0 %v5769
      %v6209 = vpop.f32.mrb[0].mxu0
      %v6210 = vadd.f32 0.0, %v6209
      %v6211 = vpop.f32.mrb[0].mxu0
      %6212 = vmatprep.mubr.f32.mxu0 0.0
      %6213 = vmatmul.mubr.f32.gmra.mrb[0].mxu0 %v5772
      %v6214 = vpop.f32.mrb[0].mxu0
      %v6215 = vadd.f32 0.0, %v6214
      %v6216 = vpop.f32.mrb[0].mxu0
      %6217 = vmatprep.mubr.f32.mxu0 0.0
      %6218 = vmatmul.mubr.f32.gmra.mrb[0].mxu0 %v5775
      %v6219 = vpop.f32.mrb[0].mxu0
      %v6220 = vadd.f32 0.0, %v6219
      %v6221 = vpop.f32.mrb[0].mxu0
      %6222 = vmatprep.mubr.f32.mxu0 0.0
      %6223 = vmatmul.mubr.f32.gmra.mrb[0].mxu0 %v5778
      %v6224 = vpop.f32.mrb[0].mxu0
      %v6225 = vadd.f32 0.0, %v6224
      %v6226 = vpop.f32.mrb[0].mxu0
      %6227 = vmatprep.mubr.f32.mxu0 0.0
      %6228 = vmatmul.mubr.f32.gmra.mrb[0].mxu0 %v5781
      %v6229 = vpop.f32.mrb[0].mxu0
      %v6230 = vadd.f32 0.0, %v6229
      %v6231 = vpop.f32.mrb[0].mxu0
      %6232 = vmatprep.mubr.f32.mxu0 0.0
      %6233 = vmatmul.mubr.f32.gmra.mrb[0].mxu0 %v5784
      %v6234 = vpop.f32.mrb[0].mxu0
      %v6235 = vadd.f32 0.0, %v6234
      %v6236 = vpop.f32.mrb[0].mxu0
      %6237 = vmatprep.mubr.f32.mxu0 0.0
      %6238 = vmatmul.mubr.f32.gmra.mrb[0].mxu0 %v5787
      %v6239 = vpop.f32.mrb[0].mxu0
      %v6240 = vadd.f32 0.0, %v6239
      %v6241 = vpop.f32.mrb[0].mxu0
      %6242 = vmatprep.mubr.f32.mxu0 0.0
      %6243 = vmatmul.mubr.f32.gmra.mrb[0].mxu0 %v5790
      %v6244 = vpop.f32.mrb[0].mxu0
      %v6245 = vadd.f32 0.0, %v6244
      %v6246 = vpop.f32.mrb[0].mxu0
      %6247 = vmatprep.mubr.f32.mxu0 0.0
      %6248 = vmatmul.mubr.f32.gmra.mrb[0].mxu0 %v5793
      %v6249 = vpop.f32.mrb[0].mxu0
      %v6250 = vadd.f32 0.0, %v6249
      %v6251 = vpop.f32.mrb[0].mxu0
      %6252 = vmatprep.mubr.f32.mxu0 0.0
      %6253 = vmatmul.mubr.f32.gmra.mrb[0].mxu0 %v5796
      %v6254 = vpop.f32.mrb[0].mxu0
      %v6255 = vadd.f32 0.0, %v6254
      %v6256 = vpop.f32.mrb[0].mxu0
      %6257 = vmatprep.mubr.f32.mxu0 0.0
      %6258 = vmatmul.mubr.f32.gmra.mrb[0].mxu0 %v5799
      %v6259 = vpop.f32.mrb[0].mxu0
      %v6260 = vadd.f32 0.0, %v6259
      %v6261 = vpop.f32.mrb[0].mxu0
      %6262 = vmatprep.mubr.f32.mxu0 0.0
      %6263 = vmatmul.mubr.f32.gmra.mrb[0].mxu0 %v5802
      %v6264 = vpop.f32.mrb[0].mxu0
      %v6265 = vadd.f32 0.0, %v6264
      %v6266 = vpop.f32.mrb[0].mxu0
      %6267 = vmatprep.mubr.f32.mxu0 0.0
      %6268 = vmatmul.mubr.f32.gmra.mrb[0].mxu0 %v5805
      %v6269 = vpop.f32.mrb[0].mxu0
      %v6270 = vadd.f32 0.0, %v6269
      %v6271 = vpop.f32.mrb[0].mxu0
      %6272 = vmatprep.mubr.f32.mxu0 0.0
      %6273 = vmatmul.mubr.f32.gmra.mrb[0].mxu0 %v5808
      %v6274 = vpop.f32.mrb[0].mxu0
      %v6275 = vadd.f32 0.0, %v6274
      %v6276 = vpop.f32.mrb[0].mxu0
      %6277 = vmatprep.mubr.f32.mxu0 0.0
      %6278 = vmatmul.mubr.f32.gmra.mrb[0].mxu0 %v5811
      %v6279 = vpop.f32.mrb[0].mxu0
      %v6280 = vadd.f32 0.0, %v6279
      %v6281 = vpop.f32.mrb[0].mxu0
      %6282 = vmatprep.mubr.f32.mxu0 0.0
      %6283 = vmatmul.mubr.f32.gmra.mrb[0].mxu0 %v5814
      %v6284 = vpop.f32.mrb[0].mxu0
      %v6285 = vadd.f32 0.0, %v6284
      %v6286 = vpop.f32.mrb[0].mxu0
      %6287 = vmatprep.mubr.f32.mxu0 0.0
      %6288 = vmatmul.mubr.f32.gmra.mrb[0].mxu0 %v5817
      %v6289 = vpop.f32.mrb[0].mxu0
      %v6290 = vadd.f32 0.0, %v6289
      %v6291 = vpop.f32.mrb[0].mxu0
      %6292 = vmatprep.mubr.f32.mxu0 0.0
      %6293 = vmatmul.mubr.f32.gmra.mrb[0].mxu0 %v5820
      %v6294 = vpop.f32.mrb[0].mxu0
      %v6295 = vadd.f32 0.0, %v6294
      %v6296 = vpop.f32.mrb[0].mxu0
      %6297 = vmatprep.mubr.f32.mxu0 0.0
      %6298 = vmatmul.mubr.f32.gmra.mrb[0].mxu0 %v5823
      %v6299 = vpop.f32.mrb[0].mxu0
      %v6300 = vadd.f32 0.0, %v6299
      %v6301 = vpop.f32.mrb[0].mxu0
      %6302 = vmatprep.mubr.f32.mxu0 0.0
      %6303 = vmatmul.mubr.f32.gmra.mrb[0].mxu0 %v5826
      %v6304 = vpop.f32.mrb[0].mxu0
      %v6305 = vadd.f32 0.0, %v6304
      %v6306 = vpop.f32.mrb[0].mxu0
      %6307 = vmatprep.mubr.f32.mxu0 0.0
      %6308 = vmatmul.mubr.f32.gmra.mrb[0].mxu0 %v5829
      %v6309 = vpop.f32.mrb[0].mxu0
      %v6310 = vadd.f32 0.0, %v6309
      %v6311 = vpop.f32.mrb[0].mxu0
      %6312 = vmatprep.mubr.f32.mxu0 0.0
      %6313 = vmatmul.mubr.f32.gmra.mrb[0].mxu0 %v5832
      %v6314 = vpop.f32.mrb[0].mxu0
      %v6315 = vadd.f32 0.0, %v6314
      %v6316 = vpop.f32.mrb[0].mxu0
      %6317 = vmatprep.mubr.f32.mxu0 0.0
      %6318 = vmatmul.mubr.f32.gmra.mrb[0].mxu0 %v5835
      %v6319 = vpop.f32.mrb[0].mxu0
      %v6320 = vadd.f32 0.0, %v6319
      %v6321 = vpop.f32.mrb[0].mxu0
      %6322 = vmatprep.mubr.f32.mxu0 0.0
      %6323 = vmatmul.mubr.f32.gmra.mrb[0].mxu0 %v5838
      %v6324 = vpop.f32.mrb[0].mxu0
      %v6325 = vadd.f32 0.0, %v6324
      %v6326 = vpop.f32.mrb[0].mxu0
      %6327 = vmatprep.mubr.f32.mxu0 0.0
      %6328 = vmatmul.mubr.f32.gmra.mrb[0].mxu0 %v5841
      %v6329 = vpop.f32.mrb[0].mxu0
      %v6330 = vadd.f32 0.0, %v6329
      %v6331 = vpop.f32.mrb[0].mxu0
      %6332 = vdwg.mxu0
      %v6333 = vadd.f32 %v5681, %v6175
      %v6334 = vadd.f32 %v5682, %v6180
      %v6335 = vadd.f32 %v5683, %v6185
      %v6336 = vadd.f32 %v5684, %v6190
      %v6337 = vadd.f32 %v5685, %v6195
      %v6338 = vadd.f32 %v5686, %v6200
      %v6339 = vadd.f32 %v5687, %v6205
      %v6340 = vadd.f32 %v5688, %v6210
      %v6341 = vadd.f32 %v5689, %v6215
      %v6342 = vadd.f32 %v5690, %v6220
      %v6343 = vadd.f32 %v5691, %v6225
      %v6344 = vadd.f32 %v5692, %v6230
      %v6345 = vadd.f32 %v5693, %v6235
      %v6346 = vadd.f32 %v5694, %v6240
      %v6347 = vadd.f32 %v5695, %v6245
      %v6348 = vadd.f32 %v5696, %v6250
      %v6349 = vadd.f32 %v5697, %v6255
      %v6350 = vadd.f32 %v5698, %v6260
      %v6351 = vadd.f32 %v5699, %v6265
      %v6352 = vadd.f32 %v5700, %v6270
      %v6353 = vadd.f32 %v5701, %v6275
      %v6354 = vadd.f32 %v5702, %v6280
      %v6355 = vadd.f32 %v5703, %v6285
      %v6356 = vadd.f32 %v5704, %v6290
      %v6357 = vadd.f32 %v5705, %v6295
      %v6358 = vadd.f32 %v5706, %v6300
      %v6359 = vadd.f32 %v5707, %v6305
      %v6360 = vadd.f32 %v5708, %v6310
      %v6361 = vadd.f32 %v5709, %v6315
      %v6362 = vadd.f32 %v5710, %v6320
      %v6363 = vadd.f32 %v5711, %v6325
      %v6364 = vadd.f32 %v5712, %v6330
      %vm6365 = vcmp.ge.f32.partialorder %v6071, 0.0
      %vm6366 = vcmp.ge.f32.partialorder %v6072, 0.0
      %vm6367 = vcmp.ge.f32.partialorder %v6073, 0.0
      %vm6368 = vcmp.ge.f32.partialorder %v6074, 0.0
      %vm6369 = vcmp.ge.f32.partialorder %v6075, 0.0
      %vm6370 = vcmp.ge.f32.partialorder %v6076, 0.0
      %vm6371 = vcmp.ge.f32.partialorder %v6077, 0.0
      %vm6372 = vcmp.ge.f32.partialorder %v6078, 0.0
      %vm6373 = vcmp.ge.f32.partialorder %v6079, 0.0
      %vm6374 = vcmp.ge.f32.partialorder %v6080, 0.0
      %vm6375 = vcmp.ge.f32.partialorder %v6081, 0.0
      %vm6376 = vcmp.ge.f32.partialorder %v6082, 0.0
      %vm6377 = vcmp.ge.f32.partialorder %v6083, 0.0
      %vm6378 = vcmp.ge.f32.partialorder %v6084, 0.0
      %vm6379 = vcmp.ge.f32.partialorder %v6085, 0.0
      %vm6380 = vcmp.ge.f32.partialorder %v6086, 0.0
      %vm6381 = vcmp.ge.f32.partialorder %v6087, 0.0
      %vm6382 = vcmp.ge.f32.partialorder %v6088, 0.0
      %vm6383 = vcmp.ge.f32.partialorder %v6089, 0.0
      %vm6384 = vcmp.ge.f32.partialorder %v6090, 0.0
      %vm6385 = vcmp.ge.f32.partialorder %v6091, 0.0
      %vm6386 = vcmp.ge.f32.partialorder %v6092, 0.0
      %vm6387 = vcmp.ge.f32.partialorder %v6093, 0.0
      %vm6388 = vcmp.ge.f32.partialorder %v6094, 0.0
      %vm6389 = vcmp.ge.f32.partialorder %v6095, 0.0
      %vm6390 = vcmp.ge.f32.partialorder %v6096, 0.0
      %vm6391 = vcmp.ge.f32.partialorder %v6097, 0.0
      %vm6392 = vcmp.ge.f32.partialorder %v6098, 0.0
      %vm6393 = vcmp.ge.f32.partialorder %v6099, 0.0
      %vm6394 = vcmp.ge.f32.partialorder %v6100, 0.0
      %vm6395 = vcmp.ge.f32.partialorder %v6101, 0.0
      %vm6396 = vcmp.ge.f32.partialorder %v6102, 0.0
      %v6397 = vmul.f32 %v6071, 0.2
      %v6398 = vmul.f32 %v6072, 0.2
      %v6399 = vmul.f32 %v6073, 0.2
      %v6400 = vmul.f32 %v6074, 0.2
      %v6401 = vmul.f32 %v6075, 0.2
      %v6402 = vmul.f32 %v6076, 0.2
      %v6403 = vmul.f32 %v6077, 0.2
      %v6404 = vmul.f32 %v6078, 0.2
      %v6405 = vmul.f32 %v6079, 0.2
      %v6406 = vmul.f32 %v6080, 0.2
      %v6407 = vmul.f32 %v6081, 0.2
      %v6408 = vmul.f32 %v6082, 0.2
      %v6409 = vmul.f32 %v6083, 0.2
      %v6410 = vmul.f32 %v6084, 0.2
      %v6411 = vmul.f32 %v6085, 0.2
      %v6412 = vmul.f32 %v6086, 0.2
      %v6413 = vmul.f32 %v6087, 0.2
      %v6414 = vmul.f32 %v6088, 0.2
      %v6415 = vmul.f32 %v6089, 0.2
      %v6416 = vmul.f32 %v6090, 0.2
      %v6417 = vmul.f32 %v6091, 0.2
      %v6418 = vmul.f32 %v6092, 0.2
      %v6419 = vmul.f32 %v6093, 0.2
      %v6420 = vmul.f32 %v6094, 0.2
      %v6421 = vmul.f32 %v6095, 0.2
      %v6422 = vmul.f32 %v6096, 0.2
      %v6423 = vmul.f32 %v6097, 0.2
      %v6424 = vmul.f32 %v6098, 0.2
      %v6425 = vmul.f32 %v6099, 0.2
      %v6426 = vmul.f32 %v6100, 0.2
      %v6427 = vmul.f32 %v6101, 0.2
      %v6428 = vmul.f32 %v6102, 0.2
      %v6429 = vsel %vm6365, %v6071, %v6397
      %v6430 = vsel %vm6366, %v6072, %v6398
      %v6431 = vsel %vm6367, %v6073, %v6399
      %v6432 = vsel %vm6368, %v6074, %v6400
      %v6433 = vsel %vm6369, %v6075, %v6401
      %v6434 = vsel %vm6370, %v6076, %v6402
      %v6435 = vsel %vm6371, %v6077, %v6403
      %v6436 = vsel %vm6372, %v6078, %v6404
      %v6437 = vsel %vm6373, %v6079, %v6405
      %v6438 = vsel %vm6374, %v6080, %v6406
      %v6439 = vsel %vm6375, %v6081, %v6407
      %v6440 = vsel %vm6376, %v6082, %v6408
      %v6441 = vsel %vm6377, %v6083, %v6409
      %v6442 = vsel %vm6378, %v6084, %v6410
      %v6443 = vsel %vm6379, %v6085, %v6411
      %v6444 = vsel %vm6380, %v6086, %v6412
      %v6445 = vsel %vm6381, %v6087, %v6413
      %v6446 = vsel %vm6382, %v6088, %v6414
      %v6447 = vsel %vm6383, %v6089, %v6415
      %v6448 = vsel %vm6384, %v6090, %v6416
      %v6449 = vsel %vm6385, %v6091, %v6417
      %v6450 = vsel %vm6386, %v6092, %v6418
      %v6451 = vsel %vm6387, %v6093, %v6419
      %v6452 = vsel %vm6388, %v6094, %v6420
      %v6453 = vsel %vm6389, %v6095, %v6421
      %v6454 = vsel %vm6390, %v6096, %v6422
      %v6455 = vsel %vm6391, %v6097, %v6423
      %v6456 = vsel %vm6392, %v6098, %v6424
      %v6457 = vsel %vm6393, %v6099, %v6425
      %v6458 = vsel %vm6394, %v6100, %v6426
      %v6459 = vsel %vm6395, %v6101, %v6427
      %v6460 = vsel %vm6396, %v6102, %v6428
      %s6461 = scalar_lea.vmem [#allocation3], 24
      %6462 = vst.msk [vmem:[%s6461 + $0x1] sm:$0xff] %vm362, %v6429
      %6463 = vst.msk [vmem:[%s6461 + $0x9] sm:$0xff] %vm362, %v6430
      %6464 = vst.msk [vmem:[%s6461 + $0x19] sm:$0xff] %vm362, %v6431
      %6465 = vst.msk [vmem:[%s6461 + $0x21] sm:$0xff] %vm362, %v6432
      %6466 = vst.msk [vmem:[%s6461 + $0x31] sm:$0xff] %vm362, %v6433
      %6467 = vst.msk [vmem:[%s6461 + $0x39] sm:$0xff] %vm362, %v6434
      %6468 = vst.msk [vmem:[%s6461 + $0x49] sm:$0xff] %vm362, %v6435
      %6469 = vst.msk [vmem:[%s6461 + $0x51] sm:$0xff] %vm362, %v6436
      %6470 = vst.msk [vmem:[%s6461 + $0x61] sm:$0xff] %vm362, %v6437
      %6471 = vst.msk [vmem:[%s6461 + $0x69] sm:$0xff] %vm362, %v6438
      %6472 = vst.msk [vmem:[%s6461 + $0x79] sm:$0xff] %vm362, %v6439
      %6473 = vst.msk [vmem:[%s6461 + $0x81] sm:$0xff] %vm362, %v6440
      %6474 = vst.msk [vmem:[%s6461 + $0x91] sm:$0xff] %vm362, %v6441
      %6475 = vst.msk [vmem:[%s6461 + $0x99] sm:$0xff] %vm362, %v6442
      %6476 = vst.msk [vmem:[%s6461 + $0xa9] sm:$0xff] %vm362, %v6443
      %6477 = vst.msk [vmem:[%s6461 + $0xb1] sm:$0xff] %vm362, %v6444
      %6478 = vst.msk [vmem:[%s6461 + $0xc1] sm:$0xff] %vm362, %v6445
      %6479 = vst.msk [vmem:[%s6461 + $0xc9] sm:$0xff] %vm362, %v6446
      %6480 = vst.msk [vmem:[%s6461 + $0xd9] sm:$0xff] %vm362, %v6447
      %6481 = vst.msk [vmem:[%s6461 + $0xe1] sm:$0xff] %vm362, %v6448
      %6482 = vst.msk [vmem:[%s6461 + $0xf1] sm:$0xff] %vm362, %v6449
      %6483 = vst.msk [vmem:[%s6461 + $0xf9] sm:$0xff] %vm362, %v6450
      %6484 = vst.msk [vmem:[%s6461 + $0x109] sm:$0xff] %vm362, %v6451
      %6485 = vst.msk [vmem:[%s6461 + $0x111] sm:$0xff] %vm362, %v6452
      %6486 = vst.msk [vmem:[%s6461 + $0x121] sm:$0xff] %vm362, %v6453
      %6487 = vst.msk [vmem:[%s6461 + $0x129] sm:$0xff] %vm362, %v6454
      %6488 = vst.msk [vmem:[%s6461 + $0x139] sm:$0xff] %vm362, %v6455
      %6489 = vst.msk [vmem:[%s6461 + $0x141] sm:$0xff] %vm362, %v6456
      %6490 = vst.msk [vmem:[%s6461 + $0x151] sm:$0xff] %vm362, %v6457
      %6491 = vst.msk [vmem:[%s6461 + $0x159] sm:$0xff] %vm362, %v6458
      %6492 = vst.msk [vmem:[%s6461 + $0x169] sm:$0xff] %vm362, %v6459
      %6493 = vst.msk [vmem:[%s6461 + $0x171] sm:$0xff] %vm362, %v6460
      %v6494 = vld [vmem:[#allocation3] sm:$0xff]
      %v6495 = vld [vmem:[#allocation3 + $0x8] sm:$0xff]
      %v6496 = vld [vmem:[#allocation3 + $0x18] sm:$0xff]
      %v6497 = vld [vmem:[#allocation3 + $0x20] sm:$0xff]
      %v6498 = vld [vmem:[#allocation3 + $0x30] sm:$0xff]
      %v6499 = vld [vmem:[#allocation3 + $0x38] sm:$0xff]
      %v6500 = vld [vmem:[#allocation3 + $0x48] sm:$0xff]
      %v6501 = vld [vmem:[#allocation3 + $0x50] sm:$0xff]
      %v6502 = vld [vmem:[#allocation3 + $0x60] sm:$0xff]
      %v6503 = vld [vmem:[#allocation3 + $0x68] sm:$0xff]
      %v6504 = vld [vmem:[#allocation3 + $0x78] sm:$0xff]
      %v6505 = vld [vmem:[#allocation3 + $0x80] sm:$0xff]
      %v6506 = vld [vmem:[#allocation3 + $0x90] sm:$0xff]
      %v6507 = vld [vmem:[#allocation3 + $0x98] sm:$0xff]
      %v6508 = vld [vmem:[#allocation3 + $0xa8] sm:$0xff]
      %v6509 = vld [vmem:[#allocation3 + $0xb0] sm:$0xff]
      %v6510 = vld [vmem:[#allocation3 + $0xc0] sm:$0xff]
      %v6511 = vld [vmem:[#allocation3 + $0xc8] sm:$0xff]
      %v6512 = vld [vmem:[#allocation3 + $0xd8] sm:$0xff]
      %v6513 = vld [vmem:[#allocation3 + $0xe0] sm:$0xff]
      %v6514 = vld [vmem:[#allocation3 + $0xf0] sm:$0xff]
      %v6515 = vld [vmem:[#allocation3 + $0xf8] sm:$0xff]
      %v6516 = vld [vmem:[#allocation3 + $0x108] sm:$0xff]
      %v6517 = vld [vmem:[#allocation3 + $0x110] sm:$0xff]
      %v6518 = vld [vmem:[#allocation3 + $0x120] sm:$0xff]
      %v6519 = vld [vmem:[#allocation3 + $0x128] sm:$0xff]
      %v6520 = vld [vmem:[#allocation3 + $0x138] sm:$0xff]
      %v6521 = vld [vmem:[#allocation3 + $0x140] sm:$0xff]
      %v6522 = vld [vmem:[#allocation3 + $0x150] sm:$0xff]
      %v6523 = vld [vmem:[#allocation3 + $0x158] sm:$0xff]
      %v6524 = vld [vmem:[#allocation3 + $0x168] sm:$0xff]
      %v6525 = vld [vmem:[#allocation3 + $0x170] sm:$0xff]
      %v6526 = vld [vmem:[#allocation3 + $0x1] sm:$0xff]
      %v6527 = vld [vmem:[#allocation3 + $0x9] sm:$0xff]
      %v6528 = vld [vmem:[#allocation3 + $0x19] sm:$0xff]
      %v6529 = vld [vmem:[#allocation3 + $0x21] sm:$0xff]
      %v6530 = vld [vmem:[#allocation3 + $0x31] sm:$0xff]
      %v6531 = vld [vmem:[#allocation3 + $0x39] sm:$0xff]
      %v6532 = vld [vmem:[#allocation3 + $0x49] sm:$0xff]
      %v6533 = vld [vmem:[#allocation3 + $0x51] sm:$0xff]
      %v6534 = vld [vmem:[#allocation3 + $0x61] sm:$0xff]
      %v6535 = vld [vmem:[#allocation3 + $0x69] sm:$0xff]
      %v6536 = vld [vmem:[#allocation3 + $0x79] sm:$0xff]
      %v6537 = vld [vmem:[#allocation3 + $0x81] sm:$0xff]
      %v6538 = vld [vmem:[#allocation3 + $0x91] sm:$0xff]
      %v6539 = vld [vmem:[#allocation3 + $0x99] sm:$0xff]
      %v6540 = vld [vmem:[#allocation3 + $0xa9] sm:$0xff]
      %v6541 = vld [vmem:[#allocation3 + $0xb1] sm:$0xff]
      %v6542 = vld [vmem:[#allocation3 + $0xc1] sm:$0xff]
      %v6543 = vld [vmem:[#allocation3 + $0xc9] sm:$0xff]
      %v6544 = vld [vmem:[#allocation3 + $0xd9] sm:$0xff]
      %v6545 = vld [vmem:[#allocation3 + $0xe1] sm:$0xff]
      %v6546 = vld [vmem:[#allocation3 + $0xf1] sm:$0xff]
      %v6547 = vld [vmem:[#allocation3 + $0xf9] sm:$0xff]
      %v6548 = vld [vmem:[#allocation3 + $0x109] sm:$0xff]
      %v6549 = vld [vmem:[#allocation3 + $0x111] sm:$0xff]
      %v6550 = vld [vmem:[#allocation3 + $0x121] sm:$0xff]
      %v6551 = vld [vmem:[#allocation3 + $0x129] sm:$0xff]
      %v6552 = vld [vmem:[#allocation3 + $0x139] sm:$0xff]
      %v6553 = vld [vmem:[#allocation3 + $0x141] sm:$0xff]
      %v6554 = vld [vmem:[#allocation3 + $0x151] sm:$0xff]
      %v6555 = vld [vmem:[#allocation3 + $0x159] sm:$0xff]
      %v6556 = vld [vmem:[#allocation3 + $0x169] sm:$0xff]
      %v6557 = vld [vmem:[#allocation3 + $0x171] sm:$0xff]
      %v6558 = vld [vmem:[#allocation3 + $0x2] sm:$0xff]
      %v6559 = vld [vmem:[#allocation3 + $0xa] sm:$0xff]
      %v6560 = vld [vmem:[#allocation3 + $0x1a] sm:$0xff]
      %v6561 = vld [vmem:[#allocation3 + $0x22] sm:$0xff]
      %v6562 = vld [vmem:[#allocation3 + $0x32] sm:$0xff]
      %v6563 = vld [vmem:[#allocation3 + $0x3a] sm:$0xff]
      %v6564 = vld [vmem:[#allocation3 + $0x4a] sm:$0xff]
      %v6565 = vld [vmem:[#allocation3 + $0x52] sm:$0xff]
      %v6566 = vld [vmem:[#allocation3 + $0x62] sm:$0xff]
      %v6567 = vld [vmem:[#allocation3 + $0x6a] sm:$0xff]
      %v6568 = vld [vmem:[#allocation3 + $0x7a] sm:$0xff]
      %v6569 = vld [vmem:[#allocation3 + $0x82] sm:$0xff]
      %v6570 = vld [vmem:[#allocation3 + $0x92] sm:$0xff]
      %v6571 = vld [vmem:[#allocation3 + $0x9a] sm:$0xff]
      %v6572 = vld [vmem:[#allocation3 + $0xaa] sm:$0xff]
      %v6573 = vld [vmem:[#allocation3 + $0xb2] sm:$0xff]
      %v6574 = vld [vmem:[#allocation3 + $0xc2] sm:$0xff]
      %v6575 = vld [vmem:[#allocation3 + $0xca] sm:$0xff]
      %v6576 = vld [vmem:[#allocation3 + $0xda] sm:$0xff]
      %v6577 = vld [vmem:[#allocation3 + $0xe2] sm:$0xff]
      %v6578 = vld [vmem:[#allocation3 + $0xf2] sm:$0xff]
      %v6579 = vld [vmem:[#allocation3 + $0xfa] sm:$0xff]
      %v6580 = vld [vmem:[#allocation3 + $0x10a] sm:$0xff]
      %v6581 = vld [vmem:[#allocation3 + $0x112] sm:$0xff]
      %v6582 = vld [vmem:[#allocation3 + $0x122] sm:$0xff]
      %v6583 = vld [vmem:[#allocation3 + $0x12a] sm:$0xff]
      %v6584 = vld [vmem:[#allocation3 + $0x13a] sm:$0xff]
      %v6585 = vld [vmem:[#allocation3 + $0x142] sm:$0xff]
      %v6586 = vld [vmem:[#allocation3 + $0x152] sm:$0xff]
      %v6587 = vld [vmem:[#allocation3 + $0x15a] sm:$0xff]
      %v6588 = vld [vmem:[#allocation3 + $0x16a] sm:$0xff]
      %v6589 = vld [vmem:[#allocation3 + $0x172] sm:$0xff]
      %v6590 = vld [vmem:[%s6461] sm:$0xff]
      %v6591 = vld [vmem:[%s6461 + $0x8] sm:$0xff]
      %v6592 = vld [vmem:[%s6461 + $0x18] sm:$0xff]
      %v6593 = vld [vmem:[%s6461 + $0x20] sm:$0xff]
      %v6594 = vld [vmem:[%s6461 + $0x30] sm:$0xff]
      %v6595 = vld [vmem:[%s6461 + $0x38] sm:$0xff]
      %v6596 = vld [vmem:[%s6461 + $0x48] sm:$0xff]
      %v6597 = vld [vmem:[%s6461 + $0x50] sm:$0xff]
      %v6598 = vld [vmem:[%s6461 + $0x60] sm:$0xff]
      %v6599 = vld [vmem:[%s6461 + $0x68] sm:$0xff]
      %v6600 = vld [vmem:[%s6461 + $0x78] sm:$0xff]
      %v6601 = vld [vmem:[%s6461 + $0x80] sm:$0xff]
      %v6602 = vld [vmem:[%s6461 + $0x90] sm:$0xff]
      %v6603 = vld [vmem:[%s6461 + $0x98] sm:$0xff]
      %v6604 = vld [vmem:[%s6461 + $0xa8] sm:$0xff]
      %v6605 = vld [vmem:[%s6461 + $0xb0] sm:$0xff]
      %v6606 = vld [vmem:[%s6461 + $0xc0] sm:$0xff]
      %v6607 = vld [vmem:[%s6461 + $0xc8] sm:$0xff]
      %v6608 = vld [vmem:[%s6461 + $0xd8] sm:$0xff]
      %v6609 = vld [vmem:[%s6461 + $0xe0] sm:$0xff]
      %v6610 = vld [vmem:[%s6461 + $0xf0] sm:$0xff]
      %v6611 = vld [vmem:[%s6461 + $0xf8] sm:$0xff]
      %v6612 = vld [vmem:[%s6461 + $0x108] sm:$0xff]
      %v6613 = vld [vmem:[%s6461 + $0x110] sm:$0xff]
      %v6614 = vld [vmem:[%s6461 + $0x120] sm:$0xff]
      %v6615 = vld [vmem:[%s6461 + $0x128] sm:$0xff]
      %v6616 = vld [vmem:[%s6461 + $0x138] sm:$0xff]
      %v6617 = vld [vmem:[%s6461 + $0x140] sm:$0xff]
      %v6618 = vld [vmem:[%s6461 + $0x150] sm:$0xff]
      %v6619 = vld [vmem:[%s6461 + $0x158] sm:$0xff]
      %v6620 = vld [vmem:[%s6461 + $0x168] sm:$0xff]
      %v6621 = vld [vmem:[%s6461 + $0x170] sm:$0xff]
      %v6622 = vld [vmem:[%s6461 + $0x1] sm:$0xff]
      %v6623 = vld [vmem:[%s6461 + $0x9] sm:$0xff]
      %v6624 = vld [vmem:[%s6461 + $0x19] sm:$0xff]
      %v6625 = vld [vmem:[%s6461 + $0x21] sm:$0xff]
      %v6626 = vld [vmem:[%s6461 + $0x31] sm:$0xff]
      %v6627 = vld [vmem:[%s6461 + $0x39] sm:$0xff]
      %v6628 = vld [vmem:[%s6461 + $0x49] sm:$0xff]
      %v6629 = vld [vmem:[%s6461 + $0x51] sm:$0xff]
      %v6630 = vld [vmem:[%s6461 + $0x61] sm:$0xff]
      %v6631 = vld [vmem:[%s6461 + $0x69] sm:$0xff]
      %v6632 = vld [vmem:[%s6461 + $0x79] sm:$0xff]
      %v6633 = vld [vmem:[%s6461 + $0x81] sm:$0xff]
      %v6634 = vld [vmem:[%s6461 + $0x91] sm:$0xff]
      %v6635 = vld [vmem:[%s6461 + $0x99] sm:$0xff]
      %v6636 = vld [vmem:[%s6461 + $0xa9] sm:$0xff]
      %v6637 = vld [vmem:[%s6461 + $0xb1] sm:$0xff]
      %v6638 = vld [vmem:[%s6461 + $0xc1] sm:$0xff]
      %v6639 = vld [vmem:[%s6461 + $0xc9] sm:$0xff]
      %v6640 = vld [vmem:[%s6461 + $0xd9] sm:$0xff]
      %v6641 = vld [vmem:[%s6461 + $0xe1] sm:$0xff]
      %v6642 = vld [vmem:[%s6461 + $0xf1] sm:$0xff]
      %v6643 = vld [vmem:[%s6461 + $0xf9] sm:$0xff]
      %v6644 = vld [vmem:[%s6461 + $0x109] sm:$0xff]
      %v6645 = vld [vmem:[%s6461 + $0x111] sm:$0xff]
      %v6646 = vld [vmem:[%s6461 + $0x121] sm:$0xff]
      %v6647 = vld [vmem:[%s6461 + $0x129] sm:$0xff]
      %v6648 = vld [vmem:[%s6461 + $0x139] sm:$0xff]
      %v6649 = vld [vmem:[%s6461 + $0x141] sm:$0xff]
      %v6650 = vld [vmem:[%s6461 + $0x151] sm:$0xff]
      %v6651 = vld [vmem:[%s6461 + $0x159] sm:$0xff]
      %v6652 = vld [vmem:[%s6461 + $0x169] sm:$0xff]
      %v6653 = vld [vmem:[%s6461 + $0x171] sm:$0xff]
      %v6654 = vld [vmem:[%s6461 + $0x2] sm:$0xff]
      %v6655 = vld [vmem:[%s6461 + $0xa] sm:$0xff]
      %v6656 = vld [vmem:[%s6461 + $0x1a] sm:$0xff]
      %v6657 = vld [vmem:[%s6461 + $0x22] sm:$0xff]
      %v6658 = vld [vmem:[%s6461 + $0x32] sm:$0xff]
      %v6659 = vld [vmem:[%s6461 + $0x3a] sm:$0xff]
      %v6660 = vld [vmem:[%s6461 + $0x4a] sm:$0xff]
      %v6661 = vld [vmem:[%s6461 + $0x52] sm:$0xff]
      %v6662 = vld [vmem:[%s6461 + $0x62] sm:$0xff]
      %v6663 = vld [vmem:[%s6461 + $0x6a] sm:$0xff]
      %v6664 = vld [vmem:[%s6461 + $0x7a] sm:$0xff]
      %v6665 = vld [vmem:[%s6461 + $0x82] sm:$0xff]
      %v6666 = vld [vmem:[%s6461 + $0x92] sm:$0xff]
      %v6667 = vld [vmem:[%s6461 + $0x9a] sm:$0xff]
      %v6668 = vld [vmem:[%s6461 + $0xaa] sm:$0xff]
      %v6669 = vld [vmem:[%s6461 + $0xb2] sm:$0xff]
      %v6670 = vld [vmem:[%s6461 + $0xc2] sm:$0xff]
      %v6671 = vld [vmem:[%s6461 + $0xca] sm:$0xff]
      %v6672 = vld [vmem:[%s6461 + $0xda] sm:$0xff]
      %v6673 = vld [vmem:[%s6461 + $0xe2] sm:$0xff]
      %v6674 = vld [vmem:[%s6461 + $0xf2] sm:$0xff]
      %v6675 = vld [vmem:[%s6461 + $0xfa] sm:$0xff]
      %v6676 = vld [vmem:[%s6461 + $0x10a] sm:$0xff]
      %v6677 = vld [vmem:[%s6461 + $0x112] sm:$0xff]
      %v6678 = vld [vmem:[%s6461 + $0x122] sm:$0xff]
      %v6679 = vld [vmem:[%s6461 + $0x12a] sm:$0xff]
      %v6680 = vld [vmem:[%s6461 + $0x13a] sm:$0xff]
      %v6681 = vld [vmem:[%s6461 + $0x142] sm:$0xff]
      %v6682 = vld [vmem:[%s6461 + $0x152] sm:$0xff]
      %v6683 = vld [vmem:[%s6461 + $0x15a] sm:$0xff]
      %v6684 = vld [vmem:[%s6461 + $0x16a] sm:$0xff]
      %v6685 = vld [vmem:[%s6461 + $0x172] sm:$0xff]
      %s6686 = scalar_lea.vmem [#allocation3], 48
      %v6687 = vld [vmem:[%s6686] sm:$0xff]
      %v6688 = vld [vmem:[%s6686 + $0x8] sm:$0xff]
      %v6689 = vld [vmem:[%s6686 + $0x18] sm:$0xff]
      %v6690 = vld [vmem:[%s6686 + $0x20] sm:$0xff]
      %v6691 = vld [vmem:[%s6686 + $0x30] sm:$0xff]
      %v6692 = vld [vmem:[%s6686 + $0x38] sm:$0xff]
      %v6693 = vld [vmem:[%s6686 + $0x48] sm:$0xff]
      %v6694 = vld [vmem:[%s6686 + $0x50] sm:$0xff]
      %v6695 = vld [vmem:[%s6686 + $0x60] sm:$0xff]
      %v6696 = vld [vmem:[%s6686 + $0x68] sm:$0xff]
      %v6697 = vld [vmem:[%s6686 + $0x78] sm:$0xff]
      %v6698 = vld [vmem:[%s6686 + $0x80] sm:$0xff]
      %v6699 = vld [vmem:[%s6686 + $0x90] sm:$0xff]
      %v6700 = vld [vmem:[%s6686 + $0x98] sm:$0xff]
      %v6701 = vld [vmem:[%s6686 + $0xa8] sm:$0xff]
      %v6702 = vld [vmem:[%s6686 + $0xb0] sm:$0xff]
      %v6703 = vld [vmem:[%s6686 + $0xc0] sm:$0xff]
      %v6704 = vld [vmem:[%s6686 + $0xc8] sm:$0xff]
      %v6705 = vld [vmem:[%s6686 + $0xd8] sm:$0xff]
      %v6706 = vld [vmem:[%s6686 + $0xe0] sm:$0xff]
      %v6707 = vld [vmem:[%s6686 + $0xf0] sm:$0xff]
      %v6708 = vld [vmem:[%s6686 + $0xf8] sm:$0xff]
      %v6709 = vld [vmem:[%s6686 + $0x108] sm:$0xff]
      %v6710 = vld [vmem:[%s6686 + $0x110] sm:$0xff]
      %v6711 = vld [vmem:[%s6686 + $0x120] sm:$0xff]
      %v6712 = vld [vmem:[%s6686 + $0x128] sm:$0xff]
      %v6713 = vld [vmem:[%s6686 + $0x138] sm:$0xff]
      %v6714 = vld [vmem:[%s6686 + $0x140] sm:$0xff]
      %v6715 = vld [vmem:[%s6686 + $0x150] sm:$0xff]
      %v6716 = vld [vmem:[%s6686 + $0x158] sm:$0xff]
      %v6717 = vld [vmem:[%s6686 + $0x168] sm:$0xff]
      %v6718 = vld [vmem:[%s6686 + $0x170] sm:$0xff]
      %v6719 = vld [vmem:[%s6686 + $0x1] sm:$0xff]
      %v6720 = vld [vmem:[%s6686 + $0x9] sm:$0xff]
      %v6721 = vld [vmem:[%s6686 + $0x19] sm:$0xff]
      %v6722 = vld [vmem:[%s6686 + $0x21] sm:$0xff]
      %v6723 = vld [vmem:[%s6686 + $0x31] sm:$0xff]
      %v6724 = vld [vmem:[%s6686 + $0x39] sm:$0xff]
      %v6725 = vld [vmem:[%s6686 + $0x49] sm:$0xff]
      %v6726 = vld [vmem:[%s6686 + $0x51] sm:$0xff]
      %v6727 = vld [vmem:[%s6686 + $0x61] sm:$0xff]
      %v6728 = vld [vmem:[%s6686 + $0x69] sm:$0xff]
      %v6729 = vld [vmem:[%s6686 + $0x79] sm:$0xff]
      %v6730 = vld [vmem:[%s6686 + $0x81] sm:$0xff]
      %v6731 = vld [vmem:[%s6686 + $0x91] sm:$0xff]
      %v6732 = vld [vmem:[%s6686 + $0x99] sm:$0xff]
      %v6733 = vld [vmem:[%s6686 + $0xa9] sm:$0xff]
      %v6734 = vld [vmem:[%s6686 + $0xb1] sm:$0xff]
      %v6735 = vld [vmem:[%s6686 + $0xc1] sm:$0xff]
      %v6736 = vld [vmem:[%s6686 + $0xc9] sm:$0xff]
      %v6737 = vld [vmem:[%s6686 + $0xd9] sm:$0xff]
      %v6738 = vld [vmem:[%s6686 + $0xe1] sm:$0xff]
      %v6739 = vld [vmem:[%s6686 + $0xf1] sm:$0xff]
      %v6740 = vld [vmem:[%s6686 + $0xf9] sm:$0xff]
      %v6741 = vld [vmem:[%s6686 + $0x109] sm:$0xff]
      %v6742 = vld [vmem:[%s6686 + $0x111] sm:$0xff]
      %v6743 = vld [vmem:[%s6686 + $0x121] sm:$0xff]
      %v6744 = vld [vmem:[%s6686 + $0x129] sm:$0xff]
      %v6745 = vld [vmem:[%s6686 + $0x139] sm:$0xff]
      %v6746 = vld [vmem:[%s6686 + $0x141] sm:$0xff]
      %v6747 = vld [vmem:[%s6686 + $0x151] sm:$0xff]
      %v6748 = vld [vmem:[%s6686 + $0x159] sm:$0xff]
      %v6749 = vld [vmem:[%s6686 + $0x169] sm:$0xff]
      %v6750 = vld [vmem:[%s6686 + $0x171] sm:$0xff]
      %v6751 = vld [vmem:[%s6686 + $0x2] sm:$0xff]
      %v6752 = vld [vmem:[%s6686 + $0xa] sm:$0xff]
      %v6753 = vld [vmem:[%s6686 + $0x1a] sm:$0xff]
      %v6754 = vld [vmem:[%s6686 + $0x22] sm:$0xff]
      %v6755 = vld [vmem:[%s6686 + $0x32] sm:$0xff]
      %v6756 = vld [vmem:[%s6686 + $0x3a] sm:$0xff]
      %v6757 = vld [vmem:[%s6686 + $0x4a] sm:$0xff]
      %v6758 = vld [vmem:[%s6686 + $0x52] sm:$0xff]
      %v6759 = vld [vmem:[%s6686 + $0x62] sm:$0xff]
      %v6760 = vld [vmem:[%s6686 + $0x6a] sm:$0xff]
      %v6761 = vld [vmem:[%s6686 + $0x7a] sm:$0xff]
      %v6762 = vld [vmem:[%s6686 + $0x82] sm:$0xff]
      %v6763 = vld [vmem:[%s6686 + $0x92] sm:$0xff]
      %v6764 = vld [vmem:[%s6686 + $0x9a] sm:$0xff]
      %v6765 = vld [vmem:[%s6686 + $0xaa] sm:$0xff]
      %v6766 = vld [vmem:[%s6686 + $0xb2] sm:$0xff]
      %v6767 = vld [vmem:[%s6686 + $0xc2] sm:$0xff]
      %v6768 = vld [vmem:[%s6686 + $0xca] sm:$0xff]
      %v6769 = vld [vmem:[%s6686 + $0xda] sm:$0xff]
      %v6770 = vld [vmem:[%s6686 + $0xe2] sm:$0xff]
      %v6771 = vld [vmem:[%s6686 + $0xf2] sm:$0xff]
      %v6772 = vld [vmem:[%s6686 + $0xfa] sm:$0xff]
      %v6773 = vld [vmem:[%s6686 + $0x10a] sm:$0xff]
      %v6774 = vld [vmem:[%s6686 + $0x112] sm:$0xff]
      %v6775 = vld [vmem:[%s6686 + $0x122] sm:$0xff]
      %v6776 = vld [vmem:[%s6686 + $0x12a] sm:$0xff]
      %v6777 = vld [vmem:[%s6686 + $0x13a] sm:$0xff]
      %v6778 = vld [vmem:[%s6686 + $0x142] sm:$0xff]
      %v6779 = vld [vmem:[%s6686 + $0x152] sm:$0xff]
      %v6780 = vld [vmem:[%s6686 + $0x15a] sm:$0xff]
      %v6781 = vld [vmem:[%s6686 + $0x16a] sm:$0xff]
      %v6782 = vld [vmem:[%s6686 + $0x172] sm:$0xff]
      %6815 = vrot.lane.b32.xlu0 %v6526, 64
      %v6816 = vpop.permute.xlu0 %6815
      %6817 = vrot.lane.b32.xlu0 %v6527, 64
      %v6818 = vpop.permute.xlu0 %6817
      %6819 = vrot.lane.b32.xlu0 %v6528, 64
      %v6820 = vpop.permute.xlu0 %6819
      %6821 = vrot.lane.b32.xlu0 %v6529, 64
      %v6822 = vpop.permute.xlu0 %6821
      %6823 = vrot.lane.b32.xlu0 %v6530, 64
      %v6824 = vpop.permute.xlu0 %6823
      %6825 = vrot.lane.b32.xlu0 %v6531, 64
      %v6826 = vpop.permute.xlu0 %6825
      %6827 = vrot.lane.b32.xlu0 %v6532, 64
      %v6828 = vpop.permute.xlu0 %6827
      %6829 = vrot.lane.b32.xlu0 %v6533, 64
      %v6830 = vpop.permute.xlu0 %6829
      %6831 = vrot.lane.b32.xlu0 %v6534, 64
      %v6832 = vpop.permute.xlu0 %6831
      %6833 = vrot.lane.b32.xlu0 %v6535, 64
      %v6834 = vpop.permute.xlu0 %6833
      %6835 = vrot.lane.b32.xlu0 %v6536, 64
      %v6836 = vpop.permute.xlu0 %6835
      %6837 = vrot.lane.b32.xlu0 %v6537, 64
      %v6838 = vpop.permute.xlu0 %6837
      %6839 = vrot.lane.b32.xlu0 %v6538, 64
      %v6840 = vpop.permute.xlu0 %6839
      %6841 = vrot.lane.b32.xlu0 %v6539, 64
      %v6842 = vpop.permute.xlu0 %6841
      %6843 = vrot.lane.b32.xlu0 %v6540, 64
      %v6844 = vpop.permute.xlu0 %6843
      %6845 = vrot.lane.b32.xlu0 %v6541, 64
      %v6846 = vpop.permute.xlu0 %6845
      %6847 = vrot.lane.b32.xlu0 %v6542, 64
      %v6848 = vpop.permute.xlu0 %6847
      %6849 = vrot.lane.b32.xlu0 %v6543, 64
      %v6850 = vpop.permute.xlu0 %6849
      %6851 = vrot.lane.b32.xlu0 %v6544, 64
      %v6852 = vpop.permute.xlu0 %6851
      %6853 = vrot.lane.b32.xlu0 %v6545, 64
      %v6854 = vpop.permute.xlu0 %6853
      %6855 = vrot.lane.b32.xlu0 %v6546, 64
      %v6856 = vpop.permute.xlu0 %6855
      %6857 = vrot.lane.b32.xlu0 %v6547, 64
      %v6858 = vpop.permute.xlu0 %6857
      %6859 = vrot.lane.b32.xlu0 %v6548, 64
      %v6860 = vpop.permute.xlu0 %6859
      %6861 = vrot.lane.b32.xlu0 %v6549, 64
      %v6862 = vpop.permute.xlu0 %6861
      %6863 = vrot.lane.b32.xlu0 %v6550, 64
      %v6864 = vpop.permute.xlu0 %6863
      %6865 = vrot.lane.b32.xlu0 %v6551, 64
      %v6866 = vpop.permute.xlu0 %6865
      %6867 = vrot.lane.b32.xlu0 %v6552, 64
      %v6868 = vpop.permute.xlu0 %6867
      %6869 = vrot.lane.b32.xlu0 %v6553, 64
      %v6870 = vpop.permute.xlu0 %6869
      %6871 = vrot.lane.b32.xlu0 %v6554, 64
      %v6872 = vpop.permute.xlu0 %6871
      %6873 = vrot.lane.b32.xlu0 %v6555, 64
      %v6874 = vpop.permute.xlu0 %6873
      %6875 = vrot.lane.b32.xlu0 %v6556, 64
      %v6876 = vpop.permute.xlu0 %6875
      %6877 = vrot.lane.b32.xlu0 %v6557, 64
      %v6878 = vpop.permute.xlu0 %6877
      %6943 = vrot.lane.b32.xlu0 %v6590, 64
      %v6944 = vpop.permute.xlu0 %6943
      %6945 = vrot.lane.b32.xlu0 %v6591, 64
      %v6946 = vpop.permute.xlu0 %6945
      %6947 = vrot.lane.b32.xlu0 %v6592, 64
      %v6948 = vpop.permute.xlu0 %6947
      %6949 = vrot.lane.b32.xlu0 %v6593, 64
      %v6950 = vpop.permute.xlu0 %6949
      %6951 = vrot.lane.b32.xlu0 %v6594, 64
      %v6952 = vpop.permute.xlu0 %6951
      %6953 = vrot.lane.b32.xlu0 %v6595, 64
      %v6954 = vpop.permute.xlu0 %6953
      %6955 = vrot.lane.b32.xlu0 %v6596, 64
      %v6956 = vpop.permute.xlu0 %6955
      %6957 = vrot.lane.b32.xlu0 %v6597, 64
      %v6958 = vpop.permute.xlu0 %6957
      %6959 = vrot.lane.b32.xlu0 %v6598, 64
      %v6960 = vpop.permute.xlu0 %6959
      %6961 = vrot.lane.b32.xlu0 %v6599, 64
      %v6962 = vpop.permute.xlu0 %6961
      %6963 = vrot.lane.b32.xlu0 %v6600, 64
      %v6964 = vpop.permute.xlu0 %6963
      %6965 = vrot.lane.b32.xlu0 %v6601, 64
      %v6966 = vpop.permute.xlu0 %6965
      %6967 = vrot.lane.b32.xlu0 %v6602, 64
      %v6968 = vpop.permute.xlu0 %6967
      %6969 = vrot.lane.b32.xlu0 %v6603, 64
      %v6970 = vpop.permute.xlu0 %6969
      %6971 = vrot.lane.b32.xlu0 %v6604, 64
      %v6972 = vpop.permute.xlu0 %6971
      %6973 = vrot.lane.b32.xlu0 %v6605, 64
      %v6974 = vpop.permute.xlu0 %6973
      %6975 = vrot.lane.b32.xlu0 %v6606, 64
      %v6976 = vpop.permute.xlu0 %6975
      %6977 = vrot.lane.b32.xlu0 %v6607, 64
      %v6978 = vpop.permute.xlu0 %6977
      %6979 = vrot.lane.b32.xlu0 %v6608, 64
      %v6980 = vpop.permute.xlu0 %6979
      %6981 = vrot.lane.b32.xlu0 %v6609, 64
      %v6982 = vpop.permute.xlu0 %6981
      %6983 = vrot.lane.b32.xlu0 %v6610, 64
      %v6984 = vpop.permute.xlu0 %6983
      %6985 = vrot.lane.b32.xlu0 %v6611, 64
      %v6986 = vpop.permute.xlu0 %6985
      %6987 = vrot.lane.b32.xlu0 %v6612, 64
      %v6988 = vpop.permute.xlu0 %6987
      %6989 = vrot.lane.b32.xlu0 %v6613, 64
      %v6990 = vpop.permute.xlu0 %6989
      %6991 = vrot.lane.b32.xlu0 %v6614, 64
      %v6992 = vpop.permute.xlu0 %6991
      %6993 = vrot.lane.b32.xlu0 %v6615, 64
      %v6994 = vpop.permute.xlu0 %6993
      %6995 = vrot.lane.b32.xlu0 %v6616, 64
      %v6996 = vpop.permute.xlu0 %6995
      %6997 = vrot.lane.b32.xlu0 %v6617, 64
      %v6998 = vpop.permute.xlu0 %6997
      %6999 = vrot.lane.b32.xlu0 %v6618, 64
      %v7000 = vpop.permute.xlu0 %6999
      %7001 = vrot.lane.b32.xlu0 %v6619, 64
      %v7002 = vpop.permute.xlu0 %7001
      %7003 = vrot.lane.b32.xlu0 %v6620, 64
      %v7004 = vpop.permute.xlu0 %7003
      %7005 = vrot.lane.b32.xlu0 %v6621, 64
      %v7006 = vpop.permute.xlu0 %7005
      %7071 = vrot.lane.b32.xlu0 %v6654, 64
      %v7072 = vpop.permute.xlu0 %7071
      %7073 = vrot.lane.b32.xlu0 %v6655, 64
      %v7074 = vpop.permute.xlu0 %7073
      %7075 = vrot.lane.b32.xlu0 %v6656, 64
      %v7076 = vpop.permute.xlu0 %7075
      %7077 = vrot.lane.b32.xlu0 %v6657, 64
      %v7078 = vpop.permute.xlu0 %7077
      %7079 = vrot.lane.b32.xlu0 %v6658, 64
      %v7080 = vpop.permute.xlu0 %7079
      %7081 = vrot.lane.b32.xlu0 %v6659, 64
      %v7082 = vpop.permute.xlu0 %7081
      %7083 = vrot.lane.b32.xlu0 %v6660, 64
      %v7084 = vpop.permute.xlu0 %7083
      %7085 = vrot.lane.b32.xlu0 %v6661, 64
      %v7086 = vpop.permute.xlu0 %7085
      %7087 = vrot.lane.b32.xlu0 %v6662, 64
      %v7088 = vpop.permute.xlu0 %7087
      %7089 = vrot.lane.b32.xlu0 %v6663, 64
      %v7090 = vpop.permute.xlu0 %7089
      %7091 = vrot.lane.b32.xlu0 %v6664, 64
      %v7092 = vpop.permute.xlu0 %7091
      %7093 = vrot.lane.b32.xlu0 %v6665, 64
      %v7094 = vpop.permute.xlu0 %7093
      %7095 = vrot.lane.b32.xlu0 %v6666, 64
      %v7096 = vpop.permute.xlu0 %7095
      %7097 = vrot.lane.b32.xlu0 %v6667, 64
      %v7098 = vpop.permute.xlu0 %7097
      %7099 = vrot.lane.b32.xlu0 %v6668, 64
      %v7100 = vpop.permute.xlu0 %7099
      %7101 = vrot.lane.b32.xlu0 %v6669, 64
      %v7102 = vpop.permute.xlu0 %7101
      %7103 = vrot.lane.b32.xlu0 %v6670, 64
      %v7104 = vpop.permute.xlu0 %7103
      %7105 = vrot.lane.b32.xlu0 %v6671, 64
      %v7106 = vpop.permute.xlu0 %7105
      %7107 = vrot.lane.b32.xlu0 %v6672, 64
      %v7108 = vpop.permute.xlu0 %7107
      %7109 = vrot.lane.b32.xlu0 %v6673, 64
      %v7110 = vpop.permute.xlu0 %7109
      %7111 = vrot.lane.b32.xlu0 %v6674, 64
      %v7112 = vpop.permute.xlu0 %7111
      %7113 = vrot.lane.b32.xlu0 %v6675, 64
      %v7114 = vpop.permute.xlu0 %7113
      %7115 = vrot.lane.b32.xlu0 %v6676, 64
      %v7116 = vpop.permute.xlu0 %7115
      %7117 = vrot.lane.b32.xlu0 %v6677, 64
      %v7118 = vpop.permute.xlu0 %7117
      %7119 = vrot.lane.b32.xlu0 %v6678, 64
      %v7120 = vpop.permute.xlu0 %7119
      %7121 = vrot.lane.b32.xlu0 %v6679, 64
      %v7122 = vpop.permute.xlu0 %7121
      %7123 = vrot.lane.b32.xlu0 %v6680, 64
      %v7124 = vpop.permute.xlu0 %7123
      %7125 = vrot.lane.b32.xlu0 %v6681, 64
      %v7126 = vpop.permute.xlu0 %7125
      %7127 = vrot.lane.b32.xlu0 %v6682, 64
      %v7128 = vpop.permute.xlu0 %7127
      %7129 = vrot.lane.b32.xlu0 %v6683, 64
      %v7130 = vpop.permute.xlu0 %7129
      %7131 = vrot.lane.b32.xlu0 %v6684, 64
      %v7132 = vpop.permute.xlu0 %7131
      %7133 = vrot.lane.b32.xlu0 %v6685, 64
      %v7134 = vpop.permute.xlu0 %7133
      %7199 = vrot.lane.b32.xlu0 %v6719, 64
      %v7200 = vpop.permute.xlu0 %7199
      %7201 = vrot.lane.b32.xlu0 %v6720, 64
      %v7202 = vpop.permute.xlu0 %7201
      %7203 = vrot.lane.b32.xlu0 %v6721, 64
      %v7204 = vpop.permute.xlu0 %7203
      %7205 = vrot.lane.b32.xlu0 %v6722, 64
      %v7206 = vpop.permute.xlu0 %7205
      %7207 = vrot.lane.b32.xlu0 %v6723, 64
      %v7208 = vpop.permute.xlu0 %7207
      %7209 = vrot.lane.b32.xlu0 %v6724, 64
      %v7210 = vpop.permute.xlu0 %7209
      %7211 = vrot.lane.b32.xlu0 %v6725, 64
      %v7212 = vpop.permute.xlu0 %7211
      %7213 = vrot.lane.b32.xlu0 %v6726, 64
      %v7214 = vpop.permute.xlu0 %7213
      %7215 = vrot.lane.b32.xlu0 %v6727, 64
      %v7216 = vpop.permute.xlu0 %7215
      %7217 = vrot.lane.b32.xlu0 %v6728, 64
      %v7218 = vpop.permute.xlu0 %7217
      %7219 = vrot.lane.b32.xlu0 %v6729, 64
      %v7220 = vpop.permute.xlu0 %7219
      %7221 = vrot.lane.b32.xlu0 %v6730, 64
      %v7222 = vpop.permute.xlu0 %7221
      %7223 = vrot.lane.b32.xlu0 %v6731, 64
      %v7224 = vpop.permute.xlu0 %7223
      %7225 = vrot.lane.b32.xlu0 %v6732, 64
      %v7226 = vpop.permute.xlu0 %7225
      %7227 = vrot.lane.b32.xlu0 %v6733, 64
      %v7228 = vpop.permute.xlu0 %7227
      %7229 = vrot.lane.b32.xlu0 %v6734, 64
      %v7230 = vpop.permute.xlu0 %7229
      %7231 = vrot.lane.b32.xlu0 %v6735, 64
      %v7232 = vpop.permute.xlu0 %7231
      %7233 = vrot.lane.b32.xlu0 %v6736, 64
      %v7234 = vpop.permute.xlu0 %7233
      %7235 = vrot.lane.b32.xlu0 %v6737, 64
      %v7236 = vpop.permute.xlu0 %7235
      %7237 = vrot.lane.b32.xlu0 %v6738, 64
      %v7238 = vpop.permute.xlu0 %7237
      %7239 = vrot.lane.b32.xlu0 %v6739, 64
      %v7240 = vpop.permute.xlu0 %7239
      %7241 = vrot.lane.b32.xlu0 %v6740, 64
      %v7242 = vpop.permute.xlu0 %7241
      %7243 = vrot.lane.b32.xlu0 %v6741, 64
      %v7244 = vpop.permute.xlu0 %7243
      %7245 = vrot.lane.b32.xlu0 %v6742, 64
      %v7246 = vpop.permute.xlu0 %7245
      %7247 = vrot.lane.b32.xlu0 %v6743, 64
      %v7248 = vpop.permute.xlu0 %7247
      %7249 = vrot.lane.b32.xlu0 %v6744, 64
      %v7250 = vpop.permute.xlu0 %7249
      %7251 = vrot.lane.b32.xlu0 %v6745, 64
      %v7252 = vpop.permute.xlu0 %7251
      %7253 = vrot.lane.b32.xlu0 %v6746, 64
      %v7254 = vpop.permute.xlu0 %7253
      %7255 = vrot.lane.b32.xlu0 %v6747, 64
      %v7256 = vpop.permute.xlu0 %7255
      %7257 = vrot.lane.b32.xlu0 %v6748, 64
      %v7258 = vpop.permute.xlu0 %7257
      %7259 = vrot.lane.b32.xlu0 %v6749, 64
      %v7260 = vpop.permute.xlu0 %7259
      %7261 = vrot.lane.b32.xlu0 %v6750, 64
      %v7262 = vpop.permute.xlu0 %7261
      %v7295 = vsel %vm362, %v6494, %v6816
      %v7296 = vsel %vm362, %v6495, %v6818
      %v7297 = vsel %vm362, %v6496, %v6820
      %v7298 = vsel %vm362, %v6497, %v6822
      %v7299 = vsel %vm362, %v6498, %v6824
      %v7300 = vsel %vm362, %v6499, %v6826
      %v7301 = vsel %vm362, %v6500, %v6828
      %v7302 = vsel %vm362, %v6501, %v6830
      %v7303 = vsel %vm362, %v6502, %v6832
      %v7304 = vsel %vm362, %v6503, %v6834
      %v7305 = vsel %vm362, %v6504, %v6836
      %v7306 = vsel %vm362, %v6505, %v6838
      %v7307 = vsel %vm362, %v6506, %v6840
      %v7308 = vsel %vm362, %v6507, %v6842
      %v7309 = vsel %vm362, %v6508, %v6844
      %v7310 = vsel %vm362, %v6509, %v6846
      %v7311 = vsel %vm362, %v6510, %v6848
      %v7312 = vsel %vm362, %v6511, %v6850
      %v7313 = vsel %vm362, %v6512, %v6852
      %v7314 = vsel %vm362, %v6513, %v6854
      %v7315 = vsel %vm362, %v6514, %v6856
      %v7316 = vsel %vm362, %v6515, %v6858
      %v7317 = vsel %vm362, %v6516, %v6860
      %v7318 = vsel %vm362, %v6517, %v6862
      %v7319 = vsel %vm362, %v6518, %v6864
      %v7320 = vsel %vm362, %v6519, %v6866
      %v7321 = vsel %vm362, %v6520, %v6868
      %v7322 = vsel %vm362, %v6521, %v6870
      %v7323 = vsel %vm362, %v6522, %v6872
      %v7324 = vsel %vm362, %v6523, %v6874
      %v7325 = vsel %vm362, %v6524, %v6876
      %v7326 = vsel %vm362, %v6525, %v6878
      %v7327 = vsel %vm362, %v6558, %v6944
      %v7328 = vsel %vm362, %v6559, %v6946
      %v7329 = vsel %vm362, %v6560, %v6948
      %v7330 = vsel %vm362, %v6561, %v6950
      %v7331 = vsel %vm362, %v6562, %v6952
      %v7332 = vsel %vm362, %v6563, %v6954
      %v7333 = vsel %vm362, %v6564, %v6956
      %v7334 = vsel %vm362, %v6565, %v6958
      %v7335 = vsel %vm362, %v6566, %v6960
      %v7336 = vsel %vm362, %v6567, %v6962
      %v7337 = vsel %vm362, %v6568, %v6964
      %v7338 = vsel %vm362, %v6569, %v6966
      %v7339 = vsel %vm362, %v6570, %v6968
      %v7340 = vsel %vm362, %v6571, %v6970
      %v7341 = vsel %vm362, %v6572, %v6972
      %v7342 = vsel %vm362, %v6573, %v6974
      %v7343 = vsel %vm362, %v6574, %v6976
      %v7344 = vsel %vm362, %v6575, %v6978
      %v7345 = vsel %vm362, %v6576, %v6980
      %v7346 = vsel %vm362, %v6577, %v6982
      %v7347 = vsel %vm362, %v6578, %v6984
      %v7348 = vsel %vm362, %v6579, %v6986
      %v7349 = vsel %vm362, %v6580, %v6988
      %v7350 = vsel %vm362, %v6581, %v6990
      %v7351 = vsel %vm362, %v6582, %v6992
      %v7352 = vsel %vm362, %v6583, %v6994
      %v7353 = vsel %vm362, %v6584, %v6996
      %v7354 = vsel %vm362, %v6585, %v6998
      %v7355 = vsel %vm362, %v6586, %v7000
      %v7356 = vsel %vm362, %v6587, %v7002
      %v7357 = vsel %vm362, %v6588, %v7004
      %v7358 = vsel %vm362, %v6589, %v7006
      %v7359 = vsel %vm362, %v6622, %v7072
      %v7360 = vsel %vm362, %v6623, %v7074
      %v7361 = vsel %vm362, %v6624, %v7076
      %v7362 = vsel %vm362, %v6625, %v7078
      %v7363 = vsel %vm362, %v6626, %v7080
      %v7364 = vsel %vm362, %v6627, %v7082
      %v7365 = vsel %vm362, %v6628, %v7084
      %v7366 = vsel %vm362, %v6629, %v7086
      %v7367 = vsel %vm362, %v6630, %v7088
      %v7368 = vsel %vm362, %v6631, %v7090
      %v7369 = vsel %vm362, %v6632, %v7092
      %v7370 = vsel %vm362, %v6633, %v7094
      %v7371 = vsel %vm362, %v6634, %v7096
      %v7372 = vsel %vm362, %v6635, %v7098
      %v7373 = vsel %vm362, %v6636, %v7100
      %v7374 = vsel %vm362, %v6637, %v7102
      %v7375 = vsel %vm362, %v6638, %v7104
      %v7376 = vsel %vm362, %v6639, %v7106
      %v7377 = vsel %vm362, %v6640, %v7108
      %v7378 = vsel %vm362, %v6641, %v7110
      %v7379 = vsel %vm362, %v6642, %v7112
      %v7380 = vsel %vm362, %v6643, %v7114
      %v7381 = vsel %vm362, %v6644, %v7116
      %v7382 = vsel %vm362, %v6645, %v7118
      %v7383 = vsel %vm362, %v6646, %v7120
      %v7384 = vsel %vm362, %v6647, %v7122
      %v7385 = vsel %vm362, %v6648, %v7124
      %v7386 = vsel %vm362, %v6649, %v7126
      %v7387 = vsel %vm362, %v6650, %v7128
      %v7388 = vsel %vm362, %v6651, %v7130
      %v7389 = vsel %vm362, %v6652, %v7132
      %v7390 = vsel %vm362, %v6653, %v7134
      %v7391 = vsel %vm362, %v6687, %v7200
      %v7392 = vsel %vm362, %v6688, %v7202
      %v7393 = vsel %vm362, %v6689, %v7204
      %v7394 = vsel %vm362, %v6690, %v7206
      %v7395 = vsel %vm362, %v6691, %v7208
      %v7396 = vsel %vm362, %v6692, %v7210
      %v7397 = vsel %vm362, %v6693, %v7212
      %v7398 = vsel %vm362, %v6694, %v7214
      %v7399 = vsel %vm362, %v6695, %v7216
      %v7400 = vsel %vm362, %v6696, %v7218
      %v7401 = vsel %vm362, %v6697, %v7220
      %v7402 = vsel %vm362, %v6698, %v7222
      %v7403 = vsel %vm362, %v6699, %v7224
      %v7404 = vsel %vm362, %v6700, %v7226
      %v7405 = vsel %vm362, %v6701, %v7228
      %v7406 = vsel %vm362, %v6702, %v7230
      %v7407 = vsel %vm362, %v6703, %v7232
      %v7408 = vsel %vm362, %v6704, %v7234
      %v7409 = vsel %vm362, %v6705, %v7236
      %v7410 = vsel %vm362, %v6706, %v7238
      %v7411 = vsel %vm362, %v6707, %v7240
      %v7412 = vsel %vm362, %v6708, %v7242
      %v7413 = vsel %vm362, %v6709, %v7244
      %v7414 = vsel %vm362, %v6710, %v7246
      %v7415 = vsel %vm362, %v6711, %v7248
      %v7416 = vsel %vm362, %v6712, %v7250
      %v7417 = vsel %vm362, %v6713, %v7252
      %v7418 = vsel %vm362, %v6714, %v7254
      %v7419 = vsel %vm362, %v6715, %v7256
      %v7420 = vsel %vm362, %v6716, %v7258
      %v7421 = vsel %vm362, %v6717, %v7260
      %v7422 = vsel %vm362, %v6718, %v7262
      %v7423 = vld [vmem:[%s3] sm:$0xff]
      %v7424 = vld [vmem:[%s3 + $0x8] sm:$0xff]
      %v7425 = vld [vmem:[%s3 + $0x10] sm:$0xff]
      %v7426 = vld [vmem:[%s3 + $0x18] sm:$0xff]
      %v7427 = vld [vmem:[%s3 + $0x20] sm:$0xff]
      %v7428 = vld [vmem:[%s3 + $0x28] sm:$0xff]
      %v7429 = vld [vmem:[%s3 + $0x30] sm:$0xff]
      %v7430 = vld [vmem:[%s3 + $0x38] sm:$0xff]
      %v7431 = vld [vmem:[%s3 + $0x40] sm:$0xff]
      %v7432 = vld [vmem:[%s3 + $0x48] sm:$0xff]
      %v7433 = vld [vmem:[%s3 + $0x50] sm:$0xff]
      %v7434 = vld [vmem:[%s3 + $0x58] sm:$0xff]
      %v7435 = vld [vmem:[%s3 + $0x60] sm:$0xff]
      %v7436 = vld [vmem:[%s3 + $0x68] sm:$0xff]
      %v7437 = vld [vmem:[%s3 + $0x70] sm:$0xff]
      %v7438 = vld [vmem:[%s3 + $0x78] sm:$0xff]
      %v7439 = vld [vmem:[%s3 + $0x80] sm:$0xff]
      %v7440 = vld [vmem:[%s3 + $0x88] sm:$0xff]
      %v7441 = vld [vmem:[%s3 + $0x90] sm:$0xff]
      %v7442 = vld [vmem:[%s3 + $0x98] sm:$0xff]
      %v7443 = vld [vmem:[%s3 + $0xa0] sm:$0xff]
      %v7444 = vld [vmem:[%s3 + $0xa8] sm:$0xff]
      %v7445 = vld [vmem:[%s3 + $0xb0] sm:$0xff]
      %v7446 = vld [vmem:[%s3 + $0xb8] sm:$0xff]
      %v7447 = vld [vmem:[%s3 + $0xc0] sm:$0xff]
      %v7448 = vld [vmem:[%s3 + $0xc8] sm:$0xff]
      %v7449 = vld [vmem:[%s3 + $0xd0] sm:$0xff]
      %v7450 = vld [vmem:[%s3 + $0xd8] sm:$0xff]
      %v7451 = vld [vmem:[%s3 + $0xe0] sm:$0xff]
      %v7452 = vld [vmem:[%s3 + $0xe8] sm:$0xff]
      %v7453 = vld [vmem:[%s3 + $0xf0] sm:$0xff]
      %v7454 = vld [vmem:[%s3 + $0xf8] sm:$0xff]
      %v7455 = vld [vmem:[%s3 + $0x100] sm:$0xff]
      %v7456 = vld [vmem:[%s3 + $0x108] sm:$0xff]
      %v7457 = vld [vmem:[%s3 + $0x110] sm:$0xff]
      %v7458 = vld [vmem:[%s3 + $0x118] sm:$0xff]
      %v7459 = vld [vmem:[%s3 + $0x120] sm:$0xff]
      %v7460 = vld [vmem:[%s3 + $0x128] sm:$0xff]
      %v7461 = vld [vmem:[%s3 + $0x130] sm:$0xff]
      %v7462 = vld [vmem:[%s3 + $0x138] sm:$0xff]
      %v7463 = vld [vmem:[%s3 + $0x140] sm:$0xff]
      %v7464 = vld [vmem:[%s3 + $0x148] sm:$0xff]
      %v7465 = vld [vmem:[%s3 + $0x150] sm:$0xff]
      %v7466 = vld [vmem:[%s3 + $0x158] sm:$0xff]
      %v7467 = vld [vmem:[%s3 + $0x160] sm:$0xff]
      %v7468 = vld [vmem:[%s3 + $0x168] sm:$0xff]
      %v7469 = vld [vmem:[%s3 + $0x170] sm:$0xff]
      %v7470 = vld [vmem:[%s3 + $0x178] sm:$0xff]
      %v7471 = vld [vmem:[%s3 + $0x180] sm:$0xff]
      %v7472 = vld [vmem:[%s3 + $0x188] sm:$0xff]
      %v7473 = vld [vmem:[%s3 + $0x190] sm:$0xff]
      %v7474 = vld [vmem:[%s3 + $0x198] sm:$0xff]
      %v7475 = vld [vmem:[%s3 + $0x1a0] sm:$0xff]
      %v7476 = vld [vmem:[%s3 + $0x1a8] sm:$0xff]
      %v7477 = vld [vmem:[%s3 + $0x1b0] sm:$0xff]
      %v7478 = vld [vmem:[%s3 + $0x1b8] sm:$0xff]
      %v7479 = vld [vmem:[%s3 + $0x1c0] sm:$0xff]
      %v7480 = vld [vmem:[%s3 + $0x1c8] sm:$0xff]
      %v7481 = vld [vmem:[%s3 + $0x1d0] sm:$0xff]
      %v7482 = vld [vmem:[%s3 + $0x1d8] sm:$0xff]
      %v7483 = vld [vmem:[%s3 + $0x1e0] sm:$0xff]
      %v7484 = vld [vmem:[%s3 + $0x1e8] sm:$0xff]
      %v7485 = vld [vmem:[%s3 + $0x1f0] sm:$0xff]
      %v7486 = vld [vmem:[%s3 + $0x1f8] sm:$0xff]
      %v7487 = vld [vmem:[%s3 + $0x200] sm:$0xff]
      %v7488 = vld [vmem:[%s3 + $0x208] sm:$0xff]
      %v7489 = vld [vmem:[%s3 + $0x210] sm:$0xff]
      %v7490 = vld [vmem:[%s3 + $0x218] sm:$0xff]
      %v7491 = vld [vmem:[%s3 + $0x220] sm:$0xff]
      %v7492 = vld [vmem:[%s3 + $0x228] sm:$0xff]
      %v7493 = vld [vmem:[%s3 + $0x230] sm:$0xff]
      %v7494 = vld [vmem:[%s3 + $0x238] sm:$0xff]
      %v7495 = vld [vmem:[%s4] sm:$0x1]
      %v7497 = vlaneseq
      %v7498 = vshrl.u32 %v7497, 7
      %v7499 = vsub.s32 0, %v7498
      %v7500 = vrot.slane %v7495, %v7499
      %v7503 = vsel %vm362, %v6751, 0
      %v7506 = vsel %vm362, %v6752, 0
      %v7509 = vsel %vm362, %v6753, 0
      %v7512 = vsel %vm362, %v6754, 0
      %v7515 = vsel %vm362, %v6755, 0
      %v7518 = vsel %vm362, %v6756, 0
      %v7521 = vsel %vm362, %v6757, 0
      %v7524 = vsel %vm362, %v6758, 0
      %v7527 = vsel %vm362, %v6759, 0
      %v7530 = vsel %vm362, %v6760, 0
      %v7533 = vsel %vm362, %v6761, 0
      %v7536 = vsel %vm362, %v6762, 0
      %v7539 = vsel %vm362, %v6763, 0
      %v7542 = vsel %vm362, %v6764, 0
      %v7545 = vsel %vm362, %v6765, 0
      %v7548 = vsel %vm362, %v6766, 0
      %v7551 = vsel %vm362, %v6767, 0
      %v7554 = vsel %vm362, %v6768, 0
      %v7557 = vsel %vm362, %v6769, 0
      %v7560 = vsel %vm362, %v6770, 0
      %v7563 = vsel %vm362, %v6771, 0
      %v7566 = vsel %vm362, %v6772, 0
      %v7569 = vsel %vm362, %v6773, 0
      %v7572 = vsel %vm362, %v6774, 0
      %v7575 = vsel %vm362, %v6775, 0
      %v7578 = vsel %vm362, %v6776, 0
      %v7581 = vsel %vm362, %v6777, 0
      %v7584 = vsel %vm362, %v6778, 0
      %v7587 = vsel %vm362, %v6779, 0
      %v7590 = vsel %vm362, %v6780, 0
      %v7593 = vsel %vm362, %v6781, 0
      %v7596 = vsel %vm362, %v6782, 0
      %7598 = vmatprep.subr.mxu0 0.0
      %7599 = vmatpush1.msra.mxu0 %v7423
      %7600 = vmatprep.subr.mxu0 0.0
      %7601 = vmatpush1.msra.mxu0 %v7424
      %7602 = vmatprep.subr.mxu0 0.0
      %7603 = vmatpush1.msra.mxu0 %v7425
      %7604 = vmatprep.subr.mxu0 0.0
      %7605 = vmatpush1.msra.mxu0 %v7426
      %7606 = vmatprep.subr.mxu0 0.0
      %7607 = vmatpush1.msra.mxu0 %v7427
      %7608 = vmatprep.subr.mxu0 0.0
      %7609 = vmatpush1.msra.mxu0 %v7428
      %7610 = vmatprep.subr.mxu0 0.0
      %7611 = vmatpush1.msra.mxu0 %v7429
      %7612 = vmatprep.subr.mxu0 0.0
      %7613 = vmatpush1.msra.mxu0 %v7430
      %7614 = vmatprep.subr.mxu0 0.0
      %7615 = vmatpush1.msra.mxu0 %v7431
      %7616 = vmatprep.subr.mxu0 0.0
      %7617 = vmatpush1.msra.mxu0 %v7432
      %7618 = vmatprep.subr.mxu0 0.0
      %7619 = vmatpush1.msra.mxu0 %v7433
      %7620 = vmatprep.subr.mxu0 0.0
      %7621 = vmatpush1.msra.mxu0 %v7434
      %7622 = vmatprep.subr.mxu0 0.0
      %7623 = vmatpush1.msra.mxu0 %v7435
      %7624 = vmatprep.subr.mxu0 0.0
      %7625 = vmatpush1.msra.mxu0 %v7436
      %7626 = vmatprep.subr.mxu0 0.0
      %7627 = vmatpush1.msra.mxu0 %v7437
      %7628 = vmatprep.subr.mxu0 0.0
      %7629 = vmatpush1.msra.mxu0 %v7438
      %7630 = vmatprep.subr.mxu0 0.0
      %7631 = vmatpush1.msra.mxu0 %v7439
      %7632 = vmatprep.subr.mxu0 0.0
      %7633 = vmatpush1.msra.mxu0 %v7440
      %7634 = vmatprep.subr.mxu0 0.0
      %7635 = vmatpush1.msra.mxu0 %v7441
      %7636 = vmatprep.subr.mxu0 0.0
      %7637 = vmatpush1.msra.mxu0 %v7442
      %7638 = vmatprep.subr.mxu0 0.0
      %7639 = vmatpush1.msra.mxu0 %v7443
      %7640 = vmatprep.subr.mxu0 0.0
      %7641 = vmatpush1.msra.mxu0 %v7444
      %7642 = vmatprep.subr.mxu0 0.0
      %7643 = vmatpush1.msra.mxu0 %v7445
      %7644 = vmatprep.subr.mxu0 0.0
      %7645 = vmatpush1.msra.mxu0 %v7446
      %7646 = vmatprep.subr.mxu0 0.0
      %7647 = vmatpush1.msra.mxu0 %v7447
      %7648 = vmatprep.subr.mxu0 0.0
      %7649 = vmatpush1.msra.mxu0 %v7448
      %7650 = vmatprep.subr.mxu0 0.0
      %7651 = vmatpush1.msra.mxu0 %v7449
      %7652 = vmatprep.subr.mxu0 0.0
      %7653 = vmatpush1.msra.mxu0 %v7450
      %7654 = vmatprep.subr.mxu0 0.0
      %7655 = vmatpush1.msra.mxu0 %v7451
      %7656 = vmatprep.subr.mxu0 0.0
      %7657 = vmatpush1.msra.mxu0 %v7452
      %7658 = vmatprep.subr.mxu0 0.0
      %7659 = vmatpush1.msra.mxu0 %v7453
      %7660 = vmatprep.subr.mxu0 0.0
      %7661 = vmatpush1.msra.mxu0 %v7454
      %7662 = vmatprep.mubr.f32.mxu0 %v7327
      %7663 = vmatmul.mubr.f32.gmra.mrb[0].mxu0 %v7295
      %v7664 = vpop.f32.mrb[0].mxu0
      %v7665 = vadd.f32 %v7500, %v7664
      %v7666 = vpop.f32.mrb[0].mxu0
      %7667 = vmatprep.mubr.f32.mxu0 %v7328
      %7668 = vmatmul.mubr.f32.gmra.mrb[0].mxu0 %v7296
      %v7669 = vpop.f32.mrb[0].mxu0
      %v7670 = vadd.f32 %v7500, %v7669
      %v7671 = vpop.f32.mrb[0].mxu0
      %7672 = vmatprep.mubr.f32.mxu0 %v7329
      %7673 = vmatmul.mubr.f32.gmra.mrb[0].mxu0 %v7297
      %v7674 = vpop.f32.mrb[0].mxu0
      %v7675 = vadd.f32 %v7500, %v7674
      %v7676 = vpop.f32.mrb[0].mxu0
      %7677 = vmatprep.mubr.f32.mxu0 %v7330
      %7678 = vmatmul.mubr.f32.gmra.mrb[0].mxu0 %v7298
      %v7679 = vpop.f32.mrb[0].mxu0
      %v7680 = vadd.f32 %v7500, %v7679
      %v7681 = vpop.f32.mrb[0].mxu0
      %7682 = vmatprep.mubr.f32.mxu0 %v7331
      %7683 = vmatmul.mubr.f32.gmra.mrb[0].mxu0 %v7299
      %v7684 = vpop.f32.mrb[0].mxu0
      %v7685 = vadd.f32 %v7500, %v7684
      %v7686 = vpop.f32.mrb[0].mxu0
      %7687 = vmatprep.mubr.f32.mxu0 %v7332
      %7688 = vmatmul.mubr.f32.gmra.mrb[0].mxu0 %v7300
      %v7689 = vpop.f32.mrb[0].mxu0
      %v7690 = vadd.f32 %v7500, %v7689
      %v7691 = vpop.f32.mrb[0].mxu0
      %7692 = vmatprep.mubr.f32.mxu0 %v7333
      %7693 = vmatmul.mubr.f32.gmra.mrb[0].mxu0 %v7301
      %v7694 = vpop.f32.mrb[0].mxu0
      %v7695 = vadd.f32 %v7500, %v7694
      %v7696 = vpop.f32.mrb[0].mxu0
      %7697 = vmatprep.mubr.f32.mxu0 %v7334
      %7698 = vmatmul.mubr.f32.gmra.mrb[0].mxu0 %v7302
      %v7699 = vpop.f32.mrb[0].mxu0
      %v7700 = vadd.f32 %v7500, %v7699
      %v7701 = vpop.f32.mrb[0].mxu0
      %7702 = vmatprep.mubr.f32.mxu0 %v7335
      %7703 = vmatmul.mubr.f32.gmra.mrb[0].mxu0 %v7303
      %v7704 = vpop.f32.mrb[0].mxu0
      %v7705 = vadd.f32 %v7500, %v7704
      %v7706 = vpop.f32.mrb[0].mxu0
      %7707 = vmatprep.mubr.f32.mxu0 %v7336
      %7708 = vmatmul.mubr.f32.gmra.mrb[0].mxu0 %v7304
      %v7709 = vpop.f32.mrb[0].mxu0
      %v7710 = vadd.f32 %v7500, %v7709
      %v7711 = vpop.f32.mrb[0].mxu0
      %7712 = vmatprep.mubr.f32.mxu0 %v7337
      %7713 = vmatmul.mubr.f32.gmra.mrb[0].mxu0 %v7305
      %v7714 = vpop.f32.mrb[0].mxu0
      %v7715 = vadd.f32 %v7500, %v7714
      %v7716 = vpop.f32.mrb[0].mxu0
      %7717 = vmatprep.mubr.f32.mxu0 %v7338
      %7718 = vmatmul.mubr.f32.gmra.mrb[0].mxu0 %v7306
      %v7719 = vpop.f32.mrb[0].mxu0
      %v7720 = vadd.f32 %v7500, %v7719
      %v7721 = vpop.f32.mrb[0].mxu0
      %7722 = vmatprep.mubr.f32.mxu0 %v7339
      %7723 = vmatmul.mubr.f32.gmra.mrb[0].mxu0 %v7307
      %v7724 = vpop.f32.mrb[0].mxu0
      %v7725 = vadd.f32 %v7500, %v7724
      %v7726 = vpop.f32.mrb[0].mxu0
      %7727 = vmatprep.mubr.f32.mxu0 %v7340
      %7728 = vmatmul.mubr.f32.gmra.mrb[0].mxu0 %v7308
      %v7729 = vpop.f32.mrb[0].mxu0
      %v7730 = vadd.f32 %v7500, %v7729
      %v7731 = vpop.f32.mrb[0].mxu0
      %7732 = vmatprep.mubr.f32.mxu0 %v7341
      %7733 = vmatmul.mubr.f32.gmra.mrb[0].mxu0 %v7309
      %v7734 = vpop.f32.mrb[0].mxu0
      %v7735 = vadd.f32 %v7500, %v7734
      %v7736 = vpop.f32.mrb[0].mxu0
      %7737 = vmatprep.mubr.f32.mxu0 %v7342
      %7738 = vmatmul.mubr.f32.gmra.mrb[0].mxu0 %v7310
      %v7739 = vpop.f32.mrb[0].mxu0
      %v7740 = vadd.f32 %v7500, %v7739
      %v7741 = vpop.f32.mrb[0].mxu0
      %7742 = vmatprep.mubr.f32.mxu0 %v7343
      %7743 = vmatmul.mubr.f32.gmra.mrb[0].mxu0 %v7311
      %v7744 = vpop.f32.mrb[0].mxu0
      %v7745 = vadd.f32 %v7500, %v7744
      %v7746 = vpop.f32.mrb[0].mxu0
      %7747 = vmatprep.mubr.f32.mxu0 %v7344
      %7748 = vmatmul.mubr.f32.gmra.mrb[0].mxu0 %v7312
      %v7749 = vpop.f32.mrb[0].mxu0
      %v7750 = vadd.f32 %v7500, %v7749
      %v7751 = vpop.f32.mrb[0].mxu0
      %7752 = vmatprep.mubr.f32.mxu0 %v7345
      %7753 = vmatmul.mubr.f32.gmra.mrb[0].mxu0 %v7313
      %v7754 = vpop.f32.mrb[0].mxu0
      %v7755 = vadd.f32 %v7500, %v7754
      %v7756 = vpop.f32.mrb[0].mxu0
      %7757 = vmatprep.mubr.f32.mxu0 %v7346
      %7758 = vmatmul.mubr.f32.gmra.mrb[0].mxu0 %v7314
      %v7759 = vpop.f32.mrb[0].mxu0
      %v7760 = vadd.f32 %v7500, %v7759
      %v7761 = vpop.f32.mrb[0].mxu0
      %7762 = vmatprep.mubr.f32.mxu0 %v7347
      %7763 = vmatmul.mubr.f32.gmra.mrb[0].mxu0 %v7315
      %v7764 = vpop.f32.mrb[0].mxu0
      %v7765 = vadd.f32 %v7500, %v7764
      %v7766 = vpop.f32.mrb[0].mxu0
      %7767 = vmatprep.mubr.f32.mxu0 %v7348
      %7768 = vmatmul.mubr.f32.gmra.mrb[0].mxu0 %v7316
      %v7769 = vpop.f32.mrb[0].mxu0
      %v7770 = vadd.f32 %v7500, %v7769
      %v7771 = vpop.f32.mrb[0].mxu0
      %7772 = vmatprep.mubr.f32.mxu0 %v7349
      %7773 = vmatmul.mubr.f32.gmra.mrb[0].mxu0 %v7317
      %v7774 = vpop.f32.mrb[0].mxu0
      %v7775 = vadd.f32 %v7500, %v7774
      %v7776 = vpop.f32.mrb[0].mxu0
      %7777 = vmatprep.mubr.f32.mxu0 %v7350
      %7778 = vmatmul.mubr.f32.gmra.mrb[0].mxu0 %v7318
      %v7779 = vpop.f32.mrb[0].mxu0
      %v7780 = vadd.f32 %v7500, %v7779
      %v7781 = vpop.f32.mrb[0].mxu0
      %7782 = vmatprep.mubr.f32.mxu0 %v7351
      %7783 = vmatmul.mubr.f32.gmra.mrb[0].mxu0 %v7319
      %v7784 = vpop.f32.mrb[0].mxu0
      %v7785 = vadd.f32 %v7500, %v7784
      %v7786 = vpop.f32.mrb[0].mxu0
      %7787 = vmatprep.mubr.f32.mxu0 %v7352
      %7788 = vmatmul.mubr.f32.gmra.mrb[0].mxu0 %v7320
      %v7789 = vpop.f32.mrb[0].mxu0
      %v7790 = vadd.f32 %v7500, %v7789
      %v7791 = vpop.f32.mrb[0].mxu0
      %7792 = vmatprep.mubr.f32.mxu0 %v7353
      %7793 = vmatmul.mubr.f32.gmra.mrb[0].mxu0 %v7321
      %v7794 = vpop.f32.mrb[0].mxu0
      %v7795 = vadd.f32 %v7500, %v7794
      %v7796 = vpop.f32.mrb[0].mxu0
      %7797 = vmatprep.mubr.f32.mxu0 %v7354
      %7798 = vmatmul.mubr.f32.gmra.mrb[0].mxu0 %v7322
      %v7799 = vpop.f32.mrb[0].mxu0
      %v7800 = vadd.f32 %v7500, %v7799
      %v7801 = vpop.f32.mrb[0].mxu0
      %7802 = vmatprep.mubr.f32.mxu0 %v7355
      %7803 = vmatmul.mubr.f32.gmra.mrb[0].mxu0 %v7323
      %v7804 = vpop.f32.mrb[0].mxu0
      %v7805 = vadd.f32 %v7500, %v7804
      %v7806 = vpop.f32.mrb[0].mxu0
      %7807 = vmatprep.mubr.f32.mxu0 %v7356
      %7808 = vmatmul.mubr.f32.gmra.mrb[0].mxu0 %v7324
      %v7809 = vpop.f32.mrb[0].mxu0
      %v7810 = vadd.f32 %v7500, %v7809
      %v7811 = vpop.f32.mrb[0].mxu0
      %7812 = vmatprep.mubr.f32.mxu0 %v7357
      %7813 = vmatmul.mubr.f32.gmra.mrb[0].mxu0 %v7325
      %v7814 = vpop.f32.mrb[0].mxu0
      %v7815 = vadd.f32 %v7500, %v7814
      %v7816 = vpop.f32.mrb[0].mxu0
      %7817 = vmatprep.mubr.f32.mxu0 %v7358
      %7818 = vmatmul.mubr.f32.gmra.mrb[0].mxu0 %v7326
      %v7819 = vpop.f32.mrb[0].mxu0
      %v7820 = vadd.f32 %v7500, %v7819
      %v7821 = vpop.f32.mrb[0].mxu0
      %7822 = vdwg.mxu0
      %7823 = vmatprep.subr.mxu0 0.0
      %7824 = vmatpush1.msra.mxu0 %v7455
      %7825 = vmatprep.subr.mxu0 0.0
      %7826 = vmatpush1.msra.mxu0 %v7456
      %7827 = vmatprep.subr.mxu0 0.0
      %7828 = vmatpush1.msra.mxu0 %v7457
      %7829 = vmatprep.subr.mxu0 0.0
      %7830 = vmatpush1.msra.mxu0 %v7458
      %7831 = vmatprep.subr.mxu0 0.0
      %7832 = vmatpush1.msra.mxu0 %v7459
      %7833 = vmatprep.subr.mxu0 0.0
      %7834 = vmatpush1.msra.mxu0 %v7460
      %7835 = vmatprep.subr.mxu0 0.0
      %7836 = vmatpush1.msra.mxu0 %v7461
      %7837 = vmatprep.subr.mxu0 0.0
      %7838 = vmatpush1.msra.mxu0 %v7462
      %7839 = vmatprep.subr.mxu0 0.0
      %7840 = vmatpush1.msra.mxu0 %v7463
      %7841 = vmatprep.subr.mxu0 0.0
      %7842 = vmatpush1.msra.mxu0 %v7464
      %7843 = vmatprep.subr.mxu0 0.0
      %7844 = vmatpush1.msra.mxu0 %v7465
      %7845 = vmatprep.subr.mxu0 0.0
      %7846 = vmatpush1.msra.mxu0 %v7466
      %7847 = vmatprep.subr.mxu0 0.0
      %7848 = vmatpush1.msra.mxu0 %v7467
      %7849 = vmatprep.subr.mxu0 0.0
      %7850 = vmatpush1.msra.mxu0 %v7468
      %7851 = vmatprep.subr.mxu0 0.0
      %7852 = vmatpush1.msra.mxu0 %v7469
      %7853 = vmatprep.subr.mxu0 0.0
      %7854 = vmatpush1.msra.mxu0 %v7470
      %7855 = vmatprep.subr.mxu0 0.0
      %7856 = vmatpush1.msra.mxu0 %v7471
      %7857 = vmatprep.subr.mxu0 0.0
      %7858 = vmatpush1.msra.mxu0 %v7472
      %7859 = vmatprep.subr.mxu0 0.0
      %7860 = vmatpush1.msra.mxu0 %v7473
      %7861 = vmatprep.subr.mxu0 0.0
      %7862 = vmatpush1.msra.mxu0 %v7474
      %7863 = vmatprep.subr.mxu0 0.0
      %7864 = vmatpush1.msra.mxu0 %v7475
      %7865 = vmatprep.subr.mxu0 0.0
      %7866 = vmatpush1.msra.mxu0 %v7476
      %7867 = vmatprep.subr.mxu0 0.0
      %7868 = vmatpush1.msra.mxu0 %v7477
      %7869 = vmatprep.subr.mxu0 0.0
      %7870 = vmatpush1.msra.mxu0 %v7478
      %7871 = vmatprep.subr.mxu0 0.0
      %7872 = vmatpush1.msra.mxu0 %v7479
      %7873 = vmatprep.subr.mxu0 0.0
      %7874 = vmatpush1.msra.mxu0 %v7480
      %7875 = vmatprep.subr.mxu0 0.0
      %7876 = vmatpush1.msra.mxu0 %v7481
      %7877 = vmatprep.subr.mxu0 0.0
      %7878 = vmatpush1.msra.mxu0 %v7482
      %7879 = vmatprep.subr.mxu0 0.0
      %7880 = vmatpush1.msra.mxu0 %v7483
      %7881 = vmatprep.subr.mxu0 0.0
      %7882 = vmatpush1.msra.mxu0 %v7484
      %7883 = vmatprep.subr.mxu0 0.0
      %7884 = vmatpush1.msra.mxu0 %v7485
      %7885 = vmatprep.subr.mxu0 0.0
      %7886 = vmatpush1.msra.mxu0 %v7486
      %7887 = vmatprep.mubr.f32.mxu0 %v7391
      %7888 = vmatmul.mubr.f32.gmra.mrb[0].mxu0 %v7359
      %v7889 = vpop.f32.mrb[0].mxu0
      %v7890 = vadd.f32 %v7665, %v7889
      %v7891 = vpop.f32.mrb[0].mxu0
      %7892 = vmatprep.mubr.f32.mxu0 %v7392
      %7893 = vmatmul.mubr.f32.gmra.mrb[0].mxu0 %v7360
      %v7894 = vpop.f32.mrb[0].mxu0
      %v7895 = vadd.f32 %v7670, %v7894
      %v7896 = vpop.f32.mrb[0].mxu0
      %7897 = vmatprep.mubr.f32.mxu0 %v7393
      %7898 = vmatmul.mubr.f32.gmra.mrb[0].mxu0 %v7361
      %v7899 = vpop.f32.mrb[0].mxu0
      %v7900 = vadd.f32 %v7675, %v7899
      %v7901 = vpop.f32.mrb[0].mxu0
      %7902 = vmatprep.mubr.f32.mxu0 %v7394
      %7903 = vmatmul.mubr.f32.gmra.mrb[0].mxu0 %v7362
      %v7904 = vpop.f32.mrb[0].mxu0
      %v7905 = vadd.f32 %v7680, %v7904
      %v7906 = vpop.f32.mrb[0].mxu0
      %7907 = vmatprep.mubr.f32.mxu0 %v7395
      %7908 = vmatmul.mubr.f32.gmra.mrb[0].mxu0 %v7363
      %v7909 = vpop.f32.mrb[0].mxu0
      %v7910 = vadd.f32 %v7685, %v7909
      %v7911 = vpop.f32.mrb[0].mxu0
      %7912 = vmatprep.mubr.f32.mxu0 %v7396
      %7913 = vmatmul.mubr.f32.gmra.mrb[0].mxu0 %v7364
      %v7914 = vpop.f32.mrb[0].mxu0
      %v7915 = vadd.f32 %v7690, %v7914
      %v7916 = vpop.f32.mrb[0].mxu0
      %7917 = vmatprep.mubr.f32.mxu0 %v7397
      %7918 = vmatmul.mubr.f32.gmra.mrb[0].mxu0 %v7365
      %v7919 = vpop.f32.mrb[0].mxu0
      %v7920 = vadd.f32 %v7695, %v7919
      %v7921 = vpop.f32.mrb[0].mxu0
      %7922 = vmatprep.mubr.f32.mxu0 %v7398
      %7923 = vmatmul.mubr.f32.gmra.mrb[0].mxu0 %v7366
      %v7924 = vpop.f32.mrb[0].mxu0
      %v7925 = vadd.f32 %v7700, %v7924
      %v7926 = vpop.f32.mrb[0].mxu0
      %7927 = vmatprep.mubr.f32.mxu0 %v7399
      %7928 = vmatmul.mubr.f32.gmra.mrb[0].mxu0 %v7367
      %v7929 = vpop.f32.mrb[0].mxu0
      %v7930 = vadd.f32 %v7705, %v7929
      %v7931 = vpop.f32.mrb[0].mxu0
      %7932 = vmatprep.mubr.f32.mxu0 %v7400
      %7933 = vmatmul.mubr.f32.gmra.mrb[0].mxu0 %v7368
      %v7934 = vpop.f32.mrb[0].mxu0
      %v7935 = vadd.f32 %v7710, %v7934
      %v7936 = vpop.f32.mrb[0].mxu0
      %7937 = vmatprep.mubr.f32.mxu0 %v7401
      %7938 = vmatmul.mubr.f32.gmra.mrb[0].mxu0 %v7369
      %v7939 = vpop.f32.mrb[0].mxu0
      %v7940 = vadd.f32 %v7715, %v7939
      %v7941 = vpop.f32.mrb[0].mxu0
      %7942 = vmatprep.mubr.f32.mxu0 %v7402
      %7943 = vmatmul.mubr.f32.gmra.mrb[0].mxu0 %v7370
      %v7944 = vpop.f32.mrb[0].mxu0
      %v7945 = vadd.f32 %v7720, %v7944
      %v7946 = vpop.f32.mrb[0].mxu0
      %7947 = vmatprep.mubr.f32.mxu0 %v7403
      %7948 = vmatmul.mubr.f32.gmra.mrb[0].mxu0 %v7371
      %v7949 = vpop.f32.mrb[0].mxu0
      %v7950 = vadd.f32 %v7725, %v7949
      %v7951 = vpop.f32.mrb[0].mxu0
      %7952 = vmatprep.mubr.f32.mxu0 %v7404
      %7953 = vmatmul.mubr.f32.gmra.mrb[0].mxu0 %v7372
      %v7954 = vpop.f32.mrb[0].mxu0
      %v7955 = vadd.f32 %v7730, %v7954
      %v7956 = vpop.f32.mrb[0].mxu0
      %7957 = vmatprep.mubr.f32.mxu0 %v7405
      %7958 = vmatmul.mubr.f32.gmra.mrb[0].mxu0 %v7373
      %v7959 = vpop.f32.mrb[0].mxu0
      %v7960 = vadd.f32 %v7735, %v7959
      %v7961 = vpop.f32.mrb[0].mxu0
      %7962 = vmatprep.mubr.f32.mxu0 %v7406
      %7963 = vmatmul.mubr.f32.gmra.mrb[0].mxu0 %v7374
      %v7964 = vpop.f32.mrb[0].mxu0
      %v7965 = vadd.f32 %v7740, %v7964
      %v7966 = vpop.f32.mrb[0].mxu0
      %7967 = vmatprep.mubr.f32.mxu0 %v7407
      %7968 = vmatmul.mubr.f32.gmra.mrb[0].mxu0 %v7375
      %v7969 = vpop.f32.mrb[0].mxu0
      %v7970 = vadd.f32 %v7745, %v7969
      %v7971 = vpop.f32.mrb[0].mxu0
      %7972 = vmatprep.mubr.f32.mxu0 %v7408
      %7973 = vmatmul.mubr.f32.gmra.mrb[0].mxu0 %v7376
      %v7974 = vpop.f32.mrb[0].mxu0
      %v7975 = vadd.f32 %v7750, %v7974
      %v7976 = vpop.f32.mrb[0].mxu0
      %7977 = vmatprep.mubr.f32.mxu0 %v7409
      %7978 = vmatmul.mubr.f32.gmra.mrb[0].mxu0 %v7377
      %v7979 = vpop.f32.mrb[0].mxu0
      %v7980 = vadd.f32 %v7755, %v7979
      %v7981 = vpop.f32.mrb[0].mxu0
      %7982 = vmatprep.mubr.f32.mxu0 %v7410
      %7983 = vmatmul.mubr.f32.gmra.mrb[0].mxu0 %v7378
      %v7984 = vpop.f32.mrb[0].mxu0
      %v7985 = vadd.f32 %v7760, %v7984
      %v7986 = vpop.f32.mrb[0].mxu0
      %7987 = vmatprep.mubr.f32.mxu0 %v7411
      %7988 = vmatmul.mubr.f32.gmra.mrb[0].mxu0 %v7379
      %v7989 = vpop.f32.mrb[0].mxu0
      %v7990 = vadd.f32 %v7765, %v7989
      %v7991 = vpop.f32.mrb[0].mxu0
      %7992 = vmatprep.mubr.f32.mxu0 %v7412
      %7993 = vmatmul.mubr.f32.gmra.mrb[0].mxu0 %v7380
      %v7994 = vpop.f32.mrb[0].mxu0
      %v7995 = vadd.f32 %v7770, %v7994
      %v7996 = vpop.f32.mrb[0].mxu0
      %7997 = vmatprep.mubr.f32.mxu0 %v7413
      %7998 = vmatmul.mubr.f32.gmra.mrb[0].mxu0 %v7381
      %v7999 = vpop.f32.mrb[0].mxu0
      %v8000 = vadd.f32 %v7775, %v7999
      %v8001 = vpop.f32.mrb[0].mxu0
      %8002 = vmatprep.mubr.f32.mxu0 %v7414
      %8003 = vmatmul.mubr.f32.gmra.mrb[0].mxu0 %v7382
      %v8004 = vpop.f32.mrb[0].mxu0
      %v8005 = vadd.f32 %v7780, %v8004
      %v8006 = vpop.f32.mrb[0].mxu0
      %8007 = vmatprep.mubr.f32.mxu0 %v7415
      %8008 = vmatmul.mubr.f32.gmra.mrb[0].mxu0 %v7383
      %v8009 = vpop.f32.mrb[0].mxu0
      %v8010 = vadd.f32 %v7785, %v8009
      %v8011 = vpop.f32.mrb[0].mxu0
      %8012 = vmatprep.mubr.f32.mxu0 %v7416
      %8013 = vmatmul.mubr.f32.gmra.mrb[0].mxu0 %v7384
      %v8014 = vpop.f32.mrb[0].mxu0
      %v8015 = vadd.f32 %v7790, %v8014
      %v8016 = vpop.f32.mrb[0].mxu0
      %8017 = vmatprep.mubr.f32.mxu0 %v7417
      %8018 = vmatmul.mubr.f32.gmra.mrb[0].mxu0 %v7385
      %v8019 = vpop.f32.mrb[0].mxu0
      %v8020 = vadd.f32 %v7795, %v8019
      %v8021 = vpop.f32.mrb[0].mxu0
      %8022 = vmatprep.mubr.f32.mxu0 %v7418
      %8023 = vmatmul.mubr.f32.gmra.mrb[0].mxu0 %v7386
      %v8024 = vpop.f32.mrb[0].mxu0
      %v8025 = vadd.f32 %v7800, %v8024
      %v8026 = vpop.f32.mrb[0].mxu0
      %8027 = vmatprep.mubr.f32.mxu0 %v7419
      %8028 = vmatmul.mubr.f32.gmra.mrb[0].mxu0 %v7387
      %v8029 = vpop.f32.mrb[0].mxu0
      %v8030 = vadd.f32 %v7805, %v8029
      %v8031 = vpop.f32.mrb[0].mxu0
      %8032 = vmatprep.mubr.f32.mxu0 %v7420
      %8033 = vmatmul.mubr.f32.gmra.mrb[0].mxu0 %v7388
      %v8034 = vpop.f32.mrb[0].mxu0
      %v8035 = vadd.f32 %v7810, %v8034
      %v8036 = vpop.f32.mrb[0].mxu0
      %8037 = vmatprep.mubr.f32.mxu0 %v7421
      %8038 = vmatmul.mubr.f32.gmra.mrb[0].mxu0 %v7389
      %v8039 = vpop.f32.mrb[0].mxu0
      %v8040 = vadd.f32 %v7815, %v8039
      %v8041 = vpop.f32.mrb[0].mxu0
      %8042 = vmatprep.mubr.f32.mxu0 %v7422
      %8043 = vmatmul.mubr.f32.gmra.mrb[0].mxu0 %v7390
      %v8044 = vpop.f32.mrb[0].mxu0
      %v8045 = vadd.f32 %v7820, %v8044
      %v8046 = vpop.f32.mrb[0].mxu0
      %8047 = vdwg.mxu0
      %8048 = vmatprep.subr.mxu0 0.0
      %8049 = vmatpush1.msra.mxu0 %v7487
      %8050 = vmatprep.subr.mxu0 0.0
      %8051 = vmatpush1.msra.mxu0 %v7488
      %8052 = vmatprep.subr.mxu0 0.0
      %8053 = vmatpush1.msra.mxu0 %v7489
      %8054 = vmatprep.subr.mxu0 0.0
      %8055 = vmatpush1.msra.mxu0 %v7490
      %8056 = vmatprep.subr.mxu0 0.0
      %8057 = vmatpush1.msra.mxu0 %v7491
      %8058 = vmatprep.subr.mxu0 0.0
      %8059 = vmatpush1.msra.mxu0 %v7492
      %8060 = vmatprep.subr.mxu0 0.0
      %8061 = vmatpush1.msra.mxu0 %v7493
      %8062 = vmatprep.subr.mxu0 0.0
      %8063 = vmatpush1.msra.mxu0 %v7494
      %8064 = vmatprep.subr.mxu0 0.0
      %8065 = vmatpush1.msra.mxu0 0.0
      %8066 = vmatprep.subr.mxu0 0.0
      %8067 = vmatpush1.msra.mxu0 0.0
      %8068 = vmatprep.subr.mxu0 0.0
      %8069 = vmatpush1.msra.mxu0 0.0
      %8070 = vmatprep.subr.mxu0 0.0
      %8071 = vmatpush1.msra.mxu0 0.0
      %8072 = vmatprep.subr.mxu0 0.0
      %8073 = vmatpush1.msra.mxu0 0.0
      %8074 = vmatprep.subr.mxu0 0.0
      %8075 = vmatpush1.msra.mxu0 0.0
      %8076 = vmatprep.subr.mxu0 0.0
      %8077 = vmatpush1.msra.mxu0 0.0
      %8078 = vmatprep.subr.mxu0 0.0
      %8079 = vmatpush1.msra.mxu0 0.0
      %8080 = vmatprep.subr.mxu0 0.0
      %8081 = vmatpush1.msra.mxu0 0.0
      %8082 = vmatprep.subr.mxu0 0.0
      %8083 = vmatpush1.msra.mxu0 0.0
      %8084 = vmatprep.subr.mxu0 0.0
      %8085 = vmatpush1.msra.mxu0 0.0
      %8086 = vmatprep.subr.mxu0 0.0
      %8087 = vmatpush1.msra.mxu0 0.0
      %8088 = vmatprep.subr.mxu0 0.0
      %8089 = vmatpush1.msra.mxu0 0.0
      %8090 = vmatprep.subr.mxu0 0.0
      %8091 = vmatpush1.msra.mxu0 0.0
      %8092 = vmatprep.subr.mxu0 0.0
      %8093 = vmatpush1.msra.mxu0 0.0
      %8094 = vmatprep.subr.mxu0 0.0
      %8095 = vmatpush1.msra.mxu0 0.0
      %8096 = vmatprep.subr.mxu0 0.0
      %8097 = vmatpush1.msra.mxu0 0.0
      %8098 = vmatprep.subr.mxu0 0.0
      %8099 = vmatpush1.msra.mxu0 0.0
      %8100 = vmatprep.subr.mxu0 0.0
      %8101 = vmatpush1.msra.mxu0 0.0
      %8102 = vmatprep.subr.mxu0 0.0
      %8103 = vmatpush1.msra.mxu0 0.0
      %8104 = vmatprep.subr.mxu0 0.0
      %8105 = vmatpush1.msra.mxu0 0.0
      %8106 = vmatprep.subr.mxu0 0.0
      %8107 = vmatpush1.msra.mxu0 0.0
      %8108 = vmatprep.subr.mxu0 0.0
      %8109 = vmatpush1.msra.mxu0 0.0
      %8110 = vmatprep.subr.mxu0 0.0
      %8111 = vmatpush1.msra.mxu0 0.0
      %8112 = vmatprep.mubr.f32.mxu0 0.0
      %8113 = vmatmul.mubr.f32.gmra.mrb[0].mxu0 %v7503
      %v8114 = vpop.f32.mrb[0].mxu0
      %v8115 = vadd.f32 %v7890, %v8114
      %v8116 = vpop.f32.mrb[0].mxu0
      %8117 = vmatprep.mubr.f32.mxu0 0.0
      %8118 = vmatmul.mubr.f32.gmra.mrb[0].mxu0 %v7506
      %v8119 = vpop.f32.mrb[0].mxu0
      %v8120 = vadd.f32 %v7895, %v8119
      %v8121 = vpop.f32.mrb[0].mxu0
      %8122 = vmatprep.mubr.f32.mxu0 0.0
      %8123 = vmatmul.mubr.f32.gmra.mrb[0].mxu0 %v7509
      %v8124 = vpop.f32.mrb[0].mxu0
      %v8125 = vadd.f32 %v7900, %v8124
      %v8126 = vpop.f32.mrb[0].mxu0
      %8127 = vmatprep.mubr.f32.mxu0 0.0
      %8128 = vmatmul.mubr.f32.gmra.mrb[0].mxu0 %v7512
      %v8129 = vpop.f32.mrb[0].mxu0
      %v8130 = vadd.f32 %v7905, %v8129
      %v8131 = vpop.f32.mrb[0].mxu0
      %8132 = vmatprep.mubr.f32.mxu0 0.0
      %8133 = vmatmul.mubr.f32.gmra.mrb[0].mxu0 %v7515
      %v8134 = vpop.f32.mrb[0].mxu0
      %v8135 = vadd.f32 %v7910, %v8134
      %v8136 = vpop.f32.mrb[0].mxu0
      %8137 = vmatprep.mubr.f32.mxu0 0.0
      %8138 = vmatmul.mubr.f32.gmra.mrb[0].mxu0 %v7518
      %v8139 = vpop.f32.mrb[0].mxu0
      %v8140 = vadd.f32 %v7915, %v8139
      %v8141 = vpop.f32.mrb[0].mxu0
      %8142 = vmatprep.mubr.f32.mxu0 0.0
      %8143 = vmatmul.mubr.f32.gmra.mrb[0].mxu0 %v7521
      %v8144 = vpop.f32.mrb[0].mxu0
      %v8145 = vadd.f32 %v7920, %v8144
      %v8146 = vpop.f32.mrb[0].mxu0
      %8147 = vmatprep.mubr.f32.mxu0 0.0
      %8148 = vmatmul.mubr.f32.gmra.mrb[0].mxu0 %v7524
      %v8149 = vpop.f32.mrb[0].mxu0
      %v8150 = vadd.f32 %v7925, %v8149
      %v8151 = vpop.f32.mrb[0].mxu0
      %8152 = vmatprep.mubr.f32.mxu0 0.0
      %8153 = vmatmul.mubr.f32.gmra.mrb[0].mxu0 %v7527
      %v8154 = vpop.f32.mrb[0].mxu0
      %v8155 = vadd.f32 %v7930, %v8154
      %v8156 = vpop.f32.mrb[0].mxu0
      %8157 = vmatprep.mubr.f32.mxu0 0.0
      %8158 = vmatmul.mubr.f32.gmra.mrb[0].mxu0 %v7530
      %v8159 = vpop.f32.mrb[0].mxu0
      %v8160 = vadd.f32 %v7935, %v8159
      %v8161 = vpop.f32.mrb[0].mxu0
      %8162 = vmatprep.mubr.f32.mxu0 0.0
      %8163 = vmatmul.mubr.f32.gmra.mrb[0].mxu0 %v7533
      %v8164 = vpop.f32.mrb[0].mxu0
      %v8165 = vadd.f32 %v7940, %v8164
      %v8166 = vpop.f32.mrb[0].mxu0
      %8167 = vmatprep.mubr.f32.mxu0 0.0
      %8168 = vmatmul.mubr.f32.gmra.mrb[0].mxu0 %v7536
      %v8169 = vpop.f32.mrb[0].mxu0
      %v8170 = vadd.f32 %v7945, %v8169
      %v8171 = vpop.f32.mrb[0].mxu0
      %8172 = vmatprep.mubr.f32.mxu0 0.0
      %8173 = vmatmul.mubr.f32.gmra.mrb[0].mxu0 %v7539
      %v8174 = vpop.f32.mrb[0].mxu0
      %v8175 = vadd.f32 %v7950, %v8174
      %v8176 = vpop.f32.mrb[0].mxu0
      %8177 = vmatprep.mubr.f32.mxu0 0.0
      %8178 = vmatmul.mubr.f32.gmra.mrb[0].mxu0 %v7542
      %v8179 = vpop.f32.mrb[0].mxu0
      %v8180 = vadd.f32 %v7955, %v8179
      %v8181 = vpop.f32.mrb[0].mxu0
      %8182 = vmatprep.mubr.f32.mxu0 0.0
      %8183 = vmatmul.mubr.f32.gmra.mrb[0].mxu0 %v7545
      %v8184 = vpop.f32.mrb[0].mxu0
      %v8185 = vadd.f32 %v7960, %v8184
      %v8186 = vpop.f32.mrb[0].mxu0
      %8187 = vmatprep.mubr.f32.mxu0 0.0
      %8188 = vmatmul.mubr.f32.gmra.mrb[0].mxu0 %v7548
      %v8189 = vpop.f32.mrb[0].mxu0
      %v8190 = vadd.f32 %v7965, %v8189
      %v8191 = vpop.f32.mrb[0].mxu0
      %8192 = vmatprep.mubr.f32.mxu0 0.0
      %8193 = vmatmul.mubr.f32.gmra.mrb[0].mxu0 %v7551
      %v8194 = vpop.f32.mrb[0].mxu0
      %v8195 = vadd.f32 %v7970, %v8194
      %v8196 = vpop.f32.mrb[0].mxu0
      %8197 = vmatprep.mubr.f32.mxu0 0.0
      %8198 = vmatmul.mubr.f32.gmra.mrb[0].mxu0 %v7554
      %v8199 = vpop.f32.mrb[0].mxu0
      %v8200 = vadd.f32 %v7975, %v8199
      %v8201 = vpop.f32.mrb[0].mxu0
      %8202 = vmatprep.mubr.f32.mxu0 0.0
      %8203 = vmatmul.mubr.f32.gmra.mrb[0].mxu0 %v7557
      %v8204 = vpop.f32.mrb[0].mxu0
      %v8205 = vadd.f32 %v7980, %v8204
      %v8206 = vpop.f32.mrb[0].mxu0
      %8207 = vmatprep.mubr.f32.mxu0 0.0
      %8208 = vmatmul.mubr.f32.gmra.mrb[0].mxu0 %v7560
      %v8209 = vpop.f32.mrb[0].mxu0
      %v8210 = vadd.f32 %v7985, %v8209
      %v8211 = vpop.f32.mrb[0].mxu0
      %8212 = vmatprep.mubr.f32.mxu0 0.0
      %8213 = vmatmul.mubr.f32.gmra.mrb[0].mxu0 %v7563
      %v8214 = vpop.f32.mrb[0].mxu0
      %v8215 = vadd.f32 %v7990, %v8214
      %v8216 = vpop.f32.mrb[0].mxu0
      %8217 = vmatprep.mubr.f32.mxu0 0.0
      %8218 = vmatmul.mubr.f32.gmra.mrb[0].mxu0 %v7566
      %v8219 = vpop.f32.mrb[0].mxu0
      %v8220 = vadd.f32 %v7995, %v8219
      %v8221 = vpop.f32.mrb[0].mxu0
      %8222 = vmatprep.mubr.f32.mxu0 0.0
      %8223 = vmatmul.mubr.f32.gmra.mrb[0].mxu0 %v7569
      %v8224 = vpop.f32.mrb[0].mxu0
      %v8225 = vadd.f32 %v8000, %v8224
      %v8226 = vpop.f32.mrb[0].mxu0
      %8227 = vmatprep.mubr.f32.mxu0 0.0
      %8228 = vmatmul.mubr.f32.gmra.mrb[0].mxu0 %v7572
      %v8229 = vpop.f32.mrb[0].mxu0
      %v8230 = vadd.f32 %v8005, %v8229
      %v8231 = vpop.f32.mrb[0].mxu0
      %8232 = vmatprep.mubr.f32.mxu0 0.0
      %8233 = vmatmul.mubr.f32.gmra.mrb[0].mxu0 %v7575
      %v8234 = vpop.f32.mrb[0].mxu0
      %v8235 = vadd.f32 %v8010, %v8234
      %v8236 = vpop.f32.mrb[0].mxu0
      %8237 = vmatprep.mubr.f32.mxu0 0.0
      %8238 = vmatmul.mubr.f32.gmra.mrb[0].mxu0 %v7578
      %v8239 = vpop.f32.mrb[0].mxu0
      %v8240 = vadd.f32 %v8015, %v8239
      %v8241 = vpop.f32.mrb[0].mxu0
      %8242 = vmatprep.mubr.f32.mxu0 0.0
      %8243 = vmatmul.mubr.f32.gmra.mrb[0].mxu0 %v7581
      %v8244 = vpop.f32.mrb[0].mxu0
      %v8245 = vadd.f32 %v8020, %v8244
      %v8246 = vpop.f32.mrb[0].mxu0
      %8247 = vmatprep.mubr.f32.mxu0 0.0
      %8248 = vmatmul.mubr.f32.gmra.mrb[0].mxu0 %v7584
      %v8249 = vpop.f32.mrb[0].mxu0
      %v8250 = vadd.f32 %v8025, %v8249
      %v8251 = vpop.f32.mrb[0].mxu0
      %8252 = vmatprep.mubr.f32.mxu0 0.0
      %8253 = vmatmul.mubr.f32.gmra.mrb[0].mxu0 %v7587
      %v8254 = vpop.f32.mrb[0].mxu0
      %v8255 = vadd.f32 %v8030, %v8254
      %v8256 = vpop.f32.mrb[0].mxu0
      %8257 = vmatprep.mubr.f32.mxu0 0.0
      %8258 = vmatmul.mubr.f32.gmra.mrb[0].mxu0 %v7590
      %v8259 = vpop.f32.mrb[0].mxu0
      %v8260 = vadd.f32 %v8035, %v8259
      %v8261 = vpop.f32.mrb[0].mxu0
      %8262 = vmatprep.mubr.f32.mxu0 0.0
      %8263 = vmatmul.mubr.f32.gmra.mrb[0].mxu0 %v7593
      %v8264 = vpop.f32.mrb[0].mxu0
      %v8265 = vadd.f32 %v8040, %v8264
      %v8266 = vpop.f32.mrb[0].mxu0
      %8267 = vmatprep.mubr.f32.mxu0 0.0
      %8268 = vmatmul.mubr.f32.gmra.mrb[0].mxu0 %v7596
      %v8269 = vpop.f32.mrb[0].mxu0
      %v8270 = vadd.f32 %v8045, %v8269
      %v8271 = vpop.f32.mrb[0].mxu0
      %8272 = vdwg.mxu0
      %vm8273 = vcmp.ge.f32.partialorder %v8115, 0.0
      %vm8274 = vcmp.ge.f32.partialorder %v8120, 0.0
      %vm8275 = vcmp.ge.f32.partialorder %v8125, 0.0
      %vm8276 = vcmp.ge.f32.partialorder %v8130, 0.0
      %vm8277 = vcmp.ge.f32.partialorder %v8135, 0.0
      %vm8278 = vcmp.ge.f32.partialorder %v8140, 0.0
      %vm8279 = vcmp.ge.f32.partialorder %v8145, 0.0
      %vm8280 = vcmp.ge.f32.partialorder %v8150, 0.0
      %vm8281 = vcmp.ge.f32.partialorder %v8155, 0.0
      %vm8282 = vcmp.ge.f32.partialorder %v8160, 0.0
      %vm8283 = vcmp.ge.f32.partialorder %v8165, 0.0
      %vm8284 = vcmp.ge.f32.partialorder %v8170, 0.0
      %vm8285 = vcmp.ge.f32.partialorder %v8175, 0.0
      %vm8286 = vcmp.ge.f32.partialorder %v8180, 0.0
      %vm8287 = vcmp.ge.f32.partialorder %v8185, 0.0
      %vm8288 = vcmp.ge.f32.partialorder %v8190, 0.0
      %vm8289 = vcmp.ge.f32.partialorder %v8195, 0.0
      %vm8290 = vcmp.ge.f32.partialorder %v8200, 0.0
      %vm8291 = vcmp.ge.f32.partialorder %v8205, 0.0
      %vm8292 = vcmp.ge.f32.partialorder %v8210, 0.0
      %vm8293 = vcmp.ge.f32.partialorder %v8215, 0.0
      %vm8294 = vcmp.ge.f32.partialorder %v8220, 0.0
      %vm8295 = vcmp.ge.f32.partialorder %v8225, 0.0
      %vm8296 = vcmp.ge.f32.partialorder %v8230, 0.0
      %vm8297 = vcmp.ge.f32.partialorder %v8235, 0.0
      %vm8298 = vcmp.ge.f32.partialorder %v8240, 0.0
      %vm8299 = vcmp.ge.f32.partialorder %v8245, 0.0
      %vm8300 = vcmp.ge.f32.partialorder %v8250, 0.0
      %vm8301 = vcmp.ge.f32.partialorder %v8255, 0.0
      %vm8302 = vcmp.ge.f32.partialorder %v8260, 0.0
      %vm8303 = vcmp.ge.f32.partialorder %v8265, 0.0
      %vm8304 = vcmp.ge.f32.partialorder %v8270, 0.0
      %v8305 = vmul.f32 %v8115, 0.2
      %v8306 = vmul.f32 %v8120, 0.2
      %v8307 = vmul.f32 %v8125, 0.2
      %v8308 = vmul.f32 %v8130, 0.2
      %v8309 = vmul.f32 %v8135, 0.2
      %v8310 = vmul.f32 %v8140, 0.2
      %v8311 = vmul.f32 %v8145, 0.2
      %v8312 = vmul.f32 %v8150, 0.2
      %v8313 = vmul.f32 %v8155, 0.2
      %v8314 = vmul.f32 %v8160, 0.2
      %v8315 = vmul.f32 %v8165, 0.2
      %v8316 = vmul.f32 %v8170, 0.2
      %v8317 = vmul.f32 %v8175, 0.2
      %v8318 = vmul.f32 %v8180, 0.2
      %v8319 = vmul.f32 %v8185, 0.2
      %v8320 = vmul.f32 %v8190, 0.2
      %v8321 = vmul.f32 %v8195, 0.2
      %v8322 = vmul.f32 %v8200, 0.2
      %v8323 = vmul.f32 %v8205, 0.2
      %v8324 = vmul.f32 %v8210, 0.2
      %v8325 = vmul.f32 %v8215, 0.2
      %v8326 = vmul.f32 %v8220, 0.2
      %v8327 = vmul.f32 %v8225, 0.2
      %v8328 = vmul.f32 %v8230, 0.2
      %v8329 = vmul.f32 %v8235, 0.2
      %v8330 = vmul.f32 %v8240, 0.2
      %v8331 = vmul.f32 %v8245, 0.2
      %v8332 = vmul.f32 %v8250, 0.2
      %v8333 = vmul.f32 %v8255, 0.2
      %v8334 = vmul.f32 %v8260, 0.2
      %v8335 = vmul.f32 %v8265, 0.2
      %v8336 = vmul.f32 %v8270, 0.2
      %v8337 = vsel %vm8273, %v8115, %v8305
      %v8338 = vsel %vm8274, %v8120, %v8306
      %v8339 = vsel %vm8275, %v8125, %v8307
      %v8340 = vsel %vm8276, %v8130, %v8308
      %v8341 = vsel %vm8277, %v8135, %v8309
      %v8342 = vsel %vm8278, %v8140, %v8310
      %v8343 = vsel %vm8279, %v8145, %v8311
      %v8344 = vsel %vm8280, %v8150, %v8312
      %v8345 = vsel %vm8281, %v8155, %v8313
      %v8346 = vsel %vm8282, %v8160, %v8314
      %v8347 = vsel %vm8283, %v8165, %v8315
      %v8348 = vsel %vm8284, %v8170, %v8316
      %v8349 = vsel %vm8285, %v8175, %v8317
      %v8350 = vsel %vm8286, %v8180, %v8318
      %v8351 = vsel %vm8287, %v8185, %v8319
      %v8352 = vsel %vm8288, %v8190, %v8320
      %v8353 = vsel %vm8289, %v8195, %v8321
      %v8354 = vsel %vm8290, %v8200, %v8322
      %v8355 = vsel %vm8291, %v8205, %v8323
      %v8356 = vsel %vm8292, %v8210, %v8324
      %v8357 = vsel %vm8293, %v8215, %v8325
      %v8358 = vsel %vm8294, %v8220, %v8326
      %v8359 = vsel %vm8295, %v8225, %v8327
      %v8360 = vsel %vm8296, %v8230, %v8328
      %v8361 = vsel %vm8297, %v8235, %v8329
      %v8362 = vsel %vm8298, %v8240, %v8330
      %v8363 = vsel %vm8299, %v8245, %v8331
      %v8364 = vsel %vm8300, %v8250, %v8332
      %v8365 = vsel %vm8301, %v8255, %v8333
      %v8366 = vsel %vm8302, %v8260, %v8334
      %v8367 = vsel %vm8303, %v8265, %v8335
      %v8368 = vsel %vm8304, %v8270, %v8336
      %8369 = vst.msk [vmem:[%s6461 + $0x1] sm:$0xff] %vm362, %v8337
      %8370 = vst.msk [vmem:[%s6461 + $0x9] sm:$0xff] %vm362, %v8338
      %8371 = vst.msk [vmem:[%s6461 + $0x19] sm:$0xff] %vm362, %v8339
      %8372 = vst.msk [vmem:[%s6461 + $0x21] sm:$0xff] %vm362, %v8340
      %8373 = vst.msk [vmem:[%s6461 + $0x31] sm:$0xff] %vm362, %v8341
      %8374 = vst.msk [vmem:[%s6461 + $0x39] sm:$0xff] %vm362, %v8342
      %8375 = vst.msk [vmem:[%s6461 + $0x49] sm:$0xff] %vm362, %v8343
      %8376 = vst.msk [vmem:[%s6461 + $0x51] sm:$0xff] %vm362, %v8344
      %8377 = vst.msk [vmem:[%s6461 + $0x61] sm:$0xff] %vm362, %v8345
      %8378 = vst.msk [vmem:[%s6461 + $0x69] sm:$0xff] %vm362, %v8346
      %8379 = vst.msk [vmem:[%s6461 + $0x79] sm:$0xff] %vm362, %v8347
      %8380 = vst.msk [vmem:[%s6461 + $0x81] sm:$0xff] %vm362, %v8348
      %8381 = vst.msk [vmem:[%s6461 + $0x91] sm:$0xff] %vm362, %v8349
      %8382 = vst.msk [vmem:[%s6461 + $0x99] sm:$0xff] %vm362, %v8350
      %8383 = vst.msk [vmem:[%s6461 + $0xa9] sm:$0xff] %vm362, %v8351
      %8384 = vst.msk [vmem:[%s6461 + $0xb1] sm:$0xff] %vm362, %v8352
      %8385 = vst.msk [vmem:[%s6461 + $0xc1] sm:$0xff] %vm362, %v8353
      %8386 = vst.msk [vmem:[%s6461 + $0xc9] sm:$0xff] %vm362, %v8354
      %8387 = vst.msk [vmem:[%s6461 + $0xd9] sm:$0xff] %vm362, %v8355
      %8388 = vst.msk [vmem:[%s6461 + $0xe1] sm:$0xff] %vm362, %v8356
      %8389 = vst.msk [vmem:[%s6461 + $0xf1] sm:$0xff] %vm362, %v8357
      %8390 = vst.msk [vmem:[%s6461 + $0xf9] sm:$0xff] %vm362, %v8358
      %8391 = vst.msk [vmem:[%s6461 + $0x109] sm:$0xff] %vm362, %v8359
      %8392 = vst.msk [vmem:[%s6461 + $0x111] sm:$0xff] %vm362, %v8360
      %8393 = vst.msk [vmem:[%s6461 + $0x121] sm:$0xff] %vm362, %v8361
      %8394 = vst.msk [vmem:[%s6461 + $0x129] sm:$0xff] %vm362, %v8362
      %8395 = vst.msk [vmem:[%s6461 + $0x139] sm:$0xff] %vm362, %v8363
      %8396 = vst.msk [vmem:[%s6461 + $0x141] sm:$0xff] %vm362, %v8364
      %8397 = vst.msk [vmem:[%s6461 + $0x151] sm:$0xff] %vm362, %v8365
      %8398 = vst.msk [vmem:[%s6461 + $0x159] sm:$0xff] %vm362, %v8366
      %8399 = vst.msk [vmem:[%s6461 + $0x169] sm:$0xff] %vm362, %v8367
      %8400 = vst.msk [vmem:[%s6461 + $0x171] sm:$0xff] %vm362, %v8368
      %v8401 = vld [vmem:[#allocation3] sm:$0xff]
      %v8402 = vld [vmem:[#allocation3 + $0x8] sm:$0xff]
      %v8403 = vld [vmem:[#allocation3 + $0x18] sm:$0xff]
      %v8404 = vld [vmem:[#allocation3 + $0x20] sm:$0xff]
      %v8405 = vld [vmem:[#allocation3 + $0x30] sm:$0xff]
      %v8406 = vld [vmem:[#allocation3 + $0x38] sm:$0xff]
      %v8407 = vld [vmem:[#allocation3 + $0x48] sm:$0xff]
      %v8408 = vld [vmem:[#allocation3 + $0x50] sm:$0xff]
      %v8409 = vld [vmem:[#allocation3 + $0x60] sm:$0xff]
      %v8410 = vld [vmem:[#allocation3 + $0x68] sm:$0xff]
      %v8411 = vld [vmem:[#allocation3 + $0x78] sm:$0xff]
      %v8412 = vld [vmem:[#allocation3 + $0x80] sm:$0xff]
      %v8413 = vld [vmem:[#allocation3 + $0x90] sm:$0xff]
      %v8414 = vld [vmem:[#allocation3 + $0x98] sm:$0xff]
      %v8415 = vld [vmem:[#allocation3 + $0xa8] sm:$0xff]
      %v8416 = vld [vmem:[#allocation3 + $0xb0] sm:$0xff]
      %v8417 = vld [vmem:[#allocation3 + $0xc0] sm:$0xff]
      %v8418 = vld [vmem:[#allocation3 + $0xc8] sm:$0xff]
      %v8419 = vld [vmem:[#allocation3 + $0xd8] sm:$0xff]
      %v8420 = vld [vmem:[#allocation3 + $0xe0] sm:$0xff]
      %v8421 = vld [vmem:[#allocation3 + $0xf0] sm:$0xff]
      %v8422 = vld [vmem:[#allocation3 + $0xf8] sm:$0xff]
      %v8423 = vld [vmem:[#allocation3 + $0x108] sm:$0xff]
      %v8424 = vld [vmem:[#allocation3 + $0x110] sm:$0xff]
      %v8425 = vld [vmem:[#allocation3 + $0x120] sm:$0xff]
      %v8426 = vld [vmem:[#allocation3 + $0x128] sm:$0xff]
      %v8427 = vld [vmem:[#allocation3 + $0x138] sm:$0xff]
      %v8428 = vld [vmem:[#allocation3 + $0x140] sm:$0xff]
      %v8429 = vld [vmem:[#allocation3 + $0x150] sm:$0xff]
      %v8430 = vld [vmem:[#allocation3 + $0x158] sm:$0xff]
      %v8431 = vld [vmem:[#allocation3 + $0x168] sm:$0xff]
      %v8432 = vld [vmem:[#allocation3 + $0x170] sm:$0xff]
      %v8433 = vld [vmem:[#allocation3 + $0x1] sm:$0xff]
      %v8434 = vld [vmem:[#allocation3 + $0x9] sm:$0xff]
      %v8435 = vld [vmem:[#allocation3 + $0x19] sm:$0xff]
      %v8436 = vld [vmem:[#allocation3 + $0x21] sm:$0xff]
      %v8437 = vld [vmem:[#allocation3 + $0x31] sm:$0xff]
      %v8438 = vld [vmem:[#allocation3 + $0x39] sm:$0xff]
      %v8439 = vld [vmem:[#allocation3 + $0x49] sm:$0xff]
      %v8440 = vld [vmem:[#allocation3 + $0x51] sm:$0xff]
      %v8441 = vld [vmem:[#allocation3 + $0x61] sm:$0xff]
      %v8442 = vld [vmem:[#allocation3 + $0x69] sm:$0xff]
      %v8443 = vld [vmem:[#allocation3 + $0x79] sm:$0xff]
      %v8444 = vld [vmem:[#allocation3 + $0x81] sm:$0xff]
      %v8445 = vld [vmem:[#allocation3 + $0x91] sm:$0xff]
      %v8446 = vld [vmem:[#allocation3 + $0x99] sm:$0xff]
      %v8447 = vld [vmem:[#allocation3 + $0xa9] sm:$0xff]
      %v8448 = vld [vmem:[#allocation3 + $0xb1] sm:$0xff]
      %v8449 = vld [vmem:[#allocation3 + $0xc1] sm:$0xff]
      %v8450 = vld [vmem:[#allocation3 + $0xc9] sm:$0xff]
      %v8451 = vld [vmem:[#allocation3 + $0xd9] sm:$0xff]
      %v8452 = vld [vmem:[#allocation3 + $0xe1] sm:$0xff]
      %v8453 = vld [vmem:[#allocation3 + $0xf1] sm:$0xff]
      %v8454 = vld [vmem:[#allocation3 + $0xf9] sm:$0xff]
      %v8455 = vld [vmem:[#allocation3 + $0x109] sm:$0xff]
      %v8456 = vld [vmem:[#allocation3 + $0x111] sm:$0xff]
      %v8457 = vld [vmem:[#allocation3 + $0x121] sm:$0xff]
      %v8458 = vld [vmem:[#allocation3 + $0x129] sm:$0xff]
      %v8459 = vld [vmem:[#allocation3 + $0x139] sm:$0xff]
      %v8460 = vld [vmem:[#allocation3 + $0x141] sm:$0xff]
      %v8461 = vld [vmem:[#allocation3 + $0x151] sm:$0xff]
      %v8462 = vld [vmem:[#allocation3 + $0x159] sm:$0xff]
      %v8463 = vld [vmem:[#allocation3 + $0x169] sm:$0xff]
      %v8464 = vld [vmem:[#allocation3 + $0x171] sm:$0xff]
      %v8465 = vld [vmem:[#allocation3 + $0x2] sm:$0xff]
      %v8466 = vld [vmem:[#allocation3 + $0xa] sm:$0xff]
      %v8467 = vld [vmem:[#allocation3 + $0x1a] sm:$0xff]
      %v8468 = vld [vmem:[#allocation3 + $0x22] sm:$0xff]
      %v8469 = vld [vmem:[#allocation3 + $0x32] sm:$0xff]
      %v8470 = vld [vmem:[#allocation3 + $0x3a] sm:$0xff]
      %v8471 = vld [vmem:[#allocation3 + $0x4a] sm:$0xff]
      %v8472 = vld [vmem:[#allocation3 + $0x52] sm:$0xff]
      %v8473 = vld [vmem:[#allocation3 + $0x62] sm:$0xff]
      %v8474 = vld [vmem:[#allocation3 + $0x6a] sm:$0xff]
      %v8475 = vld [vmem:[#allocation3 + $0x7a] sm:$0xff]
      %v8476 = vld [vmem:[#allocation3 + $0x82] sm:$0xff]
      %v8477 = vld [vmem:[#allocation3 + $0x92] sm:$0xff]
      %v8478 = vld [vmem:[#allocation3 + $0x9a] sm:$0xff]
      %v8479 = vld [vmem:[#allocation3 + $0xaa] sm:$0xff]
      %v8480 = vld [vmem:[#allocation3 + $0xb2] sm:$0xff]
      %v8481 = vld [vmem:[#allocation3 + $0xc2] sm:$0xff]
      %v8482 = vld [vmem:[#allocation3 + $0xca] sm:$0xff]
      %v8483 = vld [vmem:[#allocation3 + $0xda] sm:$0xff]
      %v8484 = vld [vmem:[#allocation3 + $0xe2] sm:$0xff]
      %v8485 = vld [vmem:[#allocation3 + $0xf2] sm:$0xff]
      %v8486 = vld [vmem:[#allocation3 + $0xfa] sm:$0xff]
      %v8487 = vld [vmem:[#allocation3 + $0x10a] sm:$0xff]
      %v8488 = vld [vmem:[#allocation3 + $0x112] sm:$0xff]
      %v8489 = vld [vmem:[#allocation3 + $0x122] sm:$0xff]
      %v8490 = vld [vmem:[#allocation3 + $0x12a] sm:$0xff]
      %v8491 = vld [vmem:[#allocation3 + $0x13a] sm:$0xff]
      %v8492 = vld [vmem:[#allocation3 + $0x142] sm:$0xff]
      %v8493 = vld [vmem:[#allocation3 + $0x152] sm:$0xff]
      %v8494 = vld [vmem:[#allocation3 + $0x15a] sm:$0xff]
      %v8495 = vld [vmem:[#allocation3 + $0x16a] sm:$0xff]
      %v8496 = vld [vmem:[#allocation3 + $0x172] sm:$0xff]
      %v8497 = vld [vmem:[%s6461] sm:$0xff]
      %v8498 = vld [vmem:[%s6461 + $0x8] sm:$0xff]
      %v8499 = vld [vmem:[%s6461 + $0x18] sm:$0xff]
      %v8500 = vld [vmem:[%s6461 + $0x20] sm:$0xff]
      %v8501 = vld [vmem:[%s6461 + $0x30] sm:$0xff]
      %v8502 = vld [vmem:[%s6461 + $0x38] sm:$0xff]
      %v8503 = vld [vmem:[%s6461 + $0x48] sm:$0xff]
      %v8504 = vld [vmem:[%s6461 + $0x50] sm:$0xff]
      %v8505 = vld [vmem:[%s6461 + $0x60] sm:$0xff]
      %v8506 = vld [vmem:[%s6461 + $0x68] sm:$0xff]
      %v8507 = vld [vmem:[%s6461 + $0x78] sm:$0xff]
      %v8508 = vld [vmem:[%s6461 + $0x80] sm:$0xff]
      %v8509 = vld [vmem:[%s6461 + $0x90] sm:$0xff]
      %v8510 = vld [vmem:[%s6461 + $0x98] sm:$0xff]
      %v8511 = vld [vmem:[%s6461 + $0xa8] sm:$0xff]
      %v8512 = vld [vmem:[%s6461 + $0xb0] sm:$0xff]
      %v8513 = vld [vmem:[%s6461 + $0xc0] sm:$0xff]
      %v8514 = vld [vmem:[%s6461 + $0xc8] sm:$0xff]
      %v8515 = vld [vmem:[%s6461 + $0xd8] sm:$0xff]
      %v8516 = vld [vmem:[%s6461 + $0xe0] sm:$0xff]
      %v8517 = vld [vmem:[%s6461 + $0xf0] sm:$0xff]
      %v8518 = vld [vmem:[%s6461 + $0xf8] sm:$0xff]
      %v8519 = vld [vmem:[%s6461 + $0x108] sm:$0xff]
      %v8520 = vld [vmem:[%s6461 + $0x110] sm:$0xff]
      %v8521 = vld [vmem:[%s6461 + $0x120] sm:$0xff]
      %v8522 = vld [vmem:[%s6461 + $0x128] sm:$0xff]
      %v8523 = vld [vmem:[%s6461 + $0x138] sm:$0xff]
      %v8524 = vld [vmem:[%s6461 + $0x140] sm:$0xff]
      %v8525 = vld [vmem:[%s6461 + $0x150] sm:$0xff]
      %v8526 = vld [vmem:[%s6461 + $0x158] sm:$0xff]
      %v8527 = vld [vmem:[%s6461 + $0x168] sm:$0xff]
      %v8528 = vld [vmem:[%s6461 + $0x170] sm:$0xff]
      %v8529 = vld [vmem:[%s6461 + $0x1] sm:$0xff]
      %v8530 = vld [vmem:[%s6461 + $0x9] sm:$0xff]
      %v8531 = vld [vmem:[%s6461 + $0x19] sm:$0xff]
      %v8532 = vld [vmem:[%s6461 + $0x21] sm:$0xff]
      %v8533 = vld [vmem:[%s6461 + $0x31] sm:$0xff]
      %v8534 = vld [vmem:[%s6461 + $0x39] sm:$0xff]
      %v8535 = vld [vmem:[%s6461 + $0x49] sm:$0xff]
      %v8536 = vld [vmem:[%s6461 + $0x51] sm:$0xff]
      %v8537 = vld [vmem:[%s6461 + $0x61] sm:$0xff]
      %v8538 = vld [vmem:[%s6461 + $0x69] sm:$0xff]
      %v8539 = vld [vmem:[%s6461 + $0x79] sm:$0xff]
      %v8540 = vld [vmem:[%s6461 + $0x81] sm:$0xff]
      %v8541 = vld [vmem:[%s6461 + $0x91] sm:$0xff]
      %v8542 = vld [vmem:[%s6461 + $0x99] sm:$0xff]
      %v8543 = vld [vmem:[%s6461 + $0xa9] sm:$0xff]
      %v8544 = vld [vmem:[%s6461 + $0xb1] sm:$0xff]
      %v8545 = vld [vmem:[%s6461 + $0xc1] sm:$0xff]
      %v8546 = vld [vmem:[%s6461 + $0xc9] sm:$0xff]
      %v8547 = vld [vmem:[%s6461 + $0xd9] sm:$0xff]
      %v8548 = vld [vmem:[%s6461 + $0xe1] sm:$0xff]
      %v8549 = vld [vmem:[%s6461 + $0xf1] sm:$0xff]
      %v8550 = vld [vmem:[%s6461 + $0xf9] sm:$0xff]
      %v8551 = vld [vmem:[%s6461 + $0x109] sm:$0xff]
      %v8552 = vld [vmem:[%s6461 + $0x111] sm:$0xff]
      %v8553 = vld [vmem:[%s6461 + $0x121] sm:$0xff]
      %v8554 = vld [vmem:[%s6461 + $0x129] sm:$0xff]
      %v8555 = vld [vmem:[%s6461 + $0x139] sm:$0xff]
      %v8556 = vld [vmem:[%s6461 + $0x141] sm:$0xff]
      %v8557 = vld [vmem:[%s6461 + $0x151] sm:$0xff]
      %v8558 = vld [vmem:[%s6461 + $0x159] sm:$0xff]
      %v8559 = vld [vmem:[%s6461 + $0x169] sm:$0xff]
      %v8560 = vld [vmem:[%s6461 + $0x171] sm:$0xff]
      %v8561 = vld [vmem:[%s6461 + $0x2] sm:$0xff]
      %v8562 = vld [vmem:[%s6461 + $0xa] sm:$0xff]
      %v8563 = vld [vmem:[%s6461 + $0x1a] sm:$0xff]
      %v8564 = vld [vmem:[%s6461 + $0x22] sm:$0xff]
      %v8565 = vld [vmem:[%s6461 + $0x32] sm:$0xff]
      %v8566 = vld [vmem:[%s6461 + $0x3a] sm:$0xff]
      %v8567 = vld [vmem:[%s6461 + $0x4a] sm:$0xff]
      %v8568 = vld [vmem:[%s6461 + $0x52] sm:$0xff]
      %v8569 = vld [vmem:[%s6461 + $0x62] sm:$0xff]
      %v8570 = vld [vmem:[%s6461 + $0x6a] sm:$0xff]
      %v8571 = vld [vmem:[%s6461 + $0x7a] sm:$0xff]
      %v8572 = vld [vmem:[%s6461 + $0x82] sm:$0xff]
      %v8573 = vld [vmem:[%s6461 + $0x92] sm:$0xff]
      %v8574 = vld [vmem:[%s6461 + $0x9a] sm:$0xff]
      %v8575 = vld [vmem:[%s6461 + $0xaa] sm:$0xff]
      %v8576 = vld [vmem:[%s6461 + $0xb2] sm:$0xff]
      %v8577 = vld [vmem:[%s6461 + $0xc2] sm:$0xff]
      %v8578 = vld [vmem:[%s6461 + $0xca] sm:$0xff]
      %v8579 = vld [vmem:[%s6461 + $0xda] sm:$0xff]
      %v8580 = vld [vmem:[%s6461 + $0xe2] sm:$0xff]
      %v8581 = vld [vmem:[%s6461 + $0xf2] sm:$0xff]
      %v8582 = vld [vmem:[%s6461 + $0xfa] sm:$0xff]
      %v8583 = vld [vmem:[%s6461 + $0x10a] sm:$0xff]
      %v8584 = vld [vmem:[%s6461 + $0x112] sm:$0xff]
      %v8585 = vld [vmem:[%s6461 + $0x122] sm:$0xff]
      %v8586 = vld [vmem:[%s6461 + $0x12a] sm:$0xff]
      %v8587 = vld [vmem:[%s6461 + $0x13a] sm:$0xff]
      %v8588 = vld [vmem:[%s6461 + $0x142] sm:$0xff]
      %v8589 = vld [vmem:[%s6461 + $0x152] sm:$0xff]
      %v8590 = vld [vmem:[%s6461 + $0x15a] sm:$0xff]
      %v8591 = vld [vmem:[%s6461 + $0x16a] sm:$0xff]
      %v8592 = vld [vmem:[%s6461 + $0x172] sm:$0xff]
      %v8593 = vld [vmem:[%s6686] sm:$0xff]
      %v8594 = vld [vmem:[%s6686 + $0x8] sm:$0xff]
      %v8595 = vld [vmem:[%s6686 + $0x18] sm:$0xff]
      %v8596 = vld [vmem:[%s6686 + $0x20] sm:$0xff]
      %v8597 = vld [vmem:[%s6686 + $0x30] sm:$0xff]
      %v8598 = vld [vmem:[%s6686 + $0x38] sm:$0xff]
      %v8599 = vld [vmem:[%s6686 + $0x48] sm:$0xff]
      %v8600 = vld [vmem:[%s6686 + $0x50] sm:$0xff]
      %v8601 = vld [vmem:[%s6686 + $0x60] sm:$0xff]
      %v8602 = vld [vmem:[%s6686 + $0x68] sm:$0xff]
      %v8603 = vld [vmem:[%s6686 + $0x78] sm:$0xff]
      %v8604 = vld [vmem:[%s6686 + $0x80] sm:$0xff]
      %v8605 = vld [vmem:[%s6686 + $0x90] sm:$0xff]
      %v8606 = vld [vmem:[%s6686 + $0x98] sm:$0xff]
      %v8607 = vld [vmem:[%s6686 + $0xa8] sm:$0xff]
      %v8608 = vld [vmem:[%s6686 + $0xb0] sm:$0xff]
      %v8609 = vld [vmem:[%s6686 + $0xc0] sm:$0xff]
      %v8610 = vld [vmem:[%s6686 + $0xc8] sm:$0xff]
      %v8611 = vld [vmem:[%s6686 + $0xd8] sm:$0xff]
      %v8612 = vld [vmem:[%s6686 + $0xe0] sm:$0xff]
      %v8613 = vld [vmem:[%s6686 + $0xf0] sm:$0xff]
      %v8614 = vld [vmem:[%s6686 + $0xf8] sm:$0xff]
      %v8615 = vld [vmem:[%s6686 + $0x108] sm:$0xff]
      %v8616 = vld [vmem:[%s6686 + $0x110] sm:$0xff]
      %v8617 = vld [vmem:[%s6686 + $0x120] sm:$0xff]
      %v8618 = vld [vmem:[%s6686 + $0x128] sm:$0xff]
      %v8619 = vld [vmem:[%s6686 + $0x138] sm:$0xff]
      %v8620 = vld [vmem:[%s6686 + $0x140] sm:$0xff]
      %v8621 = vld [vmem:[%s6686 + $0x150] sm:$0xff]
      %v8622 = vld [vmem:[%s6686 + $0x158] sm:$0xff]
      %v8623 = vld [vmem:[%s6686 + $0x168] sm:$0xff]
      %v8624 = vld [vmem:[%s6686 + $0x170] sm:$0xff]
      %v8625 = vld [vmem:[%s6686 + $0x1] sm:$0xff]
      %v8626 = vld [vmem:[%s6686 + $0x9] sm:$0xff]
      %v8627 = vld [vmem:[%s6686 + $0x19] sm:$0xff]
      %v8628 = vld [vmem:[%s6686 + $0x21] sm:$0xff]
      %v8629 = vld [vmem:[%s6686 + $0x31] sm:$0xff]
      %v8630 = vld [vmem:[%s6686 + $0x39] sm:$0xff]
      %v8631 = vld [vmem:[%s6686 + $0x49] sm:$0xff]
      %v8632 = vld [vmem:[%s6686 + $0x51] sm:$0xff]
      %v8633 = vld [vmem:[%s6686 + $0x61] sm:$0xff]
      %v8634 = vld [vmem:[%s6686 + $0x69] sm:$0xff]
      %v8635 = vld [vmem:[%s6686 + $0x79] sm:$0xff]
      %v8636 = vld [vmem:[%s6686 + $0x81] sm:$0xff]
      %v8637 = vld [vmem:[%s6686 + $0x91] sm:$0xff]
      %v8638 = vld [vmem:[%s6686 + $0x99] sm:$0xff]
      %v8639 = vld [vmem:[%s6686 + $0xa9] sm:$0xff]
      %v8640 = vld [vmem:[%s6686 + $0xb1] sm:$0xff]
      %v8641 = vld [vmem:[%s6686 + $0xc1] sm:$0xff]
      %v8642 = vld [vmem:[%s6686 + $0xc9] sm:$0xff]
      %v8643 = vld [vmem:[%s6686 + $0xd9] sm:$0xff]
      %v8644 = vld [vmem:[%s6686 + $0xe1] sm:$0xff]
      %v8645 = vld [vmem:[%s6686 + $0xf1] sm:$0xff]
      %v8646 = vld [vmem:[%s6686 + $0xf9] sm:$0xff]
      %v8647 = vld [vmem:[%s6686 + $0x109] sm:$0xff]
      %v8648 = vld [vmem:[%s6686 + $0x111] sm:$0xff]
      %v8649 = vld [vmem:[%s6686 + $0x121] sm:$0xff]
      %v8650 = vld [vmem:[%s6686 + $0x129] sm:$0xff]
      %v8651 = vld [vmem:[%s6686 + $0x139] sm:$0xff]
      %v8652 = vld [vmem:[%s6686 + $0x141] sm:$0xff]
      %v8653 = vld [vmem:[%s6686 + $0x151] sm:$0xff]
      %v8654 = vld [vmem:[%s6686 + $0x159] sm:$0xff]
      %v8655 = vld [vmem:[%s6686 + $0x169] sm:$0xff]
      %v8656 = vld [vmem:[%s6686 + $0x171] sm:$0xff]
      %v8657 = vld [vmem:[%s6686 + $0x2] sm:$0xff]
      %v8658 = vld [vmem:[%s6686 + $0xa] sm:$0xff]
      %v8659 = vld [vmem:[%s6686 + $0x1a] sm:$0xff]
      %v8660 = vld [vmem:[%s6686 + $0x22] sm:$0xff]
      %v8661 = vld [vmem:[%s6686 + $0x32] sm:$0xff]
      %v8662 = vld [vmem:[%s6686 + $0x3a] sm:$0xff]
      %v8663 = vld [vmem:[%s6686 + $0x4a] sm:$0xff]
      %v8664 = vld [vmem:[%s6686 + $0x52] sm:$0xff]
      %v8665 = vld [vmem:[%s6686 + $0x62] sm:$0xff]
      %v8666 = vld [vmem:[%s6686 + $0x6a] sm:$0xff]
      %v8667 = vld [vmem:[%s6686 + $0x7a] sm:$0xff]
      %v8668 = vld [vmem:[%s6686 + $0x82] sm:$0xff]
      %v8669 = vld [vmem:[%s6686 + $0x92] sm:$0xff]
      %v8670 = vld [vmem:[%s6686 + $0x9a] sm:$0xff]
      %v8671 = vld [vmem:[%s6686 + $0xaa] sm:$0xff]
      %v8672 = vld [vmem:[%s6686 + $0xb2] sm:$0xff]
      %v8673 = vld [vmem:[%s6686 + $0xc2] sm:$0xff]
      %v8674 = vld [vmem:[%s6686 + $0xca] sm:$0xff]
      %v8675 = vld [vmem:[%s6686 + $0xda] sm:$0xff]
      %v8676 = vld [vmem:[%s6686 + $0xe2] sm:$0xff]
      %v8677 = vld [vmem:[%s6686 + $0xf2] sm:$0xff]
      %v8678 = vld [vmem:[%s6686 + $0xfa] sm:$0xff]
      %v8679 = vld [vmem:[%s6686 + $0x10a] sm:$0xff]
      %v8680 = vld [vmem:[%s6686 + $0x112] sm:$0xff]
      %v8681 = vld [vmem:[%s6686 + $0x122] sm:$0xff]
      %v8682 = vld [vmem:[%s6686 + $0x12a] sm:$0xff]
      %v8683 = vld [vmem:[%s6686 + $0x13a] sm:$0xff]
      %v8684 = vld [vmem:[%s6686 + $0x142] sm:$0xff]
      %v8685 = vld [vmem:[%s6686 + $0x152] sm:$0xff]
      %v8686 = vld [vmem:[%s6686 + $0x15a] sm:$0xff]
      %v8687 = vld [vmem:[%s6686 + $0x16a] sm:$0xff]
      %v8688 = vld [vmem:[%s6686 + $0x172] sm:$0xff]
      %8721 = vrot.lane.b32.xlu0 %v8433, 64
      %v8722 = vpop.permute.xlu0 %8721
      %8723 = vrot.lane.b32.xlu0 %v8434, 64
      %v8724 = vpop.permute.xlu0 %8723
      %8725 = vrot.lane.b32.xlu0 %v8435, 64
      %v8726 = vpop.permute.xlu0 %8725
      %8727 = vrot.lane.b32.xlu0 %v8436, 64
      %v8728 = vpop.permute.xlu0 %8727
      %8729 = vrot.lane.b32.xlu0 %v8437, 64
      %v8730 = vpop.permute.xlu0 %8729
      %8731 = vrot.lane.b32.xlu0 %v8438, 64
      %v8732 = vpop.permute.xlu0 %8731
      %8733 = vrot.lane.b32.xlu0 %v8439, 64
      %v8734 = vpop.permute.xlu0 %8733
      %8735 = vrot.lane.b32.xlu0 %v8440, 64
      %v8736 = vpop.permute.xlu0 %8735
      %8737 = vrot.lane.b32.xlu0 %v8441, 64
      %v8738 = vpop.permute.xlu0 %8737
      %8739 = vrot.lane.b32.xlu0 %v8442, 64
      %v8740 = vpop.permute.xlu0 %8739
      %8741 = vrot.lane.b32.xlu0 %v8443, 64
      %v8742 = vpop.permute.xlu0 %8741
      %8743 = vrot.lane.b32.xlu0 %v8444, 64
      %v8744 = vpop.permute.xlu0 %8743
      %8745 = vrot.lane.b32.xlu0 %v8445, 64
      %v8746 = vpop.permute.xlu0 %8745
      %8747 = vrot.lane.b32.xlu0 %v8446, 64
      %v8748 = vpop.permute.xlu0 %8747
      %8749 = vrot.lane.b32.xlu0 %v8447, 64
      %v8750 = vpop.permute.xlu0 %8749
      %8751 = vrot.lane.b32.xlu0 %v8448, 64
      %v8752 = vpop.permute.xlu0 %8751
      %8753 = vrot.lane.b32.xlu0 %v8449, 64
      %v8754 = vpop.permute.xlu0 %8753
      %8755 = vrot.lane.b32.xlu0 %v8450, 64
      %v8756 = vpop.permute.xlu0 %8755
      %8757 = vrot.lane.b32.xlu0 %v8451, 64
      %v8758 = vpop.permute.xlu0 %8757
      %8759 = vrot.lane.b32.xlu0 %v8452, 64
      %v8760 = vpop.permute.xlu0 %8759
      %8761 = vrot.lane.b32.xlu0 %v8453, 64
      %v8762 = vpop.permute.xlu0 %8761
      %8763 = vrot.lane.b32.xlu0 %v8454, 64
      %v8764 = vpop.permute.xlu0 %8763
      %8765 = vrot.lane.b32.xlu0 %v8455, 64
      %v8766 = vpop.permute.xlu0 %8765
      %8767 = vrot.lane.b32.xlu0 %v8456, 64
      %v8768 = vpop.permute.xlu0 %8767
      %8769 = vrot.lane.b32.xlu0 %v8457, 64
      %v8770 = vpop.permute.xlu0 %8769
      %8771 = vrot.lane.b32.xlu0 %v8458, 64
      %v8772 = vpop.permute.xlu0 %8771
      %8773 = vrot.lane.b32.xlu0 %v8459, 64
      %v8774 = vpop.permute.xlu0 %8773
      %8775 = vrot.lane.b32.xlu0 %v8460, 64
      %v8776 = vpop.permute.xlu0 %8775
      %8777 = vrot.lane.b32.xlu0 %v8461, 64
      %v8778 = vpop.permute.xlu0 %8777
      %8779 = vrot.lane.b32.xlu0 %v8462, 64
      %v8780 = vpop.permute.xlu0 %8779
      %8781 = vrot.lane.b32.xlu0 %v8463, 64
      %v8782 = vpop.permute.xlu0 %8781
      %8783 = vrot.lane.b32.xlu0 %v8464, 64
      %v8784 = vpop.permute.xlu0 %8783
      %8849 = vrot.lane.b32.xlu0 %v8497, 64
      %v8850 = vpop.permute.xlu0 %8849
      %8851 = vrot.lane.b32.xlu0 %v8498, 64
      %v8852 = vpop.permute.xlu0 %8851
      %8853 = vrot.lane.b32.xlu0 %v8499, 64
      %v8854 = vpop.permute.xlu0 %8853
      %8855 = vrot.lane.b32.xlu0 %v8500, 64
      %v8856 = vpop.permute.xlu0 %8855
      %8857 = vrot.lane.b32.xlu0 %v8501, 64
      %v8858 = vpop.permute.xlu0 %8857
      %8859 = vrot.lane.b32.xlu0 %v8502, 64
      %v8860 = vpop.permute.xlu0 %8859
      %8861 = vrot.lane.b32.xlu0 %v8503, 64
      %v8862 = vpop.permute.xlu0 %8861
      %8863 = vrot.lane.b32.xlu0 %v8504, 64
      %v8864 = vpop.permute.xlu0 %8863
      %8865 = vrot.lane.b32.xlu0 %v8505, 64
      %v8866 = vpop.permute.xlu0 %8865
      %8867 = vrot.lane.b32.xlu0 %v8506, 64
      %v8868 = vpop.permute.xlu0 %8867
      %8869 = vrot.lane.b32.xlu0 %v8507, 64
      %v8870 = vpop.permute.xlu0 %8869
      %8871 = vrot.lane.b32.xlu0 %v8508, 64
      %v8872 = vpop.permute.xlu0 %8871
      %8873 = vrot.lane.b32.xlu0 %v8509, 64
      %v8874 = vpop.permute.xlu0 %8873
      %8875 = vrot.lane.b32.xlu0 %v8510, 64
      %v8876 = vpop.permute.xlu0 %8875
      %8877 = vrot.lane.b32.xlu0 %v8511, 64
      %v8878 = vpop.permute.xlu0 %8877
      %8879 = vrot.lane.b32.xlu0 %v8512, 64
      %v8880 = vpop.permute.xlu0 %8879
      %8881 = vrot.lane.b32.xlu0 %v8513, 64
      %v8882 = vpop.permute.xlu0 %8881
      %8883 = vrot.lane.b32.xlu0 %v8514, 64
      %v8884 = vpop.permute.xlu0 %8883
      %8885 = vrot.lane.b32.xlu0 %v8515, 64
      %v8886 = vpop.permute.xlu0 %8885
      %8887 = vrot.lane.b32.xlu0 %v8516, 64
      %v8888 = vpop.permute.xlu0 %8887
      %8889 = vrot.lane.b32.xlu0 %v8517, 64
      %v8890 = vpop.permute.xlu0 %8889
      %8891 = vrot.lane.b32.xlu0 %v8518, 64
      %v8892 = vpop.permute.xlu0 %8891
      %8893 = vrot.lane.b32.xlu0 %v8519, 64
      %v8894 = vpop.permute.xlu0 %8893
      %8895 = vrot.lane.b32.xlu0 %v8520, 64
      %v8896 = vpop.permute.xlu0 %8895
      %8897 = vrot.lane.b32.xlu0 %v8521, 64
      %v8898 = vpop.permute.xlu0 %8897
      %8899 = vrot.lane.b32.xlu0 %v8522, 64
      %v8900 = vpop.permute.xlu0 %8899
      %8901 = vrot.lane.b32.xlu0 %v8523, 64
      %v8902 = vpop.permute.xlu0 %8901
      %8903 = vrot.lane.b32.xlu0 %v8524, 64
      %v8904 = vpop.permute.xlu0 %8903
      %8905 = vrot.lane.b32.xlu0 %v8525, 64
      %v8906 = vpop.permute.xlu0 %8905
      %8907 = vrot.lane.b32.xlu0 %v8526, 64
      %v8908 = vpop.permute.xlu0 %8907
      %8909 = vrot.lane.b32.xlu0 %v8527, 64
      %v8910 = vpop.permute.xlu0 %8909
      %8911 = vrot.lane.b32.xlu0 %v8528, 64
      %v8912 = vpop.permute.xlu0 %8911
      %8977 = vrot.lane.b32.xlu0 %v8561, 64
      %v8978 = vpop.permute.xlu0 %8977
      %8979 = vrot.lane.b32.xlu0 %v8562, 64
      %v8980 = vpop.permute.xlu0 %8979
      %8981 = vrot.lane.b32.xlu0 %v8563, 64
      %v8982 = vpop.permute.xlu0 %8981
      %8983 = vrot.lane.b32.xlu0 %v8564, 64
      %v8984 = vpop.permute.xlu0 %8983
      %8985 = vrot.lane.b32.xlu0 %v8565, 64
      %v8986 = vpop.permute.xlu0 %8985
      %8987 = vrot.lane.b32.xlu0 %v8566, 64
      %v8988 = vpop.permute.xlu0 %8987
      %8989 = vrot.lane.b32.xlu0 %v8567, 64
      %v8990 = vpop.permute.xlu0 %8989
      %8991 = vrot.lane.b32.xlu0 %v8568, 64
      %v8992 = vpop.permute.xlu0 %8991
      %8993 = vrot.lane.b32.xlu0 %v8569, 64
      %v8994 = vpop.permute.xlu0 %8993
      %8995 = vrot.lane.b32.xlu0 %v8570, 64
      %v8996 = vpop.permute.xlu0 %8995
      %8997 = vrot.lane.b32.xlu0 %v8571, 64
      %v8998 = vpop.permute.xlu0 %8997
      %8999 = vrot.lane.b32.xlu0 %v8572, 64
      %v9000 = vpop.permute.xlu0 %8999
      %9001 = vrot.lane.b32.xlu0 %v8573, 64
      %v9002 = vpop.permute.xlu0 %9001
      %9003 = vrot.lane.b32.xlu0 %v8574, 64
      %v9004 = vpop.permute.xlu0 %9003
      %9005 = vrot.lane.b32.xlu0 %v8575, 64
      %v9006 = vpop.permute.xlu0 %9005
      %9007 = vrot.lane.b32.xlu0 %v8576, 64
      %v9008 = vpop.permute.xlu0 %9007
      %9009 = vrot.lane.b32.xlu0 %v8577, 64
      %v9010 = vpop.permute.xlu0 %9009
      %9011 = vrot.lane.b32.xlu0 %v8578, 64
      %v9012 = vpop.permute.xlu0 %9011
      %9013 = vrot.lane.b32.xlu0 %v8579, 64
      %v9014 = vpop.permute.xlu0 %9013
      %9015 = vrot.lane.b32.xlu0 %v8580, 64
      %v9016 = vpop.permute.xlu0 %9015
      %9017 = vrot.lane.b32.xlu0 %v8581, 64
      %v9018 = vpop.permute.xlu0 %9017
      %9019 = vrot.lane.b32.xlu0 %v8582, 64
      %v9020 = vpop.permute.xlu0 %9019
      %9021 = vrot.lane.b32.xlu0 %v8583, 64
      %v9022 = vpop.permute.xlu0 %9021
      %9023 = vrot.lane.b32.xlu0 %v8584, 64
      %v9024 = vpop.permute.xlu0 %9023
      %9025 = vrot.lane.b32.xlu0 %v8585, 64
      %v9026 = vpop.permute.xlu0 %9025
      %9027 = vrot.lane.b32.xlu0 %v8586, 64
      %v9028 = vpop.permute.xlu0 %9027
      %9029 = vrot.lane.b32.xlu0 %v8587, 64
      %v9030 = vpop.permute.xlu0 %9029
      %9031 = vrot.lane.b32.xlu0 %v8588, 64
      %v9032 = vpop.permute.xlu0 %9031
      %9033 = vrot.lane.b32.xlu0 %v8589, 64
      %v9034 = vpop.permute.xlu0 %9033
      %9035 = vrot.lane.b32.xlu0 %v8590, 64
      %v9036 = vpop.permute.xlu0 %9035
      %9037 = vrot.lane.b32.xlu0 %v8591, 64
      %v9038 = vpop.permute.xlu0 %9037
      %9039 = vrot.lane.b32.xlu0 %v8592, 64
      %v9040 = vpop.permute.xlu0 %9039
      %9105 = vrot.lane.b32.xlu0 %v8625, 64
      %v9106 = vpop.permute.xlu0 %9105
      %9107 = vrot.lane.b32.xlu0 %v8626, 64
      %v9108 = vpop.permute.xlu0 %9107
      %9109 = vrot.lane.b32.xlu0 %v8627, 64
      %v9110 = vpop.permute.xlu0 %9109
      %9111 = vrot.lane.b32.xlu0 %v8628, 64
      %v9112 = vpop.permute.xlu0 %9111
      %9113 = vrot.lane.b32.xlu0 %v8629, 64
      %v9114 = vpop.permute.xlu0 %9113
      %9115 = vrot.lane.b32.xlu0 %v8630, 64
      %v9116 = vpop.permute.xlu0 %9115
      %9117 = vrot.lane.b32.xlu0 %v8631, 64
      %v9118 = vpop.permute.xlu0 %9117
      %9119 = vrot.lane.b32.xlu0 %v8632, 64
      %v9120 = vpop.permute.xlu0 %9119
      %9121 = vrot.lane.b32.xlu0 %v8633, 64
      %v9122 = vpop.permute.xlu0 %9121
      %9123 = vrot.lane.b32.xlu0 %v8634, 64
      %v9124 = vpop.permute.xlu0 %9123
      %9125 = vrot.lane.b32.xlu0 %v8635, 64
      %v9126 = vpop.permute.xlu0 %9125
      %9127 = vrot.lane.b32.xlu0 %v8636, 64
      %v9128 = vpop.permute.xlu0 %9127
      %9129 = vrot.lane.b32.xlu0 %v8637, 64
      %v9130 = vpop.permute.xlu0 %9129
      %9131 = vrot.lane.b32.xlu0 %v8638, 64
      %v9132 = vpop.permute.xlu0 %9131
      %9133 = vrot.lane.b32.xlu0 %v8639, 64
      %v9134 = vpop.permute.xlu0 %9133
      %9135 = vrot.lane.b32.xlu0 %v8640, 64
      %v9136 = vpop.permute.xlu0 %9135
      %9137 = vrot.lane.b32.xlu0 %v8641, 64
      %v9138 = vpop.permute.xlu0 %9137
      %9139 = vrot.lane.b32.xlu0 %v8642, 64
      %v9140 = vpop.permute.xlu0 %9139
      %9141 = vrot.lane.b32.xlu0 %v8643, 64
      %v9142 = vpop.permute.xlu0 %9141
      %9143 = vrot.lane.b32.xlu0 %v8644, 64
      %v9144 = vpop.permute.xlu0 %9143
      %9145 = vrot.lane.b32.xlu0 %v8645, 64
      %v9146 = vpop.permute.xlu0 %9145
      %9147 = vrot.lane.b32.xlu0 %v8646, 64
      %v9148 = vpop.permute.xlu0 %9147
      %9149 = vrot.lane.b32.xlu0 %v8647, 64
      %v9150 = vpop.permute.xlu0 %9149
      %9151 = vrot.lane.b32.xlu0 %v8648, 64
      %v9152 = vpop.permute.xlu0 %9151
      %9153 = vrot.lane.b32.xlu0 %v8649, 64
      %v9154 = vpop.permute.xlu0 %9153
      %9155 = vrot.lane.b32.xlu0 %v8650, 64
      %v9156 = vpop.permute.xlu0 %9155
      %9157 = vrot.lane.b32.xlu0 %v8651, 64
      %v9158 = vpop.permute.xlu0 %9157
      %9159 = vrot.lane.b32.xlu0 %v8652, 64
      %v9160 = vpop.permute.xlu0 %9159
      %9161 = vrot.lane.b32.xlu0 %v8653, 64
      %v9162 = vpop.permute.xlu0 %9161
      %9163 = vrot.lane.b32.xlu0 %v8654, 64
      %v9164 = vpop.permute.xlu0 %9163
      %9165 = vrot.lane.b32.xlu0 %v8655, 64
      %v9166 = vpop.permute.xlu0 %9165
      %9167 = vrot.lane.b32.xlu0 %v8656, 64
      %v9168 = vpop.permute.xlu0 %9167
      %v9201 = vsel %vm362, %v8401, %v8722
      %v9202 = vsel %vm362, %v8402, %v8724
      %v9203 = vsel %vm362, %v8403, %v8726
      %v9204 = vsel %vm362, %v8404, %v8728
      %v9205 = vsel %vm362, %v8405, %v8730
      %v9206 = vsel %vm362, %v8406, %v8732
      %v9207 = vsel %vm362, %v8407, %v8734
      %v9208 = vsel %vm362, %v8408, %v8736
      %v9209 = vsel %vm362, %v8409, %v8738
      %v9210 = vsel %vm362, %v8410, %v8740
      %v9211 = vsel %vm362, %v8411, %v8742
      %v9212 = vsel %vm362, %v8412, %v8744
      %v9213 = vsel %vm362, %v8413, %v8746
      %v9214 = vsel %vm362, %v8414, %v8748
      %v9215 = vsel %vm362, %v8415, %v8750
      %v9216 = vsel %vm362, %v8416, %v8752
      %v9217 = vsel %vm362, %v8417, %v8754
      %v9218 = vsel %vm362, %v8418, %v8756
      %v9219 = vsel %vm362, %v8419, %v8758
      %v9220 = vsel %vm362, %v8420, %v8760
      %v9221 = vsel %vm362, %v8421, %v8762
      %v9222 = vsel %vm362, %v8422, %v8764
      %v9223 = vsel %vm362, %v8423, %v8766
      %v9224 = vsel %vm362, %v8424, %v8768
      %v9225 = vsel %vm362, %v8425, %v8770
      %v9226 = vsel %vm362, %v8426, %v8772
      %v9227 = vsel %vm362, %v8427, %v8774
      %v9228 = vsel %vm362, %v8428, %v8776
      %v9229 = vsel %vm362, %v8429, %v8778
      %v9230 = vsel %vm362, %v8430, %v8780
      %v9231 = vsel %vm362, %v8431, %v8782
      %v9232 = vsel %vm362, %v8432, %v8784
      %v9233 = vsel %vm362, %v8465, %v8850
      %v9234 = vsel %vm362, %v8466, %v8852
      %v9235 = vsel %vm362, %v8467, %v8854
      %v9236 = vsel %vm362, %v8468, %v8856
      %v9237 = vsel %vm362, %v8469, %v8858
      %v9238 = vsel %vm362, %v8470, %v8860
      %v9239 = vsel %vm362, %v8471, %v8862
      %v9240 = vsel %vm362, %v8472, %v8864
      %v9241 = vsel %vm362, %v8473, %v8866
      %v9242 = vsel %vm362, %v8474, %v8868
      %v9243 = vsel %vm362, %v8475, %v8870
      %v9244 = vsel %vm362, %v8476, %v8872
      %v9245 = vsel %vm362, %v8477, %v8874
      %v9246 = vsel %vm362, %v8478, %v8876
      %v9247 = vsel %vm362, %v8479, %v8878
      %v9248 = vsel %vm362, %v8480, %v8880
      %v9249 = vsel %vm362, %v8481, %v8882
      %v9250 = vsel %vm362, %v8482, %v8884
      %v9251 = vsel %vm362, %v8483, %v8886
      %v9252 = vsel %vm362, %v8484, %v8888
      %v9253 = vsel %vm362, %v8485, %v8890
      %v9254 = vsel %vm362, %v8486, %v8892
      %v9255 = vsel %vm362, %v8487, %v8894
      %v9256 = vsel %vm362, %v8488, %v8896
      %v9257 = vsel %vm362, %v8489, %v8898
      %v9258 = vsel %vm362, %v8490, %v8900
      %v9259 = vsel %vm362, %v8491, %v8902
      %v9260 = vsel %vm362, %v8492, %v8904
      %v9261 = vsel %vm362, %v8493, %v8906
      %v9262 = vsel %vm362, %v8494, %v8908
      %v9263 = vsel %vm362, %v8495, %v8910
      %v9264 = vsel %vm362, %v8496, %v8912
      %v9265 = vsel %vm362, %v8529, %v8978
      %v9266 = vsel %vm362, %v8530, %v8980
      %v9267 = vsel %vm362, %v8531, %v8982
      %v9268 = vsel %vm362, %v8532, %v8984
      %v9269 = vsel %vm362, %v8533, %v8986
      %v9270 = vsel %vm362, %v8534, %v8988
      %v9271 = vsel %vm362, %v8535, %v8990
      %v9272 = vsel %vm362, %v8536, %v8992
      %v9273 = vsel %vm362, %v8537, %v8994
      %v9274 = vsel %vm362, %v8538, %v8996
      %v9275 = vsel %vm362, %v8539, %v8998
      %v9276 = vsel %vm362, %v8540, %v9000
      %v9277 = vsel %vm362, %v8541, %v9002
      %v9278 = vsel %vm362, %v8542, %v9004
      %v9279 = vsel %vm362, %v8543, %v9006
      %v9280 = vsel %vm362, %v8544, %v9008
      %v9281 = vsel %vm362, %v8545, %v9010
      %v9282 = vsel %vm362, %v8546, %v9012
      %v9283 = vsel %vm362, %v8547, %v9014
      %v9284 = vsel %vm362, %v8548, %v9016
      %v9285 = vsel %vm362, %v8549, %v9018
      %v9286 = vsel %vm362, %v8550, %v9020
      %v9287 = vsel %vm362, %v8551, %v9022
      %v9288 = vsel %vm362, %v8552, %v9024
      %v9289 = vsel %vm362, %v8553, %v9026
      %v9290 = vsel %vm362, %v8554, %v9028
      %v9291 = vsel %vm362, %v8555, %v9030
      %v9292 = vsel %vm362, %v8556, %v9032
      %v9293 = vsel %vm362, %v8557, %v9034
      %v9294 = vsel %vm362, %v8558, %v9036
      %v9295 = vsel %vm362, %v8559, %v9038
      %v9296 = vsel %vm362, %v8560, %v9040
      %v9297 = vsel %vm362, %v8593, %v9106
      %v9298 = vsel %vm362, %v8594, %v9108
      %v9299 = vsel %vm362, %v8595, %v9110
      %v9300 = vsel %vm362, %v8596, %v9112
      %v9301 = vsel %vm362, %v8597, %v9114
      %v9302 = vsel %vm362, %v8598, %v9116
      %v9303 = vsel %vm362, %v8599, %v9118
      %v9304 = vsel %vm362, %v8600, %v9120
      %v9305 = vsel %vm362, %v8601, %v9122
      %v9306 = vsel %vm362, %v8602, %v9124
      %v9307 = vsel %vm362, %v8603, %v9126
      %v9308 = vsel %vm362, %v8604, %v9128
      %v9309 = vsel %vm362, %v8605, %v9130
      %v9310 = vsel %vm362, %v8606, %v9132
      %v9311 = vsel %vm362, %v8607, %v9134
      %v9312 = vsel %vm362, %v8608, %v9136
      %v9313 = vsel %vm362, %v8609, %v9138
      %v9314 = vsel %vm362, %v8610, %v9140
      %v9315 = vsel %vm362, %v8611, %v9142
      %v9316 = vsel %vm362, %v8612, %v9144
      %v9317 = vsel %vm362, %v8613, %v9146
      %v9318 = vsel %vm362, %v8614, %v9148
      %v9319 = vsel %vm362, %v8615, %v9150
      %v9320 = vsel %vm362, %v8616, %v9152
      %v9321 = vsel %vm362, %v8617, %v9154
      %v9322 = vsel %vm362, %v8618, %v9156
      %v9323 = vsel %vm362, %v8619, %v9158
      %v9324 = vsel %vm362, %v8620, %v9160
      %v9325 = vsel %vm362, %v8621, %v9162
      %v9326 = vsel %vm362, %v8622, %v9164
      %v9327 = vsel %vm362, %v8623, %v9166
      %v9328 = vsel %vm362, %v8624, %v9168
      %v9329 = vld [vmem:[%s6] sm:$0xff]
      %v9330 = vld [vmem:[%s6 + $0x8] sm:$0xff]
      %v9331 = vld [vmem:[%s6 + $0x10] sm:$0xff]
      %v9332 = vld [vmem:[%s6 + $0x18] sm:$0xff]
      %v9333 = vld [vmem:[%s6 + $0x20] sm:$0xff]
      %v9334 = vld [vmem:[%s6 + $0x28] sm:$0xff]
      %v9335 = vld [vmem:[%s6 + $0x30] sm:$0xff]
      %v9336 = vld [vmem:[%s6 + $0x38] sm:$0xff]
      %v9337 = vld [vmem:[%s6 + $0x40] sm:$0xff]
      %v9338 = vld [vmem:[%s6 + $0x48] sm:$0xff]
      %v9339 = vld [vmem:[%s6 + $0x50] sm:$0xff]
      %v9340 = vld [vmem:[%s6 + $0x58] sm:$0xff]
      %v9341 = vld [vmem:[%s6 + $0x60] sm:$0xff]
      %v9342 = vld [vmem:[%s6 + $0x68] sm:$0xff]
      %v9343 = vld [vmem:[%s6 + $0x70] sm:$0xff]
      %v9344 = vld [vmem:[%s6 + $0x78] sm:$0xff]
      %v9345 = vld [vmem:[%s6 + $0x80] sm:$0xff]
      %v9346 = vld [vmem:[%s6 + $0x88] sm:$0xff]
      %v9347 = vld [vmem:[%s6 + $0x90] sm:$0xff]
      %v9348 = vld [vmem:[%s6 + $0x98] sm:$0xff]
      %v9349 = vld [vmem:[%s6 + $0xa0] sm:$0xff]
      %v9350 = vld [vmem:[%s6 + $0xa8] sm:$0xff]
      %v9351 = vld [vmem:[%s6 + $0xb0] sm:$0xff]
      %v9352 = vld [vmem:[%s6 + $0xb8] sm:$0xff]
      %v9353 = vld [vmem:[%s6 + $0xc0] sm:$0xff]
      %v9354 = vld [vmem:[%s6 + $0xc8] sm:$0xff]
      %v9355 = vld [vmem:[%s6 + $0xd0] sm:$0xff]
      %v9356 = vld [vmem:[%s6 + $0xd8] sm:$0xff]
      %v9357 = vld [vmem:[%s6 + $0xe0] sm:$0xff]
      %v9358 = vld [vmem:[%s6 + $0xe8] sm:$0xff]
      %v9359 = vld [vmem:[%s6 + $0xf0] sm:$0xff]
      %v9360 = vld [vmem:[%s6 + $0xf8] sm:$0xff]
      %v9361 = vld [vmem:[%s6 + $0x100] sm:$0xff]
      %v9362 = vld [vmem:[%s6 + $0x108] sm:$0xff]
      %v9363 = vld [vmem:[%s6 + $0x110] sm:$0xff]
      %v9364 = vld [vmem:[%s6 + $0x118] sm:$0xff]
      %v9365 = vld [vmem:[%s6 + $0x120] sm:$0xff]
      %v9366 = vld [vmem:[%s6 + $0x128] sm:$0xff]
      %v9367 = vld [vmem:[%s6 + $0x130] sm:$0xff]
      %v9368 = vld [vmem:[%s6 + $0x138] sm:$0xff]
      %v9369 = vld [vmem:[%s6 + $0x140] sm:$0xff]
      %v9370 = vld [vmem:[%s6 + $0x148] sm:$0xff]
      %v9371 = vld [vmem:[%s6 + $0x150] sm:$0xff]
      %v9372 = vld [vmem:[%s6 + $0x158] sm:$0xff]
      %v9373 = vld [vmem:[%s6 + $0x160] sm:$0xff]
      %v9374 = vld [vmem:[%s6 + $0x168] sm:$0xff]
      %v9375 = vld [vmem:[%s6 + $0x170] sm:$0xff]
      %v9376 = vld [vmem:[%s6 + $0x178] sm:$0xff]
      %v9377 = vld [vmem:[%s6 + $0x180] sm:$0xff]
      %v9378 = vld [vmem:[%s6 + $0x188] sm:$0xff]
      %v9379 = vld [vmem:[%s6 + $0x190] sm:$0xff]
      %v9380 = vld [vmem:[%s6 + $0x198] sm:$0xff]
      %v9381 = vld [vmem:[%s6 + $0x1a0] sm:$0xff]
      %v9382 = vld [vmem:[%s6 + $0x1a8] sm:$0xff]
      %v9383 = vld [vmem:[%s6 + $0x1b0] sm:$0xff]
      %v9384 = vld [vmem:[%s6 + $0x1b8] sm:$0xff]
      %v9385 = vld [vmem:[%s6 + $0x1c0] sm:$0xff]
      %v9386 = vld [vmem:[%s6 + $0x1c8] sm:$0xff]
      %v9387 = vld [vmem:[%s6 + $0x1d0] sm:$0xff]
      %v9388 = vld [vmem:[%s6 + $0x1d8] sm:$0xff]
      %v9389 = vld [vmem:[%s6 + $0x1e0] sm:$0xff]
      %v9390 = vld [vmem:[%s6 + $0x1e8] sm:$0xff]
      %v9391 = vld [vmem:[%s6 + $0x1f0] sm:$0xff]
      %v9392 = vld [vmem:[%s6 + $0x1f8] sm:$0xff]
      %v9393 = vld [vmem:[%s6 + $0x200] sm:$0xff]
      %v9394 = vld [vmem:[%s6 + $0x208] sm:$0xff]
      %v9395 = vld [vmem:[%s6 + $0x210] sm:$0xff]
      %v9396 = vld [vmem:[%s6 + $0x218] sm:$0xff]
      %v9397 = vld [vmem:[%s6 + $0x220] sm:$0xff]
      %v9398 = vld [vmem:[%s6 + $0x228] sm:$0xff]
      %v9399 = vld [vmem:[%s6 + $0x230] sm:$0xff]
      %v9400 = vld [vmem:[%s6 + $0x238] sm:$0xff]
      %v9402 = vsel %vm362, %v8657, 0
      %v9405 = vsel %vm362, %v8658, 0
      %v9408 = vsel %vm362, %v8659, 0
      %v9411 = vsel %vm362, %v8660, 0
      %v9414 = vsel %vm362, %v8661, 0
      %v9417 = vsel %vm362, %v8662, 0
      %v9420 = vsel %vm362, %v8663, 0
      %v9423 = vsel %vm362, %v8664, 0
      %v9426 = vsel %vm362, %v8665, 0
      %v9429 = vsel %vm362, %v8666, 0
      %v9432 = vsel %vm362, %v8667, 0
      %v9435 = vsel %vm362, %v8668, 0
      %v9438 = vsel %vm362, %v8669, 0
      %v9441 = vsel %vm362, %v8670, 0
      %v9444 = vsel %vm362, %v8671, 0
      %v9447 = vsel %vm362, %v8672, 0
      %v9450 = vsel %vm362, %v8673, 0
      %v9453 = vsel %vm362, %v8674, 0
      %v9456 = vsel %vm362, %v8675, 0
      %v9459 = vsel %vm362, %v8676, 0
      %v9462 = vsel %vm362, %v8677, 0
      %v9465 = vsel %vm362, %v8678, 0
      %v9468 = vsel %vm362, %v8679, 0
      %v9471 = vsel %vm362, %v8680, 0
      %v9474 = vsel %vm362, %v8681, 0
      %v9477 = vsel %vm362, %v8682, 0
      %v9480 = vsel %vm362, %v8683, 0
      %v9483 = vsel %vm362, %v8684, 0
      %v9486 = vsel %vm362, %v8685, 0
      %v9489 = vsel %vm362, %v8686, 0
      %v9492 = vsel %vm362, %v8687, 0
      %v9495 = vsel %vm362, %v8688, 0
      %9497 = vmatprep.subr.mxu0 0.0
      %9498 = vmatpush1.msra.mxu0 %v9329
      %9499 = vmatprep.subr.mxu0 0.0
      %9500 = vmatpush1.msra.mxu0 %v9330
      %9501 = vmatprep.subr.mxu0 0.0
      %9502 = vmatpush1.msra.mxu0 %v9331
      %9503 = vmatprep.subr.mxu0 0.0
      %9504 = vmatpush1.msra.mxu0 %v9332
      %9505 = vmatprep.subr.mxu0 0.0
      %9506 = vmatpush1.msra.mxu0 %v9333
      %9507 = vmatprep.subr.mxu0 0.0
      %9508 = vmatpush1.msra.mxu0 %v9334
      %9509 = vmatprep.subr.mxu0 0.0
      %9510 = vmatpush1.msra.mxu0 %v9335
      %9511 = vmatprep.subr.mxu0 0.0
      %9512 = vmatpush1.msra.mxu0 %v9336
      %9513 = vmatprep.subr.mxu0 0.0
      %9514 = vmatpush1.msra.mxu0 %v9337
      %9515 = vmatprep.subr.mxu0 0.0
      %9516 = vmatpush1.msra.mxu0 %v9338
      %9517 = vmatprep.subr.mxu0 0.0
      %9518 = vmatpush1.msra.mxu0 %v9339
      %9519 = vmatprep.subr.mxu0 0.0
      %9520 = vmatpush1.msra.mxu0 %v9340
      %9521 = vmatprep.subr.mxu0 0.0
      %9522 = vmatpush1.msra.mxu0 %v9341
      %9523 = vmatprep.subr.mxu0 0.0
      %9524 = vmatpush1.msra.mxu0 %v9342
      %9525 = vmatprep.subr.mxu0 0.0
      %9526 = vmatpush1.msra.mxu0 %v9343
      %9527 = vmatprep.subr.mxu0 0.0
      %9528 = vmatpush1.msra.mxu0 %v9344
      %9529 = vmatprep.subr.mxu0 0.0
      %9530 = vmatpush1.msra.mxu0 %v9345
      %9531 = vmatprep.subr.mxu0 0.0
      %9532 = vmatpush1.msra.mxu0 %v9346
      %9533 = vmatprep.subr.mxu0 0.0
      %9534 = vmatpush1.msra.mxu0 %v9347
      %9535 = vmatprep.subr.mxu0 0.0
      %9536 = vmatpush1.msra.mxu0 %v9348
      %9537 = vmatprep.subr.mxu0 0.0
      %9538 = vmatpush1.msra.mxu0 %v9349
      %9539 = vmatprep.subr.mxu0 0.0
      %9540 = vmatpush1.msra.mxu0 %v9350
      %9541 = vmatprep.subr.mxu0 0.0
      %9542 = vmatpush1.msra.mxu0 %v9351
      %9543 = vmatprep.subr.mxu0 0.0
      %9544 = vmatpush1.msra.mxu0 %v9352
      %9545 = vmatprep.subr.mxu0 0.0
      %9546 = vmatpush1.msra.mxu0 %v9353
      %9547 = vmatprep.subr.mxu0 0.0
      %9548 = vmatpush1.msra.mxu0 %v9354
      %9549 = vmatprep.subr.mxu0 0.0
      %9550 = vmatpush1.msra.mxu0 %v9355
      %9551 = vmatprep.subr.mxu0 0.0
      %9552 = vmatpush1.msra.mxu0 %v9356
      %9553 = vmatprep.subr.mxu0 0.0
      %9554 = vmatpush1.msra.mxu0 %v9357
      %9555 = vmatprep.subr.mxu0 0.0
      %9556 = vmatpush1.msra.mxu0 %v9358
      %9557 = vmatprep.subr.mxu0 0.0
      %9558 = vmatpush1.msra.mxu0 %v9359
      %9559 = vmatprep.subr.mxu0 0.0
      %9560 = vmatpush1.msra.mxu0 %v9360
      %9561 = vmatprep.mubr.f32.mxu0 %v9233
      %9562 = vmatmul.mubr.f32.gmra.mrb[0].mxu0 %v9201
      %v9563 = vpop.f32.mrb[0].mxu0
      %v9564 = vadd.f32 0.0, %v9563
      %v9565 = vpop.f32.mrb[0].mxu0
      %9566 = vmatprep.mubr.f32.mxu0 %v9234
      %9567 = vmatmul.mubr.f32.gmra.mrb[0].mxu0 %v9202
      %v9568 = vpop.f32.mrb[0].mxu0
      %v9569 = vadd.f32 0.0, %v9568
      %v9570 = vpop.f32.mrb[0].mxu0
      %9571 = vmatprep.mubr.f32.mxu0 %v9235
      %9572 = vmatmul.mubr.f32.gmra.mrb[0].mxu0 %v9203
      %v9573 = vpop.f32.mrb[0].mxu0
      %v9574 = vadd.f32 0.0, %v9573
      %v9575 = vpop.f32.mrb[0].mxu0
      %9576 = vmatprep.mubr.f32.mxu0 %v9236
      %9577 = vmatmul.mubr.f32.gmra.mrb[0].mxu0 %v9204
      %v9578 = vpop.f32.mrb[0].mxu0
      %v9579 = vadd.f32 0.0, %v9578
      %v9580 = vpop.f32.mrb[0].mxu0
      %9581 = vmatprep.mubr.f32.mxu0 %v9237
      %9582 = vmatmul.mubr.f32.gmra.mrb[0].mxu0 %v9205
      %v9583 = vpop.f32.mrb[0].mxu0
      %v9584 = vadd.f32 0.0, %v9583
      %v9585 = vpop.f32.mrb[0].mxu0
      %9586 = vmatprep.mubr.f32.mxu0 %v9238
      %9587 = vmatmul.mubr.f32.gmra.mrb[0].mxu0 %v9206
      %v9588 = vpop.f32.mrb[0].mxu0
      %v9589 = vadd.f32 0.0, %v9588
      %v9590 = vpop.f32.mrb[0].mxu0
      %9591 = vmatprep.mubr.f32.mxu0 %v9239
      %9592 = vmatmul.mubr.f32.gmra.mrb[0].mxu0 %v9207
      %v9593 = vpop.f32.mrb[0].mxu0
      %v9594 = vadd.f32 0.0, %v9593
      %v9595 = vpop.f32.mrb[0].mxu0
      %9596 = vmatprep.mubr.f32.mxu0 %v9240
      %9597 = vmatmul.mubr.f32.gmra.mrb[0].mxu0 %v9208
      %v9598 = vpop.f32.mrb[0].mxu0
      %v9599 = vadd.f32 0.0, %v9598
      %v9600 = vpop.f32.mrb[0].mxu0
      %9601 = vmatprep.mubr.f32.mxu0 %v9241
      %9602 = vmatmul.mubr.f32.gmra.mrb[0].mxu0 %v9209
      %v9603 = vpop.f32.mrb[0].mxu0
      %v9604 = vadd.f32 0.0, %v9603
      %v9605 = vpop.f32.mrb[0].mxu0
      %9606 = vmatprep.mubr.f32.mxu0 %v9242
      %9607 = vmatmul.mubr.f32.gmra.mrb[0].mxu0 %v9210
      %v9608 = vpop.f32.mrb[0].mxu0
      %v9609 = vadd.f32 0.0, %v9608
      %v9610 = vpop.f32.mrb[0].mxu0
      %9611 = vmatprep.mubr.f32.mxu0 %v9243
      %9612 = vmatmul.mubr.f32.gmra.mrb[0].mxu0 %v9211
      %v9613 = vpop.f32.mrb[0].mxu0
      %v9614 = vadd.f32 0.0, %v9613
      %v9615 = vpop.f32.mrb[0].mxu0
      %9616 = vmatprep.mubr.f32.mxu0 %v9244
      %9617 = vmatmul.mubr.f32.gmra.mrb[0].mxu0 %v9212
      %v9618 = vpop.f32.mrb[0].mxu0
      %v9619 = vadd.f32 0.0, %v9618
      %v9620 = vpop.f32.mrb[0].mxu0
      %9621 = vmatprep.mubr.f32.mxu0 %v9245
      %9622 = vmatmul.mubr.f32.gmra.mrb[0].mxu0 %v9213
      %v9623 = vpop.f32.mrb[0].mxu0
      %v9624 = vadd.f32 0.0, %v9623
      %v9625 = vpop.f32.mrb[0].mxu0
      %9626 = vmatprep.mubr.f32.mxu0 %v9246
      %9627 = vmatmul.mubr.f32.gmra.mrb[0].mxu0 %v9214
      %v9628 = vpop.f32.mrb[0].mxu0
      %v9629 = vadd.f32 0.0, %v9628
      %v9630 = vpop.f32.mrb[0].mxu0
      %9631 = vmatprep.mubr.f32.mxu0 %v9247
      %9632 = vmatmul.mubr.f32.gmra.mrb[0].mxu0 %v9215
      %v9633 = vpop.f32.mrb[0].mxu0
      %v9634 = vadd.f32 0.0, %v9633
      %v9635 = vpop.f32.mrb[0].mxu0
      %9636 = vmatprep.mubr.f32.mxu0 %v9248
      %9637 = vmatmul.mubr.f32.gmra.mrb[0].mxu0 %v9216
      %v9638 = vpop.f32.mrb[0].mxu0
      %v9639 = vadd.f32 0.0, %v9638
      %v9640 = vpop.f32.mrb[0].mxu0
      %9641 = vmatprep.mubr.f32.mxu0 %v9249
      %9642 = vmatmul.mubr.f32.gmra.mrb[0].mxu0 %v9217
      %v9643 = vpop.f32.mrb[0].mxu0
      %v9644 = vadd.f32 0.0, %v9643
      %v9645 = vpop.f32.mrb[0].mxu0
      %9646 = vmatprep.mubr.f32.mxu0 %v9250
      %9647 = vmatmul.mubr.f32.gmra.mrb[0].mxu0 %v9218
      %v9648 = vpop.f32.mrb[0].mxu0
      %v9649 = vadd.f32 0.0, %v9648
      %v9650 = vpop.f32.mrb[0].mxu0
      %9651 = vmatprep.mubr.f32.mxu0 %v9251
      %9652 = vmatmul.mubr.f32.gmra.mrb[0].mxu0 %v9219
      %v9653 = vpop.f32.mrb[0].mxu0
      %v9654 = vadd.f32 0.0, %v9653
      %v9655 = vpop.f32.mrb[0].mxu0
      %9656 = vmatprep.mubr.f32.mxu0 %v9252
      %9657 = vmatmul.mubr.f32.gmra.mrb[0].mxu0 %v9220
      %v9658 = vpop.f32.mrb[0].mxu0
      %v9659 = vadd.f32 0.0, %v9658
      %v9660 = vpop.f32.mrb[0].mxu0
      %9661 = vmatprep.mubr.f32.mxu0 %v9253
      %9662 = vmatmul.mubr.f32.gmra.mrb[0].mxu0 %v9221
      %v9663 = vpop.f32.mrb[0].mxu0
      %v9664 = vadd.f32 0.0, %v9663
      %v9665 = vpop.f32.mrb[0].mxu0
      %9666 = vmatprep.mubr.f32.mxu0 %v9254
      %9667 = vmatmul.mubr.f32.gmra.mrb[0].mxu0 %v9222
      %v9668 = vpop.f32.mrb[0].mxu0
      %v9669 = vadd.f32 0.0, %v9668
      %v9670 = vpop.f32.mrb[0].mxu0
      %9671 = vmatprep.mubr.f32.mxu0 %v9255
      %9672 = vmatmul.mubr.f32.gmra.mrb[0].mxu0 %v9223
      %v9673 = vpop.f32.mrb[0].mxu0
      %v9674 = vadd.f32 0.0, %v9673
      %v9675 = vpop.f32.mrb[0].mxu0
      %9676 = vmatprep.mubr.f32.mxu0 %v9256
      %9677 = vmatmul.mubr.f32.gmra.mrb[0].mxu0 %v9224
      %v9678 = vpop.f32.mrb[0].mxu0
      %v9679 = vadd.f32 0.0, %v9678
      %v9680 = vpop.f32.mrb[0].mxu0
      %9681 = vmatprep.mubr.f32.mxu0 %v9257
      %9682 = vmatmul.mubr.f32.gmra.mrb[0].mxu0 %v9225
      %v9683 = vpop.f32.mrb[0].mxu0
      %v9684 = vadd.f32 0.0, %v9683
      %v9685 = vpop.f32.mrb[0].mxu0
      %9686 = vmatprep.mubr.f32.mxu0 %v9258
      %9687 = vmatmul.mubr.f32.gmra.mrb[0].mxu0 %v9226
      %v9688 = vpop.f32.mrb[0].mxu0
      %v9689 = vadd.f32 0.0, %v9688
      %v9690 = vpop.f32.mrb[0].mxu0
      %9691 = vmatprep.mubr.f32.mxu0 %v9259
      %9692 = vmatmul.mubr.f32.gmra.mrb[0].mxu0 %v9227
      %v9693 = vpop.f32.mrb[0].mxu0
      %v9694 = vadd.f32 0.0, %v9693
      %v9695 = vpop.f32.mrb[0].mxu0
      %9696 = vmatprep.mubr.f32.mxu0 %v9260
      %9697 = vmatmul.mubr.f32.gmra.mrb[0].mxu0 %v9228
      %v9698 = vpop.f32.mrb[0].mxu0
      %v9699 = vadd.f32 0.0, %v9698
      %v9700 = vpop.f32.mrb[0].mxu0
      %9701 = vmatprep.mubr.f32.mxu0 %v9261
      %9702 = vmatmul.mubr.f32.gmra.mrb[0].mxu0 %v9229
      %v9703 = vpop.f32.mrb[0].mxu0
      %v9704 = vadd.f32 0.0, %v9703
      %v9705 = vpop.f32.mrb[0].mxu0
      %9706 = vmatprep.mubr.f32.mxu0 %v9262
      %9707 = vmatmul.mubr.f32.gmra.mrb[0].mxu0 %v9230
      %v9708 = vpop.f32.mrb[0].mxu0
      %v9709 = vadd.f32 0.0, %v9708
      %v9710 = vpop.f32.mrb[0].mxu0
      %9711 = vmatprep.mubr.f32.mxu0 %v9263
      %9712 = vmatmul.mubr.f32.gmra.mrb[0].mxu0 %v9231
      %v9713 = vpop.f32.mrb[0].mxu0
      %v9714 = vadd.f32 0.0, %v9713
      %v9715 = vpop.f32.mrb[0].mxu0
      %9716 = vmatprep.mubr.f32.mxu0 %v9264
      %9717 = vmatmul.mubr.f32.gmra.mrb[0].mxu0 %v9232
      %v9718 = vpop.f32.mrb[0].mxu0
      %v9719 = vadd.f32 0.0, %v9718
      %v9720 = vpop.f32.mrb[0].mxu0
      %9721 = vdwg.mxu0
      %9722 = vmatprep.subr.mxu0 0.0
      %9723 = vmatpush1.msra.mxu0 %v9361
      %9724 = vmatprep.subr.mxu0 0.0
      %9725 = vmatpush1.msra.mxu0 %v9362
      %9726 = vmatprep.subr.mxu0 0.0
      %9727 = vmatpush1.msra.mxu0 %v9363
      %9728 = vmatprep.subr.mxu0 0.0
      %9729 = vmatpush1.msra.mxu0 %v9364
      %9730 = vmatprep.subr.mxu0 0.0
      %9731 = vmatpush1.msra.mxu0 %v9365
      %9732 = vmatprep.subr.mxu0 0.0
      %9733 = vmatpush1.msra.mxu0 %v9366
      %9734 = vmatprep.subr.mxu0 0.0
      %9735 = vmatpush1.msra.mxu0 %v9367
      %9736 = vmatprep.subr.mxu0 0.0
      %9737 = vmatpush1.msra.mxu0 %v9368
      %9738 = vmatprep.subr.mxu0 0.0
      %9739 = vmatpush1.msra.mxu0 %v9369
      %9740 = vmatprep.subr.mxu0 0.0
      %9741 = vmatpush1.msra.mxu0 %v9370
      %9742 = vmatprep.subr.mxu0 0.0
      %9743 = vmatpush1.msra.mxu0 %v9371
      %9744 = vmatprep.subr.mxu0 0.0
      %9745 = vmatpush1.msra.mxu0 %v9372
      %9746 = vmatprep.subr.mxu0 0.0
      %9747 = vmatpush1.msra.mxu0 %v9373
      %9748 = vmatprep.subr.mxu0 0.0
      %9749 = vmatpush1.msra.mxu0 %v9374
      %9750 = vmatprep.subr.mxu0 0.0
      %9751 = vmatpush1.msra.mxu0 %v9375
      %9752 = vmatprep.subr.mxu0 0.0
      %9753 = vmatpush1.msra.mxu0 %v9376
      %9754 = vmatprep.subr.mxu0 0.0
      %9755 = vmatpush1.msra.mxu0 %v9377
      %9756 = vmatprep.subr.mxu0 0.0
      %9757 = vmatpush1.msra.mxu0 %v9378
      %9758 = vmatprep.subr.mxu0 0.0
      %9759 = vmatpush1.msra.mxu0 %v9379
      %9760 = vmatprep.subr.mxu0 0.0
      %9761 = vmatpush1.msra.mxu0 %v9380
      %9762 = vmatprep.subr.mxu0 0.0
      %9763 = vmatpush1.msra.mxu0 %v9381
      %9764 = vmatprep.subr.mxu0 0.0
      %9765 = vmatpush1.msra.mxu0 %v9382
      %9766 = vmatprep.subr.mxu0 0.0
      %9767 = vmatpush1.msra.mxu0 %v9383
      %9768 = vmatprep.subr.mxu0 0.0
      %9769 = vmatpush1.msra.mxu0 %v9384
      %9770 = vmatprep.subr.mxu0 0.0
      %9771 = vmatpush1.msra.mxu0 %v9385
      %9772 = vmatprep.subr.mxu0 0.0
      %9773 = vmatpush1.msra.mxu0 %v9386
      %9774 = vmatprep.subr.mxu0 0.0
      %9775 = vmatpush1.msra.mxu0 %v9387
      %9776 = vmatprep.subr.mxu0 0.0
      %9777 = vmatpush1.msra.mxu0 %v9388
      %9778 = vmatprep.subr.mxu0 0.0
      %9779 = vmatpush1.msra.mxu0 %v9389
      %9780 = vmatprep.subr.mxu0 0.0
      %9781 = vmatpush1.msra.mxu0 %v9390
      %9782 = vmatprep.subr.mxu0 0.0
      %9783 = vmatpush1.msra.mxu0 %v9391
      %9784 = vmatprep.subr.mxu0 0.0
      %9785 = vmatpush1.msra.mxu0 %v9392
      %9786 = vmatprep.mubr.f32.mxu0 %v9297
      %9787 = vmatmul.mubr.f32.gmra.mrb[0].mxu0 %v9265
      %v9788 = vpop.f32.mrb[0].mxu0
      %v9789 = vadd.f32 %v9564, %v9788
      %v9790 = vpop.f32.mrb[0].mxu0
      %9791 = vmatprep.mubr.f32.mxu0 %v9298
      %9792 = vmatmul.mubr.f32.gmra.mrb[0].mxu0 %v9266
      %v9793 = vpop.f32.mrb[0].mxu0
      %v9794 = vadd.f32 %v9569, %v9793
      %v9795 = vpop.f32.mrb[0].mxu0
      %9796 = vmatprep.mubr.f32.mxu0 %v9299
      %9797 = vmatmul.mubr.f32.gmra.mrb[0].mxu0 %v9267
      %v9798 = vpop.f32.mrb[0].mxu0
      %v9799 = vadd.f32 %v9574, %v9798
      %v9800 = vpop.f32.mrb[0].mxu0
      %9801 = vmatprep.mubr.f32.mxu0 %v9300
      %9802 = vmatmul.mubr.f32.gmra.mrb[0].mxu0 %v9268
      %v9803 = vpop.f32.mrb[0].mxu0
      %v9804 = vadd.f32 %v9579, %v9803
      %v9805 = vpop.f32.mrb[0].mxu0
      %9806 = vmatprep.mubr.f32.mxu0 %v9301
      %9807 = vmatmul.mubr.f32.gmra.mrb[0].mxu0 %v9269
      %v9808 = vpop.f32.mrb[0].mxu0
      %v9809 = vadd.f32 %v9584, %v9808
      %v9810 = vpop.f32.mrb[0].mxu0
      %9811 = vmatprep.mubr.f32.mxu0 %v9302
      %9812 = vmatmul.mubr.f32.gmra.mrb[0].mxu0 %v9270
      %v9813 = vpop.f32.mrb[0].mxu0
      %v9814 = vadd.f32 %v9589, %v9813
      %v9815 = vpop.f32.mrb[0].mxu0
      %9816 = vmatprep.mubr.f32.mxu0 %v9303
      %9817 = vmatmul.mubr.f32.gmra.mrb[0].mxu0 %v9271
      %v9818 = vpop.f32.mrb[0].mxu0
      %v9819 = vadd.f32 %v9594, %v9818
      %v9820 = vpop.f32.mrb[0].mxu0
      %9821 = vmatprep.mubr.f32.mxu0 %v9304
      %9822 = vmatmul.mubr.f32.gmra.mrb[0].mxu0 %v9272
      %v9823 = vpop.f32.mrb[0].mxu0
      %v9824 = vadd.f32 %v9599, %v9823
      %v9825 = vpop.f32.mrb[0].mxu0
      %9826 = vmatprep.mubr.f32.mxu0 %v9305
      %9827 = vmatmul.mubr.f32.gmra.mrb[0].mxu0 %v9273
      %v9828 = vpop.f32.mrb[0].mxu0
      %v9829 = vadd.f32 %v9604, %v9828
      %v9830 = vpop.f32.mrb[0].mxu0
      %9831 = vmatprep.mubr.f32.mxu0 %v9306
      %9832 = vmatmul.mubr.f32.gmra.mrb[0].mxu0 %v9274
      %v9833 = vpop.f32.mrb[0].mxu0
      %v9834 = vadd.f32 %v9609, %v9833
      %v9835 = vpop.f32.mrb[0].mxu0
      %9836 = vmatprep.mubr.f32.mxu0 %v9307
      %9837 = vmatmul.mubr.f32.gmra.mrb[0].mxu0 %v9275
      %v9838 = vpop.f32.mrb[0].mxu0
      %v9839 = vadd.f32 %v9614, %v9838
      %v9840 = vpop.f32.mrb[0].mxu0
      %9841 = vmatprep.mubr.f32.mxu0 %v9308
      %9842 = vmatmul.mubr.f32.gmra.mrb[0].mxu0 %v9276
      %v9843 = vpop.f32.mrb[0].mxu0
      %v9844 = vadd.f32 %v9619, %v9843
      %v9845 = vpop.f32.mrb[0].mxu0
      %9846 = vmatprep.mubr.f32.mxu0 %v9309
      %9847 = vmatmul.mubr.f32.gmra.mrb[0].mxu0 %v9277
      %v9848 = vpop.f32.mrb[0].mxu0
      %v9849 = vadd.f32 %v9624, %v9848
      %v9850 = vpop.f32.mrb[0].mxu0
      %9851 = vmatprep.mubr.f32.mxu0 %v9310
      %9852 = vmatmul.mubr.f32.gmra.mrb[0].mxu0 %v9278
      %v9853 = vpop.f32.mrb[0].mxu0
      %v9854 = vadd.f32 %v9629, %v9853
      %v9855 = vpop.f32.mrb[0].mxu0
      %9856 = vmatprep.mubr.f32.mxu0 %v9311
      %9857 = vmatmul.mubr.f32.gmra.mrb[0].mxu0 %v9279
      %v9858 = vpop.f32.mrb[0].mxu0
      %v9859 = vadd.f32 %v9634, %v9858
      %v9860 = vpop.f32.mrb[0].mxu0
      %9861 = vmatprep.mubr.f32.mxu0 %v9312
      %9862 = vmatmul.mubr.f32.gmra.mrb[0].mxu0 %v9280
      %v9863 = vpop.f32.mrb[0].mxu0
      %v9864 = vadd.f32 %v9639, %v9863
      %v9865 = vpop.f32.mrb[0].mxu0
      %9866 = vmatprep.mubr.f32.mxu0 %v9313
      %9867 = vmatmul.mubr.f32.gmra.mrb[0].mxu0 %v9281
      %v9868 = vpop.f32.mrb[0].mxu0
      %v9869 = vadd.f32 %v9644, %v9868
      %v9870 = vpop.f32.mrb[0].mxu0
      %9871 = vmatprep.mubr.f32.mxu0 %v9314
      %9872 = vmatmul.mubr.f32.gmra.mrb[0].mxu0 %v9282
      %v9873 = vpop.f32.mrb[0].mxu0
      %v9874 = vadd.f32 %v9649, %v9873
      %v9875 = vpop.f32.mrb[0].mxu0
      %9876 = vmatprep.mubr.f32.mxu0 %v9315
      %9877 = vmatmul.mubr.f32.gmra.mrb[0].mxu0 %v9283
      %v9878 = vpop.f32.mrb[0].mxu0
      %v9879 = vadd.f32 %v9654, %v9878
      %v9880 = vpop.f32.mrb[0].mxu0
      %9881 = vmatprep.mubr.f32.mxu0 %v9316
      %9882 = vmatmul.mubr.f32.gmra.mrb[0].mxu0 %v9284
      %v9883 = vpop.f32.mrb[0].mxu0
      %v9884 = vadd.f32 %v9659, %v9883
      %v9885 = vpop.f32.mrb[0].mxu0
      %9886 = vmatprep.mubr.f32.mxu0 %v9317
      %9887 = vmatmul.mubr.f32.gmra.mrb[0].mxu0 %v9285
      %v9888 = vpop.f32.mrb[0].mxu0
      %v9889 = vadd.f32 %v9664, %v9888
      %v9890 = vpop.f32.mrb[0].mxu0
      %9891 = vmatprep.mubr.f32.mxu0 %v9318
      %9892 = vmatmul.mubr.f32.gmra.mrb[0].mxu0 %v9286
      %v9893 = vpop.f32.mrb[0].mxu0
      %v9894 = vadd.f32 %v9669, %v9893
      %v9895 = vpop.f32.mrb[0].mxu0
      %9896 = vmatprep.mubr.f32.mxu0 %v9319
      %9897 = vmatmul.mubr.f32.gmra.mrb[0].mxu0 %v9287
      %v9898 = vpop.f32.mrb[0].mxu0
      %v9899 = vadd.f32 %v9674, %v9898
      %v9900 = vpop.f32.mrb[0].mxu0
      %9901 = vmatprep.mubr.f32.mxu0 %v9320
      %9902 = vmatmul.mubr.f32.gmra.mrb[0].mxu0 %v9288
      %v9903 = vpop.f32.mrb[0].mxu0
      %v9904 = vadd.f32 %v9679, %v9903
      %v9905 = vpop.f32.mrb[0].mxu0
      %9906 = vmatprep.mubr.f32.mxu0 %v9321
      %9907 = vmatmul.mubr.f32.gmra.mrb[0].mxu0 %v9289
      %v9908 = vpop.f32.mrb[0].mxu0
      %v9909 = vadd.f32 %v9684, %v9908
      %v9910 = vpop.f32.mrb[0].mxu0
      %9911 = vmatprep.mubr.f32.mxu0 %v9322
      %9912 = vmatmul.mubr.f32.gmra.mrb[0].mxu0 %v9290
      %v9913 = vpop.f32.mrb[0].mxu0
      %v9914 = vadd.f32 %v9689, %v9913
      %v9915 = vpop.f32.mrb[0].mxu0
      %9916 = vmatprep.mubr.f32.mxu0 %v9323
      %9917 = vmatmul.mubr.f32.gmra.mrb[0].mxu0 %v9291
      %v9918 = vpop.f32.mrb[0].mxu0
      %v9919 = vadd.f32 %v9694, %v9918
      %v9920 = vpop.f32.mrb[0].mxu0
      %9921 = vmatprep.mubr.f32.mxu0 %v9324
      %9922 = vmatmul.mubr.f32.gmra.mrb[0].mxu0 %v9292
      %v9923 = vpop.f32.mrb[0].mxu0
      %v9924 = vadd.f32 %v9699, %v9923
      %v9925 = vpop.f32.mrb[0].mxu0
      %9926 = vmatprep.mubr.f32.mxu0 %v9325
      %9927 = vmatmul.mubr.f32.gmra.mrb[0].mxu0 %v9293
      %v9928 = vpop.f32.mrb[0].mxu0
      %v9929 = vadd.f32 %v9704, %v9928
      %v9930 = vpop.f32.mrb[0].mxu0
      %9931 = vmatprep.mubr.f32.mxu0 %v9326
      %9932 = vmatmul.mubr.f32.gmra.mrb[0].mxu0 %v9294
      %v9933 = vpop.f32.mrb[0].mxu0
      %v9934 = vadd.f32 %v9709, %v9933
      %v9935 = vpop.f32.mrb[0].mxu0
      %9936 = vmatprep.mubr.f32.mxu0 %v9327
      %9937 = vmatmul.mubr.f32.gmra.mrb[0].mxu0 %v9295
      %v9938 = vpop.f32.mrb[0].mxu0
      %v9939 = vadd.f32 %v9714, %v9938
      %v9940 = vpop.f32.mrb[0].mxu0
      %9941 = vmatprep.mubr.f32.mxu0 %v9328
      %9942 = vmatmul.mubr.f32.gmra.mrb[0].mxu0 %v9296
      %v9943 = vpop.f32.mrb[0].mxu0
      %v9944 = vadd.f32 %v9719, %v9943
      %v9945 = vpop.f32.mrb[0].mxu0
      %9946 = vdwg.mxu0
      %9947 = vmatprep.subr.mxu0 0.0
      %9948 = vmatpush1.msra.mxu0 %v9393
      %9949 = vmatprep.subr.mxu0 0.0
      %9950 = vmatpush1.msra.mxu0 %v9394
      %9951 = vmatprep.subr.mxu0 0.0
      %9952 = vmatpush1.msra.mxu0 %v9395
      %9953 = vmatprep.subr.mxu0 0.0
      %9954 = vmatpush1.msra.mxu0 %v9396
      %9955 = vmatprep.subr.mxu0 0.0
      %9956 = vmatpush1.msra.mxu0 %v9397
      %9957 = vmatprep.subr.mxu0 0.0
      %9958 = vmatpush1.msra.mxu0 %v9398
      %9959 = vmatprep.subr.mxu0 0.0
      %9960 = vmatpush1.msra.mxu0 %v9399
      %9961 = vmatprep.subr.mxu0 0.0
      %9962 = vmatpush1.msra.mxu0 %v9400
      %9963 = vmatprep.subr.mxu0 0.0
      %9964 = vmatpush1.msra.mxu0 0.0
      %9965 = vmatprep.subr.mxu0 0.0
      %9966 = vmatpush1.msra.mxu0 0.0
      %9967 = vmatprep.subr.mxu0 0.0
      %9968 = vmatpush1.msra.mxu0 0.0
      %9969 = vmatprep.subr.mxu0 0.0
      %9970 = vmatpush1.msra.mxu0 0.0
      %9971 = vmatprep.subr.mxu0 0.0
      %9972 = vmatpush1.msra.mxu0 0.0
      %9973 = vmatprep.subr.mxu0 0.0
      %9974 = vmatpush1.msra.mxu0 0.0
      %9975 = vmatprep.subr.mxu0 0.0
      %9976 = vmatpush1.msra.mxu0 0.0
      %9977 = vmatprep.subr.mxu0 0.0
      %9978 = vmatpush1.msra.mxu0 0.0
      %9979 = vmatprep.subr.mxu0 0.0
      %9980 = vmatpush1.msra.mxu0 0.0
      %9981 = vmatprep.subr.mxu0 0.0
      %9982 = vmatpush1.msra.mxu0 0.0
      %9983 = vmatprep.subr.mxu0 0.0
      %9984 = vmatpush1.msra.mxu0 0.0
      %9985 = vmatprep.subr.mxu0 0.0
      %9986 = vmatpush1.msra.mxu0 0.0
      %9987 = vmatprep.subr.mxu0 0.0
      %9988 = vmatpush1.msra.mxu0 0.0
      %9989 = vmatprep.subr.mxu0 0.0
      %9990 = vmatpush1.msra.mxu0 0.0
      %9991 = vmatprep.subr.mxu0 0.0
      %9992 = vmatpush1.msra.mxu0 0.0
      %9993 = vmatprep.subr.mxu0 0.0
      %9994 = vmatpush1.msra.mxu0 0.0
      %9995 = vmatprep.subr.mxu0 0.0
      %9996 = vmatpush1.msra.mxu0 0.0
      %9997 = vmatprep.subr.mxu0 0.0
      %9998 = vmatpush1.msra.mxu0 0.0
      %9999 = vmatprep.subr.mxu0 0.0
      %10000 = vmatpush1.msra.mxu0 0.0
      %10001 = vmatprep.subr.mxu0 0.0
      %10002 = vmatpush1.msra.mxu0 0.0
      %10003 = vmatprep.subr.mxu0 0.0
      %10004 = vmatpush1.msra.mxu0 0.0
      %10005 = vmatprep.subr.mxu0 0.0
      %10006 = vmatpush1.msra.mxu0 0.0
      %10007 = vmatprep.subr.mxu0 0.0
      %10008 = vmatpush1.msra.mxu0 0.0
      %10009 = vmatprep.subr.mxu0 0.0
      %10010 = vmatpush1.msra.mxu0 0.0
      %10011 = vmatprep.mubr.f32.mxu0 0.0
      %10012 = vmatmul.mubr.f32.gmra.mrb[0].mxu0 %v9402
      %v10013 = vpop.f32.mrb[0].mxu0
      %v10014 = vadd.f32 %v9789, %v10013
      %v10015 = vpop.f32.mrb[0].mxu0
      %10016 = vmatprep.mubr.f32.mxu0 0.0
      %10017 = vmatmul.mubr.f32.gmra.mrb[0].mxu0 %v9405
      %v10018 = vpop.f32.mrb[0].mxu0
      %v10019 = vadd.f32 %v9794, %v10018
      %v10020 = vpop.f32.mrb[0].mxu0
      %10021 = vmatprep.mubr.f32.mxu0 0.0
      %10022 = vmatmul.mubr.f32.gmra.mrb[0].mxu0 %v9408
      %v10023 = vpop.f32.mrb[0].mxu0
      %v10024 = vadd.f32 %v9799, %v10023
      %v10025 = vpop.f32.mrb[0].mxu0
      %10026 = vmatprep.mubr.f32.mxu0 0.0
      %10027 = vmatmul.mubr.f32.gmra.mrb[0].mxu0 %v9411
      %v10028 = vpop.f32.mrb[0].mxu0
      %v10029 = vadd.f32 %v9804, %v10028
      %v10030 = vpop.f32.mrb[0].mxu0
      %10031 = vmatprep.mubr.f32.mxu0 0.0
      %10032 = vmatmul.mubr.f32.gmra.mrb[0].mxu0 %v9414
      %v10033 = vpop.f32.mrb[0].mxu0
      %v10034 = vadd.f32 %v9809, %v10033
      %v10035 = vpop.f32.mrb[0].mxu0
      %10036 = vmatprep.mubr.f32.mxu0 0.0
      %10037 = vmatmul.mubr.f32.gmra.mrb[0].mxu0 %v9417
      %v10038 = vpop.f32.mrb[0].mxu0
      %v10039 = vadd.f32 %v9814, %v10038
      %v10040 = vpop.f32.mrb[0].mxu0
      %10041 = vmatprep.mubr.f32.mxu0 0.0
      %10042 = vmatmul.mubr.f32.gmra.mrb[0].mxu0 %v9420
      %v10043 = vpop.f32.mrb[0].mxu0
      %v10044 = vadd.f32 %v9819, %v10043
      %v10045 = vpop.f32.mrb[0].mxu0
      %10046 = vmatprep.mubr.f32.mxu0 0.0
      %10047 = vmatmul.mubr.f32.gmra.mrb[0].mxu0 %v9423
      %v10048 = vpop.f32.mrb[0].mxu0
      %v10049 = vadd.f32 %v9824, %v10048
      %v10050 = vpop.f32.mrb[0].mxu0
      %10051 = vmatprep.mubr.f32.mxu0 0.0
      %10052 = vmatmul.mubr.f32.gmra.mrb[0].mxu0 %v9426
      %v10053 = vpop.f32.mrb[0].mxu0
      %v10054 = vadd.f32 %v9829, %v10053
      %v10055 = vpop.f32.mrb[0].mxu0
      %10056 = vmatprep.mubr.f32.mxu0 0.0
      %10057 = vmatmul.mubr.f32.gmra.mrb[0].mxu0 %v9429
      %v10058 = vpop.f32.mrb[0].mxu0
      %v10059 = vadd.f32 %v9834, %v10058
      %v10060 = vpop.f32.mrb[0].mxu0
      %10061 = vmatprep.mubr.f32.mxu0 0.0
      %10062 = vmatmul.mubr.f32.gmra.mrb[0].mxu0 %v9432
      %v10063 = vpop.f32.mrb[0].mxu0
      %v10064 = vadd.f32 %v9839, %v10063
      %v10065 = vpop.f32.mrb[0].mxu0
      %10066 = vmatprep.mubr.f32.mxu0 0.0
      %10067 = vmatmul.mubr.f32.gmra.mrb[0].mxu0 %v9435
      %v10068 = vpop.f32.mrb[0].mxu0
      %v10069 = vadd.f32 %v9844, %v10068
      %v10070 = vpop.f32.mrb[0].mxu0
      %10071 = vmatprep.mubr.f32.mxu0 0.0
      %10072 = vmatmul.mubr.f32.gmra.mrb[0].mxu0 %v9438
      %v10073 = vpop.f32.mrb[0].mxu0
      %v10074 = vadd.f32 %v9849, %v10073
      %v10075 = vpop.f32.mrb[0].mxu0
      %10076 = vmatprep.mubr.f32.mxu0 0.0
      %10077 = vmatmul.mubr.f32.gmra.mrb[0].mxu0 %v9441
      %v10078 = vpop.f32.mrb[0].mxu0
      %v10079 = vadd.f32 %v9854, %v10078
      %v10080 = vpop.f32.mrb[0].mxu0
      %10081 = vmatprep.mubr.f32.mxu0 0.0
      %10082 = vmatmul.mubr.f32.gmra.mrb[0].mxu0 %v9444
      %v10083 = vpop.f32.mrb[0].mxu0
      %v10084 = vadd.f32 %v9859, %v10083
      %v10085 = vpop.f32.mrb[0].mxu0
      %10086 = vmatprep.mubr.f32.mxu0 0.0
      %10087 = vmatmul.mubr.f32.gmra.mrb[0].mxu0 %v9447
      %v10088 = vpop.f32.mrb[0].mxu0
      %v10089 = vadd.f32 %v9864, %v10088
      %v10090 = vpop.f32.mrb[0].mxu0
      %10091 = vmatprep.mubr.f32.mxu0 0.0
      %10092 = vmatmul.mubr.f32.gmra.mrb[0].mxu0 %v9450
      %v10093 = vpop.f32.mrb[0].mxu0
      %v10094 = vadd.f32 %v9869, %v10093
      %v10095 = vpop.f32.mrb[0].mxu0
      %10096 = vmatprep.mubr.f32.mxu0 0.0
      %10097 = vmatmul.mubr.f32.gmra.mrb[0].mxu0 %v9453
      %v10098 = vpop.f32.mrb[0].mxu0
      %v10099 = vadd.f32 %v9874, %v10098
      %v10100 = vpop.f32.mrb[0].mxu0
      %10101 = vmatprep.mubr.f32.mxu0 0.0
      %10102 = vmatmul.mubr.f32.gmra.mrb[0].mxu0 %v9456
      %v10103 = vpop.f32.mrb[0].mxu0
      %v10104 = vadd.f32 %v9879, %v10103
      %v10105 = vpop.f32.mrb[0].mxu0
      %10106 = vmatprep.mubr.f32.mxu0 0.0
      %10107 = vmatmul.mubr.f32.gmra.mrb[0].mxu0 %v9459
      %v10108 = vpop.f32.mrb[0].mxu0
      %v10109 = vadd.f32 %v9884, %v10108
      %v10110 = vpop.f32.mrb[0].mxu0
      %10111 = vmatprep.mubr.f32.mxu0 0.0
      %10112 = vmatmul.mubr.f32.gmra.mrb[0].mxu0 %v9462
      %v10113 = vpop.f32.mrb[0].mxu0
      %v10114 = vadd.f32 %v9889, %v10113
      %v10115 = vpop.f32.mrb[0].mxu0
      %10116 = vmatprep.mubr.f32.mxu0 0.0
      %10117 = vmatmul.mubr.f32.gmra.mrb[0].mxu0 %v9465
      %v10118 = vpop.f32.mrb[0].mxu0
      %v10119 = vadd.f32 %v9894, %v10118
      %v10120 = vpop.f32.mrb[0].mxu0
      %10121 = vmatprep.mubr.f32.mxu0 0.0
      %10122 = vmatmul.mubr.f32.gmra.mrb[0].mxu0 %v9468
      %v10123 = vpop.f32.mrb[0].mxu0
      %v10124 = vadd.f32 %v9899, %v10123
      %v10125 = vpop.f32.mrb[0].mxu0
      %10126 = vmatprep.mubr.f32.mxu0 0.0
      %10127 = vmatmul.mubr.f32.gmra.mrb[0].mxu0 %v9471
      %v10128 = vpop.f32.mrb[0].mxu0
      %v10129 = vadd.f32 %v9904, %v10128
      %v10130 = vpop.f32.mrb[0].mxu0
      %10131 = vmatprep.mubr.f32.mxu0 0.0
      %10132 = vmatmul.mubr.f32.gmra.mrb[0].mxu0 %v9474
      %v10133 = vpop.f32.mrb[0].mxu0
      %v10134 = vadd.f32 %v9909, %v10133
      %v10135 = vpop.f32.mrb[0].mxu0
      %10136 = vmatprep.mubr.f32.mxu0 0.0
      %10137 = vmatmul.mubr.f32.gmra.mrb[0].mxu0 %v9477
      %v10138 = vpop.f32.mrb[0].mxu0
      %v10139 = vadd.f32 %v9914, %v10138
      %v10140 = vpop.f32.mrb[0].mxu0
      %10141 = vmatprep.mubr.f32.mxu0 0.0
      %10142 = vmatmul.mubr.f32.gmra.mrb[0].mxu0 %v9480
      %v10143 = vpop.f32.mrb[0].mxu0
      %v10144 = vadd.f32 %v9919, %v10143
      %v10145 = vpop.f32.mrb[0].mxu0
      %10146 = vmatprep.mubr.f32.mxu0 0.0
      %10147 = vmatmul.mubr.f32.gmra.mrb[0].mxu0 %v9483
      %v10148 = vpop.f32.mrb[0].mxu0
      %v10149 = vadd.f32 %v9924, %v10148
      %v10150 = vpop.f32.mrb[0].mxu0
      %10151 = vmatprep.mubr.f32.mxu0 0.0
      %10152 = vmatmul.mubr.f32.gmra.mrb[0].mxu0 %v9486
      %v10153 = vpop.f32.mrb[0].mxu0
      %v10154 = vadd.f32 %v9929, %v10153
      %v10155 = vpop.f32.mrb[0].mxu0
      %10156 = vmatprep.mubr.f32.mxu0 0.0
      %10157 = vmatmul.mubr.f32.gmra.mrb[0].mxu0 %v9489
      %v10158 = vpop.f32.mrb[0].mxu0
      %v10159 = vadd.f32 %v9934, %v10158
      %v10160 = vpop.f32.mrb[0].mxu0
      %10161 = vmatprep.mubr.f32.mxu0 0.0
      %10162 = vmatmul.mubr.f32.gmra.mrb[0].mxu0 %v9492
      %v10163 = vpop.f32.mrb[0].mxu0
      %v10164 = vadd.f32 %v9939, %v10163
      %v10165 = vpop.f32.mrb[0].mxu0
      %10166 = vmatprep.mubr.f32.mxu0 0.0
      %10167 = vmatmul.mubr.f32.gmra.mrb[0].mxu0 %v9495
      %v10168 = vpop.f32.mrb[0].mxu0
      %v10169 = vadd.f32 %v9944, %v10168
      %v10170 = vpop.f32.mrb[0].mxu0
      %10171 = vdwg.mxu0
      %v10172 = vadd.f32 %v6333, %v10014
      %v10173 = vadd.f32 %v6334, %v10019
      %v10174 = vadd.f32 %v6335, %v10024
      %v10175 = vadd.f32 %v6336, %v10029
      %v10176 = vadd.f32 %v6337, %v10034
      %v10177 = vadd.f32 %v6338, %v10039
      %v10178 = vadd.f32 %v6339, %v10044
      %v10179 = vadd.f32 %v6340, %v10049
      %v10180 = vadd.f32 %v6341, %v10054
      %v10181 = vadd.f32 %v6342, %v10059
      %v10182 = vadd.f32 %v6343, %v10064
      %v10183 = vadd.f32 %v6344, %v10069
      %v10184 = vadd.f32 %v6345, %v10074
      %v10185 = vadd.f32 %v6346, %v10079
      %v10186 = vadd.f32 %v6347, %v10084
      %v10187 = vadd.f32 %v6348, %v10089
      %v10188 = vadd.f32 %v6349, %v10094
      %v10189 = vadd.f32 %v6350, %v10099
      %v10190 = vadd.f32 %v6351, %v10104
      %v10191 = vadd.f32 %v6352, %v10109
      %v10192 = vadd.f32 %v6353, %v10114
      %v10193 = vadd.f32 %v6354, %v10119
      %v10194 = vadd.f32 %v6355, %v10124
      %v10195 = vadd.f32 %v6356, %v10129
      %v10196 = vadd.f32 %v6357, %v10134
      %v10197 = vadd.f32 %v6358, %v10139
      %v10198 = vadd.f32 %v6359, %v10144
      %v10199 = vadd.f32 %v6360, %v10149
      %v10200 = vadd.f32 %v6361, %v10154
      %v10201 = vadd.f32 %v6362, %v10159
      %v10202 = vadd.f32 %v6363, %v10164
      %v10203 = vadd.f32 %v6364, %v10169
      %10204 = vst.msk [vmem:[%s305] sm:$0xff] %vm306, %v10172
      %10205 = vst.msk [vmem:[%s305 + $0x8] sm:$0xff] %vm306, %v10173
      %10206 = vst.msk [vmem:[%s305 + $0x10] sm:$0xff] %vm306, %v10174
      %10207 = vst.msk [vmem:[%s305 + $0x18] sm:$0xff] %vm306, %v10175
      %10208 = vst.msk [vmem:[%s305 + $0x20] sm:$0xff] %vm306, %v10176
      %10209 = vst.msk [vmem:[%s305 + $0x28] sm:$0xff] %vm306, %v10177
      %10210 = vst.msk [vmem:[%s305 + $0x30] sm:$0xff] %vm306, %v10178
      %10211 = vst.msk [vmem:[%s305 + $0x38] sm:$0xff] %vm306, %v10179
      %10212 = vst.msk [vmem:[%s305 + $0x40] sm:$0xff] %vm306, %v10180
      %10213 = vst.msk [vmem:[%s305 + $0x48] sm:$0xff] %vm306, %v10181
      %10214 = vst.msk [vmem:[%s305 + $0x50] sm:$0xff] %vm306, %v10182
      %10215 = vst.msk [vmem:[%s305 + $0x58] sm:$0xff] %vm306, %v10183
      %10216 = vst.msk [vmem:[%s305 + $0x60] sm:$0xff] %vm306, %v10184
      %10217 = vst.msk [vmem:[%s305 + $0x68] sm:$0xff] %vm306, %v10185
      %10218 = vst.msk [vmem:[%s305 + $0x70] sm:$0xff] %vm306, %v10186
      %10219 = vst.msk [vmem:[%s305 + $0x78] sm:$0xff] %vm306, %v10187
      %10220 = vst.msk [vmem:[%s305 + $0x80] sm:$0xff] %vm306, %v10188
      %10221 = vst.msk [vmem:[%s305 + $0x88] sm:$0xff] %vm306, %v10189
      %10222 = vst.msk [vmem:[%s305 + $0x90] sm:$0xff] %vm306, %v10190
      %10223 = vst.msk [vmem:[%s305 + $0x98] sm:$0xff] %vm306, %v10191
      %10224 = vst.msk [vmem:[%s305 + $0xa0] sm:$0xff] %vm306, %v10192
      %10225 = vst.msk [vmem:[%s305 + $0xa8] sm:$0xff] %vm306, %v10193
      %10226 = vst.msk [vmem:[%s305 + $0xb0] sm:$0xff] %vm306, %v10194
      %10227 = vst.msk [vmem:[%s305 + $0xb8] sm:$0xff] %vm306, %v10195
      %10228 = vst.msk [vmem:[%s305 + $0xc0] sm:$0xff] %vm306, %v10196
      %10229 = vst.msk [vmem:[%s305 + $0xc8] sm:$0xff] %vm306, %v10197
      %10230 = vst.msk [vmem:[%s305 + $0xd0] sm:$0xff] %vm306, %v10198
      %10231 = vst.msk [vmem:[%s305 + $0xd8] sm:$0xff] %vm306, %v10199
      %10232 = vst.msk [vmem:[%s305 + $0xe0] sm:$0xff] %vm306, %v10200
      %10233 = vst.msk [vmem:[%s305 + $0xe8] sm:$0xff] %vm306, %v10201
      %10234 = vst.msk [vmem:[%s305 + $0xf0] sm:$0xff] %vm306, %v10202
      %10235 = vst.msk [vmem:[%s305 + $0xf8] sm:$0xff] %vm306, %v10203
      %p10236 = scmp.lt.s32.totalorder %s19, 1
      %s10237 = scalar_select %p10236, %s19, 1
      %s10238 = smul.addr %s10237, 32
      %s10239 = smul.addr %s10238, 8
      %s10240 = scalar_lea.vmem %s8, %s10239
      // Predicated region
      $region53: #{resblock_forward.1} parent=51 // pred_check
        %p10241 = pneg %p210
      $region54: #{resblock_forward.1} parent=51 // pred_check_branch
        %10243 = sbr.rel (%p10241) target = $region56
      $region55: #{resblock_forward.1} parent=51 // pred_region
        _
      $region56: #{resblock_forward.1} parent=51 // pred_fallthru
        _
    $region52: #{resblock_forward.1} parent=5 // pred_fallthru
      _
    %p10244 = scmp.le.s32.totalorder 2, %s14
    // Predicated region
    $region57: #{resblock_forward.1} parent=5 // pred_check
      %p10245 = pneg %p10244
    $region58: #{resblock_forward.1} parent=5 // pred_check_branch
      %10247 = sbr.rel (%p10245) target = $region60
    $region59: #{resblock_forward.1} parent=5 // pred_region
      %s10248 = ssub.s32 %s14, 2
      // Predicated region
      $region61: #{resblock_forward.1} parent=59 // pred_check
        %p10249 = pneg %p216
      $region62: #{resblock_forward.1} parent=59 // pred_check_branch
        %10251 = sbr.rel (%p10249) target = $region64
      $region63: #{resblock_forward.1} parent=59 // pred_region
        %p10252 = scmp.lt.s32.totalorder %s20, 1
        %s10253 = scalar_select %p10252, %s20, 1
        %s10254 = smul.addr %s10253, 32
        %s10255 = smul.addr %s10254, 8
        %s10256 = scalar_lea.vmem %s8, %s10255
      $region64: #{resblock_forward.1} parent=59 // pred_fallthru
        _
    $region60: #{resblock_forward.1} parent=5 // pred_fallthru
      _
  $region6: #{resblock_forward.1} parent=0 // loop_footer
    %s18 = sadd.s32 1, %s14
  $region7: #{resblock_forward.1} parent=0 // loop_footer_branch
    %13 = sbr.rel target = $region3
  $region8: #{resblock_forward.1} parent=0 // loop_exit
    _

</llo_original>
